<compile_context>
chip_gen: v5e
topology: v5e:2x2
jax: 0.10.0
libtpu: 0.0.40
codegen_flags: <defaults>
</compile_context>

<pallas_src>
import functools
import numpy as np
import jax
import jax.numpy as jnp
from jax.experimental import pallas as pl
from jax.experimental.pallas import tpu as pltpu


# ---------------------------------------------------------------------------
# Pallas kernel: one grid step == TB windows.
# ---------------------------------------------------------------------------
def _window_attn_kernel(x_ref, wqkv_ref, bqkv_ref, wproj_ref, bproj_ref,
                        bias_ref, *rest, num_heads, head_dim, has_mask, mm_dtype):
    if has_mask:
        mask_ref, o_ref = rest
    else:
        (o_ref,) = rest

    TB, N, C = x_ref.shape

    # ---- fused QKV projection over all TB windows: (TB*N, C) @ (C, 3C) ----
    xr = x_ref[...].reshape(TB * N, C)
    qkv = jnp.dot(xr.astype(mm_dtype), wqkv_ref[...].astype(mm_dtype),
                  preferred_element_type=jnp.float32) + bqkv_ref[...]    # (TB*N, 3C)

    if has_mask:
        mask = mask_ref[...]                  # (nW, N, N), resident across grid steps
        nW = mask.shape[0]
        rep = TB // nW                        # TB is chosen as a multiple of nW

    acc = jnp.zeros((TB * N, C), jnp.float32)
    for h in range(num_heads):                # static unroll; per-head live set is small
        lo = h * head_dim
        qh = qkv[:, lo:lo + head_dim]                     # (TB*N, hd), scale folded in W
        kh = qkv[:, C + lo:C + lo + head_dim]
        vh = qkv[:, 2 * C + lo:2 * C + lo + head_dim]

        qh = qh.reshape(TB, N, head_dim)
        kh = kh.reshape(TB, N, head_dim)
        vh = vh.reshape(TB, N, head_dim)

        attn = jnp.einsum('bqd,bkd->bqk', qh.astype(mm_dtype), kh.astype(mm_dtype),
                          preferred_element_type=jnp.float32)            # (TB, N, N)
        attn = attn + bias_ref[h][None, :, :]
        if has_mask:
            attn = (attn.reshape(rep, nW, N, N) + mask[None]).reshape(TB, N, N)

        # f32 softmax with approx-reciprocal denominator (EUP slot).
        attn = attn - jnp.max(attn, axis=-1, keepdims=True)
        p = jnp.exp(attn)
        p = p * pl.reciprocal(jnp.sum(p, axis=-1, keepdims=True), approx=True)

        out_h = jnp.einsum('bqk,bkd->bqd', p.astype(mm_dtype), vh.astype(mm_dtype),
                           preferred_element_type=jnp.float32)           # (TB, N, hd)

        # Per-head slice of the output projection -> accumulate (no lane concat).
        acc = acc + jnp.dot(out_h.reshape(TB * N, head_dim).astype(mm_dtype),
                            wproj_ref[lo:lo + head_dim, :].astype(mm_dtype),
                            preferred_element_type=jnp.float32)

    y = acc + bproj_ref[...]
    o_ref[...] = y.reshape(TB, N, C).astype(o_ref.dtype)


# ---------------------------------------------------------------------------
# Wrapper
# ---------------------------------------------------------------------------
def _pick_window_tile(B_, N, nW):
    """Largest TB that divides B_, is a multiple of nW, and keeps TB*N <= 512 rows."""
    cands = [t for t in range(nW, B_ + 1, nW) if B_ % t == 0]
    if not cands:                 # B_ not a multiple of nW (never the case for Swin)
        return B_
    good = [t for t in cands if t * N <= 512]
    return max(good) if good else min(cands)


def window_attention(x, wqkv, bqkv, wproj, bproj, rel_pos_bias, mask=None,
                     *, num_heads, mm_dtype=jnp.float32):
    """x: (B_, N, C); wqkv: (C, 3C); bqkv: (1, 3C); wproj: (C, C); bproj: (1, C);
    rel_pos_bias: (num_heads, N, N); mask: (nW, N, N) or None."""
    B_, N, C = x.shape
    head_dim = C // num_heads
    scale = head_dim ** (-0.5)

    # Fold the qk scale into the Q columns of the QKV projection (constant transform
    # on the parameters; under jit this is constant-folded / hoisted once).
    col_scale = jnp.concatenate([jnp.full((C,), scale, wqkv.dtype),
                                 jnp.ones((2 * C,), wqkv.dtype)])
    wqkv_s = wqkv * col_scale[None, :]
    bqkv_s = bqkv * col_scale[None, :]

    has_mask = mask is not None
    nW = mask.shape[0] if has_mask else 1
    TB = _pick_window_tile(B_, N, nW)
    grid = (B_ // TB,)

    in_specs = [
        pl.BlockSpec((TB, N, C), lambda b: (b, 0, 0)),              # x: TB windows / step
        pl.BlockSpec((C, 3 * C), lambda b: (0, 0)),                 # Wqkv (resident)
        pl.BlockSpec((1, 3 * C), lambda b: (0, 0)),                 # bqkv
        pl.BlockSpec((C, C), lambda b: (0, 0)),                     # Wproj
        pl.BlockSpec((1, C), lambda b: (0, 0)),                     # bproj
        pl.BlockSpec((num_heads, N, N), lambda b: (0, 0, 0)),       # rel-pos bias (resident)
    ]
    args = [x, wqkv_s, bqkv_s, wproj, bproj, rel_pos_bias]
    if has_mask:
        in_specs.append(pl.BlockSpec((nW, N, N), lambda b: (0, 0, 0)))  # full mask, resident
        args.append(mask.astype(jnp.float32))

    kernel = functools.partial(_window_attn_kernel, num_heads=num_heads,
                               head_dim=head_dim, has_mask=has_mask,
                               mm_dtype=mm_dtype)

    return pl.pallas_call(
        kernel,
        out_shape=jax.ShapeDtypeStruct((B_, N, C), x.dtype),
        grid=grid,
        in_specs=in_specs,
        out_specs=pl.BlockSpec((TB, N, C), lambda b: (b, 0, 0)),
        compiler_params=pltpu.CompilerParams(
            dimension_semantics=("parallel",)),     # windows independent -> dual TC on v7x
    )(*args)


# ---------------------------------------------------------------------------
# Relative position index / bias construction (static, plain numpy/JAX glue).
# ---------------------------------------------------------------------------
def make_relative_position_index(window_size):
    Wh, Ww = window_size
    coords = np.stack(np.meshgrid(np.arange(Wh), np.arange(Ww), indexing="ij"))  # (2, Wh, Ww)
    coords_flatten = coords.reshape(2, -1)                                       # (2, N)
    rel = coords_flatten[:, :, None] - coords_flatten[:, None, :]                # (2, N, N)
    rel = rel.transpose(1, 2, 0).astype(np.int64)                                # (N, N, 2)
    rel[:, :, 0] += Wh - 1
    rel[:, :, 1] += Ww - 1
    rel[:, :, 0] *= 2 * Ww - 1
    return rel.sum(-1)                                                           # (N, N)


def gather_relative_position_bias(table, rel_index, num_heads, N):
    # table: ((2Wh-1)*(2Ww-1), num_heads) -> (num_heads, N, N)
    bias = table[rel_index.reshape(-1)].reshape(N, N, num_heads)
    return jnp.transpose(bias, (2, 0, 1))


# ---------------------------------------------------------------------------
# Pure-JAX reference (mirrors the PyTorch forward exactly) for validation.
# ---------------------------------------------------------------------------
def reference_window_attention(x, wqkv, bqkv, wproj, bproj, rel_pos_bias, mask,
                               *, num_heads):
    B_, N, C = x.shape
    hd = C // num_heads
    scale = hd ** (-0.5)
    qkv = (x @ wqkv + bqkv[0]).reshape(B_, N, 3, num_heads, hd).transpose(2, 0, 3, 1, 4)
    q, k, v = qkv[0], qkv[1], qkv[2]                     # (B_, H, N, hd)
    attn = (q * scale) @ jnp.swapaxes(k, -2, -1)         # (B_, H, N, N)
    attn = attn + rel_pos_bias[None]
    if mask is not None:
        nW = mask.shape[0]
        attn = attn.reshape(B_ // nW, nW, num_heads, N, N) + mask[None, :, None]
        attn = attn.reshape(B_, num_heads, N, N)
    attn = jax.nn.softmax(attn, axis=-1)
    out = (attn @ v).transpose(0, 2, 1, 3).reshape(B_, N, C)
    return out @ wproj + bproj[0]


# ---------------------------------------------------------------------------
if __name__ == "__main__":
    dim = 128                              # multiple of 128 -> lane-dense output stores
    num_heads = 4
    window_size = (8, 8)
    N = window_size[0] * window_size[1]    # 64
    nW = 4                                 # windows per image
    B = 4
    B_ = B * nW                            # 16

    key = jax.random.PRNGKey(0)
    k_x, k_wqkv, k_bqkv, k_wp, k_bp, k_tab, k_mask = jax.random.split(key, 7)

    # Deterministic parameter init (synthetic; nn.Linear weights stored transposed).
    x = jax.random.normal(k_x, (B_, N, dim), dtype=jnp.float32)
    wqkv = jax.random.normal(k_wqkv, (dim, 3 * dim), dtype=jnp.float32) * 0.05
    bqkv = jax.random.normal(k_bqkv, (1, 3 * dim), dtype=jnp.float32) * 0.01
    wproj = jax.random.normal(k_wp, (dim, dim), dtype=jnp.float32) * 0.05
    bproj = jax.random.normal(k_bp, (1, dim), dtype=jnp.float32) * 0.01
    table = jax.random.normal(
        k_tab, ((2 * window_size[0] - 1) * (2 * window_size[1] - 1), num_heads),
        dtype=jnp.float32) * 0.02          # trunc_normal(std=0.02) approximated by normal

    rel_index = make_relative_position_index(window_size)
    rel_pos_bias = gather_relative_position_bias(table, rel_index, num_heads, N)

    # Shifted-window style additive mask (0 / -100), shape (nW, N, N).
    mask = jnp.where(jax.random.bernoulli(k_mask, 0.8, (nW, N, N)),
                     0.0, -100.0).astype(jnp.float32)

    # --- mask=None path (f32 MXU) ---
    out0 = window_attention(x, wqkv, bqkv, wproj, bproj, rel_pos_bias, None,
                            num_heads=num_heads)
    jax.block_until_ready(out0)
    ref0 = reference_window_attention(x, wqkv, bqkv, wproj, bproj, rel_pos_bias, None,
                                      num_heads=num_heads)
    np.testing.assert_allclose(np.asarray(out0), np.asarray(ref0), rtol=2e-3, atol=2e-3)

    # --- masked (shifted-window) path (f32 MXU) ---
    out1 = window_attention(x, wqkv, bqkv, wproj, bproj, rel_pos_bias, mask,
                            num_heads=num_heads)
    jax.block_until_ready(out1)
    ref1 = reference_window_attention(x, wqkv, bqkv, wproj, bproj, rel_pos_bias, mask,
                                      num_heads=num_heads)
    np.testing.assert_allclose(np.asarray(out1), np.asarray(ref1), rtol=2e-3, atol=2e-3)

    # --- masked path with bf16 MXU operands (f32 accumulation / f32 softmax) ---
    out2 = window_attention(x, wqkv, bqkv, wproj, bproj, rel_pos_bias, mask,
                            num_heads=num_heads, mm_dtype=jnp.bfloat16)
    jax.block_until_ready(out2)
    np.testing.assert_allclose(np.asarray(out2), np.asarray(ref1), rtol=5e-2, atol=2e-2)

    # attn_drop / proj_drop are identity in eval mode (p=0.0), so not modeled.
    print("KERNEL_OK")
</pallas_src>

<mosaic_0001>
module attributes {stable_mosaic.version = 11 : i64} {
  func.func @_window_attn_kernel(%arg0: i32, %arg1: memref<8x64x128xf32, #tpu.memory_space<vmem>>, %arg2: memref<128x384xf32, #tpu.memory_space<vmem>>, %arg3: memref<1x384xf32, #tpu.memory_space<vmem>>, %arg4: memref<128x128xf32, #tpu.memory_space<vmem>>, %arg5: memref<1x128xf32, #tpu.memory_space<vmem>>, %arg6: memref<4x64x64xf32, #tpu.memory_space<vmem>>, %arg7: memref<8x64x128xf32, #tpu.memory_space<vmem>>) attributes {dimension_semantics = [#tpu.dimension_semantics<parallel>], iteration_bounds = array<i64: 2>, scalar_prefetch = 0 : i64, scratch_operands = 0 : i64, tpu.core_type = #tpu.core_type<tc>, window_params = [{transform_indices = @transform_0, window_bounds = array<i64: 8, 64, 128>}, {pipeline_mode = #tpu.pipeline_mode<synchronous>, transform_indices = @transform_1, window_bounds = array<i64: 128, 384>}, {pipeline_mode = #tpu.pipeline_mode<synchronous>, transform_indices = @transform_2, window_bounds = array<i64: 1, 384>}, {pipeline_mode = #tpu.pipeline_mode<synchronous>, transform_indices = @transform_3, window_bounds = array<i64: 128, 128>}, {pipeline_mode = #tpu.pipeline_mode<synchronous>, transform_indices = @transform_4, window_bounds = array<i64: 1, 128>}, {pipeline_mode = #tpu.pipeline_mode<synchronous>, transform_indices = @transform_5, window_bounds = array<i64: 4, 64, 64>}, {transform_indices = @transform_6, window_bounds = array<i64: 8, 64, 128>}]} {
    %c0 = arith.constant 0 : index
    %c0_0 = arith.constant 0 : index
    %c0_1 = arith.constant 0 : index
    %0 = vector.load %arg1[%c0, %c0_0, %c0_1] : memref<8x64x128xf32, #tpu.memory_space<vmem>>, vector<8x64x128xf32>
    %1 = vector.shape_cast %0 : vector<8x64x128xf32> to vector<512x128xf32>
    %c0_2 = arith.constant 0 : index
    %c0_3 = arith.constant 0 : index
    %2 = vector.load %arg2[%c0_2, %c0_3] : memref<128x384xf32, #tpu.memory_space<vmem>>, vector<128x384xf32>
    %cst = arith.constant dense<0.000000e+00> : vector<512x384xf32>
    %3 = tpu.matmul %1, %2, %cst {dimension_numbers = #tpu.dot_dimension_numbers<[1], [0], [0], [1], [0, 0, 1, 1], [], []>} : vector<512x128xf32>, vector<128x384xf32>, vector<512x384xf32> -> vector<512x384xf32>
    %c0_4 = arith.constant 0 : index
    %c0_5 = arith.constant 0 : index
    %4 = vector.load %arg3[%c0_4, %c0_5] : memref<1x384xf32, #tpu.memory_space<vmem>>, vector<1x384xf32>
    %5 = vector.broadcast %4 : vector<1x384xf32> to vector<512x384xf32>
    %6 = arith.addf %3, %5 : vector<512x384xf32>
    %cst_6 = arith.constant 0.000000e+00 : f32
    %7 = vector.broadcast %cst_6 : f32 to vector<512x128xf32>
    %8 = vector.extract_strided_slice %6 {offsets = [0, 0], sizes = [512, 32], strides = [1, 1]} : vector<512x384xf32> to vector<512x32xf32>
    %9 = vector.extract_strided_slice %6 {offsets = [0, 128], sizes = [512, 32], strides = [1, 1]} : vector<512x384xf32> to vector<512x32xf32>
    %10 = vector.extract_strided_slice %6 {offsets = [0, 256], sizes = [512, 32], strides = [1, 1]} : vector<512x384xf32> to vector<512x32xf32>
    %11 = vector.shape_cast %8 : vector<512x32xf32> to vector<8x64x32xf32>
    %12 = vector.shape_cast %9 : vector<512x32xf32> to vector<8x64x32xf32>
    %13 = vector.shape_cast %10 : vector<512x32xf32> to vector<8x64x32xf32>
    "tpu.trace_start"() <{level = 10 : i32, message = "bqd,bkd->bqk"}> : () -> ()
    %cst_7 = arith.constant dense<0.000000e+00> : vector<8x64x64xf32>
    %14 = tpu.matmul %11, %12, %cst_7 {dimension_numbers = #tpu.dot_dimension_numbers<[2], [2], [1], [1], [0, 0, 0, 1, 1, 1], [0], [0]>} : vector<8x64x32xf32>, vector<8x64x32xf32>, vector<8x64x64xf32> -> vector<8x64x64xf32>
    "tpu.trace_stop"() : () -> ()
    %c0_8 = arith.constant 0 : index
    %c0_9 = arith.constant 0 : index
    %c0_10 = arith.constant 0 : index
    %15 = vector.load %arg6[%c0_8, %c0_9, %c0_10] : memref<4x64x64xf32, #tpu.memory_space<vmem>>, vector<1x64x64xf32>
    %16 = vector.shape_cast %15 : vector<1x64x64xf32> to vector<64x64xf32>
    %17 = vector.shape_cast %16 : vector<64x64xf32> to vector<1x64x64xf32>
    %18 = vector.broadcast %17 : vector<1x64x64xf32> to vector<8x64x64xf32>
    %19 = arith.addf %14, %18 : vector<8x64x64xf32>
    %cst_11 = arith.constant dense<0xFF800000> : vector<8x64xf32>
    %20 = vector.multi_reduction <maximumf>, %19, %cst_11 [2] : vector<8x64x64xf32> to vector<8x64xf32>
    %21 = vector.shape_cast %20 : vector<8x64xf32> to vector<8x64x1xf32>
    %22 = vector.broadcast %21 : vector<8x64x1xf32> to vector<8x64x64xf32>
    %23 = arith.subf %19, %22 : vector<8x64x64xf32>
    %24 = math.exp %23 : vector<8x64x64xf32>
    %cst_12 = arith.constant dense<0.000000e+00> : vector<8x64xf32>
    %25 = vector.multi_reduction <add>, %24, %cst_12 [2] : vector<8x64x64xf32> to vector<8x64xf32>
    %26 = vector.shape_cast %25 : vector<8x64xf32> to vector<8x64x1xf32>
    %27 = tpu.reciprocal %26 {approx = true} : vector<8x64x1xf32> -> vector<8x64x1xf32>
    %28 = vector.broadcast %27 : vector<8x64x1xf32> to vector<8x64x64xf32>
    %29 = arith.mulf %24, %28 : vector<8x64x64xf32>
    "tpu.trace_start"() <{level = 10 : i32, message = "bqk,bkd->bqd"}> : () -> ()
    %cst_13 = arith.constant dense<0.000000e+00> : vector<8x64x32xf32>
    %30 = tpu.matmul %29, %13, %cst_13 {dimension_numbers = #tpu.dot_dimension_numbers<[2], [1], [1], [2], [0, 0, 0, 1, 1, 2], [0], [0]>} : vector<8x64x64xf32>, vector<8x64x32xf32>, vector<8x64x32xf32> -> vector<8x64x32xf32>
    "tpu.trace_stop"() : () -> ()
    %31 = vector.shape_cast %30 : vector<8x64x32xf32> to vector<512x32xf32>
    %c0_14 = arith.constant 0 : index
    %c0_15 = arith.constant 0 : index
    %32 = vector.load %arg4[%c0_14, %c0_15] : memref<128x128xf32, #tpu.memory_space<vmem>>, vector<32x128xf32>
    %cst_16 = arith.constant dense<0.000000e+00> : vector<512x128xf32>
    %33 = tpu.matmul %31, %32, %cst_16 {dimension_numbers = #tpu.dot_dimension_numbers<[1], [0], [0], [1], [0, 0, 1, 1], [], []>} : vector<512x32xf32>, vector<32x128xf32>, vector<512x128xf32> -> vector<512x128xf32>
    %34 = arith.addf %7, %33 : vector<512x128xf32>
    %35 = vector.extract_strided_slice %6 {offsets = [0, 32], sizes = [512, 32], strides = [1, 1]} : vector<512x384xf32> to vector<512x32xf32>
    %36 = vector.extract_strided_slice %6 {offsets = [0, 160], sizes = [512, 32], strides = [1, 1]} : vector<512x384xf32> to vector<512x32xf32>
    %37 = vector.extract_strided_slice %6 {offsets = [0, 288], sizes = [512, 32], strides = [1, 1]} : vector<512x384xf32> to vector<512x32xf32>
    %38 = vector.shape_cast %35 : vector<512x32xf32> to vector<8x64x32xf32>
    %39 = vector.shape_cast %36 : vector<512x32xf32> to vector<8x64x32xf32>
    %40 = vector.shape_cast %37 : vector<512x32xf32> to vector<8x64x32xf32>
    "tpu.trace_start"() <{level = 10 : i32, message = "bqd,bkd->bqk"}> : () -> ()
    %cst_17 = arith.constant dense<0.000000e+00> : vector<8x64x64xf32>
    %41 = tpu.matmul %38, %39, %cst_17 {dimension_numbers = #tpu.dot_dimension_numbers<[2], [2], [1], [1], [0, 0, 0, 1, 1, 1], [0], [0]>} : vector<8x64x32xf32>, vector<8x64x32xf32>, vector<8x64x64xf32> -> vector<8x64x64xf32>
    "tpu.trace_stop"() : () -> ()
    %c1 = arith.constant 1 : index
    %c0_18 = arith.constant 0 : index
    %c0_19 = arith.constant 0 : index
    %42 = vector.load %arg6[%c1, %c0_18, %c0_19] : memref<4x64x64xf32, #tpu.memory_space<vmem>>, vector<1x64x64xf32>
    %43 = vector.shape_cast %42 : vector<1x64x64xf32> to vector<64x64xf32>
    %44 = vector.shape_cast %43 : vector<64x64xf32> to vector<1x64x64xf32>
    %45 = vector.broadcast %44 : vector<1x64x64xf32> to vector<8x64x64xf32>
    %46 = arith.addf %41, %45 : vector<8x64x64xf32>
    %cst_20 = arith.constant dense<0xFF800000> : vector<8x64xf32>
    %47 = vector.multi_reduction <maximumf>, %46, %cst_20 [2] : vector<8x64x64xf32> to vector<8x64xf32>
    %48 = vector.shape_cast %47 : vector<8x64xf32> to vector<8x64x1xf32>
    %49 = vector.broadcast %48 : vector<8x64x1xf32> to vector<8x64x64xf32>
    %50 = arith.subf %46, %49 : vector<8x64x64xf32>
    %51 = math.exp %50 : vector<8x64x64xf32>
    %cst_21 = arith.constant dense<0.000000e+00> : vector<8x64xf32>
    %52 = vector.multi_reduction <add>, %51, %cst_21 [2] : vector<8x64x64xf32> to vector<8x64xf32>
    %53 = vector.shape_cast %52 : vector<8x64xf32> to vector<8x64x1xf32>
    %54 = tpu.reciprocal %53 {approx = true} : vector<8x64x1xf32> -> vector<8x64x1xf32>
    %55 = vector.broadcast %54 : vector<8x64x1xf32> to vector<8x64x64xf32>
    %56 = arith.mulf %51, %55 : vector<8x64x64xf32>
    "tpu.trace_start"() <{level = 10 : i32, message = "bqk,bkd->bqd"}> : () -> ()
    %cst_22 = arith.constant dense<0.000000e+00> : vector<8x64x32xf32>
    %57 = tpu.matmul %56, %40, %cst_22 {dimension_numbers = #tpu.dot_dimension_numbers<[2], [1], [1], [2], [0, 0, 0, 1, 1, 2], [0], [0]>} : vector<8x64x64xf32>, vector<8x64x32xf32>, vector<8x64x32xf32> -> vector<8x64x32xf32>
    "tpu.trace_stop"() : () -> ()
    %58 = vector.shape_cast %57 : vector<8x64x32xf32> to vector<512x32xf32>
    %c32 = arith.constant 32 : index
    %c0_23 = arith.constant 0 : index
    %59 = vector.load %arg4[%c32, %c0_23] : memref<128x128xf32, #tpu.memory_space<vmem>>, vector<32x128xf32>
    %cst_24 = arith.constant dense<0.000000e+00> : vector<512x128xf32>
    %60 = tpu.matmul %58, %59, %cst_24 {dimension_numbers = #tpu.dot_dimension_numbers<[1], [0], [0], [1], [0, 0, 1, 1], [], []>} : vector<512x32xf32>, vector<32x128xf32>, vector<512x128xf32> -> vector<512x128xf32>
    %61 = arith.addf %34, %60 : vector<512x128xf32>
    %62 = vector.extract_strided_slice %6 {offsets = [0, 64], sizes = [512, 32], strides = [1, 1]} : vector<512x384xf32> to vector<512x32xf32>
    %63 = vector.extract_strided_slice %6 {offsets = [0, 192], sizes = [512, 32], strides = [1, 1]} : vector<512x384xf32> to vector<512x32xf32>
    %64 = vector.extract_strided_slice %6 {offsets = [0, 320], sizes = [512, 32], strides = [1, 1]} : vector<512x384xf32> to vector<512x32xf32>
    %65 = vector.shape_cast %62 : vector<512x32xf32> to vector<8x64x32xf32>
    %66 = vector.shape_cast %63 : vector<512x32xf32> to vector<8x64x32xf32>
    %67 = vector.shape_cast %64 : vector<512x32xf32> to vector<8x64x32xf32>
    "tpu.trace_start"() <{level = 10 : i32, message = "bqd,bkd->bqk"}> : () -> ()
    %cst_25 = arith.constant dense<0.000000e+00> : vector<8x64x64xf32>
    %68 = tpu.matmul %65, %66, %cst_25 {dimension_numbers = #tpu.dot_dimension_numbers<[2], [2], [1], [1], [0, 0, 0, 1, 1, 1], [0], [0]>} : vector<8x64x32xf32>, vector<8x64x32xf32>, vector<8x64x64xf32> -> vector<8x64x64xf32>
    "tpu.trace_stop"() : () -> ()
    %c2 = arith.constant 2 : index
    %c0_26 = arith.constant 0 : index
    %c0_27 = arith.constant 0 : index
    %69 = vector.load %arg6[%c2, %c0_26, %c0_27] : memref<4x64x64xf32, #tpu.memory_space<vmem>>, vector<1x64x64xf32>
    %70 = vector.shape_cast %69 : vector<1x64x64xf32> to vector<64x64xf32>
    %71 = vector.shape_cast %70 : vector<64x64xf32> to vector<1x64x64xf32>
    %72 = vector.broadcast %71 : vector<1x64x64xf32> to vector<8x64x64xf32>
    %73 = arith.addf %68, %72 : vector<8x64x64xf32>
    %cst_28 = arith.constant dense<0xFF800000> : vector<8x64xf32>
    %74 = vector.multi_reduction <maximumf>, %73, %cst_28 [2] : vector<8x64x64xf32> to vector<8x64xf32>
    %75 = vector.shape_cast %74 : vector<8x64xf32> to vector<8x64x1xf32>
    %76 = vector.broadcast %75 : vector<8x64x1xf32> to vector<8x64x64xf32>
    %77 = arith.subf %73, %76 : vector<8x64x64xf32>
    %78 = math.exp %77 : vector<8x64x64xf32>
    %cst_29 = arith.constant dense<0.000000e+00> : vector<8x64xf32>
    %79 = vector.multi_reduction <add>, %78, %cst_29 [2] : vector<8x64x64xf32> to vector<8x64xf32>
    %80 = vector.shape_cast %79 : vector<8x64xf32> to vector<8x64x1xf32>
    %81 = tpu.reciprocal %80 {approx = true} : vector<8x64x1xf32> -> vector<8x64x1xf32>
    %82 = vector.broadcast %81 : vector<8x64x1xf32> to vector<8x64x64xf32>
    %83 = arith.mulf %78, %82 : vector<8x64x64xf32>
    "tpu.trace_start"() <{level = 10 : i32, message = "bqk,bkd->bqd"}> : () -> ()
    %cst_30 = arith.constant dense<0.000000e+00> : vector<8x64x32xf32>
    %84 = tpu.matmul %83, %67, %cst_30 {dimension_numbers = #tpu.dot_dimension_numbers<[2], [1], [1], [2], [0, 0, 0, 1, 1, 2], [0], [0]>} : vector<8x64x64xf32>, vector<8x64x32xf32>, vector<8x64x32xf32> -> vector<8x64x32xf32>
    "tpu.trace_stop"() : () -> ()
    %85 = vector.shape_cast %84 : vector<8x64x32xf32> to vector<512x32xf32>
    %c64 = arith.constant 64 : index
    %c0_31 = arith.constant 0 : index
    %86 = vector.load %arg4[%c64, %c0_31] : memref<128x128xf32, #tpu.memory_space<vmem>>, vector<32x128xf32>
    %cst_32 = arith.constant dense<0.000000e+00> : vector<512x128xf32>
    %87 = tpu.matmul %85, %86, %cst_32 {dimension_numbers = #tpu.dot_dimension_numbers<[1], [0], [0], [1], [0, 0, 1, 1], [], []>} : vector<512x32xf32>, vector<32x128xf32>, vector<512x128xf32> -> vector<512x128xf32>
    %88 = arith.addf %61, %87 : vector<512x128xf32>
    %89 = vector.extract_strided_slice %6 {offsets = [0, 96], sizes = [512, 32], strides = [1, 1]} : vector<512x384xf32> to vector<512x32xf32>
    %90 = vector.extract_strided_slice %6 {offsets = [0, 224], sizes = [512, 32], strides = [1, 1]} : vector<512x384xf32> to vector<512x32xf32>
    %91 = vector.extract_strided_slice %6 {offsets = [0, 352], sizes = [512, 32], strides = [1, 1]} : vector<512x384xf32> to vector<512x32xf32>
    %92 = vector.shape_cast %89 : vector<512x32xf32> to vector<8x64x32xf32>
    %93 = vector.shape_cast %90 : vector<512x32xf32> to vector<8x64x32xf32>
    %94 = vector.shape_cast %91 : vector<512x32xf32> to vector<8x64x32xf32>
    "tpu.trace_start"() <{level = 10 : i32, message = "bqd,bkd->bqk"}> : () -> ()
    %cst_33 = arith.constant dense<0.000000e+00> : vector<8x64x64xf32>
    %95 = tpu.matmul %92, %93, %cst_33 {dimension_numbers = #tpu.dot_dimension_numbers<[2], [2], [1], [1], [0, 0, 0, 1, 1, 1], [0], [0]>} : vector<8x64x32xf32>, vector<8x64x32xf32>, vector<8x64x64xf32> -> vector<8x64x64xf32>
    "tpu.trace_stop"() : () -> ()
    %c3 = arith.constant 3 : index
    %c0_34 = arith.constant 0 : index
    %c0_35 = arith.constant 0 : index
    %96 = vector.load %arg6[%c3, %c0_34, %c0_35] : memref<4x64x64xf32, #tpu.memory_space<vmem>>, vector<1x64x64xf32>
    %97 = vector.shape_cast %96 : vector<1x64x64xf32> to vector<64x64xf32>
    %98 = vector.shape_cast %97 : vector<64x64xf32> to vector<1x64x64xf32>
    %99 = vector.broadcast %98 : vector<1x64x64xf32> to vector<8x64x64xf32>
    %100 = arith.addf %95, %99 : vector<8x64x64xf32>
    %cst_36 = arith.constant dense<0xFF800000> : vector<8x64xf32>
    %101 = vector.multi_reduction <maximumf>, %100, %cst_36 [2] : vector<8x64x64xf32> to vector<8x64xf32>
    %102 = vector.shape_cast %101 : vector<8x64xf32> to vector<8x64x1xf32>
    %103 = vector.broadcast %102 : vector<8x64x1xf32> to vector<8x64x64xf32>
    %104 = arith.subf %100, %103 : vector<8x64x64xf32>
    %105 = math.exp %104 : vector<8x64x64xf32>
    %cst_37 = arith.constant dense<0.000000e+00> : vector<8x64xf32>
    %106 = vector.multi_reduction <add>, %105, %cst_37 [2] : vector<8x64x64xf32> to vector<8x64xf32>
    %107 = vector.shape_cast %106 : vector<8x64xf32> to vector<8x64x1xf32>
    %108 = tpu.reciprocal %107 {approx = true} : vector<8x64x1xf32> -> vector<8x64x1xf32>
    %109 = vector.broadcast %108 : vector<8x64x1xf32> to vector<8x64x64xf32>
    %110 = arith.mulf %105, %109 : vector<8x64x64xf32>
    "tpu.trace_start"() <{level = 10 : i32, message = "bqk,bkd->bqd"}> : () -> ()
    %cst_38 = arith.constant dense<0.000000e+00> : vector<8x64x32xf32>
    %111 = tpu.matmul %110, %94, %cst_38 {dimension_numbers = #tpu.dot_dimension_numbers<[2], [1], [1], [2], [0, 0, 0, 1, 1, 2], [0], [0]>} : vector<8x64x64xf32>, vector<8x64x32xf32>, vector<8x64x32xf32> -> vector<8x64x32xf32>
    "tpu.trace_stop"() : () -> ()
    %112 = vector.shape_cast %111 : vector<8x64x32xf32> to vector<512x32xf32>
    %c96 = arith.constant 96 : index
    %c0_39 = arith.constant 0 : index
    %113 = vector.load %arg4[%c96, %c0_39] : memref<128x128xf32, #tpu.memory_space<vmem>>, vector<32x128xf32>
    %cst_40 = arith.constant dense<0.000000e+00> : vector<512x128xf32>
    %114 = tpu.matmul %112, %113, %cst_40 {dimension_numbers = #tpu.dot_dimension_numbers<[1], [0], [0], [1], [0, 0, 1, 1], [], []>} : vector<512x32xf32>, vector<32x128xf32>, vector<512x128xf32> -> vector<512x128xf32>
    %115 = arith.addf %88, %114 : vector<512x128xf32>
    %c0_41 = arith.constant 0 : index
    %c0_42 = arith.constant 0 : index
    %116 = vector.load %arg5[%c0_41, %c0_42] : memref<1x128xf32, #tpu.memory_space<vmem>>, vector<1x128xf32>
    %117 = vector.broadcast %116 : vector<1x128xf32> to vector<512x128xf32>
    %118 = arith.addf %115, %117 : vector<512x128xf32>
    %119 = vector.shape_cast %118 : vector<512x128xf32> to vector<8x64x128xf32>
    %c0_43 = arith.constant 0 : index
    %c0_44 = arith.constant 0 : index
    %c0_45 = arith.constant 0 : index
    %120 = vector.load %arg7[%c0_43, %c0_44, %c0_45] : memref<8x64x128xf32, #tpu.memory_space<vmem>>, vector<8x64x128xf32>
    tpu.vector_store %arg7[%c0_43, %c0_44, %c0_45], %119 {strides = array<i32>} : memref<8x64x128xf32, #tpu.memory_space<vmem>>, vector<8x64x128xf32>,
    return
  }
  func.func @transform_0(%arg0: i32) -> (i32, i32, i32) {
    %c0_i32 = arith.constant 0 : i32
    %c0_i32_0 = arith.constant 0 : i32
    %c0_i32_1 = arith.constant 0 : i32
    return %arg0, %c0_i32, %c0_i32_0 : i32, i32, i32
  }
  func.func @transform_1(%arg0: i32) -> (i32, i32) {
    %c0_i32 = arith.constant 0 : i32
    %c0_i32_0 = arith.constant 0 : i32
    %c0_i32_1 = arith.constant 0 : i32
    return %c0_i32, %c0_i32_0 : i32, i32
  }
  func.func @transform_2(%arg0: i32) -> (i32, i32) {
    %c0_i32 = arith.constant 0 : i32
    %c0_i32_0 = arith.constant 0 : i32
    %c0_i32_1 = arith.constant 0 : i32
    return %c0_i32, %c0_i32_0 : i32, i32
  }
  func.func @transform_3(%arg0: i32) -> (i32, i32) {
    %c0_i32 = arith.constant 0 : i32
    %c0_i32_0 = arith.constant 0 : i32
    %c0_i32_1 = arith.constant 0 : i32
    return %c0_i32, %c0_i32_0 : i32, i32
  }
  func.func @transform_4(%arg0: i32) -> (i32, i32) {
    %c0_i32 = arith.constant 0 : i32
    %c0_i32_0 = arith.constant 0 : i32
    %c0_i32_1 = arith.constant 0 : i32
    return %c0_i32, %c0_i32_0 : i32, i32
  }
  func.func @transform_5(%arg0: i32) -> (i32, i32, i32) {
    %c0_i32 = arith.constant 0 : i32
    %c0_i32_0 = arith.constant 0 : i32
    %c0_i32_1 = arith.constant 0 : i32
    %c0_i32_2 = arith.constant 0 : i32
    return %c0_i32, %c0_i32_0, %c0_i32_1 : i32, i32, i32
  }
  func.func @transform_6(%arg0: i32) -> (i32, i32, i32) {
    %c0_i32 = arith.constant 0 : i32
    %c0_i32_0 = arith.constant 0 : i32
    %c0_i32_1 = arith.constant 0 : i32
    return %arg0, %c0_i32, %c0_i32_0 : i32, i32, i32
  }
}

</mosaic_0001>

<llo_original>
// kernel: tpu_custom_call.1
$region0: #{tpu_custom_call.1}
  #allocation0 [shape = 'u32[]', space=smem, size = 0x4, offset = 0x4, fixed_abs, tag = 'smem constant byte address 0x4 - core index']
  #allocation1 [shape = 'u32[72,128]{1,0:T(1,128)}', space=vmem, size = 0x9000, scoped, tag = 'internal scratch']
  %s0 = inlined_call_operand.hbm [shape: f32[16,64,128], index: 0, kind: input, shape index: {}]
  %s1 = inlined_call_operand.hbm [shape: f32[128,384], index: 1, kind: input, shape index: {}]
  %s2 = inlined_call_operand.hbm [shape: f32[1,384], index: 2, kind: input, shape index: {}]
  %s3 = inlined_call_operand.hbm [shape: f32[128,128], index: 3, kind: input, shape index: {}]
  %s4 = inlined_call_operand.vmem [shape: f32[1,128], index: 4, kind: input, shape index: {}]
  %s5 = inlined_call_operand.hbm [shape: f32[4,64,64], index: 5, kind: input, shape index: {}]
  %s6 = inlined_call_operand.hbm [shape: f32[16,64,128], index: 6, kind: output, shape index: {}]
  %s7 = sld [smem:[#allocation0]]
  $region77: #{tpu_custom_call.1} parent=0
    _
  %s9 = ssub.s32 1, %s7
  %s10 = scalar_select 0, %s9, %s7
  $region1: #{tpu_custom_call.1} parent=0
    #allocation2 [shape = 'u8[524288]{0}', space=vmem, size = 0x80000, scoped, tag = 'input window, operand 0']
    #allocation3 [shape = 's32[2]{0}', space=sflag, size = 0x8, scoped, tag = 'scoped memory for tpu_custom_call.1']
    #allocation4 [shape = 's32[2]{0}', space=sflag, size = 0x8, scoped, tag = 'scoped memory for tpu_custom_call.1']
    #allocation5 [shape = 'u8[196608]{0}', space=vmem, size = 0x30000, scoped, tag = 'input window, operand 1, single buffered']
    #allocation6 [shape = 's32[1]{0}', space=sflag, size = 0x4, scoped, tag = 'scoped memory for tpu_custom_call.1']
    #allocation7 [shape = 'u8[1536]{0}', space=vmem, size = 0x800, scoped, tag = 'input window, operand 2, single buffered']
    #allocation8 [shape = 'u8[65536]{0}', space=vmem, size = 0x10000, scoped, tag = 'input window, operand 3, single buffered']
    #allocation9 [shape = 's32[1]{0}', space=sflag, size = 0x4, scoped, tag = 'scoped memory for tpu_custom_call.1']
    #allocation10 [shape = 'u8[131072]{0}', space=vmem, size = 0x20000, scoped, tag = 'input window, operand 5, single buffered']
    #allocation11 [shape = 'u8[524288]{0}', space=vmem, size = 0x80000, scoped, tag = 'output window, operand 0']
    %11 = vsyncpa [#allocation3], 0
    %s12 = scalar_lea.sflag [#allocation3], 1
    %13 = vsyncpa %s12, 0
    %14 = vsyncpa [#allocation6], 0
    %15 = vsyncpa [#allocation9], 0
    %16 = vsyncpa [#allocation4], 0
    %s17 = scalar_lea.sflag [#allocation4], 1
    %18 = vsyncpa %s17, 0
    loop: start=0, step=1, limit=4
    $region2: #{tpu_custom_call.1} parent=1 // loop_pre_header
      _
    $region3: #{tpu_custom_call.1} parent=1 // loop_header
      %s20 = sphi 0, %s24
      %p21 = scmp.ge.s32.totalorder %s20, 4
      %s30 = sphi 0, %s32
      %s33 = sphi 0, %s30
      %s34 = sphi 0, %s33
      %s50 = sphi 0, %s34
      %s54 = sphi 0, %s54
      %s56 = sphi 0, %s54
      %s57 = sphi 0, %s56
      %s71 = sphi 0, %s57
      %s75 = sphi 0, %s75
      %s77 = sphi 0, %s75
      %s78 = sphi 0, %s77
      %s92 = sphi 0, %s78
      %s96 = sphi 0, %s96
      %s98 = sphi 0, %s96
      %s99 = sphi 0, %s98
      %s113 = sphi 0, %s99
      %s117 = sphi 0, %s117
      %s119 = sphi 0, %s117
      %s120 = sphi 0, %s119
      %s134 = sphi 0, %s120
      %s138 = sphi 0, %s138
      %s140 = sphi 0, %s138
      %s141 = sphi 0, %s140
      %s155 = sphi 0, %s141
      %s161 = sphi 0, %s163
      %s164 = sphi 0, %s161
      %s165 = sphi 0, %s164
      %s181 = sphi 0, %s165
    $region4: #{tpu_custom_call.1} parent=1 // loop_header_branch
      %23 = sbr.rel (%p21) target = $region8
    $region5: #{tpu_custom_call.1} parent=1 // loop_body
      %s25 = ssub.s32 %s20, 1
      %s26 = ssub.s32 %s20, 2
      %s27 = sadd.s32 %s20, 1
      %s28 = ssub.s32 %s20, %s27
      %p29 = scmp.eq.s32.totalorder %s28, 0
      %s31 = sadd.s32 %s30, 1
      %s32 = scalar_select %p29, %s30, %s31
      %p35 = pneg %p29
      %p36 = scmp.eq.s32.totalorder %s20, 1
      %p37 = por %p35, %p36
      %p38 = scmp.ne.s32.totalorder %s30, %s33
      %p39 = scmp.eq.s32.totalorder %s20, 0
      %p40 = por %p38, %p39
      %p41 = scmp.ne.s32.totalorder %s30, %s33
      %p42 = scmp.eq.s32.totalorder %s25, 1
      %p43 = por %p41, %p42
      %p44 = scmp.ne.s32.totalorder %s33, %s34
      %p45 = scmp.eq.s32.totalorder %s25, 0
      %p46 = por %p44, %p45
      %p47 = scmp.ne.s32.totalorder %s33, %s34
      %p48 = scmp.eq.s32.totalorder %s26, 1
      %p49 = por %p47, %p48
      %p51 = scmp.ne.s32.totalorder %s34, %s50
      %p52 = scmp.eq.s32.totalorder %s26, 0
      %p53 = por %p51, %p52
      %s55 = sadd.s32 %s54, 1
      %p58 = scmp.eq.s32.totalorder %s20, 1
      %p59 = scmp.ne.s32.totalorder %s54, %s56
      %p60 = scmp.eq.s32.totalorder %s20, 0
      %p61 = por %p59, %p60
      %p62 = scmp.ne.s32.totalorder %s54, %s56
      %p63 = scmp.eq.s32.totalorder %s25, 1
      %p64 = por %p62, %p63
      %p65 = scmp.ne.s32.totalorder %s56, %s57
      %p66 = scmp.eq.s32.totalorder %s25, 0
      %p67 = por %p65, %p66
      %p68 = scmp.ne.s32.totalorder %s56, %s57
      %p69 = scmp.eq.s32.totalorder %s26, 1
      %p70 = por %p68, %p69
      %p72 = scmp.ne.s32.totalorder %s57, %s71
      %p73 = scmp.eq.s32.totalorder %s26, 0
      %p74 = por %p72, %p73
      %s76 = sadd.s32 %s75, 1
      %p79 = scmp.eq.s32.totalorder %s20, 1
      %p80 = scmp.ne.s32.totalorder %s75, %s77
      %p81 = scmp.eq.s32.totalorder %s20, 0
      %p82 = por %p80, %p81
      %p83 = scmp.ne.s32.totalorder %s75, %s77
      %p84 = scmp.eq.s32.totalorder %s25, 1
      %p85 = por %p83, %p84
      %p86 = scmp.ne.s32.totalorder %s77, %s78
      %p87 = scmp.eq.s32.totalorder %s25, 0
      %p88 = por %p86, %p87
      %p89 = scmp.ne.s32.totalorder %s77, %s78
      %p90 = scmp.eq.s32.totalorder %s26, 1
      %p91 = por %p89, %p90
      %p93 = scmp.ne.s32.totalorder %s78, %s92
      %p94 = scmp.eq.s32.totalorder %s26, 0
      %p95 = por %p93, %p94
      %s97 = sadd.s32 %s96, 1
      %p100 = scmp.eq.s32.totalorder %s20, 1
      %p101 = scmp.ne.s32.totalorder %s96, %s98
      %p102 = scmp.eq.s32.totalorder %s20, 0
      %p103 = por %p101, %p102
      %p104 = scmp.ne.s32.totalorder %s96, %s98
      %p105 = scmp.eq.s32.totalorder %s25, 1
      %p106 = por %p104, %p105
      %p107 = scmp.ne.s32.totalorder %s98, %s99
      %p108 = scmp.eq.s32.totalorder %s25, 0
      %p109 = por %p107, %p108
      %p110 = scmp.ne.s32.totalorder %s98, %s99
      %p111 = scmp.eq.s32.totalorder %s26, 1
      %p112 = por %p110, %p111
      %p114 = scmp.ne.s32.totalorder %s99, %s113
      %p115 = scmp.eq.s32.totalorder %s26, 0
      %p116 = por %p114, %p115
      %s118 = sadd.s32 %s117, 1
      %p121 = scmp.eq.s32.totalorder %s20, 1
      %p122 = scmp.ne.s32.totalorder %s117, %s119
      %p123 = scmp.eq.s32.totalorder %s20, 0
      %p124 = por %p122, %p123
      %p125 = scmp.ne.s32.totalorder %s117, %s119
      %p126 = scmp.eq.s32.totalorder %s25, 1
      %p127 = por %p125, %p126
      %p128 = scmp.ne.s32.totalorder %s119, %s120
      %p129 = scmp.eq.s32.totalorder %s25, 0
      %p130 = por %p128, %p129
      %p131 = scmp.ne.s32.totalorder %s119, %s120
      %p132 = scmp.eq.s32.totalorder %s26, 1
      %p133 = por %p131, %p132
      %p135 = scmp.ne.s32.totalorder %s120, %s134
      %p136 = scmp.eq.s32.totalorder %s26, 0
      %p137 = por %p135, %p136
      %s139 = sadd.s32 %s138, 1
      %p142 = scmp.eq.s32.totalorder %s20, 1
      %p143 = scmp.ne.s32.totalorder %s138, %s140
      %p144 = scmp.eq.s32.totalorder %s20, 0
      %p145 = por %p143, %p144
      %p146 = scmp.ne.s32.totalorder %s138, %s140
      %p147 = scmp.eq.s32.totalorder %s25, 1
      %p148 = por %p146, %p147
      %p149 = scmp.ne.s32.totalorder %s140, %s141
      %p150 = scmp.eq.s32.totalorder %s25, 0
      %p151 = por %p149, %p150
      %p152 = scmp.ne.s32.totalorder %s140, %s141
      %p153 = scmp.eq.s32.totalorder %s26, 1
      %p154 = por %p152, %p153
      %p156 = scmp.ne.s32.totalorder %s141, %s155
      %p157 = scmp.eq.s32.totalorder %s26, 0
      %p158 = por %p156, %p157
      %s159 = ssub.s32 %s20, %s27
      %p160 = scmp.eq.s32.totalorder %s159, 0
      %s162 = sadd.s32 %s161, 1
      %s163 = scalar_select %p160, %s161, %s162
      %p166 = pneg %p160
      %p167 = scmp.eq.s32.totalorder %s20, 1
      %p168 = por %p166, %p167
      %p169 = scmp.ne.s32.totalorder %s161, %s164
      %p170 = scmp.eq.s32.totalorder %s20, 0
      %p171 = por %p169, %p170
      %p172 = scmp.ne.s32.totalorder %s161, %s164
      %p173 = scmp.eq.s32.totalorder %s25, 1
      %p174 = por %p172, %p173
      %p175 = scmp.ne.s32.totalorder %s164, %s165
      %p176 = scmp.eq.s32.totalorder %s25, 0
      %p177 = por %p175, %p176
      %p178 = scmp.ne.s32.totalorder %s164, %s165
      %p179 = scmp.eq.s32.totalorder %s26, 1
      %p180 = por %p178, %p179
      %p182 = scmp.ne.s32.totalorder %s165, %s181
      %p183 = scmp.eq.s32.totalorder %s26, 0
      %p184 = por %p182, %p183
      %p185 = scmp.le.s32.totalorder 1, %s20
      %p186 = scmp.lt.s32.totalorder %s20, 3
      %p187 = pnand %p185, %p186
      %p188 = pneg %p187
      // Predicated region
      $region9: #{tpu_custom_call.1} parent=5 // pred_check
        _
      $region10: #{tpu_custom_call.1} parent=5 // pred_check_branch
        %190 = sbr.rel (%p187) target = $region12
      $region11: #{tpu_custom_call.1} parent=5 // pred_region
        %s191 = ssub.s32 %s20, 1
        // Predicated region
        $region13: #{tpu_custom_call.1} parent=11 // pred_check
          %p192 = pneg %p67
        $region14: #{tpu_custom_call.1} parent=11 // pred_check_branch
          %194 = sbr.rel (%p192) target = $region16
        $region15: #{tpu_custom_call.1} parent=11 // pred_region
          %196 = vsyncadd [#allocation6], 0
          %s197 = sshll.u32 %s1, 4
          %s198 = int_to_ptr.hbm [resolvable:$true] %s197
          %s199 = sshll.u32 [#allocation5], 4
          %s200 = int_to_ptr.vmem [resolvable:$true] %s199
          %205 = dma.hbm_to_vmem [thread:$0]  %s198, 6144, %s200, [#allocation6], 384, 384, 24
        $region16: #{tpu_custom_call.1} parent=11 // pred_fallthru
          _
        // Predicated region
        $region17: #{tpu_custom_call.1} parent=11 // pred_check
          %p206 = pneg %p88
        $region18: #{tpu_custom_call.1} parent=11 // pred_check_branch
          %208 = sbr.rel (%p206) target = $region20
        $region19: #{tpu_custom_call.1} parent=11 // pred_region
          %210 = vsyncadd [#allocation6], 0
          %s212 = sshll.u32 %s2, 4
          %s213 = int_to_ptr.hbm [resolvable:$true] %s212
          %s214 = sshll.u32 [#allocation7], 4
          %s215 = int_to_ptr.vmem [resolvable:$true] %s214
          %217 = dma.hbm_to_vmem [thread:$0]  %s213, 48, %s215, [#allocation6]
        $region20: #{tpu_custom_call.1} parent=11 // pred_fallthru
          _
        // Predicated region
        $region21: #{tpu_custom_call.1} parent=11 // pred_check
          %p218 = pneg %p109
        $region22: #{tpu_custom_call.1} parent=11 // pred_check_branch
          %220 = sbr.rel (%p218) target = $region24
        $region23: #{tpu_custom_call.1} parent=11 // pred_region
          %222 = vsyncadd [#allocation9], 0
          %s223 = sshll.u32 %s3, 4
          %s224 = int_to_ptr.hbm [resolvable:$true] %s223
          %s225 = sshll.u32 [#allocation8], 4
          %s226 = int_to_ptr.vmem [resolvable:$true] %s225
          %231 = dma.hbm_to_vmem [thread:$0]  %s224, 2048, %s226, [#allocation9], 128, 128, 8
        $region24: #{tpu_custom_call.1} parent=11 // pred_fallthru
          _
        // Predicated region
        $region25: #{tpu_custom_call.1} parent=11 // pred_check
          %p232 = pneg %p130
        $region26: #{tpu_custom_call.1} parent=11 // pred_check_branch
          %234 = sbr.rel (%p232) target = $region28
        $region27: #{tpu_custom_call.1} parent=11 // pred_region
          _
        $region28: #{tpu_custom_call.1} parent=11 // pred_fallthru
          _
        // Predicated region
        $region29: #{tpu_custom_call.1} parent=11 // pred_check
          %p235 = pneg %p151
        $region30: #{tpu_custom_call.1} parent=11 // pred_check_branch
          %237 = sbr.rel (%p235) target = $region32
        $region31: #{tpu_custom_call.1} parent=11 // pred_region
          %239 = vsyncadd [#allocation9], 0
          %s240 = sshll.u32 %s5, 4
          %s241 = int_to_ptr.hbm [resolvable:$true] %s240
          %s242 = sshll.u32 [#allocation10], 4
          %s243 = int_to_ptr.vmem [resolvable:$true] %s242
          %248 = dma.hbm_to_vmem [thread:$0]  %s241, 4096, %s243, [#allocation9], 128, 128, 8
        $region32: #{tpu_custom_call.1} parent=11 // pred_fallthru
          _
      $region12: #{tpu_custom_call.1} parent=5 // pred_fallthru
        _
      %p249 = scmp.lt.s32.totalorder %s20, 2
      // Predicated region
      $region33: #{tpu_custom_call.1} parent=5 // pred_check
        %p250 = pneg %p249
      $region34: #{tpu_custom_call.1} parent=5 // pred_check_branch
        %252 = sbr.rel (%p250) target = $region36
      $region35: #{tpu_custom_call.1} parent=5 // pred_region
        // Predicated region
        $region37: #{tpu_custom_call.1} parent=35 // pred_check
          %p253 = pneg %p40
        $region38: #{tpu_custom_call.1} parent=35 // pred_check_branch
          %255 = sbr.rel (%p253) target = $region40
        $region39: #{tpu_custom_call.1} parent=35 // pred_region
          %s256 = sand.u32 %s30, 1
          %s257 = scalar_lea.sflag [#allocation3], %s256
          %s258 = sand.u32 %s30, 1
          %s259 = smul.addr %s258, 512
          %s260 = scalar_lea.vmem [#allocation2], %s259
          %s261 = smul.u32 8, %s20
          %263 = vsyncadd %s257, 0
          %s264 = smul.addr %s261, 8
          %s265 = smul.addr %s264, 8
          %s266 = scalar_lea.hbm %s0, %s265
          %s267 = sshll.u32 %s266, 4
          %s268 = int_to_ptr.hbm [resolvable:$true] %s267
          %s269 = sshll.u32 %s260, 4
          %s270 = int_to_ptr.vmem [resolvable:$true] %s269
          %275 = dma.hbm_to_vmem [thread:$0]  %s268, 8192, %s270, %s257, 128, 128, 8
        $region40: #{tpu_custom_call.1} parent=35 // pred_fallthru
          _
      $region36: #{tpu_custom_call.1} parent=5 // pred_fallthru
        _
      %p276 = scmp.le.s32.totalorder 1, %s20
      %p277 = scmp.lt.s32.totalorder %s20, 3
      %p278 = pnand %p276, %p277
      %p279 = pneg %p278
      // Predicated region
      $region41: #{tpu_custom_call.1} parent=5 // pred_check
        _
      $region42: #{tpu_custom_call.1} parent=5 // pred_check_branch
        %281 = sbr.rel (%p278) target = $region44
      $region43: #{tpu_custom_call.1} parent=5 // pred_region
        %s282 = ssub.s32 %s20, 1
        %s283 = sand.u32 %s33, 1
        %s284 = scalar_lea.sflag [#allocation3], %s283
        %s285 = sand.u32 %s33, 1
        %s286 = smul.addr %s285, 512
        %s287 = scalar_lea.vmem [#allocation2], %s286
        // Predicated region
        $region45: #{tpu_custom_call.1} parent=43 // pred_check
          %p288 = pneg %p46
        $region46: #{tpu_custom_call.1} parent=43 // pred_check_branch
          %290 = sbr.rel (%p288) target = $region48
        $region47: #{tpu_custom_call.1} parent=43 // pred_region
          %292 = dma.done %s284, 8192
        $region48: #{tpu_custom_call.1} parent=43 // pred_fallthru
          _
        // Predicated region
        $region49: #{tpu_custom_call.1} parent=43 // pred_check
          %p293 = pneg %p67
        $region50: #{tpu_custom_call.1} parent=43 // pred_check_branch
          %295 = sbr.rel (%p293) target = $region52
        $region51: #{tpu_custom_call.1} parent=43 // pred_region
          %297 = dma.done [#allocation6], 6144
        $region52: #{tpu_custom_call.1} parent=43 // pred_fallthru
          _
        // Predicated region
        $region53: #{tpu_custom_call.1} parent=43 // pred_check
          %p298 = pneg %p88
        $region54: #{tpu_custom_call.1} parent=43 // pred_check_branch
          %300 = sbr.rel (%p298) target = $region56
        $region55: #{tpu_custom_call.1} parent=43 // pred_region
          %302 = dma.done [#allocation6], 48
        $region56: #{tpu_custom_call.1} parent=43 // pred_fallthru
          _
        // Predicated region
        $region57: #{tpu_custom_call.1} parent=43 // pred_check
          %p303 = pneg %p109
        $region58: #{tpu_custom_call.1} parent=43 // pred_check_branch
          %305 = sbr.rel (%p303) target = $region60
        $region59: #{tpu_custom_call.1} parent=43 // pred_region
          %307 = dma.done [#allocation9], 2048
        $region60: #{tpu_custom_call.1} parent=43 // pred_fallthru
          _
        // Predicated region
        $region61: #{tpu_custom_call.1} parent=43 // pred_check
          %p308 = pneg %p151
        $region62: #{tpu_custom_call.1} parent=43 // pred_check_branch
          %310 = sbr.rel (%p308) target = $region64
        $region63: #{tpu_custom_call.1} parent=43 // pred_region
          %312 = dma.done [#allocation9], 4096
        $region64: #{tpu_custom_call.1} parent=43 // pred_fallthru
          _
        %s313 = sand.u32 %s33, 1
        %s314 = scalar_lea.sflag [#allocation3], %s313
        %s315 = sand.u32 %s33, 1
        %s316 = smul.addr %s315, 512
        %s317 = scalar_lea.vmem [#allocation2], %s316
        %p318 = pneg %p46
        %p319 = pneg %p43
        %p320 = pneg %p67
        %p321 = pneg %p64
        %p322 = pneg %p88
        %p323 = pneg %p85
        %p324 = pneg %p109
        %p325 = pneg %p106
        %p326 = pneg %p130
        %p327 = pneg %p127
        %p328 = pneg %p151
        %p329 = pneg %p148
        %p330 = pneg %p177
        %p331 = pneg %p174
        %s332 = sand.u32 %s164, 1
        %s333 = scalar_lea.sflag [#allocation4], %s332
        %s334 = sand.u32 %s164, 1
        %s335 = smul.addr %s334, 512
        %s336 = scalar_lea.vmem [#allocation11], %s335
        %s337 = smul.u32 8, %s25
        %s338 = smul.u32 8, %s25
        %v339 = vld [vmem:[%s287] sm:$0xff]
        %v340 = vld [vmem:[%s287 + $0x8] sm:$0xff]
        %v341 = vld [vmem:[%s287 + $0x10] sm:$0xff]
        %v342 = vld [vmem:[%s287 + $0x18] sm:$0xff]
        %v343 = vld [vmem:[%s287 + $0x20] sm:$0xff]
        %v344 = vld [vmem:[%s287 + $0x28] sm:$0xff]
        %v345 = vld [vmem:[%s287 + $0x30] sm:$0xff]
        %v346 = vld [vmem:[%s287 + $0x38] sm:$0xff]
        %v347 = vld [vmem:[%s287 + $0x40] sm:$0xff]
        %v348 = vld [vmem:[%s287 + $0x48] sm:$0xff]
        %v349 = vld [vmem:[%s287 + $0x50] sm:$0xff]
        %v350 = vld [vmem:[%s287 + $0x58] sm:$0xff]
        %v351 = vld [vmem:[%s287 + $0x60] sm:$0xff]
        %v352 = vld [vmem:[%s287 + $0x68] sm:$0xff]
        %v353 = vld [vmem:[%s287 + $0x70] sm:$0xff]
        %v354 = vld [vmem:[%s287 + $0x78] sm:$0xff]
        %v355 = vld [vmem:[%s287 + $0x80] sm:$0xff]
        %v356 = vld [vmem:[%s287 + $0x88] sm:$0xff]
        %v357 = vld [vmem:[%s287 + $0x90] sm:$0xff]
        %v358 = vld [vmem:[%s287 + $0x98] sm:$0xff]
        %v359 = vld [vmem:[%s287 + $0xa0] sm:$0xff]
        %v360 = vld [vmem:[%s287 + $0xa8] sm:$0xff]
        %v361 = vld [vmem:[%s287 + $0xb0] sm:$0xff]
        %v362 = vld [vmem:[%s287 + $0xb8] sm:$0xff]
        %v363 = vld [vmem:[%s287 + $0xc0] sm:$0xff]
        %v364 = vld [vmem:[%s287 + $0xc8] sm:$0xff]
        %v365 = vld [vmem:[%s287 + $0xd0] sm:$0xff]
        %v366 = vld [vmem:[%s287 + $0xd8] sm:$0xff]
        %v367 = vld [vmem:[%s287 + $0xe0] sm:$0xff]
        %v368 = vld [vmem:[%s287 + $0xe8] sm:$0xff]
        %v369 = vld [vmem:[%s287 + $0xf0] sm:$0xff]
        %v370 = vld [vmem:[%s287 + $0xf8] sm:$0xff]
        %v371 = vld [vmem:[%s287 + $0x100] sm:$0xff]
        %v372 = vld [vmem:[%s287 + $0x108] sm:$0xff]
        %v373 = vld [vmem:[%s287 + $0x110] sm:$0xff]
        %v374 = vld [vmem:[%s287 + $0x118] sm:$0xff]
        %v375 = vld [vmem:[%s287 + $0x120] sm:$0xff]
        %v376 = vld [vmem:[%s287 + $0x128] sm:$0xff]
        %v377 = vld [vmem:[%s287 + $0x130] sm:$0xff]
        %v378 = vld [vmem:[%s287 + $0x138] sm:$0xff]
        %v379 = vld [vmem:[%s287 + $0x140] sm:$0xff]
        %v380 = vld [vmem:[%s287 + $0x148] sm:$0xff]
        %v381 = vld [vmem:[%s287 + $0x150] sm:$0xff]
        %v382 = vld [vmem:[%s287 + $0x158] sm:$0xff]
        %v383 = vld [vmem:[%s287 + $0x160] sm:$0xff]
        %v384 = vld [vmem:[%s287 + $0x168] sm:$0xff]
        %v385 = vld [vmem:[%s287 + $0x170] sm:$0xff]
        %v386 = vld [vmem:[%s287 + $0x178] sm:$0xff]
        %v387 = vld [vmem:[%s287 + $0x180] sm:$0xff]
        %v388 = vld [vmem:[%s287 + $0x188] sm:$0xff]
        %v389 = vld [vmem:[%s287 + $0x190] sm:$0xff]
        %v390 = vld [vmem:[%s287 + $0x198] sm:$0xff]
        %v391 = vld [vmem:[%s287 + $0x1a0] sm:$0xff]
        %v392 = vld [vmem:[%s287 + $0x1a8] sm:$0xff]
        %v393 = vld [vmem:[%s287 + $0x1b0] sm:$0xff]
        %v394 = vld [vmem:[%s287 + $0x1b8] sm:$0xff]
        %v395 = vld [vmem:[%s287 + $0x1c0] sm:$0xff]
        %v396 = vld [vmem:[%s287 + $0x1c8] sm:$0xff]
        %v397 = vld [vmem:[%s287 + $0x1d0] sm:$0xff]
        %v398 = vld [vmem:[%s287 + $0x1d8] sm:$0xff]
        %v399 = vld [vmem:[%s287 + $0x1e0] sm:$0xff]
        %v400 = vld [vmem:[%s287 + $0x1e8] sm:$0xff]
        %v401 = vld [vmem:[%s287 + $0x1f0] sm:$0xff]
        %v402 = vld [vmem:[%s287 + $0x1f8] sm:$0xff]
        %v403 = vld [vmem:[#allocation5] sm:$0xff]
        %v404 = vld [vmem:[#allocation5 + $0x8] sm:$0xff]
        %v405 = vld [vmem:[#allocation5 + $0x10] sm:$0xff]
        %v406 = vld [vmem:[#allocation5 + $0x18] sm:$0xff]
        %v407 = vld [vmem:[#allocation5 + $0x20] sm:$0xff]
        %v408 = vld [vmem:[#allocation5 + $0x28] sm:$0xff]
        %v409 = vld [vmem:[#allocation5 + $0x30] sm:$0xff]
        %v410 = vld [vmem:[#allocation5 + $0x38] sm:$0xff]
        %v411 = vld [vmem:[#allocation5 + $0x40] sm:$0xff]
        %v412 = vld [vmem:[#allocation5 + $0x48] sm:$0xff]
        %v413 = vld [vmem:[#allocation5 + $0x50] sm:$0xff]
        %v414 = vld [vmem:[#allocation5 + $0x58] sm:$0xff]
        %v415 = vld [vmem:[#allocation5 + $0x60] sm:$0xff]
        %v416 = vld [vmem:[#allocation5 + $0x68] sm:$0xff]
        %v417 = vld [vmem:[#allocation5 + $0x70] sm:$0xff]
        %v418 = vld [vmem:[#allocation5 + $0x78] sm:$0xff]
        %v419 = vld [vmem:[#allocation5 + $0x80] sm:$0xff]
        %v420 = vld [vmem:[#allocation5 + $0x88] sm:$0xff]
        %v421 = vld [vmem:[#allocation5 + $0x90] sm:$0xff]
        %v422 = vld [vmem:[#allocation5 + $0x98] sm:$0xff]
        %v423 = vld [vmem:[#allocation5 + $0xa0] sm:$0xff]
        %v424 = vld [vmem:[#allocation5 + $0xa8] sm:$0xff]
        %v425 = vld [vmem:[#allocation5 + $0xb0] sm:$0xff]
        %v426 = vld [vmem:[#allocation5 + $0xb8] sm:$0xff]
        %v427 = vld [vmem:[#allocation5 + $0xc0] sm:$0xff]
        %v428 = vld [vmem:[#allocation5 + $0xc8] sm:$0xff]
        %v429 = vld [vmem:[#allocation5 + $0xd0] sm:$0xff]
        %v430 = vld [vmem:[#allocation5 + $0xd8] sm:$0xff]
        %v431 = vld [vmem:[#allocation5 + $0xe0] sm:$0xff]
        %v432 = vld [vmem:[#allocation5 + $0xe8] sm:$0xff]
        %v433 = vld [vmem:[#allocation5 + $0xf0] sm:$0xff]
        %v434 = vld [vmem:[#allocation5 + $0xf8] sm:$0xff]
        %v435 = vld [vmem:[#allocation5 + $0x100] sm:$0xff]
        %v436 = vld [vmem:[#allocation5 + $0x108] sm:$0xff]
        %v437 = vld [vmem:[#allocation5 + $0x110] sm:$0xff]
        %v438 = vld [vmem:[#allocation5 + $0x118] sm:$0xff]
        %v439 = vld [vmem:[#allocation5 + $0x120] sm:$0xff]
        %v440 = vld [vmem:[#allocation5 + $0x128] sm:$0xff]
        %v441 = vld [vmem:[#allocation5 + $0x130] sm:$0xff]
        %v442 = vld [vmem:[#allocation5 + $0x138] sm:$0xff]
        %v443 = vld [vmem:[#allocation5 + $0x140] sm:$0xff]
        %v444 = vld [vmem:[#allocation5 + $0x148] sm:$0xff]
        %v445 = vld [vmem:[#allocation5 + $0x150] sm:$0xff]
        %v446 = vld [vmem:[#allocation5 + $0x158] sm:$0xff]
        %v447 = vld [vmem:[#allocation5 + $0x160] sm:$0xff]
        %v448 = vld [vmem:[#allocation5 + $0x168] sm:$0xff]
        %v449 = vld [vmem:[#allocation5 + $0x170] sm:$0xff]
        %v450 = vld [vmem:[#allocation5 + $0x178] sm:$0xff]
        %v451 = vld [vmem:[#allocation7] sm:$0x7]
        %v453 = vperm.slane %v451, 0
        %v454 = vperm.slane %v451, 1
        %v455 = vperm.slane %v451, 2
        %459 = vmatpush.msra.mxu0 %v448
        %460 = vmatpush.msra.mxu0 %v445
        %461 = vmatpush.msra.mxu0 %v442
        %462 = vmatpush.msra.mxu0 %v439
        %463 = vmatpush.msra.mxu0 %v436
        %464 = vmatpush.msra.mxu0 %v433
        %465 = vmatpush.msra.mxu0 %v430
        %466 = vmatpush.msra.mxu0 %v427
        %467 = vmatpush.msra.mxu0 %v424
        %468 = vmatpush.msra.mxu0 %v421
        %469 = vmatpush.msra.mxu0 %v418
        %470 = vmatpush.msra.mxu0 %v415
        %471 = vmatpush.msra.mxu0 %v412
        %472 = vmatpush.msra.mxu0 %v409
        %473 = vmatpush.msra.mxu0 %v406
        %474 = vmatpush.msra.mxu0 %v403
        %475 = vmatmul.f32.gmra.mxu0 %v339
        %v476 = vpop.f32.mrf.mxu0
        %v477 = vadd.f32 %v453, %v476
        %478 = vmatmul.f32.gmra.mxu0 %v340
        %v479 = vpop.f32.mrf.mxu0
        %v480 = vadd.f32 %v453, %v479
        %481 = vmatmul.f32.gmra.mxu0 %v341
        %v482 = vpop.f32.mrf.mxu0
        %v483 = vadd.f32 %v453, %v482
        %484 = vmatmul.f32.gmra.mxu0 %v342
        %v485 = vpop.f32.mrf.mxu0
        %v486 = vadd.f32 %v453, %v485
        %487 = vmatmul.f32.gmra.mxu0 %v343
        %v488 = vpop.f32.mrf.mxu0
        %v489 = vadd.f32 %v453, %v488
        %490 = vmatmul.f32.gmra.mxu0 %v344
        %v491 = vpop.f32.mrf.mxu0
        %v492 = vadd.f32 %v453, %v491
        %493 = vmatmul.f32.gmra.mxu0 %v345
        %v494 = vpop.f32.mrf.mxu0
        %v495 = vadd.f32 %v453, %v494
        %496 = vmatmul.f32.gmra.mxu0 %v346
        %v497 = vpop.f32.mrf.mxu0
        %v498 = vadd.f32 %v453, %v497
        %499 = vmatmul.f32.gmra.mxu0 %v347
        %v500 = vpop.f32.mrf.mxu0
        %v501 = vadd.f32 %v453, %v500
        %502 = vmatmul.f32.gmra.mxu0 %v348
        %v503 = vpop.f32.mrf.mxu0
        %v504 = vadd.f32 %v453, %v503
        %505 = vmatmul.f32.gmra.mxu0 %v349
        %v506 = vpop.f32.mrf.mxu0
        %v507 = vadd.f32 %v453, %v506
        %508 = vmatmul.f32.gmra.mxu0 %v350
        %v509 = vpop.f32.mrf.mxu0
        %v510 = vadd.f32 %v453, %v509
        %511 = vmatmul.f32.gmra.mxu0 %v351
        %v512 = vpop.f32.mrf.mxu0
        %v513 = vadd.f32 %v453, %v512
        %514 = vmatmul.f32.gmra.mxu0 %v352
        %v515 = vpop.f32.mrf.mxu0
        %v516 = vadd.f32 %v453, %v515
        %517 = vmatmul.f32.gmra.mxu0 %v353
        %v518 = vpop.f32.mrf.mxu0
        %v519 = vadd.f32 %v453, %v518
        %520 = vmatmul.f32.gmra.mxu0 %v354
        %v521 = vpop.f32.mrf.mxu0
        %v522 = vadd.f32 %v453, %v521
        %523 = vmatmul.f32.gmra.mxu0 %v355
        %v524 = vpop.f32.mrf.mxu0
        %v525 = vadd.f32 %v453, %v524
        %526 = vmatmul.f32.gmra.mxu0 %v356
        %v527 = vpop.f32.mrf.mxu0
        %v528 = vadd.f32 %v453, %v527
        %529 = vmatmul.f32.gmra.mxu0 %v357
        %v530 = vpop.f32.mrf.mxu0
        %v531 = vadd.f32 %v453, %v530
        %532 = vmatmul.f32.gmra.mxu0 %v358
        %v533 = vpop.f32.mrf.mxu0
        %v534 = vadd.f32 %v453, %v533
        %535 = vmatmul.f32.gmra.mxu0 %v359
        %v536 = vpop.f32.mrf.mxu0
        %v537 = vadd.f32 %v453, %v536
        %538 = vmatmul.f32.gmra.mxu0 %v360
        %v539 = vpop.f32.mrf.mxu0
        %v540 = vadd.f32 %v453, %v539
        %541 = vmatmul.f32.gmra.mxu0 %v361
        %v542 = vpop.f32.mrf.mxu0
        %v543 = vadd.f32 %v453, %v542
        %544 = vmatmul.f32.gmra.mxu0 %v362
        %v545 = vpop.f32.mrf.mxu0
        %v546 = vadd.f32 %v453, %v545
        %547 = vmatmul.f32.gmra.mxu0 %v363
        %v548 = vpop.f32.mrf.mxu0
        %v549 = vadd.f32 %v453, %v548
        %550 = vmatmul.f32.gmra.mxu0 %v364
        %v551 = vpop.f32.mrf.mxu0
        %v552 = vadd.f32 %v453, %v551
        %553 = vmatmul.f32.gmra.mxu0 %v365
        %v554 = vpop.f32.mrf.mxu0
        %v555 = vadd.f32 %v453, %v554
        %556 = vmatmul.f32.gmra.mxu0 %v366
        %v557 = vpop.f32.mrf.mxu0
        %v558 = vadd.f32 %v453, %v557
        %559 = vmatmul.f32.gmra.mxu0 %v367
        %v560 = vpop.f32.mrf.mxu0
        %v561 = vadd.f32 %v453, %v560
        %562 = vmatmul.f32.gmra.mxu0 %v368
        %v563 = vpop.f32.mrf.mxu0
        %v564 = vadd.f32 %v453, %v563
        %565 = vmatmul.f32.gmra.mxu0 %v369
        %v566 = vpop.f32.mrf.mxu0
        %v567 = vadd.f32 %v453, %v566
        %568 = vmatmul.f32.gmra.mxu0 %v370
        %v569 = vpop.f32.mrf.mxu0
        %v570 = vadd.f32 %v453, %v569
        %571 = vmatmul.f32.gmra.mxu0 %v371
        %v572 = vpop.f32.mrf.mxu0
        %v573 = vadd.f32 %v453, %v572
        %574 = vmatmul.f32.gmra.mxu0 %v372
        %v575 = vpop.f32.mrf.mxu0
        %v576 = vadd.f32 %v453, %v575
        %577 = vmatmul.f32.gmra.mxu0 %v373
        %v578 = vpop.f32.mrf.mxu0
        %v579 = vadd.f32 %v453, %v578
        %580 = vmatmul.f32.gmra.mxu0 %v374
        %v581 = vpop.f32.mrf.mxu0
        %v582 = vadd.f32 %v453, %v581
        %583 = vmatmul.f32.gmra.mxu0 %v375
        %v584 = vpop.f32.mrf.mxu0
        %v585 = vadd.f32 %v453, %v584
        %586 = vmatmul.f32.gmra.mxu0 %v376
        %v587 = vpop.f32.mrf.mxu0
        %v588 = vadd.f32 %v453, %v587
        %589 = vmatmul.f32.gmra.mxu0 %v377
        %v590 = vpop.f32.mrf.mxu0
        %v591 = vadd.f32 %v453, %v590
        %592 = vmatmul.f32.gmra.mxu0 %v378
        %v593 = vpop.f32.mrf.mxu0
        %v594 = vadd.f32 %v453, %v593
        %595 = vmatmul.f32.gmra.mxu0 %v379
        %v596 = vpop.f32.mrf.mxu0
        %v597 = vadd.f32 %v453, %v596
        %598 = vmatmul.f32.gmra.mxu0 %v380
        %v599 = vpop.f32.mrf.mxu0
        %v600 = vadd.f32 %v453, %v599
        %601 = vmatmul.f32.gmra.mxu0 %v381
        %v602 = vpop.f32.mrf.mxu0
        %v603 = vadd.f32 %v453, %v602
        %604 = vmatmul.f32.gmra.mxu0 %v382
        %v605 = vpop.f32.mrf.mxu0
        %v606 = vadd.f32 %v453, %v605
        %607 = vmatmul.f32.gmra.mxu0 %v383
        %v608 = vpop.f32.mrf.mxu0
        %v609 = vadd.f32 %v453, %v608
        %610 = vmatmul.f32.gmra.mxu0 %v384
        %v611 = vpop.f32.mrf.mxu0
        %v612 = vadd.f32 %v453, %v611
        %613 = vmatmul.f32.gmra.mxu0 %v385
        %v614 = vpop.f32.mrf.mxu0
        %v615 = vadd.f32 %v453, %v614
        %616 = vmatmul.f32.gmra.mxu0 %v386
        %v617 = vpop.f32.mrf.mxu0
        %v618 = vadd.f32 %v453, %v617
        %619 = vmatmul.f32.gmra.mxu0 %v387
        %v620 = vpop.f32.mrf.mxu0
        %v621 = vadd.f32 %v453, %v620
        %622 = vmatmul.f32.gmra.mxu0 %v388
        %v623 = vpop.f32.mrf.mxu0
        %v624 = vadd.f32 %v453, %v623
        %625 = vmatmul.f32.gmra.mxu0 %v389
        %v626 = vpop.f32.mrf.mxu0
        %v627 = vadd.f32 %v453, %v626
        %628 = vmatmul.f32.gmra.mxu0 %v390
        %v629 = vpop.f32.mrf.mxu0
        %v630 = vadd.f32 %v453, %v629
        %631 = vmatmul.f32.gmra.mxu0 %v391
        %v632 = vpop.f32.mrf.mxu0
        %v633 = vadd.f32 %v453, %v632
        %634 = vmatmul.f32.gmra.mxu0 %v392
        %v635 = vpop.f32.mrf.mxu0
        %v636 = vadd.f32 %v453, %v635
        %637 = vmatmul.f32.gmra.mxu0 %v393
        %v638 = vpop.f32.mrf.mxu0
        %v639 = vadd.f32 %v453, %v638
        %640 = vmatmul.f32.gmra.mxu0 %v394
        %v641 = vpop.f32.mrf.mxu0
        %v642 = vadd.f32 %v453, %v641
        %643 = vmatmul.f32.gmra.mxu0 %v395
        %v644 = vpop.f32.mrf.mxu0
        %v645 = vadd.f32 %v453, %v644
        %646 = vmatmul.f32.gmra.mxu0 %v396
        %v647 = vpop.f32.mrf.mxu0
        %v648 = vadd.f32 %v453, %v647
        %649 = vmatmul.f32.gmra.mxu0 %v397
        %v650 = vpop.f32.mrf.mxu0
        %v651 = vadd.f32 %v453, %v650
        %652 = vmatmul.f32.gmra.mxu0 %v398
        %v653 = vpop.f32.mrf.mxu0
        %v654 = vadd.f32 %v453, %v653
        %655 = vmatmul.f32.gmra.mxu0 %v399
        %v656 = vpop.f32.mrf.mxu0
        %v657 = vadd.f32 %v453, %v656
        %658 = vmatmul.f32.gmra.mxu0 %v400
        %v659 = vpop.f32.mrf.mxu0
        %v660 = vadd.f32 %v453, %v659
        %661 = vmatmul.f32.gmra.mxu0 %v401
        %v662 = vpop.f32.mrf.mxu0
        %v663 = vadd.f32 %v453, %v662
        %664 = vmatmul.f32.gmra.mxu0 %v402
        %v665 = vpop.f32.mrf.mxu0
        %v666 = vadd.f32 %v453, %v665
        %667 = vdwg.mxu0
        %668 = vmatpush.msra.mxu0 %v449
        %669 = vmatpush.msra.mxu0 %v446
        %670 = vmatpush.msra.mxu0 %v443
        %671 = vmatpush.msra.mxu0 %v440
        %672 = vmatpush.msra.mxu0 %v437
        %673 = vmatpush.msra.mxu0 %v434
        %674 = vmatpush.msra.mxu0 %v431
        %675 = vmatpush.msra.mxu0 %v428
        %676 = vmatpush.msra.mxu0 %v425
        %677 = vmatpush.msra.mxu0 %v422
        %678 = vmatpush.msra.mxu0 %v419
        %679 = vmatpush.msra.mxu0 %v416
        %680 = vmatpush.msra.mxu0 %v413
        %681 = vmatpush.msra.mxu0 %v410
        %682 = vmatpush.msra.mxu0 %v407
        %683 = vmatpush.msra.mxu0 %v404
        %684 = vmatmul.f32.gmra.mxu0 %v339
        %v685 = vpop.f32.mrf.mxu0
        %v686 = vadd.f32 %v454, %v685
        %687 = vmatmul.f32.gmra.mxu0 %v340
        %v688 = vpop.f32.mrf.mxu0
        %v689 = vadd.f32 %v454, %v688
        %690 = vmatmul.f32.gmra.mxu0 %v341
        %v691 = vpop.f32.mrf.mxu0
        %v692 = vadd.f32 %v454, %v691
        %693 = vmatmul.f32.gmra.mxu0 %v342
        %v694 = vpop.f32.mrf.mxu0
        %v695 = vadd.f32 %v454, %v694
        %696 = vmatmul.f32.gmra.mxu0 %v343
        %v697 = vpop.f32.mrf.mxu0
        %v698 = vadd.f32 %v454, %v697
        %699 = vmatmul.f32.gmra.mxu0 %v344
        %v700 = vpop.f32.mrf.mxu0
        %v701 = vadd.f32 %v454, %v700
        %702 = vmatmul.f32.gmra.mxu0 %v345
        %v703 = vpop.f32.mrf.mxu0
        %v704 = vadd.f32 %v454, %v703
        %705 = vmatmul.f32.gmra.mxu0 %v346
        %v706 = vpop.f32.mrf.mxu0
        %v707 = vadd.f32 %v454, %v706
        %708 = vmatmul.f32.gmra.mxu0 %v347
        %v709 = vpop.f32.mrf.mxu0
        %v710 = vadd.f32 %v454, %v709
        %711 = vmatmul.f32.gmra.mxu0 %v348
        %v712 = vpop.f32.mrf.mxu0
        %v713 = vadd.f32 %v454, %v712
        %714 = vmatmul.f32.gmra.mxu0 %v349
        %v715 = vpop.f32.mrf.mxu0
        %v716 = vadd.f32 %v454, %v715
        %717 = vmatmul.f32.gmra.mxu0 %v350
        %v718 = vpop.f32.mrf.mxu0
        %v719 = vadd.f32 %v454, %v718
        %720 = vmatmul.f32.gmra.mxu0 %v351
        %v721 = vpop.f32.mrf.mxu0
        %v722 = vadd.f32 %v454, %v721
        %723 = vmatmul.f32.gmra.mxu0 %v352
        %v724 = vpop.f32.mrf.mxu0
        %v725 = vadd.f32 %v454, %v724
        %726 = vmatmul.f32.gmra.mxu0 %v353
        %v727 = vpop.f32.mrf.mxu0
        %v728 = vadd.f32 %v454, %v727
        %729 = vmatmul.f32.gmra.mxu0 %v354
        %v730 = vpop.f32.mrf.mxu0
        %v731 = vadd.f32 %v454, %v730
        %732 = vmatmul.f32.gmra.mxu0 %v355
        %v733 = vpop.f32.mrf.mxu0
        %v734 = vadd.f32 %v454, %v733
        %735 = vmatmul.f32.gmra.mxu0 %v356
        %v736 = vpop.f32.mrf.mxu0
        %v737 = vadd.f32 %v454, %v736
        %738 = vmatmul.f32.gmra.mxu0 %v357
        %v739 = vpop.f32.mrf.mxu0
        %v740 = vadd.f32 %v454, %v739
        %741 = vmatmul.f32.gmra.mxu0 %v358
        %v742 = vpop.f32.mrf.mxu0
        %v743 = vadd.f32 %v454, %v742
        %744 = vmatmul.f32.gmra.mxu0 %v359
        %v745 = vpop.f32.mrf.mxu0
        %v746 = vadd.f32 %v454, %v745
        %747 = vmatmul.f32.gmra.mxu0 %v360
        %v748 = vpop.f32.mrf.mxu0
        %v749 = vadd.f32 %v454, %v748
        %750 = vmatmul.f32.gmra.mxu0 %v361
        %v751 = vpop.f32.mrf.mxu0
        %v752 = vadd.f32 %v454, %v751
        %753 = vmatmul.f32.gmra.mxu0 %v362
        %v754 = vpop.f32.mrf.mxu0
        %v755 = vadd.f32 %v454, %v754
        %756 = vmatmul.f32.gmra.mxu0 %v363
        %v757 = vpop.f32.mrf.mxu0
        %v758 = vadd.f32 %v454, %v757
        %759 = vmatmul.f32.gmra.mxu0 %v364
        %v760 = vpop.f32.mrf.mxu0
        %v761 = vadd.f32 %v454, %v760
        %762 = vmatmul.f32.gmra.mxu0 %v365
        %v763 = vpop.f32.mrf.mxu0
        %v764 = vadd.f32 %v454, %v763
        %765 = vmatmul.f32.gmra.mxu0 %v366
        %v766 = vpop.f32.mrf.mxu0
        %v767 = vadd.f32 %v454, %v766
        %768 = vmatmul.f32.gmra.mxu0 %v367
        %v769 = vpop.f32.mrf.mxu0
        %v770 = vadd.f32 %v454, %v769
        %771 = vmatmul.f32.gmra.mxu0 %v368
        %v772 = vpop.f32.mrf.mxu0
        %v773 = vadd.f32 %v454, %v772
        %774 = vmatmul.f32.gmra.mxu0 %v369
        %v775 = vpop.f32.mrf.mxu0
        %v776 = vadd.f32 %v454, %v775
        %777 = vmatmul.f32.gmra.mxu0 %v370
        %v778 = vpop.f32.mrf.mxu0
        %v779 = vadd.f32 %v454, %v778
        %780 = vmatmul.f32.gmra.mxu0 %v371
        %v781 = vpop.f32.mrf.mxu0
        %v782 = vadd.f32 %v454, %v781
        %783 = vmatmul.f32.gmra.mxu0 %v372
        %v784 = vpop.f32.mrf.mxu0
        %v785 = vadd.f32 %v454, %v784
        %786 = vmatmul.f32.gmra.mxu0 %v373
        %v787 = vpop.f32.mrf.mxu0
        %v788 = vadd.f32 %v454, %v787
        %789 = vmatmul.f32.gmra.mxu0 %v374
        %v790 = vpop.f32.mrf.mxu0
        %v791 = vadd.f32 %v454, %v790
        %792 = vmatmul.f32.gmra.mxu0 %v375
        %v793 = vpop.f32.mrf.mxu0
        %v794 = vadd.f32 %v454, %v793
        %795 = vmatmul.f32.gmra.mxu0 %v376
        %v796 = vpop.f32.mrf.mxu0
        %v797 = vadd.f32 %v454, %v796
        %798 = vmatmul.f32.gmra.mxu0 %v377
        %v799 = vpop.f32.mrf.mxu0
        %v800 = vadd.f32 %v454, %v799
        %801 = vmatmul.f32.gmra.mxu0 %v378
        %v802 = vpop.f32.mrf.mxu0
        %v803 = vadd.f32 %v454, %v802
        %804 = vmatmul.f32.gmra.mxu0 %v379
        %v805 = vpop.f32.mrf.mxu0
        %v806 = vadd.f32 %v454, %v805
        %807 = vmatmul.f32.gmra.mxu0 %v380
        %v808 = vpop.f32.mrf.mxu0
        %v809 = vadd.f32 %v454, %v808
        %810 = vmatmul.f32.gmra.mxu0 %v381
        %v811 = vpop.f32.mrf.mxu0
        %v812 = vadd.f32 %v454, %v811
        %813 = vmatmul.f32.gmra.mxu0 %v382
        %v814 = vpop.f32.mrf.mxu0
        %v815 = vadd.f32 %v454, %v814
        %816 = vmatmul.f32.gmra.mxu0 %v383
        %v817 = vpop.f32.mrf.mxu0
        %v818 = vadd.f32 %v454, %v817
        %819 = vmatmul.f32.gmra.mxu0 %v384
        %v820 = vpop.f32.mrf.mxu0
        %v821 = vadd.f32 %v454, %v820
        %822 = vmatmul.f32.gmra.mxu0 %v385
        %v823 = vpop.f32.mrf.mxu0
        %v824 = vadd.f32 %v454, %v823
        %825 = vmatmul.f32.gmra.mxu0 %v386
        %v826 = vpop.f32.mrf.mxu0
        %v827 = vadd.f32 %v454, %v826
        %828 = vmatmul.f32.gmra.mxu0 %v387
        %v829 = vpop.f32.mrf.mxu0
        %v830 = vadd.f32 %v454, %v829
        %831 = vmatmul.f32.gmra.mxu0 %v388
        %v832 = vpop.f32.mrf.mxu0
        %v833 = vadd.f32 %v454, %v832
        %834 = vmatmul.f32.gmra.mxu0 %v389
        %v835 = vpop.f32.mrf.mxu0
        %v836 = vadd.f32 %v454, %v835
        %837 = vmatmul.f32.gmra.mxu0 %v390
        %v838 = vpop.f32.mrf.mxu0
        %v839 = vadd.f32 %v454, %v838
        %840 = vmatmul.f32.gmra.mxu0 %v391
        %v841 = vpop.f32.mrf.mxu0
        %v842 = vadd.f32 %v454, %v841
        %843 = vmatmul.f32.gmra.mxu0 %v392
        %v844 = vpop.f32.mrf.mxu0
        %v845 = vadd.f32 %v454, %v844
        %846 = vmatmul.f32.gmra.mxu0 %v393
        %v847 = vpop.f32.mrf.mxu0
        %v848 = vadd.f32 %v454, %v847
        %849 = vmatmul.f32.gmra.mxu0 %v394
        %v850 = vpop.f32.mrf.mxu0
        %v851 = vadd.f32 %v454, %v850
        %852 = vmatmul.f32.gmra.mxu0 %v395
        %v853 = vpop.f32.mrf.mxu0
        %v854 = vadd.f32 %v454, %v853
        %855 = vmatmul.f32.gmra.mxu0 %v396
        %v856 = vpop.f32.mrf.mxu0
        %v857 = vadd.f32 %v454, %v856
        %858 = vmatmul.f32.gmra.mxu0 %v397
        %v859 = vpop.f32.mrf.mxu0
        %v860 = vadd.f32 %v454, %v859
        %861 = vmatmul.f32.gmra.mxu0 %v398
        %v862 = vpop.f32.mrf.mxu0
        %v863 = vadd.f32 %v454, %v862
        %864 = vmatmul.f32.gmra.mxu0 %v399
        %v865 = vpop.f32.mrf.mxu0
        %v866 = vadd.f32 %v454, %v865
        %867 = vmatmul.f32.gmra.mxu0 %v400
        %v868 = vpop.f32.mrf.mxu0
        %v869 = vadd.f32 %v454, %v868
        %870 = vmatmul.f32.gmra.mxu0 %v401
        %v871 = vpop.f32.mrf.mxu0
        %v872 = vadd.f32 %v454, %v871
        %873 = vmatmul.f32.gmra.mxu0 %v402
        %v874 = vpop.f32.mrf.mxu0
        %v875 = vadd.f32 %v454, %v874
        %876 = vdwg.mxu0
        %877 = vmatpush.msra.mxu0 %v450
        %878 = vmatpush.msra.mxu0 %v447
        %879 = vmatpush.msra.mxu0 %v444
        %880 = vmatpush.msra.mxu0 %v441
        %881 = vmatpush.msra.mxu0 %v438
        %882 = vmatpush.msra.mxu0 %v435
        %883 = vmatpush.msra.mxu0 %v432
        %884 = vmatpush.msra.mxu0 %v429
        %885 = vmatpush.msra.mxu0 %v426
        %886 = vmatpush.msra.mxu0 %v423
        %887 = vmatpush.msra.mxu0 %v420
        %888 = vmatpush.msra.mxu0 %v417
        %889 = vmatpush.msra.mxu0 %v414
        %890 = vmatpush.msra.mxu0 %v411
        %891 = vmatpush.msra.mxu0 %v408
        %892 = vmatpush.msra.mxu0 %v405
        %893 = vmatmul.f32.gmra.mxu0 %v339
        %v894 = vpop.f32.mrf.mxu0
        %v895 = vadd.f32 %v455, %v894
        %896 = vmatmul.f32.gmra.mxu0 %v340
        %v897 = vpop.f32.mrf.mxu0
        %v898 = vadd.f32 %v455, %v897
        %899 = vmatmul.f32.gmra.mxu0 %v341
        %v900 = vpop.f32.mrf.mxu0
        %v901 = vadd.f32 %v455, %v900
        %902 = vmatmul.f32.gmra.mxu0 %v342
        %v903 = vpop.f32.mrf.mxu0
        %v904 = vadd.f32 %v455, %v903
        %905 = vmatmul.f32.gmra.mxu0 %v343
        %v906 = vpop.f32.mrf.mxu0
        %v907 = vadd.f32 %v455, %v906
        %908 = vmatmul.f32.gmra.mxu0 %v344
        %v909 = vpop.f32.mrf.mxu0
        %v910 = vadd.f32 %v455, %v909
        %911 = vmatmul.f32.gmra.mxu0 %v345
        %v912 = vpop.f32.mrf.mxu0
        %v913 = vadd.f32 %v455, %v912
        %914 = vmatmul.f32.gmra.mxu0 %v346
        %v915 = vpop.f32.mrf.mxu0
        %v916 = vadd.f32 %v455, %v915
        %917 = vmatmul.f32.gmra.mxu0 %v347
        %v918 = vpop.f32.mrf.mxu0
        %v919 = vadd.f32 %v455, %v918
        %920 = vmatmul.f32.gmra.mxu0 %v348
        %v921 = vpop.f32.mrf.mxu0
        %v922 = vadd.f32 %v455, %v921
        %923 = vmatmul.f32.gmra.mxu0 %v349
        %v924 = vpop.f32.mrf.mxu0
        %v925 = vadd.f32 %v455, %v924
        %926 = vmatmul.f32.gmra.mxu0 %v350
        %v927 = vpop.f32.mrf.mxu0
        %v928 = vadd.f32 %v455, %v927
        %929 = vmatmul.f32.gmra.mxu0 %v351
        %v930 = vpop.f32.mrf.mxu0
        %v931 = vadd.f32 %v455, %v930
        %932 = vmatmul.f32.gmra.mxu0 %v352
        %v933 = vpop.f32.mrf.mxu0
        %v934 = vadd.f32 %v455, %v933
        %935 = vmatmul.f32.gmra.mxu0 %v353
        %v936 = vpop.f32.mrf.mxu0
        %v937 = vadd.f32 %v455, %v936
        %938 = vmatmul.f32.gmra.mxu0 %v354
        %v939 = vpop.f32.mrf.mxu0
        %v940 = vadd.f32 %v455, %v939
        %941 = vmatmul.f32.gmra.mxu0 %v355
        %v942 = vpop.f32.mrf.mxu0
        %v943 = vadd.f32 %v455, %v942
        %944 = vmatmul.f32.gmra.mxu0 %v356
        %v945 = vpop.f32.mrf.mxu0
        %v946 = vadd.f32 %v455, %v945
        %947 = vmatmul.f32.gmra.mxu0 %v357
        %v948 = vpop.f32.mrf.mxu0
        %v949 = vadd.f32 %v455, %v948
        %950 = vmatmul.f32.gmra.mxu0 %v358
        %v951 = vpop.f32.mrf.mxu0
        %v952 = vadd.f32 %v455, %v951
        %953 = vmatmul.f32.gmra.mxu0 %v359
        %v954 = vpop.f32.mrf.mxu0
        %v955 = vadd.f32 %v455, %v954
        %956 = vmatmul.f32.gmra.mxu0 %v360
        %v957 = vpop.f32.mrf.mxu0
        %v958 = vadd.f32 %v455, %v957
        %959 = vmatmul.f32.gmra.mxu0 %v361
        %v960 = vpop.f32.mrf.mxu0
        %v961 = vadd.f32 %v455, %v960
        %962 = vmatmul.f32.gmra.mxu0 %v362
        %v963 = vpop.f32.mrf.mxu0
        %v964 = vadd.f32 %v455, %v963
        %965 = vmatmul.f32.gmra.mxu0 %v363
        %v966 = vpop.f32.mrf.mxu0
        %v967 = vadd.f32 %v455, %v966
        %968 = vmatmul.f32.gmra.mxu0 %v364
        %v969 = vpop.f32.mrf.mxu0
        %v970 = vadd.f32 %v455, %v969
        %971 = vmatmul.f32.gmra.mxu0 %v365
        %v972 = vpop.f32.mrf.mxu0
        %v973 = vadd.f32 %v455, %v972
        %974 = vmatmul.f32.gmra.mxu0 %v366
        %v975 = vpop.f32.mrf.mxu0
        %v976 = vadd.f32 %v455, %v975
        %977 = vmatmul.f32.gmra.mxu0 %v367
        %v978 = vpop.f32.mrf.mxu0
        %v979 = vadd.f32 %v455, %v978
        %980 = vmatmul.f32.gmra.mxu0 %v368
        %v981 = vpop.f32.mrf.mxu0
        %v982 = vadd.f32 %v455, %v981
        %983 = vmatmul.f32.gmra.mxu0 %v369
        %v984 = vpop.f32.mrf.mxu0
        %v985 = vadd.f32 %v455, %v984
        %986 = vmatmul.f32.gmra.mxu0 %v370
        %v987 = vpop.f32.mrf.mxu0
        %v988 = vadd.f32 %v455, %v987
        %989 = vmatmul.f32.gmra.mxu0 %v371
        %v990 = vpop.f32.mrf.mxu0
        %v991 = vadd.f32 %v455, %v990
        %992 = vmatmul.f32.gmra.mxu0 %v372
        %v993 = vpop.f32.mrf.mxu0
        %v994 = vadd.f32 %v455, %v993
        %995 = vmatmul.f32.gmra.mxu0 %v373
        %v996 = vpop.f32.mrf.mxu0
        %v997 = vadd.f32 %v455, %v996
        %998 = vmatmul.f32.gmra.mxu0 %v374
        %v999 = vpop.f32.mrf.mxu0
        %v1000 = vadd.f32 %v455, %v999
        %1001 = vmatmul.f32.gmra.mxu0 %v375
        %v1002 = vpop.f32.mrf.mxu0
        %v1003 = vadd.f32 %v455, %v1002
        %1004 = vmatmul.f32.gmra.mxu0 %v376
        %v1005 = vpop.f32.mrf.mxu0
        %v1006 = vadd.f32 %v455, %v1005
        %1007 = vmatmul.f32.gmra.mxu0 %v377
        %v1008 = vpop.f32.mrf.mxu0
        %v1009 = vadd.f32 %v455, %v1008
        %1010 = vmatmul.f32.gmra.mxu0 %v378
        %v1011 = vpop.f32.mrf.mxu0
        %v1012 = vadd.f32 %v455, %v1011
        %1013 = vmatmul.f32.gmra.mxu0 %v379
        %v1014 = vpop.f32.mrf.mxu0
        %v1015 = vadd.f32 %v455, %v1014
        %1016 = vmatmul.f32.gmra.mxu0 %v380
        %v1017 = vpop.f32.mrf.mxu0
        %v1018 = vadd.f32 %v455, %v1017
        %1019 = vmatmul.f32.gmra.mxu0 %v381
        %v1020 = vpop.f32.mrf.mxu0
        %v1021 = vadd.f32 %v455, %v1020
        %1022 = vmatmul.f32.gmra.mxu0 %v382
        %v1023 = vpop.f32.mrf.mxu0
        %v1024 = vadd.f32 %v455, %v1023
        %1025 = vmatmul.f32.gmra.mxu0 %v383
        %v1026 = vpop.f32.mrf.mxu0
        %v1027 = vadd.f32 %v455, %v1026
        %1028 = vmatmul.f32.gmra.mxu0 %v384
        %v1029 = vpop.f32.mrf.mxu0
        %v1030 = vadd.f32 %v455, %v1029
        %1031 = vmatmul.f32.gmra.mxu0 %v385
        %v1032 = vpop.f32.mrf.mxu0
        %v1033 = vadd.f32 %v455, %v1032
        %1034 = vmatmul.f32.gmra.mxu0 %v386
        %v1035 = vpop.f32.mrf.mxu0
        %v1036 = vadd.f32 %v455, %v1035
        %1037 = vmatmul.f32.gmra.mxu0 %v387
        %v1038 = vpop.f32.mrf.mxu0
        %v1039 = vadd.f32 %v455, %v1038
        %1040 = vmatmul.f32.gmra.mxu0 %v388
        %v1041 = vpop.f32.mrf.mxu0
        %v1042 = vadd.f32 %v455, %v1041
        %1043 = vmatmul.f32.gmra.mxu0 %v389
        %v1044 = vpop.f32.mrf.mxu0
        %v1045 = vadd.f32 %v455, %v1044
        %1046 = vmatmul.f32.gmra.mxu0 %v390
        %v1047 = vpop.f32.mrf.mxu0
        %v1048 = vadd.f32 %v455, %v1047
        %1049 = vmatmul.f32.gmra.mxu0 %v391
        %v1050 = vpop.f32.mrf.mxu0
        %v1051 = vadd.f32 %v455, %v1050
        %1052 = vmatmul.f32.gmra.mxu0 %v392
        %v1053 = vpop.f32.mrf.mxu0
        %v1054 = vadd.f32 %v455, %v1053
        %1055 = vmatmul.f32.gmra.mxu0 %v393
        %v1056 = vpop.f32.mrf.mxu0
        %v1057 = vadd.f32 %v455, %v1056
        %1058 = vmatmul.f32.gmra.mxu0 %v394
        %v1059 = vpop.f32.mrf.mxu0
        %v1060 = vadd.f32 %v455, %v1059
        %1061 = vmatmul.f32.gmra.mxu0 %v395
        %v1062 = vpop.f32.mrf.mxu0
        %v1063 = vadd.f32 %v455, %v1062
        %1064 = vmatmul.f32.gmra.mxu0 %v396
        %v1065 = vpop.f32.mrf.mxu0
        %v1066 = vadd.f32 %v455, %v1065
        %1067 = vmatmul.f32.gmra.mxu0 %v397
        %v1068 = vpop.f32.mrf.mxu0
        %v1069 = vadd.f32 %v455, %v1068
        %1070 = vmatmul.f32.gmra.mxu0 %v398
        %v1071 = vpop.f32.mrf.mxu0
        %v1072 = vadd.f32 %v455, %v1071
        %1073 = vmatmul.f32.gmra.mxu0 %v399
        %v1074 = vpop.f32.mrf.mxu0
        %v1075 = vadd.f32 %v455, %v1074
        %1076 = vmatmul.f32.gmra.mxu0 %v400
        %v1077 = vpop.f32.mrf.mxu0
        %v1078 = vadd.f32 %v455, %v1077
        %1079 = vmatmul.f32.gmra.mxu0 %v401
        %v1080 = vpop.f32.mrf.mxu0
        %v1081 = vadd.f32 %v455, %v1080
        %1082 = vmatmul.f32.gmra.mxu0 %v402
        %v1083 = vpop.f32.mrf.mxu0
        %v1084 = vadd.f32 %v455, %v1083
        %1085 = vdwg.mxu0
        %v1086 = vld [vmem:[#allocation10] sm:$0xff]
        %v1087 = vld [vmem:[#allocation10 + $0x8] sm:$0xff]
        %v1088 = vld [vmem:[#allocation10 + $0x10] sm:$0xff]
        %v1089 = vld [vmem:[#allocation10 + $0x18] sm:$0xff]
        %v1090 = vld [vmem:[#allocation10 + $0x20] sm:$0xff]
        %v1091 = vld [vmem:[#allocation10 + $0x28] sm:$0xff]
        %v1092 = vld [vmem:[#allocation10 + $0x30] sm:$0xff]
        %v1093 = vld [vmem:[#allocation10 + $0x38] sm:$0xff]
        %vm1094 = vcmask 261120
        %v1096 = vsel %vm1094, %v477, 0
        %v1099 = vsel %vm1094, %v480, 0
        %v1102 = vsel %vm1094, %v483, 0
        %v1105 = vsel %vm1094, %v486, 0
        %v1108 = vsel %vm1094, %v489, 0
        %v1111 = vsel %vm1094, %v492, 0
        %v1114 = vsel %vm1094, %v495, 0
        %v1117 = vsel %vm1094, %v498, 0
        %v1120 = vsel %vm1094, %v686, 0
        %v1123 = vsel %vm1094, %v689, 0
        %v1126 = vsel %vm1094, %v692, 0
        %v1129 = vsel %vm1094, %v695, 0
        %v1132 = vsel %vm1094, %v698, 0
        %v1135 = vsel %vm1094, %v701, 0
        %v1138 = vsel %vm1094, %v704, 0
        %v1141 = vsel %vm1094, %v707, 0
        %1143 = vmatpush.xpose.msra.mxu0 0.0
        %1144 = vmatpush.xpose.msra.mxu0 0.0
        %1145 = vmatpush.xpose.msra.mxu0 0.0
        %1146 = vmatpush.xpose.msra.mxu0 0.0
        %1147 = vmatpush.xpose.msra.mxu0 0.0
        %1148 = vmatpush.xpose.msra.mxu0 0.0
        %1149 = vmatpush.xpose.msra.mxu0 0.0
        %1150 = vmatpush.xpose.msra.mxu0 0.0
        %1151 = vmatpush.xpose.msra.mxu0 %v1141
        %1152 = vmatpush.xpose.msra.mxu0 %v1138
        %1153 = vmatpush.xpose.msra.mxu0 %v1135
        %1154 = vmatpush.xpose.msra.mxu0 %v1132
        %1155 = vmatpush.xpose.msra.mxu0 %v1129
        %1156 = vmatpush.xpose.msra.mxu0 %v1126
        %1157 = vmatpush.xpose.msra.mxu0 %v1123
        %1158 = vmatpush.xpose.msra.mxu0 %v1120
        %1159 = vmatmul.f32.gmra.mxu0 %v1096
        %v1160 = vpop.f32.mrf.mxu0
        %v1161 = vadd.f32 %v1086, %v1160
        %1162 = vmatmul.f32.gmra.mxu0 %v1099
        %v1163 = vpop.f32.mrf.mxu0
        %v1164 = vadd.f32 %v1087, %v1163
        %1165 = vmatmul.f32.gmra.mxu0 %v1102
        %v1166 = vpop.f32.mrf.mxu0
        %v1167 = vadd.f32 %v1088, %v1166
        %1168 = vmatmul.f32.gmra.mxu0 %v1105
        %v1169 = vpop.f32.mrf.mxu0
        %v1170 = vadd.f32 %v1089, %v1169
        %1171 = vmatmul.f32.gmra.mxu0 %v1108
        %v1172 = vpop.f32.mrf.mxu0
        %v1173 = vadd.f32 %v1090, %v1172
        %1174 = vmatmul.f32.gmra.mxu0 %v1111
        %v1175 = vpop.f32.mrf.mxu0
        %v1176 = vadd.f32 %v1091, %v1175
        %1177 = vmatmul.f32.gmra.mxu0 %v1114
        %v1178 = vpop.f32.mrf.mxu0
        %v1179 = vadd.f32 %v1092, %v1178
        %1180 = vmatmul.f32.gmra.mxu0 %v1117
        %v1181 = vpop.f32.mrf.mxu0
        %v1182 = vadd.f32 %v1093, %v1181
        %1183 = vdwg.mxu0
        %v1185 = vsel %vm1094, %v501, 0
        %v1188 = vsel %vm1094, %v504, 0
        %v1191 = vsel %vm1094, %v507, 0
        %v1194 = vsel %vm1094, %v510, 0
        %v1197 = vsel %vm1094, %v513, 0
        %v1200 = vsel %vm1094, %v516, 0
        %v1203 = vsel %vm1094, %v519, 0
        %v1206 = vsel %vm1094, %v522, 0
        %v1209 = vsel %vm1094, %v710, 0
        %v1212 = vsel %vm1094, %v713, 0
        %v1215 = vsel %vm1094, %v716, 0
        %v1218 = vsel %vm1094, %v719, 0
        %v1221 = vsel %vm1094, %v722, 0
        %v1224 = vsel %vm1094, %v725, 0
        %v1227 = vsel %vm1094, %v728, 0
        %v1230 = vsel %vm1094, %v731, 0
        %1232 = vmatpush.xpose.msra.mxu0 0.0
        %1233 = vmatpush.xpose.msra.mxu0 0.0
        %1234 = vmatpush.xpose.msra.mxu0 0.0
        %1235 = vmatpush.xpose.msra.mxu0 0.0
        %1236 = vmatpush.xpose.msra.mxu0 0.0
        %1237 = vmatpush.xpose.msra.mxu0 0.0
        %1238 = vmatpush.xpose.msra.mxu0 0.0
        %1239 = vmatpush.xpose.msra.mxu0 0.0
        %1240 = vmatpush.xpose.msra.mxu0 %v1230
        %1241 = vmatpush.xpose.msra.mxu0 %v1227
        %1242 = vmatpush.xpose.msra.mxu0 %v1224
        %1243 = vmatpush.xpose.msra.mxu0 %v1221
        %1244 = vmatpush.xpose.msra.mxu0 %v1218
        %1245 = vmatpush.xpose.msra.mxu0 %v1215
        %1246 = vmatpush.xpose.msra.mxu0 %v1212
        %1247 = vmatpush.xpose.msra.mxu0 %v1209
        %1248 = vmatmul.f32.gmra.mxu0 %v1185
        %v1249 = vpop.f32.mrf.mxu0
        %v1250 = vadd.f32 %v1086, %v1249
        %1251 = vmatmul.f32.gmra.mxu0 %v1188
        %v1252 = vpop.f32.mrf.mxu0
        %v1253 = vadd.f32 %v1087, %v1252
        %1254 = vmatmul.f32.gmra.mxu0 %v1191
        %v1255 = vpop.f32.mrf.mxu0
        %v1256 = vadd.f32 %v1088, %v1255
        %1257 = vmatmul.f32.gmra.mxu0 %v1194
        %v1258 = vpop.f32.mrf.mxu0
        %v1259 = vadd.f32 %v1089, %v1258
        %1260 = vmatmul.f32.gmra.mxu0 %v1197
        %v1261 = vpop.f32.mrf.mxu0
        %v1262 = vadd.f32 %v1090, %v1261
        %1263 = vmatmul.f32.gmra.mxu0 %v1200
        %v1264 = vpop.f32.mrf.mxu0
        %v1265 = vadd.f32 %v1091, %v1264
        %1266 = vmatmul.f32.gmra.mxu0 %v1203
        %v1267 = vpop.f32.mrf.mxu0
        %v1268 = vadd.f32 %v1092, %v1267
        %1269 = vmatmul.f32.gmra.mxu0 %v1206
        %v1270 = vpop.f32.mrf.mxu0
        %v1271 = vadd.f32 %v1093, %v1270
        %1272 = vdwg.mxu0
        %v1274 = vsel %vm1094, %v525, 0
        %v1277 = vsel %vm1094, %v528, 0
        %v1280 = vsel %vm1094, %v531, 0
        %v1283 = vsel %vm1094, %v534, 0
        %v1286 = vsel %vm1094, %v537, 0
        %v1289 = vsel %vm1094, %v540, 0
        %v1292 = vsel %vm1094, %v543, 0
        %v1295 = vsel %vm1094, %v546, 0
        %v1298 = vsel %vm1094, %v734, 0
        %v1301 = vsel %vm1094, %v737, 0
        %v1304 = vsel %vm1094, %v740, 0
        %v1307 = vsel %vm1094, %v743, 0
        %v1310 = vsel %vm1094, %v746, 0
        %v1313 = vsel %vm1094, %v749, 0
        %v1316 = vsel %vm1094, %v752, 0
        %v1319 = vsel %vm1094, %v755, 0
        %1321 = vmatpush.xpose.msra.mxu0 0.0
        %1322 = vmatpush.xpose.msra.mxu0 0.0
        %1323 = vmatpush.xpose.msra.mxu0 0.0
        %1324 = vmatpush.xpose.msra.mxu0 0.0
        %1325 = vmatpush.xpose.msra.mxu0 0.0
        %1326 = vmatpush.xpose.msra.mxu0 0.0
        %1327 = vmatpush.xpose.msra.mxu0 0.0
        %1328 = vmatpush.xpose.msra.mxu0 0.0
        %1329 = vmatpush.xpose.msra.mxu0 %v1319
        %1330 = vmatpush.xpose.msra.mxu0 %v1316
        %1331 = vmatpush.xpose.msra.mxu0 %v1313
        %1332 = vmatpush.xpose.msra.mxu0 %v1310
        %1333 = vmatpush.xpose.msra.mxu0 %v1307
        %1334 = vmatpush.xpose.msra.mxu0 %v1304
        %1335 = vmatpush.xpose.msra.mxu0 %v1301
        %1336 = vmatpush.xpose.msra.mxu0 %v1298
        %1337 = vmatmul.f32.gmra.mxu0 %v1274
        %v1338 = vpop.f32.mrf.mxu0
        %v1339 = vadd.f32 %v1086, %v1338
        %1340 = vmatmul.f32.gmra.mxu0 %v1277
        %v1341 = vpop.f32.mrf.mxu0
        %v1342 = vadd.f32 %v1087, %v1341
        %1343 = vmatmul.f32.gmra.mxu0 %v1280
        %v1344 = vpop.f32.mrf.mxu0
        %v1345 = vadd.f32 %v1088, %v1344
        %1346 = vmatmul.f32.gmra.mxu0 %v1283
        %v1347 = vpop.f32.mrf.mxu0
        %v1348 = vadd.f32 %v1089, %v1347
        %1349 = vmatmul.f32.gmra.mxu0 %v1286
        %v1350 = vpop.f32.mrf.mxu0
        %v1351 = vadd.f32 %v1090, %v1350
        %1352 = vmatmul.f32.gmra.mxu0 %v1289
        %v1353 = vpop.f32.mrf.mxu0
        %v1354 = vadd.f32 %v1091, %v1353
        %1355 = vmatmul.f32.gmra.mxu0 %v1292
        %v1356 = vpop.f32.mrf.mxu0
        %v1357 = vadd.f32 %v1092, %v1356
        %1358 = vmatmul.f32.gmra.mxu0 %v1295
        %v1359 = vpop.f32.mrf.mxu0
        %v1360 = vadd.f32 %v1093, %v1359
        %1361 = vdwg.mxu0
        %v1363 = vsel %vm1094, %v549, 0
        %v1366 = vsel %vm1094, %v552, 0
        %v1369 = vsel %vm1094, %v555, 0
        %v1372 = vsel %vm1094, %v558, 0
        %v1375 = vsel %vm1094, %v561, 0
        %v1378 = vsel %vm1094, %v564, 0
        %v1381 = vsel %vm1094, %v567, 0
        %v1384 = vsel %vm1094, %v570, 0
        %v1387 = vsel %vm1094, %v758, 0
        %v1390 = vsel %vm1094, %v761, 0
        %v1393 = vsel %vm1094, %v764, 0
        %v1396 = vsel %vm1094, %v767, 0
        %v1399 = vsel %vm1094, %v770, 0
        %v1402 = vsel %vm1094, %v773, 0
        %v1405 = vsel %vm1094, %v776, 0
        %v1408 = vsel %vm1094, %v779, 0
        %1410 = vmatpush.xpose.msra.mxu0 0.0
        %1411 = vmatpush.xpose.msra.mxu0 0.0
        %1412 = vmatpush.xpose.msra.mxu0 0.0
        %1413 = vmatpush.xpose.msra.mxu0 0.0
        %1414 = vmatpush.xpose.msra.mxu0 0.0
        %1415 = vmatpush.xpose.msra.mxu0 0.0
        %1416 = vmatpush.xpose.msra.mxu0 0.0
        %1417 = vmatpush.xpose.msra.mxu0 0.0
        %1418 = vmatpush.xpose.msra.mxu0 %v1408
        %1419 = vmatpush.xpose.msra.mxu0 %v1405
        %1420 = vmatpush.xpose.msra.mxu0 %v1402
        %1421 = vmatpush.xpose.msra.mxu0 %v1399
        %1422 = vmatpush.xpose.msra.mxu0 %v1396
        %1423 = vmatpush.xpose.msra.mxu0 %v1393
        %1424 = vmatpush.xpose.msra.mxu0 %v1390
        %1425 = vmatpush.xpose.msra.mxu0 %v1387
        %1426 = vmatmul.f32.gmra.mxu0 %v1363
        %v1427 = vpop.f32.mrf.mxu0
        %v1428 = vadd.f32 %v1086, %v1427
        %1429 = vmatmul.f32.gmra.mxu0 %v1366
        %v1430 = vpop.f32.mrf.mxu0
        %v1431 = vadd.f32 %v1087, %v1430
        %1432 = vmatmul.f32.gmra.mxu0 %v1369
        %v1433 = vpop.f32.mrf.mxu0
        %v1434 = vadd.f32 %v1088, %v1433
        %1435 = vmatmul.f32.gmra.mxu0 %v1372
        %v1436 = vpop.f32.mrf.mxu0
        %v1437 = vadd.f32 %v1089, %v1436
        %1438 = vmatmul.f32.gmra.mxu0 %v1375
        %v1439 = vpop.f32.mrf.mxu0
        %v1440 = vadd.f32 %v1090, %v1439
        %1441 = vmatmul.f32.gmra.mxu0 %v1378
        %v1442 = vpop.f32.mrf.mxu0
        %v1443 = vadd.f32 %v1091, %v1442
        %1444 = vmatmul.f32.gmra.mxu0 %v1381
        %v1445 = vpop.f32.mrf.mxu0
        %v1446 = vadd.f32 %v1092, %v1445
        %1447 = vmatmul.f32.gmra.mxu0 %v1384
        %v1448 = vpop.f32.mrf.mxu0
        %v1449 = vadd.f32 %v1093, %v1448
        %1450 = vdwg.mxu0
        %v1452 = vsel %vm1094, %v573, 0
        %v1455 = vsel %vm1094, %v576, 0
        %v1458 = vsel %vm1094, %v579, 0
        %v1461 = vsel %vm1094, %v582, 0
        %v1464 = vsel %vm1094, %v585, 0
        %v1467 = vsel %vm1094, %v588, 0
        %v1470 = vsel %vm1094, %v591, 0
        %v1473 = vsel %vm1094, %v594, 0
        %v1476 = vsel %vm1094, %v782, 0
        %v1479 = vsel %vm1094, %v785, 0
        %v1482 = vsel %vm1094, %v788, 0
        %v1485 = vsel %vm1094, %v791, 0
        %v1488 = vsel %vm1094, %v794, 0
        %v1491 = vsel %vm1094, %v797, 0
        %v1494 = vsel %vm1094, %v800, 0
        %v1497 = vsel %vm1094, %v803, 0
        %1499 = vmatpush.xpose.msra.mxu0 0.0
        %1500 = vmatpush.xpose.msra.mxu0 0.0
        %1501 = vmatpush.xpose.msra.mxu0 0.0
        %1502 = vmatpush.xpose.msra.mxu0 0.0
        %1503 = vmatpush.xpose.msra.mxu0 0.0
        %1504 = vmatpush.xpose.msra.mxu0 0.0
        %1505 = vmatpush.xpose.msra.mxu0 0.0
        %1506 = vmatpush.xpose.msra.mxu0 0.0
        %1507 = vmatpush.xpose.msra.mxu0 %v1497
        %1508 = vmatpush.xpose.msra.mxu0 %v1494
        %1509 = vmatpush.xpose.msra.mxu0 %v1491
        %1510 = vmatpush.xpose.msra.mxu0 %v1488
        %1511 = vmatpush.xpose.msra.mxu0 %v1485
        %1512 = vmatpush.xpose.msra.mxu0 %v1482
        %1513 = vmatpush.xpose.msra.mxu0 %v1479
        %1514 = vmatpush.xpose.msra.mxu0 %v1476
        %1515 = vmatmul.f32.gmra.mxu0 %v1452
        %v1516 = vpop.f32.mrf.mxu0
        %v1517 = vadd.f32 %v1086, %v1516
        %1518 = vmatmul.f32.gmra.mxu0 %v1455
        %v1519 = vpop.f32.mrf.mxu0
        %v1520 = vadd.f32 %v1087, %v1519
        %1521 = vmatmul.f32.gmra.mxu0 %v1458
        %v1522 = vpop.f32.mrf.mxu0
        %v1523 = vadd.f32 %v1088, %v1522
        %1524 = vmatmul.f32.gmra.mxu0 %v1461
        %v1525 = vpop.f32.mrf.mxu0
        %v1526 = vadd.f32 %v1089, %v1525
        %1527 = vmatmul.f32.gmra.mxu0 %v1464
        %v1528 = vpop.f32.mrf.mxu0
        %v1529 = vadd.f32 %v1090, %v1528
        %1530 = vmatmul.f32.gmra.mxu0 %v1467
        %v1531 = vpop.f32.mrf.mxu0
        %v1532 = vadd.f32 %v1091, %v1531
        %1533 = vmatmul.f32.gmra.mxu0 %v1470
        %v1534 = vpop.f32.mrf.mxu0
        %v1535 = vadd.f32 %v1092, %v1534
        %1536 = vmatmul.f32.gmra.mxu0 %v1473
        %v1537 = vpop.f32.mrf.mxu0
        %v1538 = vadd.f32 %v1093, %v1537
        %1539 = vdwg.mxu0
        %v1541 = vsel %vm1094, %v597, 0
        %v1544 = vsel %vm1094, %v600, 0
        %v1547 = vsel %vm1094, %v603, 0
        %v1550 = vsel %vm1094, %v606, 0
        %v1553 = vsel %vm1094, %v609, 0
        %v1556 = vsel %vm1094, %v612, 0
        %v1559 = vsel %vm1094, %v615, 0
        %v1562 = vsel %vm1094, %v618, 0
        %v1565 = vsel %vm1094, %v806, 0
        %v1568 = vsel %vm1094, %v809, 0
        %v1571 = vsel %vm1094, %v812, 0
        %v1574 = vsel %vm1094, %v815, 0
        %v1577 = vsel %vm1094, %v818, 0
        %v1580 = vsel %vm1094, %v821, 0
        %v1583 = vsel %vm1094, %v824, 0
        %v1586 = vsel %vm1094, %v827, 0
        %1588 = vmatpush.xpose.msra.mxu0 0.0
        %1589 = vmatpush.xpose.msra.mxu0 0.0
        %1590 = vmatpush.xpose.msra.mxu0 0.0
        %1591 = vmatpush.xpose.msra.mxu0 0.0
        %1592 = vmatpush.xpose.msra.mxu0 0.0
        %1593 = vmatpush.xpose.msra.mxu0 0.0
        %1594 = vmatpush.xpose.msra.mxu0 0.0
        %1595 = vmatpush.xpose.msra.mxu0 0.0
        %1596 = vmatpush.xpose.msra.mxu0 %v1586
        %1597 = vmatpush.xpose.msra.mxu0 %v1583
        %1598 = vmatpush.xpose.msra.mxu0 %v1580
        %1599 = vmatpush.xpose.msra.mxu0 %v1577
        %1600 = vmatpush.xpose.msra.mxu0 %v1574
        %1601 = vmatpush.xpose.msra.mxu0 %v1571
        %1602 = vmatpush.xpose.msra.mxu0 %v1568
        %1603 = vmatpush.xpose.msra.mxu0 %v1565
        %1604 = vmatmul.f32.gmra.mxu0 %v1541
        %v1605 = vpop.f32.mrf.mxu0
        %v1606 = vadd.f32 %v1086, %v1605
        %1607 = vmatmul.f32.gmra.mxu0 %v1544
        %v1608 = vpop.f32.mrf.mxu0
        %v1609 = vadd.f32 %v1087, %v1608
        %1610 = vmatmul.f32.gmra.mxu0 %v1547
        %v1611 = vpop.f32.mrf.mxu0
        %v1612 = vadd.f32 %v1088, %v1611
        %1613 = vmatmul.f32.gmra.mxu0 %v1550
        %v1614 = vpop.f32.mrf.mxu0
        %v1615 = vadd.f32 %v1089, %v1614
        %1616 = vmatmul.f32.gmra.mxu0 %v1553
        %v1617 = vpop.f32.mrf.mxu0
        %v1618 = vadd.f32 %v1090, %v1617
        %1619 = vmatmul.f32.gmra.mxu0 %v1556
        %v1620 = vpop.f32.mrf.mxu0
        %v1621 = vadd.f32 %v1091, %v1620
        %1622 = vmatmul.f32.gmra.mxu0 %v1559
        %v1623 = vpop.f32.mrf.mxu0
        %v1624 = vadd.f32 %v1092, %v1623
        %1625 = vmatmul.f32.gmra.mxu0 %v1562
        %v1626 = vpop.f32.mrf.mxu0
        %v1627 = vadd.f32 %v1093, %v1626
        %1628 = vdwg.mxu0
        %v1630 = vsel %vm1094, %v621, 0
        %v1633 = vsel %vm1094, %v624, 0
        %v1636 = vsel %vm1094, %v627, 0
        %v1639 = vsel %vm1094, %v630, 0
        %v1642 = vsel %vm1094, %v633, 0
        %v1645 = vsel %vm1094, %v636, 0
        %v1648 = vsel %vm1094, %v639, 0
        %v1651 = vsel %vm1094, %v642, 0
        %v1654 = vsel %vm1094, %v830, 0
        %v1657 = vsel %vm1094, %v833, 0
        %v1660 = vsel %vm1094, %v836, 0
        %v1663 = vsel %vm1094, %v839, 0
        %v1666 = vsel %vm1094, %v842, 0
        %v1669 = vsel %vm1094, %v845, 0
        %v1672 = vsel %vm1094, %v848, 0
        %v1675 = vsel %vm1094, %v851, 0
        %1677 = vmatpush.xpose.msra.mxu0 0.0
        %1678 = vmatpush.xpose.msra.mxu0 0.0
        %1679 = vmatpush.xpose.msra.mxu0 0.0
        %1680 = vmatpush.xpose.msra.mxu0 0.0
        %1681 = vmatpush.xpose.msra.mxu0 0.0
        %1682 = vmatpush.xpose.msra.mxu0 0.0
        %1683 = vmatpush.xpose.msra.mxu0 0.0
        %1684 = vmatpush.xpose.msra.mxu0 0.0
        %1685 = vmatpush.xpose.msra.mxu0 %v1675
        %1686 = vmatpush.xpose.msra.mxu0 %v1672
        %1687 = vmatpush.xpose.msra.mxu0 %v1669
        %1688 = vmatpush.xpose.msra.mxu0 %v1666
        %1689 = vmatpush.xpose.msra.mxu0 %v1663
        %1690 = vmatpush.xpose.msra.mxu0 %v1660
        %1691 = vmatpush.xpose.msra.mxu0 %v1657
        %1692 = vmatpush.xpose.msra.mxu0 %v1654
        %1693 = vmatmul.f32.gmra.mxu0 %v1630
        %v1694 = vpop.f32.mrf.mxu0
        %v1695 = vadd.f32 %v1086, %v1694
        %1696 = vmatmul.f32.gmra.mxu0 %v1633
        %v1697 = vpop.f32.mrf.mxu0
        %v1698 = vadd.f32 %v1087, %v1697
        %1699 = vmatmul.f32.gmra.mxu0 %v1636
        %v1700 = vpop.f32.mrf.mxu0
        %v1701 = vadd.f32 %v1088, %v1700
        %1702 = vmatmul.f32.gmra.mxu0 %v1639
        %v1703 = vpop.f32.mrf.mxu0
        %v1704 = vadd.f32 %v1089, %v1703
        %1705 = vmatmul.f32.gmra.mxu0 %v1642
        %v1706 = vpop.f32.mrf.mxu0
        %v1707 = vadd.f32 %v1090, %v1706
        %1708 = vmatmul.f32.gmra.mxu0 %v1645
        %v1709 = vpop.f32.mrf.mxu0
        %v1710 = vadd.f32 %v1091, %v1709
        %1711 = vmatmul.f32.gmra.mxu0 %v1648
        %v1712 = vpop.f32.mrf.mxu0
        %v1713 = vadd.f32 %v1092, %v1712
        %1714 = vmatmul.f32.gmra.mxu0 %v1651
        %v1715 = vpop.f32.mrf.mxu0
        %v1716 = vadd.f32 %v1093, %v1715
        %1717 = vdwg.mxu0
        %v1719 = vsel %vm1094, %v645, 0
        %v1722 = vsel %vm1094, %v648, 0
        %v1725 = vsel %vm1094, %v651, 0
        %v1728 = vsel %vm1094, %v654, 0
        %v1731 = vsel %vm1094, %v657, 0
        %v1734 = vsel %vm1094, %v660, 0
        %v1737 = vsel %vm1094, %v663, 0
        %v1740 = vsel %vm1094, %v666, 0
        %v1743 = vsel %vm1094, %v854, 0
        %v1746 = vsel %vm1094, %v857, 0
        %v1749 = vsel %vm1094, %v860, 0
        %v1752 = vsel %vm1094, %v863, 0
        %v1755 = vsel %vm1094, %v866, 0
        %v1758 = vsel %vm1094, %v869, 0
        %v1761 = vsel %vm1094, %v872, 0
        %v1764 = vsel %vm1094, %v875, 0
        %1766 = vmatpush.xpose.msra.mxu0 0.0
        %1767 = vmatpush.xpose.msra.mxu0 0.0
        %1768 = vmatpush.xpose.msra.mxu0 0.0
        %1769 = vmatpush.xpose.msra.mxu0 0.0
        %1770 = vmatpush.xpose.msra.mxu0 0.0
        %1771 = vmatpush.xpose.msra.mxu0 0.0
        %1772 = vmatpush.xpose.msra.mxu0 0.0
        %1773 = vmatpush.xpose.msra.mxu0 0.0
        %1774 = vmatpush.xpose.msra.mxu0 %v1764
        %1775 = vmatpush.xpose.msra.mxu0 %v1761
        %1776 = vmatpush.xpose.msra.mxu0 %v1758
        %1777 = vmatpush.xpose.msra.mxu0 %v1755
        %1778 = vmatpush.xpose.msra.mxu0 %v1752
        %1779 = vmatpush.xpose.msra.mxu0 %v1749
        %1780 = vmatpush.xpose.msra.mxu0 %v1746
        %1781 = vmatpush.xpose.msra.mxu0 %v1743
        %1782 = vmatmul.f32.gmra.mxu0 %v1719
        %v1783 = vpop.f32.mrf.mxu0
        %v1784 = vadd.f32 %v1086, %v1783
        %1785 = vmatmul.f32.gmra.mxu0 %v1722
        %v1786 = vpop.f32.mrf.mxu0
        %v1787 = vadd.f32 %v1087, %v1786
        %1788 = vmatmul.f32.gmra.mxu0 %v1725
        %v1789 = vpop.f32.mrf.mxu0
        %v1790 = vadd.f32 %v1088, %v1789
        %1791 = vmatmul.f32.gmra.mxu0 %v1728
        %v1792 = vpop.f32.mrf.mxu0
        %v1793 = vadd.f32 %v1089, %v1792
        %1794 = vmatmul.f32.gmra.mxu0 %v1731
        %v1795 = vpop.f32.mrf.mxu0
        %v1796 = vadd.f32 %v1090, %v1795
        %1797 = vmatmul.f32.gmra.mxu0 %v1734
        %v1798 = vpop.f32.mrf.mxu0
        %v1799 = vadd.f32 %v1091, %v1798
        %1800 = vmatmul.f32.gmra.mxu0 %v1737
        %v1801 = vpop.f32.mrf.mxu0
        %v1802 = vadd.f32 %v1092, %v1801
        %1803 = vmatmul.f32.gmra.mxu0 %v1740
        %v1804 = vpop.f32.mrf.mxu0
        %v1805 = vadd.f32 %v1093, %v1804
        %1806 = vdwg.mxu0
        %vm1807 = vcmask 523264
        %v1808 = vsel %vm1807, %v1161, -inf
        %1809 = vmax.xlane.f32.xlu0 %v1808
        %v1810 = vpop.xlane.xlu0 %1809
        %v1811 = vsel %vm1807, %v1164, -inf
        %1812 = vmax.xlane.f32.xlu0 %v1811
        %v1813 = vpop.xlane.xlu0 %1812
        %v1814 = vsel %vm1807, %v1167, -inf
        %1815 = vmax.xlane.f32.xlu0 %v1814
        %v1816 = vpop.xlane.xlu0 %1815
        %v1817 = vsel %vm1807, %v1170, -inf
        %1818 = vmax.xlane.f32.xlu0 %v1817
        %v1819 = vpop.xlane.xlu0 %1818
        %v1820 = vsel %vm1807, %v1173, -inf
        %1821 = vmax.xlane.f32.xlu0 %v1820
        %v1822 = vpop.xlane.xlu0 %1821
        %v1823 = vsel %vm1807, %v1176, -inf
        %1824 = vmax.xlane.f32.xlu0 %v1823
        %v1825 = vpop.xlane.xlu0 %1824
        %v1826 = vsel %vm1807, %v1179, -inf
        %1827 = vmax.xlane.f32.xlu0 %v1826
        %v1828 = vpop.xlane.xlu0 %1827
        %v1829 = vsel %vm1807, %v1182, -inf
        %1830 = vmax.xlane.f32.xlu0 %v1829
        %v1831 = vpop.xlane.xlu0 %1830
        %v1832 = vsel %vm1807, %v1250, -inf
        %1833 = vmax.xlane.f32.xlu0 %v1832
        %v1834 = vpop.xlane.xlu0 %1833
        %v1835 = vsel %vm1807, %v1253, -inf
        %1836 = vmax.xlane.f32.xlu0 %v1835
        %v1837 = vpop.xlane.xlu0 %1836
        %v1838 = vsel %vm1807, %v1256, -inf
        %1839 = vmax.xlane.f32.xlu0 %v1838
        %v1840 = vpop.xlane.xlu0 %1839
        %v1841 = vsel %vm1807, %v1259, -inf
        %1842 = vmax.xlane.f32.xlu0 %v1841
        %v1843 = vpop.xlane.xlu0 %1842
        %v1844 = vsel %vm1807, %v1262, -inf
        %1845 = vmax.xlane.f32.xlu0 %v1844
        %v1846 = vpop.xlane.xlu0 %1845
        %v1847 = vsel %vm1807, %v1265, -inf
        %1848 = vmax.xlane.f32.xlu0 %v1847
        %v1849 = vpop.xlane.xlu0 %1848
        %v1850 = vsel %vm1807, %v1268, -inf
        %1851 = vmax.xlane.f32.xlu0 %v1850
        %v1852 = vpop.xlane.xlu0 %1851
        %v1853 = vsel %vm1807, %v1271, -inf
        %1854 = vmax.xlane.f32.xlu0 %v1853
        %v1855 = vpop.xlane.xlu0 %1854
        %v1856 = vsel %vm1807, %v1339, -inf
        %1857 = vmax.xlane.f32.xlu0 %v1856
        %v1858 = vpop.xlane.xlu0 %1857
        %v1859 = vsel %vm1807, %v1342, -inf
        %1860 = vmax.xlane.f32.xlu0 %v1859
        %v1861 = vpop.xlane.xlu0 %1860
        %v1862 = vsel %vm1807, %v1345, -inf
        %1863 = vmax.xlane.f32.xlu0 %v1862
        %v1864 = vpop.xlane.xlu0 %1863
        %v1865 = vsel %vm1807, %v1348, -inf
        %1866 = vmax.xlane.f32.xlu0 %v1865
        %v1867 = vpop.xlane.xlu0 %1866
        %v1868 = vsel %vm1807, %v1351, -inf
        %1869 = vmax.xlane.f32.xlu0 %v1868
        %v1870 = vpop.xlane.xlu0 %1869
        %v1871 = vsel %vm1807, %v1354, -inf
        %1872 = vmax.xlane.f32.xlu0 %v1871
        %v1873 = vpop.xlane.xlu0 %1872
        %v1874 = vsel %vm1807, %v1357, -inf
        %1875 = vmax.xlane.f32.xlu0 %v1874
        %v1876 = vpop.xlane.xlu0 %1875
        %v1877 = vsel %vm1807, %v1360, -inf
        %1878 = vmax.xlane.f32.xlu0 %v1877
        %v1879 = vpop.xlane.xlu0 %1878
        %v1880 = vsel %vm1807, %v1428, -inf
        %1881 = vmax.xlane.f32.xlu0 %v1880
        %v1882 = vpop.xlane.xlu0 %1881
        %v1883 = vsel %vm1807, %v1431, -inf
        %1884 = vmax.xlane.f32.xlu0 %v1883
        %v1885 = vpop.xlane.xlu0 %1884
        %v1886 = vsel %vm1807, %v1434, -inf
        %1887 = vmax.xlane.f32.xlu0 %v1886
        %v1888 = vpop.xlane.xlu0 %1887
        %v1889 = vsel %vm1807, %v1437, -inf
        %1890 = vmax.xlane.f32.xlu0 %v1889
        %v1891 = vpop.xlane.xlu0 %1890
        %v1892 = vsel %vm1807, %v1440, -inf
        %1893 = vmax.xlane.f32.xlu0 %v1892
        %v1894 = vpop.xlane.xlu0 %1893
        %v1895 = vsel %vm1807, %v1443, -inf
        %1896 = vmax.xlane.f32.xlu0 %v1895
        %v1897 = vpop.xlane.xlu0 %1896
        %v1898 = vsel %vm1807, %v1446, -inf
        %1899 = vmax.xlane.f32.xlu0 %v1898
        %v1900 = vpop.xlane.xlu0 %1899
        %v1901 = vsel %vm1807, %v1449, -inf
        %1902 = vmax.xlane.f32.xlu0 %v1901
        %v1903 = vpop.xlane.xlu0 %1902
        %v1904 = vsel %vm1807, %v1517, -inf
        %1905 = vmax.xlane.f32.xlu0 %v1904
        %v1906 = vpop.xlane.xlu0 %1905
        %v1907 = vsel %vm1807, %v1520, -inf
        %1908 = vmax.xlane.f32.xlu0 %v1907
        %v1909 = vpop.xlane.xlu0 %1908
        %v1910 = vsel %vm1807, %v1523, -inf
        %1911 = vmax.xlane.f32.xlu0 %v1910
        %v1912 = vpop.xlane.xlu0 %1911
        %v1913 = vsel %vm1807, %v1526, -inf
        %1914 = vmax.xlane.f32.xlu0 %v1913
        %v1915 = vpop.xlane.xlu0 %1914
        %v1916 = vsel %vm1807, %v1529, -inf
        %1917 = vmax.xlane.f32.xlu0 %v1916
        %v1918 = vpop.xlane.xlu0 %1917
        %v1919 = vsel %vm1807, %v1532, -inf
        %1920 = vmax.xlane.f32.xlu0 %v1919
        %v1921 = vpop.xlane.xlu0 %1920
        %v1922 = vsel %vm1807, %v1535, -inf
        %1923 = vmax.xlane.f32.xlu0 %v1922
        %v1924 = vpop.xlane.xlu0 %1923
        %v1925 = vsel %vm1807, %v1538, -inf
        %1926 = vmax.xlane.f32.xlu0 %v1925
        %v1927 = vpop.xlane.xlu0 %1926
        %v1928 = vsel %vm1807, %v1606, -inf
        %1929 = vmax.xlane.f32.xlu0 %v1928
        %v1930 = vpop.xlane.xlu0 %1929
        %v1931 = vsel %vm1807, %v1609, -inf
        %1932 = vmax.xlane.f32.xlu0 %v1931
        %v1933 = vpop.xlane.xlu0 %1932
        %v1934 = vsel %vm1807, %v1612, -inf
        %1935 = vmax.xlane.f32.xlu0 %v1934
        %v1936 = vpop.xlane.xlu0 %1935
        %v1937 = vsel %vm1807, %v1615, -inf
        %1938 = vmax.xlane.f32.xlu0 %v1937
        %v1939 = vpop.xlane.xlu0 %1938
        %v1940 = vsel %vm1807, %v1618, -inf
        %1941 = vmax.xlane.f32.xlu0 %v1940
        %v1942 = vpop.xlane.xlu0 %1941
        %v1943 = vsel %vm1807, %v1621, -inf
        %1944 = vmax.xlane.f32.xlu0 %v1943
        %v1945 = vpop.xlane.xlu0 %1944
        %v1946 = vsel %vm1807, %v1624, -inf
        %1947 = vmax.xlane.f32.xlu0 %v1946
        %v1948 = vpop.xlane.xlu0 %1947
        %v1949 = vsel %vm1807, %v1627, -inf
        %1950 = vmax.xlane.f32.xlu0 %v1949
        %v1951 = vpop.xlane.xlu0 %1950
        %v1952 = vsel %vm1807, %v1695, -inf
        %1953 = vmax.xlane.f32.xlu0 %v1952
        %v1954 = vpop.xlane.xlu0 %1953
        %v1955 = vsel %vm1807, %v1698, -inf
        %1956 = vmax.xlane.f32.xlu0 %v1955
        %v1957 = vpop.xlane.xlu0 %1956
        %v1958 = vsel %vm1807, %v1701, -inf
        %1959 = vmax.xlane.f32.xlu0 %v1958
        %v1960 = vpop.xlane.xlu0 %1959
        %v1961 = vsel %vm1807, %v1704, -inf
        %1962 = vmax.xlane.f32.xlu0 %v1961
        %v1963 = vpop.xlane.xlu0 %1962
        %v1964 = vsel %vm1807, %v1707, -inf
        %1965 = vmax.xlane.f32.xlu0 %v1964
        %v1966 = vpop.xlane.xlu0 %1965
        %v1967 = vsel %vm1807, %v1710, -inf
        %1968 = vmax.xlane.f32.xlu0 %v1967
        %v1969 = vpop.xlane.xlu0 %1968
        %v1970 = vsel %vm1807, %v1713, -inf
        %1971 = vmax.xlane.f32.xlu0 %v1970
        %v1972 = vpop.xlane.xlu0 %1971
        %v1973 = vsel %vm1807, %v1716, -inf
        %1974 = vmax.xlane.f32.xlu0 %v1973
        %v1975 = vpop.xlane.xlu0 %1974
        %v1976 = vsel %vm1807, %v1784, -inf
        %1977 = vmax.xlane.f32.xlu0 %v1976
        %v1978 = vpop.xlane.xlu0 %1977
        %v1979 = vsel %vm1807, %v1787, -inf
        %1980 = vmax.xlane.f32.xlu0 %v1979
        %v1981 = vpop.xlane.xlu0 %1980
        %v1982 = vsel %vm1807, %v1790, -inf
        %1983 = vmax.xlane.f32.xlu0 %v1982
        %v1984 = vpop.xlane.xlu0 %1983
        %v1985 = vsel %vm1807, %v1793, -inf
        %1986 = vmax.xlane.f32.xlu0 %v1985
        %v1987 = vpop.xlane.xlu0 %1986
        %v1988 = vsel %vm1807, %v1796, -inf
        %1989 = vmax.xlane.f32.xlu0 %v1988
        %v1990 = vpop.xlane.xlu0 %1989
        %v1991 = vsel %vm1807, %v1799, -inf
        %1992 = vmax.xlane.f32.xlu0 %v1991
        %v1993 = vpop.xlane.xlu0 %1992
        %v1994 = vsel %vm1807, %v1802, -inf
        %1995 = vmax.xlane.f32.xlu0 %v1994
        %v1996 = vpop.xlane.xlu0 %1995
        %v1997 = vsel %vm1807, %v1805, -inf
        %1998 = vmax.xlane.f32.xlu0 %v1997
        %v1999 = vpop.xlane.xlu0 %1998
        %v2000 = vsub.f32 %v1161, %v1810
        %v2001 = vsub.f32 %v1164, %v1813
        %v2002 = vsub.f32 %v1167, %v1816
        %v2003 = vsub.f32 %v1170, %v1819
        %v2004 = vsub.f32 %v1173, %v1822
        %v2005 = vsub.f32 %v1176, %v1825
        %v2006 = vsub.f32 %v1179, %v1828
        %v2007 = vsub.f32 %v1182, %v1831
        %v2008 = vsub.f32 %v1250, %v1834
        %v2009 = vsub.f32 %v1253, %v1837
        %v2010 = vsub.f32 %v1256, %v1840
        %v2011 = vsub.f32 %v1259, %v1843
        %v2012 = vsub.f32 %v1262, %v1846
        %v2013 = vsub.f32 %v1265, %v1849
        %v2014 = vsub.f32 %v1268, %v1852
        %v2015 = vsub.f32 %v1271, %v1855
        %v2016 = vsub.f32 %v1339, %v1858
        %v2017 = vsub.f32 %v1342, %v1861
        %v2018 = vsub.f32 %v1345, %v1864
        %v2019 = vsub.f32 %v1348, %v1867
        %v2020 = vsub.f32 %v1351, %v1870
        %v2021 = vsub.f32 %v1354, %v1873
        %v2022 = vsub.f32 %v1357, %v1876
        %v2023 = vsub.f32 %v1360, %v1879
        %v2024 = vsub.f32 %v1428, %v1882
        %v2025 = vsub.f32 %v1431, %v1885
        %v2026 = vsub.f32 %v1434, %v1888
        %v2027 = vsub.f32 %v1437, %v1891
        %v2028 = vsub.f32 %v1440, %v1894
        %v2029 = vsub.f32 %v1443, %v1897
        %v2030 = vsub.f32 %v1446, %v1900
        %v2031 = vsub.f32 %v1449, %v1903
        %v2032 = vsub.f32 %v1517, %v1906
        %v2033 = vsub.f32 %v1520, %v1909
        %v2034 = vsub.f32 %v1523, %v1912
        %v2035 = vsub.f32 %v1526, %v1915
        %v2036 = vsub.f32 %v1529, %v1918
        %v2037 = vsub.f32 %v1532, %v1921
        %v2038 = vsub.f32 %v1535, %v1924
        %v2039 = vsub.f32 %v1538, %v1927
        %v2040 = vsub.f32 %v1606, %v1930
        %v2041 = vsub.f32 %v1609, %v1933
        %v2042 = vsub.f32 %v1612, %v1936
        %v2043 = vsub.f32 %v1615, %v1939
        %v2044 = vsub.f32 %v1618, %v1942
        %v2045 = vsub.f32 %v1621, %v1945
        %v2046 = vsub.f32 %v1624, %v1948
        %v2047 = vsub.f32 %v1627, %v1951
        %v2048 = vsub.f32 %v1695, %v1954
        %v2049 = vsub.f32 %v1698, %v1957
        %v2050 = vsub.f32 %v1701, %v1960
        %v2051 = vsub.f32 %v1704, %v1963
        %v2052 = vsub.f32 %v1707, %v1966
        %v2053 = vsub.f32 %v1710, %v1969
        %v2054 = vsub.f32 %v1713, %v1972
        %v2055 = vsub.f32 %v1716, %v1975
        %v2056 = vsub.f32 %v1784, %v1978
        %v2057 = vsub.f32 %v1787, %v1981
        %v2058 = vsub.f32 %v1790, %v1984
        %v2059 = vsub.f32 %v1793, %v1987
        %v2060 = vsub.f32 %v1796, %v1990
        %v2061 = vsub.f32 %v1799, %v1993
        %v2062 = vsub.f32 %v1802, %v1996
        %v2063 = vsub.f32 %v1805, %v1999
        %v2064 = vmul.f32 %v2000, 1.442695
        %v2065 = vpow.pop %v2064
        %v2066 = vmul.f32 %v2001, 1.442695
        %v2067 = vpow.pop %v2066
        %v2068 = vmul.f32 %v2002, 1.442695
        %v2069 = vpow.pop %v2068
        %v2070 = vmul.f32 %v2003, 1.442695
        %v2071 = vpow.pop %v2070
        %v2072 = vmul.f32 %v2004, 1.442695
        %v2073 = vpow.pop %v2072
        %v2074 = vmul.f32 %v2005, 1.442695
        %v2075 = vpow.pop %v2074
        %v2076 = vmul.f32 %v2006, 1.442695
        %v2077 = vpow.pop %v2076
        %v2078 = vmul.f32 %v2007, 1.442695
        %v2079 = vpow.pop %v2078
        %v2080 = vmul.f32 %v2008, 1.442695
        %v2081 = vpow.pop %v2080
        %v2082 = vmul.f32 %v2009, 1.442695
        %v2083 = vpow.pop %v2082
        %v2084 = vmul.f32 %v2010, 1.442695
        %v2085 = vpow.pop %v2084
        %v2086 = vmul.f32 %v2011, 1.442695
        %v2087 = vpow.pop %v2086
        %v2088 = vmul.f32 %v2012, 1.442695
        %v2089 = vpow.pop %v2088
        %v2090 = vmul.f32 %v2013, 1.442695
        %v2091 = vpow.pop %v2090
        %v2092 = vmul.f32 %v2014, 1.442695
        %v2093 = vpow.pop %v2092
        %v2094 = vmul.f32 %v2015, 1.442695
        %v2095 = vpow.pop %v2094
        %v2096 = vmul.f32 %v2016, 1.442695
        %v2097 = vpow.pop %v2096
        %v2098 = vmul.f32 %v2017, 1.442695
        %v2099 = vpow.pop %v2098
        %v2100 = vmul.f32 %v2018, 1.442695
        %v2101 = vpow.pop %v2100
        %v2102 = vmul.f32 %v2019, 1.442695
        %v2103 = vpow.pop %v2102
        %v2104 = vmul.f32 %v2020, 1.442695
        %v2105 = vpow.pop %v2104
        %v2106 = vmul.f32 %v2021, 1.442695
        %v2107 = vpow.pop %v2106
        %v2108 = vmul.f32 %v2022, 1.442695
        %v2109 = vpow.pop %v2108
        %v2110 = vmul.f32 %v2023, 1.442695
        %v2111 = vpow.pop %v2110
        %v2112 = vmul.f32 %v2024, 1.442695
        %v2113 = vpow.pop %v2112
        %v2114 = vmul.f32 %v2025, 1.442695
        %v2115 = vpow.pop %v2114
        %v2116 = vmul.f32 %v2026, 1.442695
        %v2117 = vpow.pop %v2116
        %v2118 = vmul.f32 %v2027, 1.442695
        %v2119 = vpow.pop %v2118
        %v2120 = vmul.f32 %v2028, 1.442695
        %v2121 = vpow.pop %v2120
        %v2122 = vmul.f32 %v2029, 1.442695
        %v2123 = vpow.pop %v2122
        %v2124 = vmul.f32 %v2030, 1.442695
        %v2125 = vpow.pop %v2124
        %v2126 = vmul.f32 %v2031, 1.442695
        %v2127 = vpow.pop %v2126
        %v2128 = vmul.f32 %v2032, 1.442695
        %v2129 = vpow.pop %v2128
        %v2130 = vmul.f32 %v2033, 1.442695
        %v2131 = vpow.pop %v2130
        %v2132 = vmul.f32 %v2034, 1.442695
        %v2133 = vpow.pop %v2132
        %v2134 = vmul.f32 %v2035, 1.442695
        %v2135 = vpow.pop %v2134
        %v2136 = vmul.f32 %v2036, 1.442695
        %v2137 = vpow.pop %v2136
        %v2138 = vmul.f32 %v2037, 1.442695
        %v2139 = vpow.pop %v2138
        %v2140 = vmul.f32 %v2038, 1.442695
        %v2141 = vpow.pop %v2140
        %v2142 = vmul.f32 %v2039, 1.442695
        %v2143 = vpow.pop %v2142
        %v2144 = vmul.f32 %v2040, 1.442695
        %v2145 = vpow.pop %v2144
        %v2146 = vmul.f32 %v2041, 1.442695
        %v2147 = vpow.pop %v2146
        %v2148 = vmul.f32 %v2042, 1.442695
        %v2149 = vpow.pop %v2148
        %v2150 = vmul.f32 %v2043, 1.442695
        %v2151 = vpow.pop %v2150
        %v2152 = vmul.f32 %v2044, 1.442695
        %v2153 = vpow.pop %v2152
        %v2154 = vmul.f32 %v2045, 1.442695
        %v2155 = vpow.pop %v2154
        %v2156 = vmul.f32 %v2046, 1.442695
        %v2157 = vpow.pop %v2156
        %v2158 = vmul.f32 %v2047, 1.442695
        %v2159 = vpow.pop %v2158
        %v2160 = vmul.f32 %v2048, 1.442695
        %v2161 = vpow.pop %v2160
        %v2162 = vmul.f32 %v2049, 1.442695
        %v2163 = vpow.pop %v2162
        %v2164 = vmul.f32 %v2050, 1.442695
        %v2165 = vpow.pop %v2164
        %v2166 = vmul.f32 %v2051, 1.442695
        %v2167 = vpow.pop %v2166
        %v2168 = vmul.f32 %v2052, 1.442695
        %v2169 = vpow.pop %v2168
        %v2170 = vmul.f32 %v2053, 1.442695
        %v2171 = vpow.pop %v2170
        %v2172 = vmul.f32 %v2054, 1.442695
        %v2173 = vpow.pop %v2172
        %v2174 = vmul.f32 %v2055, 1.442695
        %v2175 = vpow.pop %v2174
        %v2176 = vmul.f32 %v2056, 1.442695
        %v2177 = vpow.pop %v2176
        %v2178 = vmul.f32 %v2057, 1.442695
        %v2179 = vpow.pop %v2178
        %v2180 = vmul.f32 %v2058, 1.442695
        %v2181 = vpow.pop %v2180
        %v2182 = vmul.f32 %v2059, 1.442695
        %v2183 = vpow.pop %v2182
        %v2184 = vmul.f32 %v2060, 1.442695
        %v2185 = vpow.pop %v2184
        %v2186 = vmul.f32 %v2061, 1.442695
        %v2187 = vpow.pop %v2186
        %v2188 = vmul.f32 %v2062, 1.442695
        %v2189 = vpow.pop %v2188
        %v2190 = vmul.f32 %v2063, 1.442695
        %v2191 = vpow.pop %v2190
        %v2192 = vsel %vm1807, %v2065, 0.0
        %2193 = vadd.xlane.f32.xlu0 %v2192
        %v2194 = vpop.xlane.xlu0 %2193
        %v2195 = vsel %vm1807, %v2067, 0.0
        %2196 = vadd.xlane.f32.xlu0 %v2195
        %v2197 = vpop.xlane.xlu0 %2196
        %v2198 = vsel %vm1807, %v2069, 0.0
        %2199 = vadd.xlane.f32.xlu0 %v2198
        %v2200 = vpop.xlane.xlu0 %2199
        %v2201 = vsel %vm1807, %v2071, 0.0
        %2202 = vadd.xlane.f32.xlu0 %v2201
        %v2203 = vpop.xlane.xlu0 %2202
        %v2204 = vsel %vm1807, %v2073, 0.0
        %2205 = vadd.xlane.f32.xlu0 %v2204
        %v2206 = vpop.xlane.xlu0 %2205
        %v2207 = vsel %vm1807, %v2075, 0.0
        %2208 = vadd.xlane.f32.xlu0 %v2207
        %v2209 = vpop.xlane.xlu0 %2208
        %v2210 = vsel %vm1807, %v2077, 0.0
        %2211 = vadd.xlane.f32.xlu0 %v2210
        %v2212 = vpop.xlane.xlu0 %2211
        %v2213 = vsel %vm1807, %v2079, 0.0
        %2214 = vadd.xlane.f32.xlu0 %v2213
        %v2215 = vpop.xlane.xlu0 %2214
        %v2216 = vsel %vm1807, %v2081, 0.0
        %2217 = vadd.xlane.f32.xlu0 %v2216
        %v2218 = vpop.xlane.xlu0 %2217
        %v2219 = vsel %vm1807, %v2083, 0.0
        %2220 = vadd.xlane.f32.xlu0 %v2219
        %v2221 = vpop.xlane.xlu0 %2220
        %v2222 = vsel %vm1807, %v2085, 0.0
        %2223 = vadd.xlane.f32.xlu0 %v2222
        %v2224 = vpop.xlane.xlu0 %2223
        %v2225 = vsel %vm1807, %v2087, 0.0
        %2226 = vadd.xlane.f32.xlu0 %v2225
        %v2227 = vpop.xlane.xlu0 %2226
        %v2228 = vsel %vm1807, %v2089, 0.0
        %2229 = vadd.xlane.f32.xlu0 %v2228
        %v2230 = vpop.xlane.xlu0 %2229
        %v2231 = vsel %vm1807, %v2091, 0.0
        %2232 = vadd.xlane.f32.xlu0 %v2231
        %v2233 = vpop.xlane.xlu0 %2232
        %v2234 = vsel %vm1807, %v2093, 0.0
        %2235 = vadd.xlane.f32.xlu0 %v2234
        %v2236 = vpop.xlane.xlu0 %2235
        %v2237 = vsel %vm1807, %v2095, 0.0
        %2238 = vadd.xlane.f32.xlu0 %v2237
        %v2239 = vpop.xlane.xlu0 %2238
        %v2240 = vsel %vm1807, %v2097, 0.0
        %2241 = vadd.xlane.f32.xlu0 %v2240
        %v2242 = vpop.xlane.xlu0 %2241
        %v2243 = vsel %vm1807, %v2099, 0.0
        %2244 = vadd.xlane.f32.xlu0 %v2243
        %v2245 = vpop.xlane.xlu0 %2244
        %v2246 = vsel %vm1807, %v2101, 0.0
        %2247 = vadd.xlane.f32.xlu0 %v2246
        %v2248 = vpop.xlane.xlu0 %2247
        %v2249 = vsel %vm1807, %v2103, 0.0
        %2250 = vadd.xlane.f32.xlu0 %v2249
        %v2251 = vpop.xlane.xlu0 %2250
        %v2252 = vsel %vm1807, %v2105, 0.0
        %2253 = vadd.xlane.f32.xlu0 %v2252
        %v2254 = vpop.xlane.xlu0 %2253
        %v2255 = vsel %vm1807, %v2107, 0.0
        %2256 = vadd.xlane.f32.xlu0 %v2255
        %v2257 = vpop.xlane.xlu0 %2256
        %v2258 = vsel %vm1807, %v2109, 0.0
        %2259 = vadd.xlane.f32.xlu0 %v2258
        %v2260 = vpop.xlane.xlu0 %2259
        %v2261 = vsel %vm1807, %v2111, 0.0
        %2262 = vadd.xlane.f32.xlu0 %v2261
        %v2263 = vpop.xlane.xlu0 %2262
        %v2264 = vsel %vm1807, %v2113, 0.0
        %2265 = vadd.xlane.f32.xlu0 %v2264
        %v2266 = vpop.xlane.xlu0 %2265
        %v2267 = vsel %vm1807, %v2115, 0.0
        %2268 = vadd.xlane.f32.xlu0 %v2267
        %v2269 = vpop.xlane.xlu0 %2268
        %v2270 = vsel %vm1807, %v2117, 0.0
        %2271 = vadd.xlane.f32.xlu0 %v2270
        %v2272 = vpop.xlane.xlu0 %2271
        %v2273 = vsel %vm1807, %v2119, 0.0
        %2274 = vadd.xlane.f32.xlu0 %v2273
        %v2275 = vpop.xlane.xlu0 %2274
        %v2276 = vsel %vm1807, %v2121, 0.0
        %2277 = vadd.xlane.f32.xlu0 %v2276
        %v2278 = vpop.xlane.xlu0 %2277
        %v2279 = vsel %vm1807, %v2123, 0.0
        %2280 = vadd.xlane.f32.xlu0 %v2279
        %v2281 = vpop.xlane.xlu0 %2280
        %v2282 = vsel %vm1807, %v2125, 0.0
        %2283 = vadd.xlane.f32.xlu0 %v2282
        %v2284 = vpop.xlane.xlu0 %2283
        %v2285 = vsel %vm1807, %v2127, 0.0
        %2286 = vadd.xlane.f32.xlu0 %v2285
        %v2287 = vpop.xlane.xlu0 %2286
        %v2288 = vsel %vm1807, %v2129, 0.0
        %2289 = vadd.xlane.f32.xlu0 %v2288
        %v2290 = vpop.xlane.xlu0 %2289
        %v2291 = vsel %vm1807, %v2131, 0.0
        %2292 = vadd.xlane.f32.xlu0 %v2291
        %v2293 = vpop.xlane.xlu0 %2292
        %v2294 = vsel %vm1807, %v2133, 0.0
        %2295 = vadd.xlane.f32.xlu0 %v2294
        %v2296 = vpop.xlane.xlu0 %2295
        %v2297 = vsel %vm1807, %v2135, 0.0
        %2298 = vadd.xlane.f32.xlu0 %v2297
        %v2299 = vpop.xlane.xlu0 %2298
        %v2300 = vsel %vm1807, %v2137, 0.0
        %2301 = vadd.xlane.f32.xlu0 %v2300
        %v2302 = vpop.xlane.xlu0 %2301
        %v2303 = vsel %vm1807, %v2139, 0.0
        %2304 = vadd.xlane.f32.xlu0 %v2303
        %v2305 = vpop.xlane.xlu0 %2304
        %v2306 = vsel %vm1807, %v2141, 0.0
        %2307 = vadd.xlane.f32.xlu0 %v2306
        %v2308 = vpop.xlane.xlu0 %2307
        %v2309 = vsel %vm1807, %v2143, 0.0
        %2310 = vadd.xlane.f32.xlu0 %v2309
        %v2311 = vpop.xlane.xlu0 %2310
        %v2312 = vsel %vm1807, %v2145, 0.0
        %2313 = vadd.xlane.f32.xlu0 %v2312
        %v2314 = vpop.xlane.xlu0 %2313
        %v2315 = vsel %vm1807, %v2147, 0.0
        %2316 = vadd.xlane.f32.xlu0 %v2315
        %v2317 = vpop.xlane.xlu0 %2316
        %v2318 = vsel %vm1807, %v2149, 0.0
        %2319 = vadd.xlane.f32.xlu0 %v2318
        %v2320 = vpop.xlane.xlu0 %2319
        %v2321 = vsel %vm1807, %v2151, 0.0
        %2322 = vadd.xlane.f32.xlu0 %v2321
        %v2323 = vpop.xlane.xlu0 %2322
        %v2324 = vsel %vm1807, %v2153, 0.0
        %2325 = vadd.xlane.f32.xlu0 %v2324
        %v2326 = vpop.xlane.xlu0 %2325
        %v2327 = vsel %vm1807, %v2155, 0.0
        %2328 = vadd.xlane.f32.xlu0 %v2327
        %v2329 = vpop.xlane.xlu0 %2328
        %v2330 = vsel %vm1807, %v2157, 0.0
        %2331 = vadd.xlane.f32.xlu0 %v2330
        %v2332 = vpop.xlane.xlu0 %2331
        %v2333 = vsel %vm1807, %v2159, 0.0
        %2334 = vadd.xlane.f32.xlu0 %v2333
        %v2335 = vpop.xlane.xlu0 %2334
        %v2336 = vsel %vm1807, %v2161, 0.0
        %2337 = vadd.xlane.f32.xlu0 %v2336
        %v2338 = vpop.xlane.xlu0 %2337
        %v2339 = vsel %vm1807, %v2163, 0.0
        %2340 = vadd.xlane.f32.xlu0 %v2339
        %v2341 = vpop.xlane.xlu0 %2340
        %v2342 = vsel %vm1807, %v2165, 0.0
        %2343 = vadd.xlane.f32.xlu0 %v2342
        %v2344 = vpop.xlane.xlu0 %2343
        %v2345 = vsel %vm1807, %v2167, 0.0
        %2346 = vadd.xlane.f32.xlu0 %v2345
        %v2347 = vpop.xlane.xlu0 %2346
        %v2348 = vsel %vm1807, %v2169, 0.0
        %2349 = vadd.xlane.f32.xlu0 %v2348
        %v2350 = vpop.xlane.xlu0 %2349
        %v2351 = vsel %vm1807, %v2171, 0.0
        %2352 = vadd.xlane.f32.xlu0 %v2351
        %v2353 = vpop.xlane.xlu0 %2352
        %v2354 = vsel %vm1807, %v2173, 0.0
        %2355 = vadd.xlane.f32.xlu0 %v2354
        %v2356 = vpop.xlane.xlu0 %2355
        %v2357 = vsel %vm1807, %v2175, 0.0
        %2358 = vadd.xlane.f32.xlu0 %v2357
        %v2359 = vpop.xlane.xlu0 %2358
        %v2360 = vsel %vm1807, %v2177, 0.0
        %2361 = vadd.xlane.f32.xlu0 %v2360
        %v2362 = vpop.xlane.xlu0 %2361
        %v2363 = vsel %vm1807, %v2179, 0.0
        %2364 = vadd.xlane.f32.xlu0 %v2363
        %v2365 = vpop.xlane.xlu0 %2364
        %v2366 = vsel %vm1807, %v2181, 0.0
        %2367 = vadd.xlane.f32.xlu0 %v2366
        %v2368 = vpop.xlane.xlu0 %2367
        %v2369 = vsel %vm1807, %v2183, 0.0
        %2370 = vadd.xlane.f32.xlu0 %v2369
        %v2371 = vpop.xlane.xlu0 %2370
        %v2372 = vsel %vm1807, %v2185, 0.0
        %2373 = vadd.xlane.f32.xlu0 %v2372
        %v2374 = vpop.xlane.xlu0 %2373
        %v2375 = vsel %vm1807, %v2187, 0.0
        %2376 = vadd.xlane.f32.xlu0 %v2375
        %v2377 = vpop.xlane.xlu0 %2376
        %v2378 = vsel %vm1807, %v2189, 0.0
        %2379 = vadd.xlane.f32.xlu0 %v2378
        %v2380 = vpop.xlane.xlu0 %2379
        %v2381 = vsel %vm1807, %v2191, 0.0
        %2382 = vadd.xlane.f32.xlu0 %v2381
        %v2383 = vpop.xlane.xlu0 %2382
        %v2384 = vrcp.pop %v2194
        %v2385 = vrcp.pop %v2197
        %v2386 = vrcp.pop %v2200
        %v2387 = vrcp.pop %v2203
        %v2388 = vrcp.pop %v2206
        %v2389 = vrcp.pop %v2209
        %v2390 = vrcp.pop %v2212
        %v2391 = vrcp.pop %v2215
        %v2392 = vrcp.pop %v2218
        %v2393 = vrcp.pop %v2221
        %v2394 = vrcp.pop %v2224
        %v2395 = vrcp.pop %v2227
        %v2396 = vrcp.pop %v2230
        %v2397 = vrcp.pop %v2233
        %v2398 = vrcp.pop %v2236
        %v2399 = vrcp.pop %v2239
        %v2400 = vrcp.pop %v2242
        %v2401 = vrcp.pop %v2245
        %v2402 = vrcp.pop %v2248
        %v2403 = vrcp.pop %v2251
        %v2404 = vrcp.pop %v2254
        %v2405 = vrcp.pop %v2257
        %v2406 = vrcp.pop %v2260
        %v2407 = vrcp.pop %v2263
        %v2408 = vrcp.pop %v2266
        %v2409 = vrcp.pop %v2269
        %v2410 = vrcp.pop %v2272
        %v2411 = vrcp.pop %v2275
        %v2412 = vrcp.pop %v2278
        %v2413 = vrcp.pop %v2281
        %v2414 = vrcp.pop %v2284
        %v2415 = vrcp.pop %v2287
        %v2416 = vrcp.pop %v2290
        %v2417 = vrcp.pop %v2293
        %v2418 = vrcp.pop %v2296
        %v2419 = vrcp.pop %v2299
        %v2420 = vrcp.pop %v2302
        %v2421 = vrcp.pop %v2305
        %v2422 = vrcp.pop %v2308
        %v2423 = vrcp.pop %v2311
        %v2424 = vrcp.pop %v2314
        %v2425 = vrcp.pop %v2317
        %v2426 = vrcp.pop %v2320
        %v2427 = vrcp.pop %v2323
        %v2428 = vrcp.pop %v2326
        %v2429 = vrcp.pop %v2329
        %v2430 = vrcp.pop %v2332
        %v2431 = vrcp.pop %v2335
        %v2432 = vrcp.pop %v2338
        %v2433 = vrcp.pop %v2341
        %v2434 = vrcp.pop %v2344
        %v2435 = vrcp.pop %v2347
        %v2436 = vrcp.pop %v2350
        %v2437 = vrcp.pop %v2353
        %v2438 = vrcp.pop %v2356
        %v2439 = vrcp.pop %v2359
        %v2440 = vrcp.pop %v2362
        %v2441 = vrcp.pop %v2365
        %v2442 = vrcp.pop %v2368
        %v2443 = vrcp.pop %v2371
        %v2444 = vrcp.pop %v2374
        %v2445 = vrcp.pop %v2377
        %v2446 = vrcp.pop %v2380
        %v2447 = vrcp.pop %v2383
        %v2448 = vmul.f32 %v2065, %v2384
        %v2449 = vmul.f32 %v2067, %v2385
        %v2450 = vmul.f32 %v2069, %v2386
        %v2451 = vmul.f32 %v2071, %v2387
        %v2452 = vmul.f32 %v2073, %v2388
        %v2453 = vmul.f32 %v2075, %v2389
        %v2454 = vmul.f32 %v2077, %v2390
        %v2455 = vmul.f32 %v2079, %v2391
        %v2456 = vmul.f32 %v2081, %v2392
        %v2457 = vmul.f32 %v2083, %v2393
        %v2458 = vmul.f32 %v2085, %v2394
        %v2459 = vmul.f32 %v2087, %v2395
        %v2460 = vmul.f32 %v2089, %v2396
        %v2461 = vmul.f32 %v2091, %v2397
        %v2462 = vmul.f32 %v2093, %v2398
        %v2463 = vmul.f32 %v2095, %v2399
        %v2464 = vmul.f32 %v2097, %v2400
        %v2465 = vmul.f32 %v2099, %v2401
        %v2466 = vmul.f32 %v2101, %v2402
        %v2467 = vmul.f32 %v2103, %v2403
        %v2468 = vmul.f32 %v2105, %v2404
        %v2469 = vmul.f32 %v2107, %v2405
        %v2470 = vmul.f32 %v2109, %v2406
        %v2471 = vmul.f32 %v2111, %v2407
        %v2472 = vmul.f32 %v2113, %v2408
        %v2473 = vmul.f32 %v2115, %v2409
        %v2474 = vmul.f32 %v2117, %v2410
        %v2475 = vmul.f32 %v2119, %v2411
        %v2476 = vmul.f32 %v2121, %v2412
        %v2477 = vmul.f32 %v2123, %v2413
        %v2478 = vmul.f32 %v2125, %v2414
        %v2479 = vmul.f32 %v2127, %v2415
        %v2480 = vmul.f32 %v2129, %v2416
        %v2481 = vmul.f32 %v2131, %v2417
        %v2482 = vmul.f32 %v2133, %v2418
        %v2483 = vmul.f32 %v2135, %v2419
        %v2484 = vmul.f32 %v2137, %v2420
        %v2485 = vmul.f32 %v2139, %v2421
        %v2486 = vmul.f32 %v2141, %v2422
        %v2487 = vmul.f32 %v2143, %v2423
        %v2488 = vmul.f32 %v2145, %v2424
        %v2489 = vmul.f32 %v2147, %v2425
        %v2490 = vmul.f32 %v2149, %v2426
        %v2491 = vmul.f32 %v2151, %v2427
        %v2492 = vmul.f32 %v2153, %v2428
        %v2493 = vmul.f32 %v2155, %v2429
        %v2494 = vmul.f32 %v2157, %v2430
        %v2495 = vmul.f32 %v2159, %v2431
        %v2496 = vmul.f32 %v2161, %v2432
        %v2497 = vmul.f32 %v2163, %v2433
        %v2498 = vmul.f32 %v2165, %v2434
        %v2499 = vmul.f32 %v2167, %v2435
        %v2500 = vmul.f32 %v2169, %v2436
        %v2501 = vmul.f32 %v2171, %v2437
        %v2502 = vmul.f32 %v2173, %v2438
        %v2503 = vmul.f32 %v2175, %v2439
        %v2504 = vmul.f32 %v2177, %v2440
        %v2505 = vmul.f32 %v2179, %v2441
        %v2506 = vmul.f32 %v2181, %v2442
        %v2507 = vmul.f32 %v2183, %v2443
        %v2508 = vmul.f32 %v2185, %v2444
        %v2509 = vmul.f32 %v2187, %v2445
        %v2510 = vmul.f32 %v2189, %v2446
        %v2511 = vmul.f32 %v2191, %v2447
        %v2513 = vsel %vm1807, %v2448, 0
        %v2516 = vsel %vm1807, %v2449, 0
        %v2519 = vsel %vm1807, %v2450, 0
        %v2522 = vsel %vm1807, %v2451, 0
        %v2525 = vsel %vm1807, %v2452, 0
        %v2528 = vsel %vm1807, %v2453, 0
        %v2531 = vsel %vm1807, %v2454, 0
        %v2534 = vsel %vm1807, %v2455, 0
        %2536 = vmatpush.msra.mxu0 0.0
        %2537 = vmatpush.msra.mxu0 0.0
        %2538 = vmatpush.msra.mxu0 0.0
        %2539 = vmatpush.msra.mxu0 0.0
        %2540 = vmatpush.msra.mxu0 0.0
        %2541 = vmatpush.msra.mxu0 0.0
        %2542 = vmatpush.msra.mxu0 0.0
        %2543 = vmatpush.msra.mxu0 0.0
        %2544 = vmatpush.msra.mxu0 %v916
        %2545 = vmatpush.msra.mxu0 %v913
        %2546 = vmatpush.msra.mxu0 %v910
        %2547 = vmatpush.msra.mxu0 %v907
        %2548 = vmatpush.msra.mxu0 %v904
        %2549 = vmatpush.msra.mxu0 %v901
        %2550 = vmatpush.msra.mxu0 %v898
        %2551 = vmatpush.msra.mxu0 %v895
        %2552 = vmatmul.f32.gmra.mxu0 %v2513
        %v2553 = vpop.f32.mrf.mxu0
        %v2554 = vadd.f32 0.0, %v2553
        %2555 = vmatmul.f32.gmra.mxu0 %v2516
        %v2556 = vpop.f32.mrf.mxu0
        %v2557 = vadd.f32 0.0, %v2556
        %2558 = vmatmul.f32.gmra.mxu0 %v2519
        %v2559 = vpop.f32.mrf.mxu0
        %v2560 = vadd.f32 0.0, %v2559
        %2561 = vmatmul.f32.gmra.mxu0 %v2522
        %v2562 = vpop.f32.mrf.mxu0
        %v2563 = vadd.f32 0.0, %v2562
        %2564 = vmatmul.f32.gmra.mxu0 %v2525
        %v2565 = vpop.f32.mrf.mxu0
        %v2566 = vadd.f32 0.0, %v2565
        %2567 = vmatmul.f32.gmra.mxu0 %v2528
        %v2568 = vpop.f32.mrf.mxu0
        %v2569 = vadd.f32 0.0, %v2568
        %2570 = vmatmul.f32.gmra.mxu0 %v2531
        %v2571 = vpop.f32.mrf.mxu0
        %v2572 = vadd.f32 0.0, %v2571
        %2573 = vmatmul.f32.gmra.mxu0 %v2534
        %v2574 = vpop.f32.mrf.mxu0
        %v2575 = vadd.f32 0.0, %v2574
        %2576 = vdwg.mxu0
        %v2578 = vsel %vm1807, %v2456, 0
        %v2581 = vsel %vm1807, %v2457, 0
        %v2584 = vsel %vm1807, %v2458, 0
        %v2587 = vsel %vm1807, %v2459, 0
        %v2590 = vsel %vm1807, %v2460, 0
        %v2593 = vsel %vm1807, %v2461, 0
        %v2596 = vsel %vm1807, %v2462, 0
        %v2599 = vsel %vm1807, %v2463, 0
        %2601 = vmatpush.msra.mxu0 0.0
        %2602 = vmatpush.msra.mxu0 0.0
        %2603 = vmatpush.msra.mxu0 0.0
        %2604 = vmatpush.msra.mxu0 0.0
        %2605 = vmatpush.msra.mxu0 0.0
        %2606 = vmatpush.msra.mxu0 0.0
        %2607 = vmatpush.msra.mxu0 0.0
        %2608 = vmatpush.msra.mxu0 0.0
        %2609 = vmatpush.msra.mxu0 %v940
        %2610 = vmatpush.msra.mxu0 %v937
        %2611 = vmatpush.msra.mxu0 %v934
        %2612 = vmatpush.msra.mxu0 %v931
        %2613 = vmatpush.msra.mxu0 %v928
        %2614 = vmatpush.msra.mxu0 %v925
        %2615 = vmatpush.msra.mxu0 %v922
        %2616 = vmatpush.msra.mxu0 %v919
        %2617 = vmatmul.f32.gmra.mxu0 %v2578
        %v2618 = vpop.f32.mrf.mxu0
        %v2619 = vadd.f32 0.0, %v2618
        %2620 = vmatmul.f32.gmra.mxu0 %v2581
        %v2621 = vpop.f32.mrf.mxu0
        %v2622 = vadd.f32 0.0, %v2621
        %2623 = vmatmul.f32.gmra.mxu0 %v2584
        %v2624 = vpop.f32.mrf.mxu0
        %v2625 = vadd.f32 0.0, %v2624
        %2626 = vmatmul.f32.gmra.mxu0 %v2587
        %v2627 = vpop.f32.mrf.mxu0
        %v2628 = vadd.f32 0.0, %v2627
        %2629 = vmatmul.f32.gmra.mxu0 %v2590
        %v2630 = vpop.f32.mrf.mxu0
        %v2631 = vadd.f32 0.0, %v2630
        %2632 = vmatmul.f32.gmra.mxu0 %v2593
        %v2633 = vpop.f32.mrf.mxu0
        %v2634 = vadd.f32 0.0, %v2633
        %2635 = vmatmul.f32.gmra.mxu0 %v2596
        %v2636 = vpop.f32.mrf.mxu0
        %v2637 = vadd.f32 0.0, %v2636
        %2638 = vmatmul.f32.gmra.mxu0 %v2599
        %v2639 = vpop.f32.mrf.mxu0
        %v2640 = vadd.f32 0.0, %v2639
        %2641 = vdwg.mxu0
        %v2643 = vsel %vm1807, %v2464, 0
        %v2646 = vsel %vm1807, %v2465, 0
        %v2649 = vsel %vm1807, %v2466, 0
        %v2652 = vsel %vm1807, %v2467, 0
        %v2655 = vsel %vm1807, %v2468, 0
        %v2658 = vsel %vm1807, %v2469, 0
        %v2661 = vsel %vm1807, %v2470, 0
        %v2664 = vsel %vm1807, %v2471, 0
        %2666 = vmatpush.msra.mxu0 0.0
        %2667 = vmatpush.msra.mxu0 0.0
        %2668 = vmatpush.msra.mxu0 0.0
        %2669 = vmatpush.msra.mxu0 0.0
        %2670 = vmatpush.msra.mxu0 0.0
        %2671 = vmatpush.msra.mxu0 0.0
        %2672 = vmatpush.msra.mxu0 0.0
        %2673 = vmatpush.msra.mxu0 0.0
        %2674 = vmatpush.msra.mxu0 %v964
        %2675 = vmatpush.msra.mxu0 %v961
        %2676 = vmatpush.msra.mxu0 %v958
        %2677 = vmatpush.msra.mxu0 %v955
        %2678 = vmatpush.msra.mxu0 %v952
        %2679 = vmatpush.msra.mxu0 %v949
        %2680 = vmatpush.msra.mxu0 %v946
        %2681 = vmatpush.msra.mxu0 %v943
        %2682 = vmatmul.f32.gmra.mxu0 %v2643
        %v2683 = vpop.f32.mrf.mxu0
        %v2684 = vadd.f32 0.0, %v2683
        %2685 = vmatmul.f32.gmra.mxu0 %v2646
        %v2686 = vpop.f32.mrf.mxu0
        %v2687 = vadd.f32 0.0, %v2686
        %2688 = vmatmul.f32.gmra.mxu0 %v2649
        %v2689 = vpop.f32.mrf.mxu0
        %v2690 = vadd.f32 0.0, %v2689
        %2691 = vmatmul.f32.gmra.mxu0 %v2652
        %v2692 = vpop.f32.mrf.mxu0
        %v2693 = vadd.f32 0.0, %v2692
        %2694 = vmatmul.f32.gmra.mxu0 %v2655
        %v2695 = vpop.f32.mrf.mxu0
        %v2696 = vadd.f32 0.0, %v2695
        %2697 = vmatmul.f32.gmra.mxu0 %v2658
        %v2698 = vpop.f32.mrf.mxu0
        %v2699 = vadd.f32 0.0, %v2698
        %2700 = vmatmul.f32.gmra.mxu0 %v2661
        %v2701 = vpop.f32.mrf.mxu0
        %v2702 = vadd.f32 0.0, %v2701
        %2703 = vmatmul.f32.gmra.mxu0 %v2664
        %v2704 = vpop.f32.mrf.mxu0
        %v2705 = vadd.f32 0.0, %v2704
        %2706 = vdwg.mxu0
        %v2708 = vsel %vm1807, %v2472, 0
        %v2711 = vsel %vm1807, %v2473, 0
        %v2714 = vsel %vm1807, %v2474, 0
        %v2717 = vsel %vm1807, %v2475, 0
        %v2720 = vsel %vm1807, %v2476, 0
        %v2723 = vsel %vm1807, %v2477, 0
        %v2726 = vsel %vm1807, %v2478, 0
        %v2729 = vsel %vm1807, %v2479, 0
        %2731 = vmatpush.msra.mxu0 0.0
        %2732 = vmatpush.msra.mxu0 0.0
        %2733 = vmatpush.msra.mxu0 0.0
        %2734 = vmatpush.msra.mxu0 0.0
        %2735 = vmatpush.msra.mxu0 0.0
        %2736 = vmatpush.msra.mxu0 0.0
        %2737 = vmatpush.msra.mxu0 0.0
        %2738 = vmatpush.msra.mxu0 0.0
        %2739 = vmatpush.msra.mxu0 %v988
        %2740 = vmatpush.msra.mxu0 %v985
        %2741 = vmatpush.msra.mxu0 %v982
        %2742 = vmatpush.msra.mxu0 %v979
        %2743 = vmatpush.msra.mxu0 %v976
        %2744 = vmatpush.msra.mxu0 %v973
        %2745 = vmatpush.msra.mxu0 %v970
        %2746 = vmatpush.msra.mxu0 %v967
        %2747 = vmatmul.f32.gmra.mxu0 %v2708
        %v2748 = vpop.f32.mrf.mxu0
        %v2749 = vadd.f32 0.0, %v2748
        %2750 = vmatmul.f32.gmra.mxu0 %v2711
        %v2751 = vpop.f32.mrf.mxu0
        %v2752 = vadd.f32 0.0, %v2751
        %2753 = vmatmul.f32.gmra.mxu0 %v2714
        %v2754 = vpop.f32.mrf.mxu0
        %v2755 = vadd.f32 0.0, %v2754
        %2756 = vmatmul.f32.gmra.mxu0 %v2717
        %v2757 = vpop.f32.mrf.mxu0
        %v2758 = vadd.f32 0.0, %v2757
        %2759 = vmatmul.f32.gmra.mxu0 %v2720
        %v2760 = vpop.f32.mrf.mxu0
        %v2761 = vadd.f32 0.0, %v2760
        %2762 = vmatmul.f32.gmra.mxu0 %v2723
        %v2763 = vpop.f32.mrf.mxu0
        %v2764 = vadd.f32 0.0, %v2763
        %2765 = vmatmul.f32.gmra.mxu0 %v2726
        %v2766 = vpop.f32.mrf.mxu0
        %v2767 = vadd.f32 0.0, %v2766
        %2768 = vmatmul.f32.gmra.mxu0 %v2729
        %v2769 = vpop.f32.mrf.mxu0
        %v2770 = vadd.f32 0.0, %v2769
        %2771 = vdwg.mxu0
        %v2773 = vsel %vm1807, %v2480, 0
        %v2776 = vsel %vm1807, %v2481, 0
        %v2779 = vsel %vm1807, %v2482, 0
        %v2782 = vsel %vm1807, %v2483, 0
        %v2785 = vsel %vm1807, %v2484, 0
        %v2788 = vsel %vm1807, %v2485, 0
        %v2791 = vsel %vm1807, %v2486, 0
        %v2794 = vsel %vm1807, %v2487, 0
        %2796 = vmatpush.msra.mxu0 0.0
        %2797 = vmatpush.msra.mxu0 0.0
        %2798 = vmatpush.msra.mxu0 0.0
        %2799 = vmatpush.msra.mxu0 0.0
        %2800 = vmatpush.msra.mxu0 0.0
        %2801 = vmatpush.msra.mxu0 0.0
        %2802 = vmatpush.msra.mxu0 0.0
        %2803 = vmatpush.msra.mxu0 0.0
        %2804 = vmatpush.msra.mxu0 %v1012
        %2805 = vmatpush.msra.mxu0 %v1009
        %2806 = vmatpush.msra.mxu0 %v1006
        %2807 = vmatpush.msra.mxu0 %v1003
        %2808 = vmatpush.msra.mxu0 %v1000
        %2809 = vmatpush.msra.mxu0 %v997
        %2810 = vmatpush.msra.mxu0 %v994
        %2811 = vmatpush.msra.mxu0 %v991
        %2812 = vmatmul.f32.gmra.mxu0 %v2773
        %v2813 = vpop.f32.mrf.mxu0
        %v2814 = vadd.f32 0.0, %v2813
        %2815 = vmatmul.f32.gmra.mxu0 %v2776
        %v2816 = vpop.f32.mrf.mxu0
        %v2817 = vadd.f32 0.0, %v2816
        %2818 = vmatmul.f32.gmra.mxu0 %v2779
        %v2819 = vpop.f32.mrf.mxu0
        %v2820 = vadd.f32 0.0, %v2819
        %2821 = vmatmul.f32.gmra.mxu0 %v2782
        %v2822 = vpop.f32.mrf.mxu0
        %v2823 = vadd.f32 0.0, %v2822
        %2824 = vmatmul.f32.gmra.mxu0 %v2785
        %v2825 = vpop.f32.mrf.mxu0
        %v2826 = vadd.f32 0.0, %v2825
        %2827 = vmatmul.f32.gmra.mxu0 %v2788
        %v2828 = vpop.f32.mrf.mxu0
        %v2829 = vadd.f32 0.0, %v2828
        %2830 = vmatmul.f32.gmra.mxu0 %v2791
        %v2831 = vpop.f32.mrf.mxu0
        %v2832 = vadd.f32 0.0, %v2831
        %2833 = vmatmul.f32.gmra.mxu0 %v2794
        %v2834 = vpop.f32.mrf.mxu0
        %v2835 = vadd.f32 0.0, %v2834
        %2836 = vdwg.mxu0
        %v2838 = vsel %vm1807, %v2488, 0
        %v2841 = vsel %vm1807, %v2489, 0
        %v2844 = vsel %vm1807, %v2490, 0
        %v2847 = vsel %vm1807, %v2491, 0
        %v2850 = vsel %vm1807, %v2492, 0
        %v2853 = vsel %vm1807, %v2493, 0
        %v2856 = vsel %vm1807, %v2494, 0
        %v2859 = vsel %vm1807, %v2495, 0
        %2861 = vmatpush.msra.mxu0 0.0
        %2862 = vmatpush.msra.mxu0 0.0
        %2863 = vmatpush.msra.mxu0 0.0
        %2864 = vmatpush.msra.mxu0 0.0
        %2865 = vmatpush.msra.mxu0 0.0
        %2866 = vmatpush.msra.mxu0 0.0
        %2867 = vmatpush.msra.mxu0 0.0
        %2868 = vmatpush.msra.mxu0 0.0
        %2869 = vmatpush.msra.mxu0 %v1036
        %2870 = vmatpush.msra.mxu0 %v1033
        %2871 = vmatpush.msra.mxu0 %v1030
        %2872 = vmatpush.msra.mxu0 %v1027
        %2873 = vmatpush.msra.mxu0 %v1024
        %2874 = vmatpush.msra.mxu0 %v1021
        %2875 = vmatpush.msra.mxu0 %v1018
        %2876 = vmatpush.msra.mxu0 %v1015
        %2877 = vmatmul.f32.gmra.mxu0 %v2838
        %v2878 = vpop.f32.mrf.mxu0
        %v2879 = vadd.f32 0.0, %v2878
        %2880 = vmatmul.f32.gmra.mxu0 %v2841
        %v2881 = vpop.f32.mrf.mxu0
        %v2882 = vadd.f32 0.0, %v2881
        %2883 = vmatmul.f32.gmra.mxu0 %v2844
        %v2884 = vpop.f32.mrf.mxu0
        %v2885 = vadd.f32 0.0, %v2884
        %2886 = vmatmul.f32.gmra.mxu0 %v2847
        %v2887 = vpop.f32.mrf.mxu0
        %v2888 = vadd.f32 0.0, %v2887
        %2889 = vmatmul.f32.gmra.mxu0 %v2850
        %v2890 = vpop.f32.mrf.mxu0
        %v2891 = vadd.f32 0.0, %v2890
        %2892 = vmatmul.f32.gmra.mxu0 %v2853
        %v2893 = vpop.f32.mrf.mxu0
        %v2894 = vadd.f32 0.0, %v2893
        %2895 = vmatmul.f32.gmra.mxu0 %v2856
        %v2896 = vpop.f32.mrf.mxu0
        %v2897 = vadd.f32 0.0, %v2896
        %2898 = vmatmul.f32.gmra.mxu0 %v2859
        %v2899 = vpop.f32.mrf.mxu0
        %v2900 = vadd.f32 0.0, %v2899
        %2901 = vdwg.mxu0
        %v2903 = vsel %vm1807, %v2496, 0
        %v2906 = vsel %vm1807, %v2497, 0
        %v2909 = vsel %vm1807, %v2498, 0
        %v2912 = vsel %vm1807, %v2499, 0
        %v2915 = vsel %vm1807, %v2500, 0
        %v2918 = vsel %vm1807, %v2501, 0
        %v2921 = vsel %vm1807, %v2502, 0
        %v2924 = vsel %vm1807, %v2503, 0
        %2926 = vmatpush.msra.mxu0 0.0
        %2927 = vmatpush.msra.mxu0 0.0
        %2928 = vmatpush.msra.mxu0 0.0
        %2929 = vmatpush.msra.mxu0 0.0
        %2930 = vmatpush.msra.mxu0 0.0
        %2931 = vmatpush.msra.mxu0 0.0
        %2932 = vmatpush.msra.mxu0 0.0
        %2933 = vmatpush.msra.mxu0 0.0
        %2934 = vmatpush.msra.mxu0 %v1060
        %2935 = vmatpush.msra.mxu0 %v1057
        %2936 = vmatpush.msra.mxu0 %v1054
        %2937 = vmatpush.msra.mxu0 %v1051
        %2938 = vmatpush.msra.mxu0 %v1048
        %2939 = vmatpush.msra.mxu0 %v1045
        %2940 = vmatpush.msra.mxu0 %v1042
        %2941 = vmatpush.msra.mxu0 %v1039
        %2942 = vmatmul.f32.gmra.mxu0 %v2903
        %v2943 = vpop.f32.mrf.mxu0
        %v2944 = vadd.f32 0.0, %v2943
        %2945 = vmatmul.f32.gmra.mxu0 %v2906
        %v2946 = vpop.f32.mrf.mxu0
        %v2947 = vadd.f32 0.0, %v2946
        %2948 = vmatmul.f32.gmra.mxu0 %v2909
        %v2949 = vpop.f32.mrf.mxu0
        %v2950 = vadd.f32 0.0, %v2949
        %2951 = vmatmul.f32.gmra.mxu0 %v2912
        %v2952 = vpop.f32.mrf.mxu0
        %v2953 = vadd.f32 0.0, %v2952
        %2954 = vmatmul.f32.gmra.mxu0 %v2915
        %v2955 = vpop.f32.mrf.mxu0
        %v2956 = vadd.f32 0.0, %v2955
        %2957 = vmatmul.f32.gmra.mxu0 %v2918
        %v2958 = vpop.f32.mrf.mxu0
        %v2959 = vadd.f32 0.0, %v2958
        %2960 = vmatmul.f32.gmra.mxu0 %v2921
        %v2961 = vpop.f32.mrf.mxu0
        %v2962 = vadd.f32 0.0, %v2961
        %2963 = vmatmul.f32.gmra.mxu0 %v2924
        %v2964 = vpop.f32.mrf.mxu0
        %v2965 = vadd.f32 0.0, %v2964
        %2966 = vdwg.mxu0
        %v2968 = vsel %vm1807, %v2504, 0
        %v2971 = vsel %vm1807, %v2505, 0
        %v2974 = vsel %vm1807, %v2506, 0
        %v2977 = vsel %vm1807, %v2507, 0
        %v2980 = vsel %vm1807, %v2508, 0
        %v2983 = vsel %vm1807, %v2509, 0
        %v2986 = vsel %vm1807, %v2510, 0
        %v2989 = vsel %vm1807, %v2511, 0
        %2991 = vmatpush.msra.mxu0 0.0
        %2992 = vmatpush.msra.mxu0 0.0
        %2993 = vmatpush.msra.mxu0 0.0
        %2994 = vmatpush.msra.mxu0 0.0
        %2995 = vmatpush.msra.mxu0 0.0
        %2996 = vmatpush.msra.mxu0 0.0
        %2997 = vmatpush.msra.mxu0 0.0
        %2998 = vmatpush.msra.mxu0 0.0
        %2999 = vmatpush.msra.mxu0 %v1084
        %3000 = vmatpush.msra.mxu0 %v1081
        %3001 = vmatpush.msra.mxu0 %v1078
        %3002 = vmatpush.msra.mxu0 %v1075
        %3003 = vmatpush.msra.mxu0 %v1072
        %3004 = vmatpush.msra.mxu0 %v1069
        %3005 = vmatpush.msra.mxu0 %v1066
        %3006 = vmatpush.msra.mxu0 %v1063
        %3007 = vmatmul.f32.gmra.mxu0 %v2968
        %v3008 = vpop.f32.mrf.mxu0
        %v3009 = vadd.f32 0.0, %v3008
        %3010 = vmatmul.f32.gmra.mxu0 %v2971
        %v3011 = vpop.f32.mrf.mxu0
        %v3012 = vadd.f32 0.0, %v3011
        %3013 = vmatmul.f32.gmra.mxu0 %v2974
        %v3014 = vpop.f32.mrf.mxu0
        %v3015 = vadd.f32 0.0, %v3014
        %3016 = vmatmul.f32.gmra.mxu0 %v2977
        %v3017 = vpop.f32.mrf.mxu0
        %v3018 = vadd.f32 0.0, %v3017
        %3019 = vmatmul.f32.gmra.mxu0 %v2980
        %v3020 = vpop.f32.mrf.mxu0
        %v3021 = vadd.f32 0.0, %v3020
        %3022 = vmatmul.f32.gmra.mxu0 %v2983
        %v3023 = vpop.f32.mrf.mxu0
        %v3024 = vadd.f32 0.0, %v3023
        %3025 = vmatmul.f32.gmra.mxu0 %v2986
        %v3026 = vpop.f32.mrf.mxu0
        %v3027 = vadd.f32 0.0, %v3026
        %3028 = vmatmul.f32.gmra.mxu0 %v2989
        %v3029 = vpop.f32.mrf.mxu0
        %v3030 = vadd.f32 0.0, %v3029
        %3031 = vdwg.mxu0
        %v3032 = vld [vmem:[#allocation8] sm:$0xff]
        %v3033 = vld [vmem:[#allocation8 + $0x8] sm:$0xff]
        %v3034 = vld [vmem:[#allocation8 + $0x10] sm:$0xff]
        %v3035 = vld [vmem:[#allocation8 + $0x18] sm:$0xff]
        %s3036 = scalar_lea.vmem [#allocation10], 64
        %v3037 = vld [vmem:[%s3036] sm:$0xff]
        %v3038 = vld [vmem:[%s3036 + $0x8] sm:$0xff]
        %v3039 = vld [vmem:[%s3036 + $0x10] sm:$0xff]
        %v3040 = vld [vmem:[%s3036 + $0x18] sm:$0xff]
        %v3041 = vld [vmem:[%s3036 + $0x20] sm:$0xff]
        %v3042 = vld [vmem:[%s3036 + $0x28] sm:$0xff]
        %v3043 = vld [vmem:[%s3036 + $0x30] sm:$0xff]
        %v3044 = vld [vmem:[%s3036 + $0x38] sm:$0xff]
        %3045 = vrot.lane.b32.xlu0 %v477, 96
        %v3046 = vpop.permute.xlu0 %3045
        %3047 = vrot.lane.b32.xlu0 %v480, 96
        %v3048 = vpop.permute.xlu0 %3047
        %3049 = vrot.lane.b32.xlu0 %v483, 96
        %v3050 = vpop.permute.xlu0 %3049
        %3051 = vrot.lane.b32.xlu0 %v486, 96
        %v3052 = vpop.permute.xlu0 %3051
        %3053 = vrot.lane.b32.xlu0 %v489, 96
        %v3054 = vpop.permute.xlu0 %3053
        %3055 = vrot.lane.b32.xlu0 %v492, 96
        %v3056 = vpop.permute.xlu0 %3055
        %3057 = vrot.lane.b32.xlu0 %v495, 96
        %v3058 = vpop.permute.xlu0 %3057
        %3059 = vrot.lane.b32.xlu0 %v498, 96
        %v3060 = vpop.permute.xlu0 %3059
        %3061 = vrot.lane.b32.xlu0 %v686, 96
        %v3062 = vpop.permute.xlu0 %3061
        %3063 = vrot.lane.b32.xlu0 %v689, 96
        %v3064 = vpop.permute.xlu0 %3063
        %3065 = vrot.lane.b32.xlu0 %v692, 96
        %v3066 = vpop.permute.xlu0 %3065
        %3067 = vrot.lane.b32.xlu0 %v695, 96
        %v3068 = vpop.permute.xlu0 %3067
        %3069 = vrot.lane.b32.xlu0 %v698, 96
        %v3070 = vpop.permute.xlu0 %3069
        %3071 = vrot.lane.b32.xlu0 %v701, 96
        %v3072 = vpop.permute.xlu0 %3071
        %3073 = vrot.lane.b32.xlu0 %v704, 96
        %v3074 = vpop.permute.xlu0 %3073
        %3075 = vrot.lane.b32.xlu0 %v707, 96
        %v3076 = vpop.permute.xlu0 %3075
        %v3077 = vsel %vm1094, %v3046, 0
        %v3079 = vsel %vm1094, %v3048, 0
        %v3081 = vsel %vm1094, %v3050, 0
        %v3083 = vsel %vm1094, %v3052, 0
        %v3085 = vsel %vm1094, %v3054, 0
        %v3087 = vsel %vm1094, %v3056, 0
        %v3089 = vsel %vm1094, %v3058, 0
        %v3091 = vsel %vm1094, %v3060, 0
        %v3093 = vsel %vm1094, %v3062, 0
        %v3095 = vsel %vm1094, %v3064, 0
        %v3097 = vsel %vm1094, %v3066, 0
        %v3099 = vsel %vm1094, %v3068, 0
        %v3101 = vsel %vm1094, %v3070, 0
        %v3103 = vsel %vm1094, %v3072, 0
        %v3105 = vsel %vm1094, %v3074, 0
        %v3107 = vsel %vm1094, %v3076, 0
        %3109 = vmatpush.xpose.msra.mxu0 0.0
        %3110 = vmatpush.xpose.msra.mxu0 0.0
        %3111 = vmatpush.xpose.msra.mxu0 0.0
        %3112 = vmatpush.xpose.msra.mxu0 0.0
        %3113 = vmatpush.xpose.msra.mxu0 0.0
        %3114 = vmatpush.xpose.msra.mxu0 0.0
        %3115 = vmatpush.xpose.msra.mxu0 0.0
        %3116 = vmatpush.xpose.msra.mxu0 0.0
        %3117 = vmatpush.xpose.msra.mxu0 %v3107
        %3118 = vmatpush.xpose.msra.mxu0 %v3105
        %3119 = vmatpush.xpose.msra.mxu0 %v3103
        %3120 = vmatpush.xpose.msra.mxu0 %v3101
        %3121 = vmatpush.xpose.msra.mxu0 %v3099
        %3122 = vmatpush.xpose.msra.mxu0 %v3097
        %3123 = vmatpush.xpose.msra.mxu0 %v3095
        %3124 = vmatpush.xpose.msra.mxu0 %v3093
        %3125 = vmatmul.f32.gmra.mxu0 %v3077
        %v3126 = vpop.f32.mrf.mxu0
        %v3127 = vadd.f32 %v3037, %v3126
        %3128 = vmatmul.f32.gmra.mxu0 %v3079
        %v3129 = vpop.f32.mrf.mxu0
        %v3130 = vadd.f32 %v3038, %v3129
        %3131 = vmatmul.f32.gmra.mxu0 %v3081
        %v3132 = vpop.f32.mrf.mxu0
        %v3133 = vadd.f32 %v3039, %v3132
        %3134 = vmatmul.f32.gmra.mxu0 %v3083
        %v3135 = vpop.f32.mrf.mxu0
        %v3136 = vadd.f32 %v3040, %v3135
        %3137 = vmatmul.f32.gmra.mxu0 %v3085
        %v3138 = vpop.f32.mrf.mxu0
        %v3139 = vadd.f32 %v3041, %v3138
        %3140 = vmatmul.f32.gmra.mxu0 %v3087
        %v3141 = vpop.f32.mrf.mxu0
        %v3142 = vadd.f32 %v3042, %v3141
        %3143 = vmatmul.f32.gmra.mxu0 %v3089
        %v3144 = vpop.f32.mrf.mxu0
        %v3145 = vadd.f32 %v3043, %v3144
        %3146 = vmatmul.f32.gmra.mxu0 %v3091
        %v3147 = vpop.f32.mrf.mxu0
        %v3148 = vadd.f32 %v3044, %v3147
        %3149 = vdwg.mxu0
        %3150 = vrot.lane.b32.xlu0 %v501, 96
        %v3151 = vpop.permute.xlu0 %3150
        %3152 = vrot.lane.b32.xlu0 %v504, 96
        %v3153 = vpop.permute.xlu0 %3152
        %3154 = vrot.lane.b32.xlu0 %v507, 96
        %v3155 = vpop.permute.xlu0 %3154
        %3156 = vrot.lane.b32.xlu0 %v510, 96
        %v3157 = vpop.permute.xlu0 %3156
        %3158 = vrot.lane.b32.xlu0 %v513, 96
        %v3159 = vpop.permute.xlu0 %3158
        %3160 = vrot.lane.b32.xlu0 %v516, 96
        %v3161 = vpop.permute.xlu0 %3160
        %3162 = vrot.lane.b32.xlu0 %v519, 96
        %v3163 = vpop.permute.xlu0 %3162
        %3164 = vrot.lane.b32.xlu0 %v522, 96
        %v3165 = vpop.permute.xlu0 %3164
        %3166 = vrot.lane.b32.xlu0 %v710, 96
        %v3167 = vpop.permute.xlu0 %3166
        %3168 = vrot.lane.b32.xlu0 %v713, 96
        %v3169 = vpop.permute.xlu0 %3168
        %3170 = vrot.lane.b32.xlu0 %v716, 96
        %v3171 = vpop.permute.xlu0 %3170
        %3172 = vrot.lane.b32.xlu0 %v719, 96
        %v3173 = vpop.permute.xlu0 %3172
        %3174 = vrot.lane.b32.xlu0 %v722, 96
        %v3175 = vpop.permute.xlu0 %3174
        %3176 = vrot.lane.b32.xlu0 %v725, 96
        %v3177 = vpop.permute.xlu0 %3176
        %3178 = vrot.lane.b32.xlu0 %v728, 96
        %v3179 = vpop.permute.xlu0 %3178
        %3180 = vrot.lane.b32.xlu0 %v731, 96
        %v3181 = vpop.permute.xlu0 %3180
        %v3182 = vsel %vm1094, %v3151, 0
        %v3184 = vsel %vm1094, %v3153, 0
        %v3186 = vsel %vm1094, %v3155, 0
        %v3188 = vsel %vm1094, %v3157, 0
        %v3190 = vsel %vm1094, %v3159, 0
        %v3192 = vsel %vm1094, %v3161, 0
        %v3194 = vsel %vm1094, %v3163, 0
        %v3196 = vsel %vm1094, %v3165, 0
        %v3198 = vsel %vm1094, %v3167, 0
        %v3200 = vsel %vm1094, %v3169, 0
        %v3202 = vsel %vm1094, %v3171, 0
        %v3204 = vsel %vm1094, %v3173, 0
        %v3206 = vsel %vm1094, %v3175, 0
        %v3208 = vsel %vm1094, %v3177, 0
        %v3210 = vsel %vm1094, %v3179, 0
        %v3212 = vsel %vm1094, %v3181, 0
        %3214 = vmatpush.xpose.msra.mxu0 0.0
        %3215 = vmatpush.xpose.msra.mxu0 0.0
        %3216 = vmatpush.xpose.msra.mxu0 0.0
        %3217 = vmatpush.xpose.msra.mxu0 0.0
        %3218 = vmatpush.xpose.msra.mxu0 0.0
        %3219 = vmatpush.xpose.msra.mxu0 0.0
        %3220 = vmatpush.xpose.msra.mxu0 0.0
        %3221 = vmatpush.xpose.msra.mxu0 0.0
        %3222 = vmatpush.xpose.msra.mxu0 %v3212
        %3223 = vmatpush.xpose.msra.mxu0 %v3210
        %3224 = vmatpush.xpose.msra.mxu0 %v3208
        %3225 = vmatpush.xpose.msra.mxu0 %v3206
        %3226 = vmatpush.xpose.msra.mxu0 %v3204
        %3227 = vmatpush.xpose.msra.mxu0 %v3202
        %3228 = vmatpush.xpose.msra.mxu0 %v3200
        %3229 = vmatpush.xpose.msra.mxu0 %v3198
        %3230 = vmatmul.f32.gmra.mxu0 %v3182
        %v3231 = vpop.f32.mrf.mxu0
        %v3232 = vadd.f32 %v3037, %v3231
        %3233 = vmatmul.f32.gmra.mxu0 %v3184
        %v3234 = vpop.f32.mrf.mxu0
        %v3235 = vadd.f32 %v3038, %v3234
        %3236 = vmatmul.f32.gmra.mxu0 %v3186
        %v3237 = vpop.f32.mrf.mxu0
        %v3238 = vadd.f32 %v3039, %v3237
        %3239 = vmatmul.f32.gmra.mxu0 %v3188
        %v3240 = vpop.f32.mrf.mxu0
        %v3241 = vadd.f32 %v3040, %v3240
        %3242 = vmatmul.f32.gmra.mxu0 %v3190
        %v3243 = vpop.f32.mrf.mxu0
        %v3244 = vadd.f32 %v3041, %v3243
        %3245 = vmatmul.f32.gmra.mxu0 %v3192
        %v3246 = vpop.f32.mrf.mxu0
        %v3247 = vadd.f32 %v3042, %v3246
        %3248 = vmatmul.f32.gmra.mxu0 %v3194
        %v3249 = vpop.f32.mrf.mxu0
        %v3250 = vadd.f32 %v3043, %v3249
        %3251 = vmatmul.f32.gmra.mxu0 %v3196
        %v3252 = vpop.f32.mrf.mxu0
        %v3253 = vadd.f32 %v3044, %v3252
        %3254 = vdwg.mxu0
        %3255 = vrot.lane.b32.xlu0 %v525, 96
        %v3256 = vpop.permute.xlu0 %3255
        %3257 = vrot.lane.b32.xlu0 %v528, 96
        %v3258 = vpop.permute.xlu0 %3257
        %3259 = vrot.lane.b32.xlu0 %v531, 96
        %v3260 = vpop.permute.xlu0 %3259
        %3261 = vrot.lane.b32.xlu0 %v534, 96
        %v3262 = vpop.permute.xlu0 %3261
        %3263 = vrot.lane.b32.xlu0 %v537, 96
        %v3264 = vpop.permute.xlu0 %3263
        %3265 = vrot.lane.b32.xlu0 %v540, 96
        %v3266 = vpop.permute.xlu0 %3265
        %3267 = vrot.lane.b32.xlu0 %v543, 96
        %v3268 = vpop.permute.xlu0 %3267
        %3269 = vrot.lane.b32.xlu0 %v546, 96
        %v3270 = vpop.permute.xlu0 %3269
        %3271 = vrot.lane.b32.xlu0 %v734, 96
        %v3272 = vpop.permute.xlu0 %3271
        %3273 = vrot.lane.b32.xlu0 %v737, 96
        %v3274 = vpop.permute.xlu0 %3273
        %3275 = vrot.lane.b32.xlu0 %v740, 96
        %v3276 = vpop.permute.xlu0 %3275
        %3277 = vrot.lane.b32.xlu0 %v743, 96
        %v3278 = vpop.permute.xlu0 %3277
        %3279 = vrot.lane.b32.xlu0 %v746, 96
        %v3280 = vpop.permute.xlu0 %3279
        %3281 = vrot.lane.b32.xlu0 %v749, 96
        %v3282 = vpop.permute.xlu0 %3281
        %3283 = vrot.lane.b32.xlu0 %v752, 96
        %v3284 = vpop.permute.xlu0 %3283
        %3285 = vrot.lane.b32.xlu0 %v755, 96
        %v3286 = vpop.permute.xlu0 %3285
        %v3287 = vsel %vm1094, %v3256, 0
        %v3289 = vsel %vm1094, %v3258, 0
        %v3291 = vsel %vm1094, %v3260, 0
        %v3293 = vsel %vm1094, %v3262, 0
        %v3295 = vsel %vm1094, %v3264, 0
        %v3297 = vsel %vm1094, %v3266, 0
        %v3299 = vsel %vm1094, %v3268, 0
        %v3301 = vsel %vm1094, %v3270, 0
        %v3303 = vsel %vm1094, %v3272, 0
        %v3305 = vsel %vm1094, %v3274, 0
        %v3307 = vsel %vm1094, %v3276, 0
        %v3309 = vsel %vm1094, %v3278, 0
        %v3311 = vsel %vm1094, %v3280, 0
        %v3313 = vsel %vm1094, %v3282, 0
        %v3315 = vsel %vm1094, %v3284, 0
        %v3317 = vsel %vm1094, %v3286, 0
        %3319 = vmatpush.xpose.msra.mxu0 0.0
        %3320 = vmatpush.xpose.msra.mxu0 0.0
        %3321 = vmatpush.xpose.msra.mxu0 0.0
        %3322 = vmatpush.xpose.msra.mxu0 0.0
        %3323 = vmatpush.xpose.msra.mxu0 0.0
        %3324 = vmatpush.xpose.msra.mxu0 0.0
        %3325 = vmatpush.xpose.msra.mxu0 0.0
        %3326 = vmatpush.xpose.msra.mxu0 0.0
        %3327 = vmatpush.xpose.msra.mxu0 %v3317
        %3328 = vmatpush.xpose.msra.mxu0 %v3315
        %3329 = vmatpush.xpose.msra.mxu0 %v3313
        %3330 = vmatpush.xpose.msra.mxu0 %v3311
        %3331 = vmatpush.xpose.msra.mxu0 %v3309
        %3332 = vmatpush.xpose.msra.mxu0 %v3307
        %3333 = vmatpush.xpose.msra.mxu0 %v3305
        %3334 = vmatpush.xpose.msra.mxu0 %v3303
        %3335 = vmatmul.f32.gmra.mxu0 %v3287
        %v3336 = vpop.f32.mrf.mxu0
        %v3337 = vadd.f32 %v3037, %v3336
        %3338 = vmatmul.f32.gmra.mxu0 %v3289
        %v3339 = vpop.f32.mrf.mxu0
        %v3340 = vadd.f32 %v3038, %v3339
        %3341 = vmatmul.f32.gmra.mxu0 %v3291
        %v3342 = vpop.f32.mrf.mxu0
        %v3343 = vadd.f32 %v3039, %v3342
        %3344 = vmatmul.f32.gmra.mxu0 %v3293
        %v3345 = vpop.f32.mrf.mxu0
        %v3346 = vadd.f32 %v3040, %v3345
        %3347 = vmatmul.f32.gmra.mxu0 %v3295
        %v3348 = vpop.f32.mrf.mxu0
        %v3349 = vadd.f32 %v3041, %v3348
        %3350 = vmatmul.f32.gmra.mxu0 %v3297
        %v3351 = vpop.f32.mrf.mxu0
        %v3352 = vadd.f32 %v3042, %v3351
        %3353 = vmatmul.f32.gmra.mxu0 %v3299
        %v3354 = vpop.f32.mrf.mxu0
        %v3355 = vadd.f32 %v3043, %v3354
        %3356 = vmatmul.f32.gmra.mxu0 %v3301
        %v3357 = vpop.f32.mrf.mxu0
        %v3358 = vadd.f32 %v3044, %v3357
        %3359 = vdwg.mxu0
        %3360 = vrot.lane.b32.xlu0 %v549, 96
        %v3361 = vpop.permute.xlu0 %3360
        %3362 = vrot.lane.b32.xlu0 %v552, 96
        %v3363 = vpop.permute.xlu0 %3362
        %3364 = vrot.lane.b32.xlu0 %v555, 96
        %v3365 = vpop.permute.xlu0 %3364
        %3366 = vrot.lane.b32.xlu0 %v558, 96
        %v3367 = vpop.permute.xlu0 %3366
        %3368 = vrot.lane.b32.xlu0 %v561, 96
        %v3369 = vpop.permute.xlu0 %3368
        %3370 = vrot.lane.b32.xlu0 %v564, 96
        %v3371 = vpop.permute.xlu0 %3370
        %3372 = vrot.lane.b32.xlu0 %v567, 96
        %v3373 = vpop.permute.xlu0 %3372
        %3374 = vrot.lane.b32.xlu0 %v570, 96
        %v3375 = vpop.permute.xlu0 %3374
        %3376 = vrot.lane.b32.xlu0 %v758, 96
        %v3377 = vpop.permute.xlu0 %3376
        %3378 = vrot.lane.b32.xlu0 %v761, 96
        %v3379 = vpop.permute.xlu0 %3378
        %3380 = vrot.lane.b32.xlu0 %v764, 96
        %v3381 = vpop.permute.xlu0 %3380
        %3382 = vrot.lane.b32.xlu0 %v767, 96
        %v3383 = vpop.permute.xlu0 %3382
        %3384 = vrot.lane.b32.xlu0 %v770, 96
        %v3385 = vpop.permute.xlu0 %3384
        %3386 = vrot.lane.b32.xlu0 %v773, 96
        %v3387 = vpop.permute.xlu0 %3386
        %3388 = vrot.lane.b32.xlu0 %v776, 96
        %v3389 = vpop.permute.xlu0 %3388
        %3390 = vrot.lane.b32.xlu0 %v779, 96
        %v3391 = vpop.permute.xlu0 %3390
        %v3392 = vsel %vm1094, %v3361, 0
        %v3394 = vsel %vm1094, %v3363, 0
        %v3396 = vsel %vm1094, %v3365, 0
        %v3398 = vsel %vm1094, %v3367, 0
        %v3400 = vsel %vm1094, %v3369, 0
        %v3402 = vsel %vm1094, %v3371, 0
        %v3404 = vsel %vm1094, %v3373, 0
        %v3406 = vsel %vm1094, %v3375, 0
        %v3408 = vsel %vm1094, %v3377, 0
        %v3410 = vsel %vm1094, %v3379, 0
        %v3412 = vsel %vm1094, %v3381, 0
        %v3414 = vsel %vm1094, %v3383, 0
        %v3416 = vsel %vm1094, %v3385, 0
        %v3418 = vsel %vm1094, %v3387, 0
        %v3420 = vsel %vm1094, %v3389, 0
        %v3422 = vsel %vm1094, %v3391, 0
        %3424 = vmatpush.xpose.msra.mxu0 0.0
        %3425 = vmatpush.xpose.msra.mxu0 0.0
        %3426 = vmatpush.xpose.msra.mxu0 0.0
        %3427 = vmatpush.xpose.msra.mxu0 0.0
        %3428 = vmatpush.xpose.msra.mxu0 0.0
        %3429 = vmatpush.xpose.msra.mxu0 0.0
        %3430 = vmatpush.xpose.msra.mxu0 0.0
        %3431 = vmatpush.xpose.msra.mxu0 0.0
        %3432 = vmatpush.xpose.msra.mxu0 %v3422
        %3433 = vmatpush.xpose.msra.mxu0 %v3420
        %3434 = vmatpush.xpose.msra.mxu0 %v3418
        %3435 = vmatpush.xpose.msra.mxu0 %v3416
        %3436 = vmatpush.xpose.msra.mxu0 %v3414
        %3437 = vmatpush.xpose.msra.mxu0 %v3412
        %3438 = vmatpush.xpose.msra.mxu0 %v3410
        %3439 = vmatpush.xpose.msra.mxu0 %v3408
        %3440 = vmatmul.f32.gmra.mxu0 %v3392
        %v3441 = vpop.f32.mrf.mxu0
        %v3442 = vadd.f32 %v3037, %v3441
        %3443 = vmatmul.f32.gmra.mxu0 %v3394
        %v3444 = vpop.f32.mrf.mxu0
        %v3445 = vadd.f32 %v3038, %v3444
        %3446 = vmatmul.f32.gmra.mxu0 %v3396
        %v3447 = vpop.f32.mrf.mxu0
        %v3448 = vadd.f32 %v3039, %v3447
        %3449 = vmatmul.f32.gmra.mxu0 %v3398
        %v3450 = vpop.f32.mrf.mxu0
        %v3451 = vadd.f32 %v3040, %v3450
        %3452 = vmatmul.f32.gmra.mxu0 %v3400
        %v3453 = vpop.f32.mrf.mxu0
        %v3454 = vadd.f32 %v3041, %v3453
        %3455 = vmatmul.f32.gmra.mxu0 %v3402
        %v3456 = vpop.f32.mrf.mxu0
        %v3457 = vadd.f32 %v3042, %v3456
        %3458 = vmatmul.f32.gmra.mxu0 %v3404
        %v3459 = vpop.f32.mrf.mxu0
        %v3460 = vadd.f32 %v3043, %v3459
        %3461 = vmatmul.f32.gmra.mxu0 %v3406
        %v3462 = vpop.f32.mrf.mxu0
        %v3463 = vadd.f32 %v3044, %v3462
        %3464 = vdwg.mxu0
        %3465 = vrot.lane.b32.xlu0 %v573, 96
        %v3466 = vpop.permute.xlu0 %3465
        %3467 = vrot.lane.b32.xlu0 %v576, 96
        %v3468 = vpop.permute.xlu0 %3467
        %3469 = vrot.lane.b32.xlu0 %v579, 96
        %v3470 = vpop.permute.xlu0 %3469
        %3471 = vrot.lane.b32.xlu0 %v582, 96
        %v3472 = vpop.permute.xlu0 %3471
        %3473 = vrot.lane.b32.xlu0 %v585, 96
        %v3474 = vpop.permute.xlu0 %3473
        %3475 = vrot.lane.b32.xlu0 %v588, 96
        %v3476 = vpop.permute.xlu0 %3475
        %3477 = vrot.lane.b32.xlu0 %v591, 96
        %v3478 = vpop.permute.xlu0 %3477
        %3479 = vrot.lane.b32.xlu0 %v594, 96
        %v3480 = vpop.permute.xlu0 %3479
        %3481 = vrot.lane.b32.xlu0 %v782, 96
        %v3482 = vpop.permute.xlu0 %3481
        %3483 = vrot.lane.b32.xlu0 %v785, 96
        %v3484 = vpop.permute.xlu0 %3483
        %3485 = vrot.lane.b32.xlu0 %v788, 96
        %v3486 = vpop.permute.xlu0 %3485
        %3487 = vrot.lane.b32.xlu0 %v791, 96
        %v3488 = vpop.permute.xlu0 %3487
        %3489 = vrot.lane.b32.xlu0 %v794, 96
        %v3490 = vpop.permute.xlu0 %3489
        %3491 = vrot.lane.b32.xlu0 %v797, 96
        %v3492 = vpop.permute.xlu0 %3491
        %3493 = vrot.lane.b32.xlu0 %v800, 96
        %v3494 = vpop.permute.xlu0 %3493
        %3495 = vrot.lane.b32.xlu0 %v803, 96
        %v3496 = vpop.permute.xlu0 %3495
        %v3497 = vsel %vm1094, %v3466, 0
        %v3499 = vsel %vm1094, %v3468, 0
        %v3501 = vsel %vm1094, %v3470, 0
        %v3503 = vsel %vm1094, %v3472, 0
        %v3505 = vsel %vm1094, %v3474, 0
        %v3507 = vsel %vm1094, %v3476, 0
        %v3509 = vsel %vm1094, %v3478, 0
        %v3511 = vsel %vm1094, %v3480, 0
        %v3513 = vsel %vm1094, %v3482, 0
        %v3515 = vsel %vm1094, %v3484, 0
        %v3517 = vsel %vm1094, %v3486, 0
        %v3519 = vsel %vm1094, %v3488, 0
        %v3521 = vsel %vm1094, %v3490, 0
        %v3523 = vsel %vm1094, %v3492, 0
        %v3525 = vsel %vm1094, %v3494, 0
        %v3527 = vsel %vm1094, %v3496, 0
        %3529 = vmatpush.xpose.msra.mxu0 0.0
        %3530 = vmatpush.xpose.msra.mxu0 0.0
        %3531 = vmatpush.xpose.msra.mxu0 0.0
        %3532 = vmatpush.xpose.msra.mxu0 0.0
        %3533 = vmatpush.xpose.msra.mxu0 0.0
        %3534 = vmatpush.xpose.msra.mxu0 0.0
        %3535 = vmatpush.xpose.msra.mxu0 0.0
        %3536 = vmatpush.xpose.msra.mxu0 0.0
        %3537 = vmatpush.xpose.msra.mxu0 %v3527
        %3538 = vmatpush.xpose.msra.mxu0 %v3525
        %3539 = vmatpush.xpose.msra.mxu0 %v3523
        %3540 = vmatpush.xpose.msra.mxu0 %v3521
        %3541 = vmatpush.xpose.msra.mxu0 %v3519
        %3542 = vmatpush.xpose.msra.mxu0 %v3517
        %3543 = vmatpush.xpose.msra.mxu0 %v3515
        %3544 = vmatpush.xpose.msra.mxu0 %v3513
        %3545 = vmatmul.f32.gmra.mxu0 %v3497
        %v3546 = vpop.f32.mrf.mxu0
        %v3547 = vadd.f32 %v3037, %v3546
        %3548 = vmatmul.f32.gmra.mxu0 %v3499
        %v3549 = vpop.f32.mrf.mxu0
        %v3550 = vadd.f32 %v3038, %v3549
        %3551 = vmatmul.f32.gmra.mxu0 %v3501
        %v3552 = vpop.f32.mrf.mxu0
        %v3553 = vadd.f32 %v3039, %v3552
        %3554 = vmatmul.f32.gmra.mxu0 %v3503
        %v3555 = vpop.f32.mrf.mxu0
        %v3556 = vadd.f32 %v3040, %v3555
        %3557 = vmatmul.f32.gmra.mxu0 %v3505
        %v3558 = vpop.f32.mrf.mxu0
        %v3559 = vadd.f32 %v3041, %v3558
        %3560 = vmatmul.f32.gmra.mxu0 %v3507
        %v3561 = vpop.f32.mrf.mxu0
        %v3562 = vadd.f32 %v3042, %v3561
        %3563 = vmatmul.f32.gmra.mxu0 %v3509
        %v3564 = vpop.f32.mrf.mxu0
        %v3565 = vadd.f32 %v3043, %v3564
        %3566 = vmatmul.f32.gmra.mxu0 %v3511
        %v3567 = vpop.f32.mrf.mxu0
        %v3568 = vadd.f32 %v3044, %v3567
        %3569 = vdwg.mxu0
        %3570 = vrot.lane.b32.xlu0 %v597, 96
        %v3571 = vpop.permute.xlu0 %3570
        %3572 = vrot.lane.b32.xlu0 %v600, 96
        %v3573 = vpop.permute.xlu0 %3572
        %3574 = vrot.lane.b32.xlu0 %v603, 96
        %v3575 = vpop.permute.xlu0 %3574
        %3576 = vrot.lane.b32.xlu0 %v606, 96
        %v3577 = vpop.permute.xlu0 %3576
        %3578 = vrot.lane.b32.xlu0 %v609, 96
        %v3579 = vpop.permute.xlu0 %3578
        %3580 = vrot.lane.b32.xlu0 %v612, 96
        %v3581 = vpop.permute.xlu0 %3580
        %3582 = vrot.lane.b32.xlu0 %v615, 96
        %v3583 = vpop.permute.xlu0 %3582
        %3584 = vrot.lane.b32.xlu0 %v618, 96
        %v3585 = vpop.permute.xlu0 %3584
        %3586 = vrot.lane.b32.xlu0 %v806, 96
        %v3587 = vpop.permute.xlu0 %3586
        %3588 = vrot.lane.b32.xlu0 %v809, 96
        %v3589 = vpop.permute.xlu0 %3588
        %3590 = vrot.lane.b32.xlu0 %v812, 96
        %v3591 = vpop.permute.xlu0 %3590
        %3592 = vrot.lane.b32.xlu0 %v815, 96
        %v3593 = vpop.permute.xlu0 %3592
        %3594 = vrot.lane.b32.xlu0 %v818, 96
        %v3595 = vpop.permute.xlu0 %3594
        %3596 = vrot.lane.b32.xlu0 %v821, 96
        %v3597 = vpop.permute.xlu0 %3596
        %3598 = vrot.lane.b32.xlu0 %v824, 96
        %v3599 = vpop.permute.xlu0 %3598
        %3600 = vrot.lane.b32.xlu0 %v827, 96
        %v3601 = vpop.permute.xlu0 %3600
        %v3602 = vsel %vm1094, %v3571, 0
        %v3604 = vsel %vm1094, %v3573, 0
        %v3606 = vsel %vm1094, %v3575, 0
        %v3608 = vsel %vm1094, %v3577, 0
        %v3610 = vsel %vm1094, %v3579, 0
        %v3612 = vsel %vm1094, %v3581, 0
        %v3614 = vsel %vm1094, %v3583, 0
        %v3616 = vsel %vm1094, %v3585, 0
        %v3618 = vsel %vm1094, %v3587, 0
        %v3620 = vsel %vm1094, %v3589, 0
        %v3622 = vsel %vm1094, %v3591, 0
        %v3624 = vsel %vm1094, %v3593, 0
        %v3626 = vsel %vm1094, %v3595, 0
        %v3628 = vsel %vm1094, %v3597, 0
        %v3630 = vsel %vm1094, %v3599, 0
        %v3632 = vsel %vm1094, %v3601, 0
        %3634 = vmatpush.xpose.msra.mxu0 0.0
        %3635 = vmatpush.xpose.msra.mxu0 0.0
        %3636 = vmatpush.xpose.msra.mxu0 0.0
        %3637 = vmatpush.xpose.msra.mxu0 0.0
        %3638 = vmatpush.xpose.msra.mxu0 0.0
        %3639 = vmatpush.xpose.msra.mxu0 0.0
        %3640 = vmatpush.xpose.msra.mxu0 0.0
        %3641 = vmatpush.xpose.msra.mxu0 0.0
        %3642 = vmatpush.xpose.msra.mxu0 %v3632
        %3643 = vmatpush.xpose.msra.mxu0 %v3630
        %3644 = vmatpush.xpose.msra.mxu0 %v3628
        %3645 = vmatpush.xpose.msra.mxu0 %v3626
        %3646 = vmatpush.xpose.msra.mxu0 %v3624
        %3647 = vmatpush.xpose.msra.mxu0 %v3622
        %3648 = vmatpush.xpose.msra.mxu0 %v3620
        %3649 = vmatpush.xpose.msra.mxu0 %v3618
        %3650 = vmatmul.f32.gmra.mxu0 %v3602
        %v3651 = vpop.f32.mrf.mxu0
        %v3652 = vadd.f32 %v3037, %v3651
        %3653 = vmatmul.f32.gmra.mxu0 %v3604
        %v3654 = vpop.f32.mrf.mxu0
        %v3655 = vadd.f32 %v3038, %v3654
        %3656 = vmatmul.f32.gmra.mxu0 %v3606
        %v3657 = vpop.f32.mrf.mxu0
        %v3658 = vadd.f32 %v3039, %v3657
        %3659 = vmatmul.f32.gmra.mxu0 %v3608
        %v3660 = vpop.f32.mrf.mxu0
        %v3661 = vadd.f32 %v3040, %v3660
        %3662 = vmatmul.f32.gmra.mxu0 %v3610
        %v3663 = vpop.f32.mrf.mxu0
        %v3664 = vadd.f32 %v3041, %v3663
        %3665 = vmatmul.f32.gmra.mxu0 %v3612
        %v3666 = vpop.f32.mrf.mxu0
        %v3667 = vadd.f32 %v3042, %v3666
        %3668 = vmatmul.f32.gmra.mxu0 %v3614
        %v3669 = vpop.f32.mrf.mxu0
        %v3670 = vadd.f32 %v3043, %v3669
        %3671 = vmatmul.f32.gmra.mxu0 %v3616
        %v3672 = vpop.f32.mrf.mxu0
        %v3673 = vadd.f32 %v3044, %v3672
        %3674 = vdwg.mxu0
        %3675 = vrot.lane.b32.xlu0 %v621, 96
        %v3676 = vpop.permute.xlu0 %3675
        %3677 = vrot.lane.b32.xlu0 %v624, 96
        %v3678 = vpop.permute.xlu0 %3677
        %3679 = vrot.lane.b32.xlu0 %v627, 96
        %v3680 = vpop.permute.xlu0 %3679
        %3681 = vrot.lane.b32.xlu0 %v630, 96
        %v3682 = vpop.permute.xlu0 %3681
        %3683 = vrot.lane.b32.xlu0 %v633, 96
        %v3684 = vpop.permute.xlu0 %3683
        %3685 = vrot.lane.b32.xlu0 %v636, 96
        %v3686 = vpop.permute.xlu0 %3685
        %3687 = vrot.lane.b32.xlu0 %v639, 96
        %v3688 = vpop.permute.xlu0 %3687
        %3689 = vrot.lane.b32.xlu0 %v642, 96
        %v3690 = vpop.permute.xlu0 %3689
        %3691 = vrot.lane.b32.xlu0 %v830, 96
        %v3692 = vpop.permute.xlu0 %3691
        %3693 = vrot.lane.b32.xlu0 %v833, 96
        %v3694 = vpop.permute.xlu0 %3693
        %3695 = vrot.lane.b32.xlu0 %v836, 96
        %v3696 = vpop.permute.xlu0 %3695
        %3697 = vrot.lane.b32.xlu0 %v839, 96
        %v3698 = vpop.permute.xlu0 %3697
        %3699 = vrot.lane.b32.xlu0 %v842, 96
        %v3700 = vpop.permute.xlu0 %3699
        %3701 = vrot.lane.b32.xlu0 %v845, 96
        %v3702 = vpop.permute.xlu0 %3701
        %3703 = vrot.lane.b32.xlu0 %v848, 96
        %v3704 = vpop.permute.xlu0 %3703
        %3705 = vrot.lane.b32.xlu0 %v851, 96
        %v3706 = vpop.permute.xlu0 %3705
        %v3707 = vsel %vm1094, %v3676, 0
        %v3709 = vsel %vm1094, %v3678, 0
        %v3711 = vsel %vm1094, %v3680, 0
        %v3713 = vsel %vm1094, %v3682, 0
        %v3715 = vsel %vm1094, %v3684, 0
        %v3717 = vsel %vm1094, %v3686, 0
        %v3719 = vsel %vm1094, %v3688, 0
        %v3721 = vsel %vm1094, %v3690, 0
        %v3723 = vsel %vm1094, %v3692, 0
        %v3725 = vsel %vm1094, %v3694, 0
        %v3727 = vsel %vm1094, %v3696, 0
        %v3729 = vsel %vm1094, %v3698, 0
        %v3731 = vsel %vm1094, %v3700, 0
        %v3733 = vsel %vm1094, %v3702, 0
        %v3735 = vsel %vm1094, %v3704, 0
        %v3737 = vsel %vm1094, %v3706, 0
        %3739 = vmatpush.xpose.msra.mxu0 0.0
        %3740 = vmatpush.xpose.msra.mxu0 0.0
        %3741 = vmatpush.xpose.msra.mxu0 0.0
        %3742 = vmatpush.xpose.msra.mxu0 0.0
        %3743 = vmatpush.xpose.msra.mxu0 0.0
        %3744 = vmatpush.xpose.msra.mxu0 0.0
        %3745 = vmatpush.xpose.msra.mxu0 0.0
        %3746 = vmatpush.xpose.msra.mxu0 0.0
        %3747 = vmatpush.xpose.msra.mxu0 %v3737
        %3748 = vmatpush.xpose.msra.mxu0 %v3735
        %3749 = vmatpush.xpose.msra.mxu0 %v3733
        %3750 = vmatpush.xpose.msra.mxu0 %v3731
        %3751 = vmatpush.xpose.msra.mxu0 %v3729
        %3752 = vmatpush.xpose.msra.mxu0 %v3727
        %3753 = vmatpush.xpose.msra.mxu0 %v3725
        %3754 = vmatpush.xpose.msra.mxu0 %v3723
        %3755 = vmatmul.f32.gmra.mxu0 %v3707
        %v3756 = vpop.f32.mrf.mxu0
        %v3757 = vadd.f32 %v3037, %v3756
        %3758 = vmatmul.f32.gmra.mxu0 %v3709
        %v3759 = vpop.f32.mrf.mxu0
        %v3760 = vadd.f32 %v3038, %v3759
        %3761 = vmatmul.f32.gmra.mxu0 %v3711
        %v3762 = vpop.f32.mrf.mxu0
        %v3763 = vadd.f32 %v3039, %v3762
        %3764 = vmatmul.f32.gmra.mxu0 %v3713
        %v3765 = vpop.f32.mrf.mxu0
        %v3766 = vadd.f32 %v3040, %v3765
        %3767 = vmatmul.f32.gmra.mxu0 %v3715
        %v3768 = vpop.f32.mrf.mxu0
        %v3769 = vadd.f32 %v3041, %v3768
        %3770 = vmatmul.f32.gmra.mxu0 %v3717
        %v3771 = vpop.f32.mrf.mxu0
        %v3772 = vadd.f32 %v3042, %v3771
        %3773 = vmatmul.f32.gmra.mxu0 %v3719
        %v3774 = vpop.f32.mrf.mxu0
        %v3775 = vadd.f32 %v3043, %v3774
        %3776 = vmatmul.f32.gmra.mxu0 %v3721
        %v3777 = vpop.f32.mrf.mxu0
        %v3778 = vadd.f32 %v3044, %v3777
        %3779 = vdwg.mxu0
        %3780 = vrot.lane.b32.xlu0 %v645, 96
        %v3781 = vpop.permute.xlu0 %3780
        %3782 = vrot.lane.b32.xlu0 %v648, 96
        %v3783 = vpop.permute.xlu0 %3782
        %3784 = vrot.lane.b32.xlu0 %v651, 96
        %v3785 = vpop.permute.xlu0 %3784
        %3786 = vrot.lane.b32.xlu0 %v654, 96
        %v3787 = vpop.permute.xlu0 %3786
        %3788 = vrot.lane.b32.xlu0 %v657, 96
        %v3789 = vpop.permute.xlu0 %3788
        %3790 = vrot.lane.b32.xlu0 %v660, 96
        %v3791 = vpop.permute.xlu0 %3790
        %3792 = vrot.lane.b32.xlu0 %v663, 96
        %v3793 = vpop.permute.xlu0 %3792
        %3794 = vrot.lane.b32.xlu0 %v666, 96
        %v3795 = vpop.permute.xlu0 %3794
        %3796 = vrot.lane.b32.xlu0 %v854, 96
        %v3797 = vpop.permute.xlu0 %3796
        %3798 = vrot.lane.b32.xlu0 %v857, 96
        %v3799 = vpop.permute.xlu0 %3798
        %3800 = vrot.lane.b32.xlu0 %v860, 96
        %v3801 = vpop.permute.xlu0 %3800
        %3802 = vrot.lane.b32.xlu0 %v863, 96
        %v3803 = vpop.permute.xlu0 %3802
        %3804 = vrot.lane.b32.xlu0 %v866, 96
        %v3805 = vpop.permute.xlu0 %3804
        %3806 = vrot.lane.b32.xlu0 %v869, 96
        %v3807 = vpop.permute.xlu0 %3806
        %3808 = vrot.lane.b32.xlu0 %v872, 96
        %v3809 = vpop.permute.xlu0 %3808
        %3810 = vrot.lane.b32.xlu0 %v875, 96
        %v3811 = vpop.permute.xlu0 %3810
        %v3812 = vsel %vm1094, %v3781, 0
        %v3814 = vsel %vm1094, %v3783, 0
        %v3816 = vsel %vm1094, %v3785, 0
        %v3818 = vsel %vm1094, %v3787, 0
        %v3820 = vsel %vm1094, %v3789, 0
        %v3822 = vsel %vm1094, %v3791, 0
        %v3824 = vsel %vm1094, %v3793, 0
        %v3826 = vsel %vm1094, %v3795, 0
        %v3828 = vsel %vm1094, %v3797, 0
        %v3830 = vsel %vm1094, %v3799, 0
        %v3832 = vsel %vm1094, %v3801, 0
        %v3834 = vsel %vm1094, %v3803, 0
        %v3836 = vsel %vm1094, %v3805, 0
        %v3838 = vsel %vm1094, %v3807, 0
        %v3840 = vsel %vm1094, %v3809, 0
        %v3842 = vsel %vm1094, %v3811, 0
        %3844 = vmatpush.xpose.msra.mxu0 0.0
        %3845 = vmatpush.xpose.msra.mxu0 0.0
        %3846 = vmatpush.xpose.msra.mxu0 0.0
        %3847 = vmatpush.xpose.msra.mxu0 0.0
        %3848 = vmatpush.xpose.msra.mxu0 0.0
        %3849 = vmatpush.xpose.msra.mxu0 0.0
        %3850 = vmatpush.xpose.msra.mxu0 0.0
        %3851 = vmatpush.xpose.msra.mxu0 0.0
        %3852 = vmatpush.xpose.msra.mxu0 %v3842
        %3853 = vmatpush.xpose.msra.mxu0 %v3840
        %3854 = vmatpush.xpose.msra.mxu0 %v3838
        %3855 = vmatpush.xpose.msra.mxu0 %v3836
        %3856 = vmatpush.xpose.msra.mxu0 %v3834
        %3857 = vmatpush.xpose.msra.mxu0 %v3832
        %3858 = vmatpush.xpose.msra.mxu0 %v3830
        %3859 = vmatpush.xpose.msra.mxu0 %v3828
        %3860 = vmatmul.f32.gmra.mxu0 %v3812
        %v3861 = vpop.f32.mrf.mxu0
        %v3862 = vadd.f32 %v3037, %v3861
        %3863 = vmatmul.f32.gmra.mxu0 %v3814
        %v3864 = vpop.f32.mrf.mxu0
        %v3865 = vadd.f32 %v3038, %v3864
        %3866 = vmatmul.f32.gmra.mxu0 %v3816
        %v3867 = vpop.f32.mrf.mxu0
        %v3868 = vadd.f32 %v3039, %v3867
        %3869 = vmatmul.f32.gmra.mxu0 %v3818
        %v3870 = vpop.f32.mrf.mxu0
        %v3871 = vadd.f32 %v3040, %v3870
        %3872 = vmatmul.f32.gmra.mxu0 %v3820
        %v3873 = vpop.f32.mrf.mxu0
        %v3874 = vadd.f32 %v3041, %v3873
        %3875 = vmatmul.f32.gmra.mxu0 %v3822
        %v3876 = vpop.f32.mrf.mxu0
        %v3877 = vadd.f32 %v3042, %v3876
        %3878 = vmatmul.f32.gmra.mxu0 %v3824
        %v3879 = vpop.f32.mrf.mxu0
        %v3880 = vadd.f32 %v3043, %v3879
        %3881 = vmatmul.f32.gmra.mxu0 %v3826
        %v3882 = vpop.f32.mrf.mxu0
        %v3883 = vadd.f32 %v3044, %v3882
        %3884 = vdwg.mxu0
        %v3885 = vsel %vm1807, %v3127, -inf
        %3886 = vmax.xlane.f32.xlu0 %v3885
        %v3887 = vpop.xlane.xlu0 %3886
        %v3888 = vsel %vm1807, %v3130, -inf
        %3889 = vmax.xlane.f32.xlu0 %v3888
        %v3890 = vpop.xlane.xlu0 %3889
        %v3891 = vsel %vm1807, %v3133, -inf
        %3892 = vmax.xlane.f32.xlu0 %v3891
        %v3893 = vpop.xlane.xlu0 %3892
        %v3894 = vsel %vm1807, %v3136, -inf
        %3895 = vmax.xlane.f32.xlu0 %v3894
        %v3896 = vpop.xlane.xlu0 %3895
        %v3897 = vsel %vm1807, %v3139, -inf
        %3898 = vmax.xlane.f32.xlu0 %v3897
        %v3899 = vpop.xlane.xlu0 %3898
        %v3900 = vsel %vm1807, %v3142, -inf
        %3901 = vmax.xlane.f32.xlu0 %v3900
        %v3902 = vpop.xlane.xlu0 %3901
        %v3903 = vsel %vm1807, %v3145, -inf
        %3904 = vmax.xlane.f32.xlu0 %v3903
        %v3905 = vpop.xlane.xlu0 %3904
        %v3906 = vsel %vm1807, %v3148, -inf
        %3907 = vmax.xlane.f32.xlu0 %v3906
        %v3908 = vpop.xlane.xlu0 %3907
        %v3909 = vsel %vm1807, %v3232, -inf
        %3910 = vmax.xlane.f32.xlu0 %v3909
        %v3911 = vpop.xlane.xlu0 %3910
        %v3912 = vsel %vm1807, %v3235, -inf
        %3913 = vmax.xlane.f32.xlu0 %v3912
        %v3914 = vpop.xlane.xlu0 %3913
        %v3915 = vsel %vm1807, %v3238, -inf
        %3916 = vmax.xlane.f32.xlu0 %v3915
        %v3917 = vpop.xlane.xlu0 %3916
        %v3918 = vsel %vm1807, %v3241, -inf
        %3919 = vmax.xlane.f32.xlu0 %v3918
        %v3920 = vpop.xlane.xlu0 %3919
        %v3921 = vsel %vm1807, %v3244, -inf
        %3922 = vmax.xlane.f32.xlu0 %v3921
        %v3923 = vpop.xlane.xlu0 %3922
        %v3924 = vsel %vm1807, %v3247, -inf
        %3925 = vmax.xlane.f32.xlu0 %v3924
        %v3926 = vpop.xlane.xlu0 %3925
        %v3927 = vsel %vm1807, %v3250, -inf
        %3928 = vmax.xlane.f32.xlu0 %v3927
        %v3929 = vpop.xlane.xlu0 %3928
        %v3930 = vsel %vm1807, %v3253, -inf
        %3931 = vmax.xlane.f32.xlu0 %v3930
        %v3932 = vpop.xlane.xlu0 %3931
        %v3933 = vsel %vm1807, %v3337, -inf
        %3934 = vmax.xlane.f32.xlu0 %v3933
        %v3935 = vpop.xlane.xlu0 %3934
        %v3936 = vsel %vm1807, %v3340, -inf
        %3937 = vmax.xlane.f32.xlu0 %v3936
        %v3938 = vpop.xlane.xlu0 %3937
        %v3939 = vsel %vm1807, %v3343, -inf
        %3940 = vmax.xlane.f32.xlu0 %v3939
        %v3941 = vpop.xlane.xlu0 %3940
        %v3942 = vsel %vm1807, %v3346, -inf
        %3943 = vmax.xlane.f32.xlu0 %v3942
        %v3944 = vpop.xlane.xlu0 %3943
        %v3945 = vsel %vm1807, %v3349, -inf
        %3946 = vmax.xlane.f32.xlu0 %v3945
        %v3947 = vpop.xlane.xlu0 %3946
        %v3948 = vsel %vm1807, %v3352, -inf
        %3949 = vmax.xlane.f32.xlu0 %v3948
        %v3950 = vpop.xlane.xlu0 %3949
        %v3951 = vsel %vm1807, %v3355, -inf
        %3952 = vmax.xlane.f32.xlu0 %v3951
        %v3953 = vpop.xlane.xlu0 %3952
        %v3954 = vsel %vm1807, %v3358, -inf
        %3955 = vmax.xlane.f32.xlu0 %v3954
        %v3956 = vpop.xlane.xlu0 %3955
        %v3957 = vsel %vm1807, %v3442, -inf
        %3958 = vmax.xlane.f32.xlu0 %v3957
        %v3959 = vpop.xlane.xlu0 %3958
        %v3960 = vsel %vm1807, %v3445, -inf
        %3961 = vmax.xlane.f32.xlu0 %v3960
        %v3962 = vpop.xlane.xlu0 %3961
        %v3963 = vsel %vm1807, %v3448, -inf
        %3964 = vmax.xlane.f32.xlu0 %v3963
        %v3965 = vpop.xlane.xlu0 %3964
        %v3966 = vsel %vm1807, %v3451, -inf
        %3967 = vmax.xlane.f32.xlu0 %v3966
        %v3968 = vpop.xlane.xlu0 %3967
        %v3969 = vsel %vm1807, %v3454, -inf
        %3970 = vmax.xlane.f32.xlu0 %v3969
        %v3971 = vpop.xlane.xlu0 %3970
        %v3972 = vsel %vm1807, %v3457, -inf
        %3973 = vmax.xlane.f32.xlu0 %v3972
        %v3974 = vpop.xlane.xlu0 %3973
        %v3975 = vsel %vm1807, %v3460, -inf
        %3976 = vmax.xlane.f32.xlu0 %v3975
        %v3977 = vpop.xlane.xlu0 %3976
        %v3978 = vsel %vm1807, %v3463, -inf
        %3979 = vmax.xlane.f32.xlu0 %v3978
        %v3980 = vpop.xlane.xlu0 %3979
        %v3981 = vsel %vm1807, %v3547, -inf
        %3982 = vmax.xlane.f32.xlu0 %v3981
        %v3983 = vpop.xlane.xlu0 %3982
        %v3984 = vsel %vm1807, %v3550, -inf
        %3985 = vmax.xlane.f32.xlu0 %v3984
        %v3986 = vpop.xlane.xlu0 %3985
        %v3987 = vsel %vm1807, %v3553, -inf
        %3988 = vmax.xlane.f32.xlu0 %v3987
        %v3989 = vpop.xlane.xlu0 %3988
        %v3990 = vsel %vm1807, %v3556, -inf
        %3991 = vmax.xlane.f32.xlu0 %v3990
        %v3992 = vpop.xlane.xlu0 %3991
        %v3993 = vsel %vm1807, %v3559, -inf
        %3994 = vmax.xlane.f32.xlu0 %v3993
        %v3995 = vpop.xlane.xlu0 %3994
        %v3996 = vsel %vm1807, %v3562, -inf
        %3997 = vmax.xlane.f32.xlu0 %v3996
        %v3998 = vpop.xlane.xlu0 %3997
        %v3999 = vsel %vm1807, %v3565, -inf
        %4000 = vmax.xlane.f32.xlu0 %v3999
        %v4001 = vpop.xlane.xlu0 %4000
        %v4002 = vsel %vm1807, %v3568, -inf
        %4003 = vmax.xlane.f32.xlu0 %v4002
        %v4004 = vpop.xlane.xlu0 %4003
        %v4005 = vsel %vm1807, %v3652, -inf
        %4006 = vmax.xlane.f32.xlu0 %v4005
        %v4007 = vpop.xlane.xlu0 %4006
        %v4008 = vsel %vm1807, %v3655, -inf
        %4009 = vmax.xlane.f32.xlu0 %v4008
        %v4010 = vpop.xlane.xlu0 %4009
        %v4011 = vsel %vm1807, %v3658, -inf
        %4012 = vmax.xlane.f32.xlu0 %v4011
        %v4013 = vpop.xlane.xlu0 %4012
        %v4014 = vsel %vm1807, %v3661, -inf
        %4015 = vmax.xlane.f32.xlu0 %v4014
        %v4016 = vpop.xlane.xlu0 %4015
        %v4017 = vsel %vm1807, %v3664, -inf
        %4018 = vmax.xlane.f32.xlu0 %v4017
        %v4019 = vpop.xlane.xlu0 %4018
        %v4020 = vsel %vm1807, %v3667, -inf
        %4021 = vmax.xlane.f32.xlu0 %v4020
        %v4022 = vpop.xlane.xlu0 %4021
        %v4023 = vsel %vm1807, %v3670, -inf
        %4024 = vmax.xlane.f32.xlu0 %v4023
        %v4025 = vpop.xlane.xlu0 %4024
        %v4026 = vsel %vm1807, %v3673, -inf
        %4027 = vmax.xlane.f32.xlu0 %v4026
        %v4028 = vpop.xlane.xlu0 %4027
        %v4029 = vsel %vm1807, %v3757, -inf
        %4030 = vmax.xlane.f32.xlu0 %v4029
        %v4031 = vpop.xlane.xlu0 %4030
        %v4032 = vsel %vm1807, %v3760, -inf
        %4033 = vmax.xlane.f32.xlu0 %v4032
        %v4034 = vpop.xlane.xlu0 %4033
        %v4035 = vsel %vm1807, %v3763, -inf
        %4036 = vmax.xlane.f32.xlu0 %v4035
        %v4037 = vpop.xlane.xlu0 %4036
        %v4038 = vsel %vm1807, %v3766, -inf
        %4039 = vmax.xlane.f32.xlu0 %v4038
        %v4040 = vpop.xlane.xlu0 %4039
        %v4041 = vsel %vm1807, %v3769, -inf
        %4042 = vmax.xlane.f32.xlu0 %v4041
        %v4043 = vpop.xlane.xlu0 %4042
        %v4044 = vsel %vm1807, %v3772, -inf
        %4045 = vmax.xlane.f32.xlu0 %v4044
        %v4046 = vpop.xlane.xlu0 %4045
        %v4047 = vsel %vm1807, %v3775, -inf
        %4048 = vmax.xlane.f32.xlu0 %v4047
        %v4049 = vpop.xlane.xlu0 %4048
        %v4050 = vsel %vm1807, %v3778, -inf
        %4051 = vmax.xlane.f32.xlu0 %v4050
        %v4052 = vpop.xlane.xlu0 %4051
        %v4053 = vsel %vm1807, %v3862, -inf
        %4054 = vmax.xlane.f32.xlu0 %v4053
        %v4055 = vpop.xlane.xlu0 %4054
        %v4056 = vsel %vm1807, %v3865, -inf
        %4057 = vmax.xlane.f32.xlu0 %v4056
        %v4058 = vpop.xlane.xlu0 %4057
        %v4059 = vsel %vm1807, %v3868, -inf
        %4060 = vmax.xlane.f32.xlu0 %v4059
        %v4061 = vpop.xlane.xlu0 %4060
        %v4062 = vsel %vm1807, %v3871, -inf
        %4063 = vmax.xlane.f32.xlu0 %v4062
        %v4064 = vpop.xlane.xlu0 %4063
        %v4065 = vsel %vm1807, %v3874, -inf
        %4066 = vmax.xlane.f32.xlu0 %v4065
        %v4067 = vpop.xlane.xlu0 %4066
        %v4068 = vsel %vm1807, %v3877, -inf
        %4069 = vmax.xlane.f32.xlu0 %v4068
        %v4070 = vpop.xlane.xlu0 %4069
        %v4071 = vsel %vm1807, %v3880, -inf
        %4072 = vmax.xlane.f32.xlu0 %v4071
        %v4073 = vpop.xlane.xlu0 %4072
        %v4074 = vsel %vm1807, %v3883, -inf
        %4075 = vmax.xlane.f32.xlu0 %v4074
        %v4076 = vpop.xlane.xlu0 %4075
        %v4077 = vsub.f32 %v3127, %v3887
        %v4078 = vsub.f32 %v3130, %v3890
        %v4079 = vsub.f32 %v3133, %v3893
        %v4080 = vsub.f32 %v3136, %v3896
        %v4081 = vsub.f32 %v3139, %v3899
        %v4082 = vsub.f32 %v3142, %v3902
        %v4083 = vsub.f32 %v3145, %v3905
        %v4084 = vsub.f32 %v3148, %v3908
        %v4085 = vsub.f32 %v3232, %v3911
        %v4086 = vsub.f32 %v3235, %v3914
        %v4087 = vsub.f32 %v3238, %v3917
        %v4088 = vsub.f32 %v3241, %v3920
        %v4089 = vsub.f32 %v3244, %v3923
        %v4090 = vsub.f32 %v3247, %v3926
        %v4091 = vsub.f32 %v3250, %v3929
        %v4092 = vsub.f32 %v3253, %v3932
        %v4093 = vsub.f32 %v3337, %v3935
        %v4094 = vsub.f32 %v3340, %v3938
        %v4095 = vsub.f32 %v3343, %v3941
        %v4096 = vsub.f32 %v3346, %v3944
        %v4097 = vsub.f32 %v3349, %v3947
        %v4098 = vsub.f32 %v3352, %v3950
        %v4099 = vsub.f32 %v3355, %v3953
        %v4100 = vsub.f32 %v3358, %v3956
        %v4101 = vsub.f32 %v3442, %v3959
        %v4102 = vsub.f32 %v3445, %v3962
        %v4103 = vsub.f32 %v3448, %v3965
        %v4104 = vsub.f32 %v3451, %v3968
        %v4105 = vsub.f32 %v3454, %v3971
        %v4106 = vsub.f32 %v3457, %v3974
        %v4107 = vsub.f32 %v3460, %v3977
        %v4108 = vsub.f32 %v3463, %v3980
        %v4109 = vsub.f32 %v3547, %v3983
        %v4110 = vsub.f32 %v3550, %v3986
        %v4111 = vsub.f32 %v3553, %v3989
        %v4112 = vsub.f32 %v3556, %v3992
        %v4113 = vsub.f32 %v3559, %v3995
        %v4114 = vsub.f32 %v3562, %v3998
        %v4115 = vsub.f32 %v3565, %v4001
        %v4116 = vsub.f32 %v3568, %v4004
        %v4117 = vsub.f32 %v3652, %v4007
        %v4118 = vsub.f32 %v3655, %v4010
        %v4119 = vsub.f32 %v3658, %v4013
        %v4120 = vsub.f32 %v3661, %v4016
        %v4121 = vsub.f32 %v3664, %v4019
        %v4122 = vsub.f32 %v3667, %v4022
        %v4123 = vsub.f32 %v3670, %v4025
        %v4124 = vsub.f32 %v3673, %v4028
        %v4125 = vsub.f32 %v3757, %v4031
        %v4126 = vsub.f32 %v3760, %v4034
        %v4127 = vsub.f32 %v3763, %v4037
        %v4128 = vsub.f32 %v3766, %v4040
        %v4129 = vsub.f32 %v3769, %v4043
        %v4130 = vsub.f32 %v3772, %v4046
        %v4131 = vsub.f32 %v3775, %v4049
        %v4132 = vsub.f32 %v3778, %v4052
        %v4133 = vsub.f32 %v3862, %v4055
        %v4134 = vsub.f32 %v3865, %v4058
        %v4135 = vsub.f32 %v3868, %v4061
        %v4136 = vsub.f32 %v3871, %v4064
        %v4137 = vsub.f32 %v3874, %v4067
        %v4138 = vsub.f32 %v3877, %v4070
        %v4139 = vsub.f32 %v3880, %v4073
        %v4140 = vsub.f32 %v3883, %v4076
        %v4141 = vmul.f32 %v4077, 1.442695
        %v4142 = vpow.pop %v4141
        %v4143 = vmul.f32 %v4078, 1.442695
        %v4144 = vpow.pop %v4143
        %v4145 = vmul.f32 %v4079, 1.442695
        %v4146 = vpow.pop %v4145
        %v4147 = vmul.f32 %v4080, 1.442695
        %v4148 = vpow.pop %v4147
        %v4149 = vmul.f32 %v4081, 1.442695
        %v4150 = vpow.pop %v4149
        %v4151 = vmul.f32 %v4082, 1.442695
        %v4152 = vpow.pop %v4151
        %v4153 = vmul.f32 %v4083, 1.442695
        %v4154 = vpow.pop %v4153
        %v4155 = vmul.f32 %v4084, 1.442695
        %v4156 = vpow.pop %v4155
        %v4157 = vmul.f32 %v4085, 1.442695
        %v4158 = vpow.pop %v4157
        %v4159 = vmul.f32 %v4086, 1.442695
        %v4160 = vpow.pop %v4159
        %v4161 = vmul.f32 %v4087, 1.442695
        %v4162 = vpow.pop %v4161
        %v4163 = vmul.f32 %v4088, 1.442695
        %v4164 = vpow.pop %v4163
        %v4165 = vmul.f32 %v4089, 1.442695
        %v4166 = vpow.pop %v4165
        %v4167 = vmul.f32 %v4090, 1.442695
        %v4168 = vpow.pop %v4167
        %v4169 = vmul.f32 %v4091, 1.442695
        %v4170 = vpow.pop %v4169
        %v4171 = vmul.f32 %v4092, 1.442695
        %v4172 = vpow.pop %v4171
        %v4173 = vmul.f32 %v4093, 1.442695
        %v4174 = vpow.pop %v4173
        %v4175 = vmul.f32 %v4094, 1.442695
        %v4176 = vpow.pop %v4175
        %v4177 = vmul.f32 %v4095, 1.442695
        %v4178 = vpow.pop %v4177
        %v4179 = vmul.f32 %v4096, 1.442695
        %v4180 = vpow.pop %v4179
        %v4181 = vmul.f32 %v4097, 1.442695
        %v4182 = vpow.pop %v4181
        %v4183 = vmul.f32 %v4098, 1.442695
        %v4184 = vpow.pop %v4183
        %v4185 = vmul.f32 %v4099, 1.442695
        %v4186 = vpow.pop %v4185
        %v4187 = vmul.f32 %v4100, 1.442695
        %v4188 = vpow.pop %v4187
        %v4189 = vmul.f32 %v4101, 1.442695
        %v4190 = vpow.pop %v4189
        %v4191 = vmul.f32 %v4102, 1.442695
        %v4192 = vpow.pop %v4191
        %v4193 = vmul.f32 %v4103, 1.442695
        %v4194 = vpow.pop %v4193
        %v4195 = vmul.f32 %v4104, 1.442695
        %v4196 = vpow.pop %v4195
        %v4197 = vmul.f32 %v4105, 1.442695
        %v4198 = vpow.pop %v4197
        %v4199 = vmul.f32 %v4106, 1.442695
        %v4200 = vpow.pop %v4199
        %v4201 = vmul.f32 %v4107, 1.442695
        %v4202 = vpow.pop %v4201
        %v4203 = vmul.f32 %v4108, 1.442695
        %v4204 = vpow.pop %v4203
        %v4205 = vmul.f32 %v4109, 1.442695
        %v4206 = vpow.pop %v4205
        %v4207 = vmul.f32 %v4110, 1.442695
        %v4208 = vpow.pop %v4207
        %v4209 = vmul.f32 %v4111, 1.442695
        %v4210 = vpow.pop %v4209
        %v4211 = vmul.f32 %v4112, 1.442695
        %v4212 = vpow.pop %v4211
        %v4213 = vmul.f32 %v4113, 1.442695
        %v4214 = vpow.pop %v4213
        %v4215 = vmul.f32 %v4114, 1.442695
        %v4216 = vpow.pop %v4215
        %v4217 = vmul.f32 %v4115, 1.442695
        %v4218 = vpow.pop %v4217
        %v4219 = vmul.f32 %v4116, 1.442695
        %v4220 = vpow.pop %v4219
        %v4221 = vmul.f32 %v4117, 1.442695
        %v4222 = vpow.pop %v4221
        %v4223 = vmul.f32 %v4118, 1.442695
        %v4224 = vpow.pop %v4223
        %v4225 = vmul.f32 %v4119, 1.442695
        %v4226 = vpow.pop %v4225
        %v4227 = vmul.f32 %v4120, 1.442695
        %v4228 = vpow.pop %v4227
        %v4229 = vmul.f32 %v4121, 1.442695
        %v4230 = vpow.pop %v4229
        %v4231 = vmul.f32 %v4122, 1.442695
        %v4232 = vpow.pop %v4231
        %v4233 = vmul.f32 %v4123, 1.442695
        %v4234 = vpow.pop %v4233
        %v4235 = vmul.f32 %v4124, 1.442695
        %v4236 = vpow.pop %v4235
        %v4237 = vmul.f32 %v4125, 1.442695
        %v4238 = vpow.pop %v4237
        %v4239 = vmul.f32 %v4126, 1.442695
        %v4240 = vpow.pop %v4239
        %v4241 = vmul.f32 %v4127, 1.442695
        %v4242 = vpow.pop %v4241
        %v4243 = vmul.f32 %v4128, 1.442695
        %v4244 = vpow.pop %v4243
        %v4245 = vmul.f32 %v4129, 1.442695
        %v4246 = vpow.pop %v4245
        %v4247 = vmul.f32 %v4130, 1.442695
        %v4248 = vpow.pop %v4247
        %v4249 = vmul.f32 %v4131, 1.442695
        %v4250 = vpow.pop %v4249
        %v4251 = vmul.f32 %v4132, 1.442695
        %v4252 = vpow.pop %v4251
        %v4253 = vmul.f32 %v4133, 1.442695
        %v4254 = vpow.pop %v4253
        %v4255 = vmul.f32 %v4134, 1.442695
        %v4256 = vpow.pop %v4255
        %v4257 = vmul.f32 %v4135, 1.442695
        %v4258 = vpow.pop %v4257
        %v4259 = vmul.f32 %v4136, 1.442695
        %v4260 = vpow.pop %v4259
        %v4261 = vmul.f32 %v4137, 1.442695
        %v4262 = vpow.pop %v4261
        %v4263 = vmul.f32 %v4138, 1.442695
        %v4264 = vpow.pop %v4263
        %v4265 = vmul.f32 %v4139, 1.442695
        %v4266 = vpow.pop %v4265
        %v4267 = vmul.f32 %v4140, 1.442695
        %v4268 = vpow.pop %v4267
        %v4269 = vsel %vm1807, %v4142, 0.0
        %4270 = vadd.xlane.f32.xlu0 %v4269
        %v4271 = vpop.xlane.xlu0 %4270
        %v4272 = vsel %vm1807, %v4144, 0.0
        %4273 = vadd.xlane.f32.xlu0 %v4272
        %v4274 = vpop.xlane.xlu0 %4273
        %v4275 = vsel %vm1807, %v4146, 0.0
        %4276 = vadd.xlane.f32.xlu0 %v4275
        %v4277 = vpop.xlane.xlu0 %4276
        %v4278 = vsel %vm1807, %v4148, 0.0
        %4279 = vadd.xlane.f32.xlu0 %v4278
        %v4280 = vpop.xlane.xlu0 %4279
        %v4281 = vsel %vm1807, %v4150, 0.0
        %4282 = vadd.xlane.f32.xlu0 %v4281
        %v4283 = vpop.xlane.xlu0 %4282
        %v4284 = vsel %vm1807, %v4152, 0.0
        %4285 = vadd.xlane.f32.xlu0 %v4284
        %v4286 = vpop.xlane.xlu0 %4285
        %v4287 = vsel %vm1807, %v4154, 0.0
        %4288 = vadd.xlane.f32.xlu0 %v4287
        %v4289 = vpop.xlane.xlu0 %4288
        %v4290 = vsel %vm1807, %v4156, 0.0
        %4291 = vadd.xlane.f32.xlu0 %v4290
        %v4292 = vpop.xlane.xlu0 %4291
        %v4293 = vsel %vm1807, %v4158, 0.0
        %4294 = vadd.xlane.f32.xlu0 %v4293
        %v4295 = vpop.xlane.xlu0 %4294
        %v4296 = vsel %vm1807, %v4160, 0.0
        %4297 = vadd.xlane.f32.xlu0 %v4296
        %v4298 = vpop.xlane.xlu0 %4297
        %v4299 = vsel %vm1807, %v4162, 0.0
        %4300 = vadd.xlane.f32.xlu0 %v4299
        %v4301 = vpop.xlane.xlu0 %4300
        %v4302 = vsel %vm1807, %v4164, 0.0
        %4303 = vadd.xlane.f32.xlu0 %v4302
        %v4304 = vpop.xlane.xlu0 %4303
        %v4305 = vsel %vm1807, %v4166, 0.0
        %4306 = vadd.xlane.f32.xlu0 %v4305
        %v4307 = vpop.xlane.xlu0 %4306
        %v4308 = vsel %vm1807, %v4168, 0.0
        %4309 = vadd.xlane.f32.xlu0 %v4308
        %v4310 = vpop.xlane.xlu0 %4309
        %v4311 = vsel %vm1807, %v4170, 0.0
        %4312 = vadd.xlane.f32.xlu0 %v4311
        %v4313 = vpop.xlane.xlu0 %4312
        %v4314 = vsel %vm1807, %v4172, 0.0
        %4315 = vadd.xlane.f32.xlu0 %v4314
        %v4316 = vpop.xlane.xlu0 %4315
        %v4317 = vsel %vm1807, %v4174, 0.0
        %4318 = vadd.xlane.f32.xlu0 %v4317
        %v4319 = vpop.xlane.xlu0 %4318
        %v4320 = vsel %vm1807, %v4176, 0.0
        %4321 = vadd.xlane.f32.xlu0 %v4320
        %v4322 = vpop.xlane.xlu0 %4321
        %v4323 = vsel %vm1807, %v4178, 0.0
        %4324 = vadd.xlane.f32.xlu0 %v4323
        %v4325 = vpop.xlane.xlu0 %4324
        %v4326 = vsel %vm1807, %v4180, 0.0
        %4327 = vadd.xlane.f32.xlu0 %v4326
        %v4328 = vpop.xlane.xlu0 %4327
        %v4329 = vsel %vm1807, %v4182, 0.0
        %4330 = vadd.xlane.f32.xlu0 %v4329
        %v4331 = vpop.xlane.xlu0 %4330
        %v4332 = vsel %vm1807, %v4184, 0.0
        %4333 = vadd.xlane.f32.xlu0 %v4332
        %v4334 = vpop.xlane.xlu0 %4333
        %v4335 = vsel %vm1807, %v4186, 0.0
        %4336 = vadd.xlane.f32.xlu0 %v4335
        %v4337 = vpop.xlane.xlu0 %4336
        %v4338 = vsel %vm1807, %v4188, 0.0
        %4339 = vadd.xlane.f32.xlu0 %v4338
        %v4340 = vpop.xlane.xlu0 %4339
        %v4341 = vsel %vm1807, %v4190, 0.0
        %4342 = vadd.xlane.f32.xlu0 %v4341
        %v4343 = vpop.xlane.xlu0 %4342
        %v4344 = vsel %vm1807, %v4192, 0.0
        %4345 = vadd.xlane.f32.xlu0 %v4344
        %v4346 = vpop.xlane.xlu0 %4345
        %v4347 = vsel %vm1807, %v4194, 0.0
        %4348 = vadd.xlane.f32.xlu0 %v4347
        %v4349 = vpop.xlane.xlu0 %4348
        %v4350 = vsel %vm1807, %v4196, 0.0
        %4351 = vadd.xlane.f32.xlu0 %v4350
        %v4352 = vpop.xlane.xlu0 %4351
        %v4353 = vsel %vm1807, %v4198, 0.0
        %4354 = vadd.xlane.f32.xlu0 %v4353
        %v4355 = vpop.xlane.xlu0 %4354
        %v4356 = vsel %vm1807, %v4200, 0.0
        %4357 = vadd.xlane.f32.xlu0 %v4356
        %v4358 = vpop.xlane.xlu0 %4357
        %v4359 = vsel %vm1807, %v4202, 0.0
        %4360 = vadd.xlane.f32.xlu0 %v4359
        %v4361 = vpop.xlane.xlu0 %4360
        %v4362 = vsel %vm1807, %v4204, 0.0
        %4363 = vadd.xlane.f32.xlu0 %v4362
        %v4364 = vpop.xlane.xlu0 %4363
        %v4365 = vsel %vm1807, %v4206, 0.0
        %4366 = vadd.xlane.f32.xlu0 %v4365
        %v4367 = vpop.xlane.xlu0 %4366
        %v4368 = vsel %vm1807, %v4208, 0.0
        %4369 = vadd.xlane.f32.xlu0 %v4368
        %v4370 = vpop.xlane.xlu0 %4369
        %v4371 = vsel %vm1807, %v4210, 0.0
        %4372 = vadd.xlane.f32.xlu0 %v4371
        %v4373 = vpop.xlane.xlu0 %4372
        %v4374 = vsel %vm1807, %v4212, 0.0
        %4375 = vadd.xlane.f32.xlu0 %v4374
        %v4376 = vpop.xlane.xlu0 %4375
        %v4377 = vsel %vm1807, %v4214, 0.0
        %4378 = vadd.xlane.f32.xlu0 %v4377
        %v4379 = vpop.xlane.xlu0 %4378
        %v4380 = vsel %vm1807, %v4216, 0.0
        %4381 = vadd.xlane.f32.xlu0 %v4380
        %v4382 = vpop.xlane.xlu0 %4381
        %v4383 = vsel %vm1807, %v4218, 0.0
        %4384 = vadd.xlane.f32.xlu0 %v4383
        %v4385 = vpop.xlane.xlu0 %4384
        %v4386 = vsel %vm1807, %v4220, 0.0
        %4387 = vadd.xlane.f32.xlu0 %v4386
        %v4388 = vpop.xlane.xlu0 %4387
        %v4389 = vsel %vm1807, %v4222, 0.0
        %4390 = vadd.xlane.f32.xlu0 %v4389
        %v4391 = vpop.xlane.xlu0 %4390
        %v4392 = vsel %vm1807, %v4224, 0.0
        %4393 = vadd.xlane.f32.xlu0 %v4392
        %v4394 = vpop.xlane.xlu0 %4393
        %v4395 = vsel %vm1807, %v4226, 0.0
        %4396 = vadd.xlane.f32.xlu0 %v4395
        %v4397 = vpop.xlane.xlu0 %4396
        %v4398 = vsel %vm1807, %v4228, 0.0
        %4399 = vadd.xlane.f32.xlu0 %v4398
        %v4400 = vpop.xlane.xlu0 %4399
        %v4401 = vsel %vm1807, %v4230, 0.0
        %4402 = vadd.xlane.f32.xlu0 %v4401
        %v4403 = vpop.xlane.xlu0 %4402
        %v4404 = vsel %vm1807, %v4232, 0.0
        %4405 = vadd.xlane.f32.xlu0 %v4404
        %v4406 = vpop.xlane.xlu0 %4405
        %v4407 = vsel %vm1807, %v4234, 0.0
        %4408 = vadd.xlane.f32.xlu0 %v4407
        %v4409 = vpop.xlane.xlu0 %4408
        %v4410 = vsel %vm1807, %v4236, 0.0
        %4411 = vadd.xlane.f32.xlu0 %v4410
        %v4412 = vpop.xlane.xlu0 %4411
        %v4413 = vsel %vm1807, %v4238, 0.0
        %4414 = vadd.xlane.f32.xlu0 %v4413
        %v4415 = vpop.xlane.xlu0 %4414
        %v4416 = vsel %vm1807, %v4240, 0.0
        %4417 = vadd.xlane.f32.xlu0 %v4416
        %v4418 = vpop.xlane.xlu0 %4417
        %v4419 = vsel %vm1807, %v4242, 0.0
        %4420 = vadd.xlane.f32.xlu0 %v4419
        %v4421 = vpop.xlane.xlu0 %4420
        %v4422 = vsel %vm1807, %v4244, 0.0
        %4423 = vadd.xlane.f32.xlu0 %v4422
        %v4424 = vpop.xlane.xlu0 %4423
        %v4425 = vsel %vm1807, %v4246, 0.0
        %4426 = vadd.xlane.f32.xlu0 %v4425
        %v4427 = vpop.xlane.xlu0 %4426
        %v4428 = vsel %vm1807, %v4248, 0.0
        %4429 = vadd.xlane.f32.xlu0 %v4428
        %v4430 = vpop.xlane.xlu0 %4429
        %v4431 = vsel %vm1807, %v4250, 0.0
        %4432 = vadd.xlane.f32.xlu0 %v4431
        %v4433 = vpop.xlane.xlu0 %4432
        %v4434 = vsel %vm1807, %v4252, 0.0
        %4435 = vadd.xlane.f32.xlu0 %v4434
        %v4436 = vpop.xlane.xlu0 %4435
        %v4437 = vsel %vm1807, %v4254, 0.0
        %4438 = vadd.xlane.f32.xlu0 %v4437
        %v4439 = vpop.xlane.xlu0 %4438
        %v4440 = vsel %vm1807, %v4256, 0.0
        %4441 = vadd.xlane.f32.xlu0 %v4440
        %v4442 = vpop.xlane.xlu0 %4441
        %v4443 = vsel %vm1807, %v4258, 0.0
        %4444 = vadd.xlane.f32.xlu0 %v4443
        %v4445 = vpop.xlane.xlu0 %4444
        %v4446 = vsel %vm1807, %v4260, 0.0
        %4447 = vadd.xlane.f32.xlu0 %v4446
        %v4448 = vpop.xlane.xlu0 %4447
        %v4449 = vsel %vm1807, %v4262, 0.0
        %4450 = vadd.xlane.f32.xlu0 %v4449
        %v4451 = vpop.xlane.xlu0 %4450
        %v4452 = vsel %vm1807, %v4264, 0.0
        %4453 = vadd.xlane.f32.xlu0 %v4452
        %v4454 = vpop.xlane.xlu0 %4453
        %v4455 = vsel %vm1807, %v4266, 0.0
        %4456 = vadd.xlane.f32.xlu0 %v4455
        %v4457 = vpop.xlane.xlu0 %4456
        %v4458 = vsel %vm1807, %v4268, 0.0
        %4459 = vadd.xlane.f32.xlu0 %v4458
        %v4460 = vpop.xlane.xlu0 %4459
        %v4461 = vrcp.pop %v4271
        %v4462 = vrcp.pop %v4274
        %v4463 = vrcp.pop %v4277
        %v4464 = vrcp.pop %v4280
        %v4465 = vrcp.pop %v4283
        %v4466 = vrcp.pop %v4286
        %v4467 = vrcp.pop %v4289
        %v4468 = vrcp.pop %v4292
        %v4469 = vrcp.pop %v4295
        %v4470 = vrcp.pop %v4298
        %v4471 = vrcp.pop %v4301
        %v4472 = vrcp.pop %v4304
        %v4473 = vrcp.pop %v4307
        %v4474 = vrcp.pop %v4310
        %v4475 = vrcp.pop %v4313
        %v4476 = vrcp.pop %v4316
        %v4477 = vrcp.pop %v4319
        %v4478 = vrcp.pop %v4322
        %v4479 = vrcp.pop %v4325
        %v4480 = vrcp.pop %v4328
        %v4481 = vrcp.pop %v4331
        %v4482 = vrcp.pop %v4334
        %v4483 = vrcp.pop %v4337
        %v4484 = vrcp.pop %v4340
        %v4485 = vrcp.pop %v4343
        %v4486 = vrcp.pop %v4346
        %v4487 = vrcp.pop %v4349
        %v4488 = vrcp.pop %v4352
        %v4489 = vrcp.pop %v4355
        %v4490 = vrcp.pop %v4358
        %v4491 = vrcp.pop %v4361
        %v4492 = vrcp.pop %v4364
        %v4493 = vrcp.pop %v4367
        %v4494 = vrcp.pop %v4370
        %v4495 = vrcp.pop %v4373
        %v4496 = vrcp.pop %v4376
        %v4497 = vrcp.pop %v4379
        %v4498 = vrcp.pop %v4382
        %v4499 = vrcp.pop %v4385
        %v4500 = vrcp.pop %v4388
        %v4501 = vrcp.pop %v4391
        %v4502 = vrcp.pop %v4394
        %v4503 = vrcp.pop %v4397
        %v4504 = vrcp.pop %v4400
        %v4505 = vrcp.pop %v4403
        %v4506 = vrcp.pop %v4406
        %v4507 = vrcp.pop %v4409
        %v4508 = vrcp.pop %v4412
        %v4509 = vrcp.pop %v4415
        %v4510 = vrcp.pop %v4418
        %v4511 = vrcp.pop %v4421
        %v4512 = vrcp.pop %v4424
        %v4513 = vrcp.pop %v4427
        %v4514 = vrcp.pop %v4430
        %v4515 = vrcp.pop %v4433
        %v4516 = vrcp.pop %v4436
        %v4517 = vrcp.pop %v4439
        %v4518 = vrcp.pop %v4442
        %v4519 = vrcp.pop %v4445
        %v4520 = vrcp.pop %v4448
        %v4521 = vrcp.pop %v4451
        %v4522 = vrcp.pop %v4454
        %v4523 = vrcp.pop %v4457
        %v4524 = vrcp.pop %v4460
        %v4525 = vmul.f32 %v4142, %v4461
        %v4526 = vmul.f32 %v4144, %v4462
        %v4527 = vmul.f32 %v4146, %v4463
        %v4528 = vmul.f32 %v4148, %v4464
        %v4529 = vmul.f32 %v4150, %v4465
        %v4530 = vmul.f32 %v4152, %v4466
        %v4531 = vmul.f32 %v4154, %v4467
        %v4532 = vmul.f32 %v4156, %v4468
        %v4533 = vmul.f32 %v4158, %v4469
        %v4534 = vmul.f32 %v4160, %v4470
        %v4535 = vmul.f32 %v4162, %v4471
        %v4536 = vmul.f32 %v4164, %v4472
        %v4537 = vmul.f32 %v4166, %v4473
        %v4538 = vmul.f32 %v4168, %v4474
        %v4539 = vmul.f32 %v4170, %v4475
        %v4540 = vmul.f32 %v4172, %v4476
        %v4541 = vmul.f32 %v4174, %v4477
        %v4542 = vmul.f32 %v4176, %v4478
        %v4543 = vmul.f32 %v4178, %v4479
        %v4544 = vmul.f32 %v4180, %v4480
        %v4545 = vmul.f32 %v4182, %v4481
        %v4546 = vmul.f32 %v4184, %v4482
        %v4547 = vmul.f32 %v4186, %v4483
        %v4548 = vmul.f32 %v4188, %v4484
        %v4549 = vmul.f32 %v4190, %v4485
        %v4550 = vmul.f32 %v4192, %v4486
        %v4551 = vmul.f32 %v4194, %v4487
        %v4552 = vmul.f32 %v4196, %v4488
        %v4553 = vmul.f32 %v4198, %v4489
        %v4554 = vmul.f32 %v4200, %v4490
        %v4555 = vmul.f32 %v4202, %v4491
        %v4556 = vmul.f32 %v4204, %v4492
        %v4557 = vmul.f32 %v4206, %v4493
        %v4558 = vmul.f32 %v4208, %v4494
        %v4559 = vmul.f32 %v4210, %v4495
        %v4560 = vmul.f32 %v4212, %v4496
        %v4561 = vmul.f32 %v4214, %v4497
        %v4562 = vmul.f32 %v4216, %v4498
        %v4563 = vmul.f32 %v4218, %v4499
        %v4564 = vmul.f32 %v4220, %v4500
        %v4565 = vmul.f32 %v4222, %v4501
        %v4566 = vmul.f32 %v4224, %v4502
        %v4567 = vmul.f32 %v4226, %v4503
        %v4568 = vmul.f32 %v4228, %v4504
        %v4569 = vmul.f32 %v4230, %v4505
        %v4570 = vmul.f32 %v4232, %v4506
        %v4571 = vmul.f32 %v4234, %v4507
        %v4572 = vmul.f32 %v4236, %v4508
        %v4573 = vmul.f32 %v4238, %v4509
        %v4574 = vmul.f32 %v4240, %v4510
        %v4575 = vmul.f32 %v4242, %v4511
        %v4576 = vmul.f32 %v4244, %v4512
        %v4577 = vmul.f32 %v4246, %v4513
        %v4578 = vmul.f32 %v4248, %v4514
        %v4579 = vmul.f32 %v4250, %v4515
        %v4580 = vmul.f32 %v4252, %v4516
        %v4581 = vmul.f32 %v4254, %v4517
        %v4582 = vmul.f32 %v4256, %v4518
        %v4583 = vmul.f32 %v4258, %v4519
        %v4584 = vmul.f32 %v4260, %v4520
        %v4585 = vmul.f32 %v4262, %v4521
        %v4586 = vmul.f32 %v4264, %v4522
        %v4587 = vmul.f32 %v4266, %v4523
        %v4588 = vmul.f32 %v4268, %v4524
        %4597 = vrot.lane.b32.xlu0 %v895, 96
        %v4598 = vpop.permute.xlu0 %4597
        %4599 = vrot.lane.b32.xlu0 %v898, 96
        %v4600 = vpop.permute.xlu0 %4599
        %4601 = vrot.lane.b32.xlu0 %v901, 96
        %v4602 = vpop.permute.xlu0 %4601
        %4603 = vrot.lane.b32.xlu0 %v904, 96
        %v4604 = vpop.permute.xlu0 %4603
        %4605 = vrot.lane.b32.xlu0 %v907, 96
        %v4606 = vpop.permute.xlu0 %4605
        %4607 = vrot.lane.b32.xlu0 %v910, 96
        %v4608 = vpop.permute.xlu0 %4607
        %4609 = vrot.lane.b32.xlu0 %v913, 96
        %v4610 = vpop.permute.xlu0 %4609
        %4611 = vrot.lane.b32.xlu0 %v916, 96
        %v4612 = vpop.permute.xlu0 %4611
        %v4622 = vsel %vm1807, %v4525, 0
        %v4625 = vsel %vm1807, %v4526, 0
        %v4628 = vsel %vm1807, %v4527, 0
        %v4631 = vsel %vm1807, %v4528, 0
        %v4634 = vsel %vm1807, %v4529, 0
        %v4637 = vsel %vm1807, %v4530, 0
        %v4640 = vsel %vm1807, %v4531, 0
        %v4643 = vsel %vm1807, %v4532, 0
        %4645 = vmatpush.msra.mxu0 0.0
        %4646 = vmatpush.msra.mxu0 0.0
        %4647 = vmatpush.msra.mxu0 0.0
        %4648 = vmatpush.msra.mxu0 0.0
        %4649 = vmatpush.msra.mxu0 0.0
        %4650 = vmatpush.msra.mxu0 0.0
        %4651 = vmatpush.msra.mxu0 0.0
        %4652 = vmatpush.msra.mxu0 0.0
        %4653 = vmatpush.msra.mxu0 %v4612
        %4654 = vmatpush.msra.mxu0 %v4610
        %4655 = vmatpush.msra.mxu0 %v4608
        %4656 = vmatpush.msra.mxu0 %v4606
        %4657 = vmatpush.msra.mxu0 %v4604
        %4658 = vmatpush.msra.mxu0 %v4602
        %4659 = vmatpush.msra.mxu0 %v4600
        %4660 = vmatpush.msra.mxu0 %v4598
        %4661 = vmatmul.f32.gmra.mxu0 %v4622
        %v4662 = vpop.f32.mrf.mxu0
        %v4663 = vadd.f32 0.0, %v4662
        %4664 = vmatmul.f32.gmra.mxu0 %v4625
        %v4665 = vpop.f32.mrf.mxu0
        %v4666 = vadd.f32 0.0, %v4665
        %4667 = vmatmul.f32.gmra.mxu0 %v4628
        %v4668 = vpop.f32.mrf.mxu0
        %v4669 = vadd.f32 0.0, %v4668
        %4670 = vmatmul.f32.gmra.mxu0 %v4631
        %v4671 = vpop.f32.mrf.mxu0
        %v4672 = vadd.f32 0.0, %v4671
        %4673 = vmatmul.f32.gmra.mxu0 %v4634
        %v4674 = vpop.f32.mrf.mxu0
        %v4675 = vadd.f32 0.0, %v4674
        %4676 = vmatmul.f32.gmra.mxu0 %v4637
        %v4677 = vpop.f32.mrf.mxu0
        %v4678 = vadd.f32 0.0, %v4677
        %4679 = vmatmul.f32.gmra.mxu0 %v4640
        %v4680 = vpop.f32.mrf.mxu0
        %v4681 = vadd.f32 0.0, %v4680
        %4682 = vmatmul.f32.gmra.mxu0 %v4643
        %v4683 = vpop.f32.mrf.mxu0
        %v4684 = vadd.f32 0.0, %v4683
        %4685 = vdwg.mxu0
        %4694 = vrot.lane.b32.xlu0 %v919, 96
        %v4695 = vpop.permute.xlu0 %4694
        %4696 = vrot.lane.b32.xlu0 %v922, 96
        %v4697 = vpop.permute.xlu0 %4696
        %4698 = vrot.lane.b32.xlu0 %v925, 96
        %v4699 = vpop.permute.xlu0 %4698
        %4700 = vrot.lane.b32.xlu0 %v928, 96
        %v4701 = vpop.permute.xlu0 %4700
        %4702 = vrot.lane.b32.xlu0 %v931, 96
        %v4703 = vpop.permute.xlu0 %4702
        %4704 = vrot.lane.b32.xlu0 %v934, 96
        %v4705 = vpop.permute.xlu0 %4704
        %4706 = vrot.lane.b32.xlu0 %v937, 96
        %v4707 = vpop.permute.xlu0 %4706
        %4708 = vrot.lane.b32.xlu0 %v940, 96
        %v4709 = vpop.permute.xlu0 %4708
        %v4719 = vsel %vm1807, %v4533, 0
        %v4722 = vsel %vm1807, %v4534, 0
        %v4725 = vsel %vm1807, %v4535, 0
        %v4728 = vsel %vm1807, %v4536, 0
        %v4731 = vsel %vm1807, %v4537, 0
        %v4734 = vsel %vm1807, %v4538, 0
        %v4737 = vsel %vm1807, %v4539, 0
        %v4740 = vsel %vm1807, %v4540, 0
        %4742 = vmatpush.msra.mxu0 0.0
        %4743 = vmatpush.msra.mxu0 0.0
        %4744 = vmatpush.msra.mxu0 0.0
        %4745 = vmatpush.msra.mxu0 0.0
        %4746 = vmatpush.msra.mxu0 0.0
        %4747 = vmatpush.msra.mxu0 0.0
        %4748 = vmatpush.msra.mxu0 0.0
        %4749 = vmatpush.msra.mxu0 0.0
        %4750 = vmatpush.msra.mxu0 %v4709
        %4751 = vmatpush.msra.mxu0 %v4707
        %4752 = vmatpush.msra.mxu0 %v4705
        %4753 = vmatpush.msra.mxu0 %v4703
        %4754 = vmatpush.msra.mxu0 %v4701
        %4755 = vmatpush.msra.mxu0 %v4699
        %4756 = vmatpush.msra.mxu0 %v4697
        %4757 = vmatpush.msra.mxu0 %v4695
        %4758 = vmatmul.f32.gmra.mxu0 %v4719
        %v4759 = vpop.f32.mrf.mxu0
        %v4760 = vadd.f32 0.0, %v4759
        %4761 = vmatmul.f32.gmra.mxu0 %v4722
        %v4762 = vpop.f32.mrf.mxu0
        %v4763 = vadd.f32 0.0, %v4762
        %4764 = vmatmul.f32.gmra.mxu0 %v4725
        %v4765 = vpop.f32.mrf.mxu0
        %v4766 = vadd.f32 0.0, %v4765
        %4767 = vmatmul.f32.gmra.mxu0 %v4728
        %v4768 = vpop.f32.mrf.mxu0
        %v4769 = vadd.f32 0.0, %v4768
        %4770 = vmatmul.f32.gmra.mxu0 %v4731
        %v4771 = vpop.f32.mrf.mxu0
        %v4772 = vadd.f32 0.0, %v4771
        %4773 = vmatmul.f32.gmra.mxu0 %v4734
        %v4774 = vpop.f32.mrf.mxu0
        %v4775 = vadd.f32 0.0, %v4774
        %4776 = vmatmul.f32.gmra.mxu0 %v4737
        %v4777 = vpop.f32.mrf.mxu0
        %v4778 = vadd.f32 0.0, %v4777
        %4779 = vmatmul.f32.gmra.mxu0 %v4740
        %v4780 = vpop.f32.mrf.mxu0
        %v4781 = vadd.f32 0.0, %v4780
        %4782 = vdwg.mxu0
        %4791 = vrot.lane.b32.xlu0 %v943, 96
        %v4792 = vpop.permute.xlu0 %4791
        %4793 = vrot.lane.b32.xlu0 %v946, 96
        %v4794 = vpop.permute.xlu0 %4793
        %4795 = vrot.lane.b32.xlu0 %v949, 96
        %v4796 = vpop.permute.xlu0 %4795
        %4797 = vrot.lane.b32.xlu0 %v952, 96
        %v4798 = vpop.permute.xlu0 %4797
        %4799 = vrot.lane.b32.xlu0 %v955, 96
        %v4800 = vpop.permute.xlu0 %4799
        %4801 = vrot.lane.b32.xlu0 %v958, 96
        %v4802 = vpop.permute.xlu0 %4801
        %4803 = vrot.lane.b32.xlu0 %v961, 96
        %v4804 = vpop.permute.xlu0 %4803
        %4805 = vrot.lane.b32.xlu0 %v964, 96
        %v4806 = vpop.permute.xlu0 %4805
        %v4816 = vsel %vm1807, %v4541, 0
        %v4819 = vsel %vm1807, %v4542, 0
        %v4822 = vsel %vm1807, %v4543, 0
        %v4825 = vsel %vm1807, %v4544, 0
        %v4828 = vsel %vm1807, %v4545, 0
        %v4831 = vsel %vm1807, %v4546, 0
        %v4834 = vsel %vm1807, %v4547, 0
        %v4837 = vsel %vm1807, %v4548, 0
        %4839 = vmatpush.msra.mxu0 0.0
        %4840 = vmatpush.msra.mxu0 0.0
        %4841 = vmatpush.msra.mxu0 0.0
        %4842 = vmatpush.msra.mxu0 0.0
        %4843 = vmatpush.msra.mxu0 0.0
        %4844 = vmatpush.msra.mxu0 0.0
        %4845 = vmatpush.msra.mxu0 0.0
        %4846 = vmatpush.msra.mxu0 0.0
        %4847 = vmatpush.msra.mxu0 %v4806
        %4848 = vmatpush.msra.mxu0 %v4804
        %4849 = vmatpush.msra.mxu0 %v4802
        %4850 = vmatpush.msra.mxu0 %v4800
        %4851 = vmatpush.msra.mxu0 %v4798
        %4852 = vmatpush.msra.mxu0 %v4796
        %4853 = vmatpush.msra.mxu0 %v4794
        %4854 = vmatpush.msra.mxu0 %v4792
        %4855 = vmatmul.f32.gmra.mxu0 %v4816
        %v4856 = vpop.f32.mrf.mxu0
        %v4857 = vadd.f32 0.0, %v4856
        %4858 = vmatmul.f32.gmra.mxu0 %v4819
        %v4859 = vpop.f32.mrf.mxu0
        %v4860 = vadd.f32 0.0, %v4859
        %4861 = vmatmul.f32.gmra.mxu0 %v4822
        %v4862 = vpop.f32.mrf.mxu0
        %v4863 = vadd.f32 0.0, %v4862
        %4864 = vmatmul.f32.gmra.mxu0 %v4825
        %v4865 = vpop.f32.mrf.mxu0
        %v4866 = vadd.f32 0.0, %v4865
        %4867 = vmatmul.f32.gmra.mxu0 %v4828
        %v4868 = vpop.f32.mrf.mxu0
        %v4869 = vadd.f32 0.0, %v4868
        %4870 = vmatmul.f32.gmra.mxu0 %v4831
        %v4871 = vpop.f32.mrf.mxu0
        %v4872 = vadd.f32 0.0, %v4871
        %4873 = vmatmul.f32.gmra.mxu0 %v4834
        %v4874 = vpop.f32.mrf.mxu0
        %v4875 = vadd.f32 0.0, %v4874
        %4876 = vmatmul.f32.gmra.mxu0 %v4837
        %v4877 = vpop.f32.mrf.mxu0
        %v4878 = vadd.f32 0.0, %v4877
        %4879 = vdwg.mxu0
        %4888 = vrot.lane.b32.xlu0 %v967, 96
        %v4889 = vpop.permute.xlu0 %4888
        %4890 = vrot.lane.b32.xlu0 %v970, 96
        %v4891 = vpop.permute.xlu0 %4890
        %4892 = vrot.lane.b32.xlu0 %v973, 96
        %v4893 = vpop.permute.xlu0 %4892
        %4894 = vrot.lane.b32.xlu0 %v976, 96
        %v4895 = vpop.permute.xlu0 %4894
        %4896 = vrot.lane.b32.xlu0 %v979, 96
        %v4897 = vpop.permute.xlu0 %4896
        %4898 = vrot.lane.b32.xlu0 %v982, 96
        %v4899 = vpop.permute.xlu0 %4898
        %4900 = vrot.lane.b32.xlu0 %v985, 96
        %v4901 = vpop.permute.xlu0 %4900
        %4902 = vrot.lane.b32.xlu0 %v988, 96
        %v4903 = vpop.permute.xlu0 %4902
        %v4913 = vsel %vm1807, %v4549, 0
        %v4916 = vsel %vm1807, %v4550, 0
        %v4919 = vsel %vm1807, %v4551, 0
        %v4922 = vsel %vm1807, %v4552, 0
        %v4925 = vsel %vm1807, %v4553, 0
        %v4928 = vsel %vm1807, %v4554, 0
        %v4931 = vsel %vm1807, %v4555, 0
        %v4934 = vsel %vm1807, %v4556, 0
        %4936 = vmatpush.msra.mxu0 0.0
        %4937 = vmatpush.msra.mxu0 0.0
        %4938 = vmatpush.msra.mxu0 0.0
        %4939 = vmatpush.msra.mxu0 0.0
        %4940 = vmatpush.msra.mxu0 0.0
        %4941 = vmatpush.msra.mxu0 0.0
        %4942 = vmatpush.msra.mxu0 0.0
        %4943 = vmatpush.msra.mxu0 0.0
        %4944 = vmatpush.msra.mxu0 %v4903
        %4945 = vmatpush.msra.mxu0 %v4901
        %4946 = vmatpush.msra.mxu0 %v4899
        %4947 = vmatpush.msra.mxu0 %v4897
        %4948 = vmatpush.msra.mxu0 %v4895
        %4949 = vmatpush.msra.mxu0 %v4893
        %4950 = vmatpush.msra.mxu0 %v4891
        %4951 = vmatpush.msra.mxu0 %v4889
        %4952 = vmatmul.f32.gmra.mxu0 %v4913
        %v4953 = vpop.f32.mrf.mxu0
        %v4954 = vadd.f32 0.0, %v4953
        %4955 = vmatmul.f32.gmra.mxu0 %v4916
        %v4956 = vpop.f32.mrf.mxu0
        %v4957 = vadd.f32 0.0, %v4956
        %4958 = vmatmul.f32.gmra.mxu0 %v4919
        %v4959 = vpop.f32.mrf.mxu0
        %v4960 = vadd.f32 0.0, %v4959
        %4961 = vmatmul.f32.gmra.mxu0 %v4922
        %v4962 = vpop.f32.mrf.mxu0
        %v4963 = vadd.f32 0.0, %v4962
        %4964 = vmatmul.f32.gmra.mxu0 %v4925
        %v4965 = vpop.f32.mrf.mxu0
        %v4966 = vadd.f32 0.0, %v4965
        %4967 = vmatmul.f32.gmra.mxu0 %v4928
        %v4968 = vpop.f32.mrf.mxu0
        %v4969 = vadd.f32 0.0, %v4968
        %4970 = vmatmul.f32.gmra.mxu0 %v4931
        %v4971 = vpop.f32.mrf.mxu0
        %v4972 = vadd.f32 0.0, %v4971
        %4973 = vmatmul.f32.gmra.mxu0 %v4934
        %v4974 = vpop.f32.mrf.mxu0
        %v4975 = vadd.f32 0.0, %v4974
        %4976 = vdwg.mxu0
        %4985 = vrot.lane.b32.xlu0 %v991, 96
        %v4986 = vpop.permute.xlu0 %4985
        %4987 = vrot.lane.b32.xlu0 %v994, 96
        %v4988 = vpop.permute.xlu0 %4987
        %4989 = vrot.lane.b32.xlu0 %v997, 96
        %v4990 = vpop.permute.xlu0 %4989
        %4991 = vrot.lane.b32.xlu0 %v1000, 96
        %v4992 = vpop.permute.xlu0 %4991
        %4993 = vrot.lane.b32.xlu0 %v1003, 96
        %v4994 = vpop.permute.xlu0 %4993
        %4995 = vrot.lane.b32.xlu0 %v1006, 96
        %v4996 = vpop.permute.xlu0 %4995
        %4997 = vrot.lane.b32.xlu0 %v1009, 96
        %v4998 = vpop.permute.xlu0 %4997
        %4999 = vrot.lane.b32.xlu0 %v1012, 96
        %v5000 = vpop.permute.xlu0 %4999
        %v5010 = vsel %vm1807, %v4557, 0
        %v5013 = vsel %vm1807, %v4558, 0
        %v5016 = vsel %vm1807, %v4559, 0
        %v5019 = vsel %vm1807, %v4560, 0
        %v5022 = vsel %vm1807, %v4561, 0
        %v5025 = vsel %vm1807, %v4562, 0
        %v5028 = vsel %vm1807, %v4563, 0
        %v5031 = vsel %vm1807, %v4564, 0
        %5033 = vmatpush.msra.mxu0 0.0
        %5034 = vmatpush.msra.mxu0 0.0
        %5035 = vmatpush.msra.mxu0 0.0
        %5036 = vmatpush.msra.mxu0 0.0
        %5037 = vmatpush.msra.mxu0 0.0
        %5038 = vmatpush.msra.mxu0 0.0
        %5039 = vmatpush.msra.mxu0 0.0
        %5040 = vmatpush.msra.mxu0 0.0
        %5041 = vmatpush.msra.mxu0 %v5000
        %5042 = vmatpush.msra.mxu0 %v4998
        %5043 = vmatpush.msra.mxu0 %v4996
        %5044 = vmatpush.msra.mxu0 %v4994
        %5045 = vmatpush.msra.mxu0 %v4992
        %5046 = vmatpush.msra.mxu0 %v4990
        %5047 = vmatpush.msra.mxu0 %v4988
        %5048 = vmatpush.msra.mxu0 %v4986
        %5049 = vmatmul.f32.gmra.mxu0 %v5010
        %v5050 = vpop.f32.mrf.mxu0
        %v5051 = vadd.f32 0.0, %v5050
        %5052 = vmatmul.f32.gmra.mxu0 %v5013
        %v5053 = vpop.f32.mrf.mxu0
        %v5054 = vadd.f32 0.0, %v5053
        %5055 = vmatmul.f32.gmra.mxu0 %v5016
        %v5056 = vpop.f32.mrf.mxu0
        %v5057 = vadd.f32 0.0, %v5056
        %5058 = vmatmul.f32.gmra.mxu0 %v5019
        %v5059 = vpop.f32.mrf.mxu0
        %v5060 = vadd.f32 0.0, %v5059
        %5061 = vmatmul.f32.gmra.mxu0 %v5022
        %v5062 = vpop.f32.mrf.mxu0
        %v5063 = vadd.f32 0.0, %v5062
        %5064 = vmatmul.f32.gmra.mxu0 %v5025
        %v5065 = vpop.f32.mrf.mxu0
        %v5066 = vadd.f32 0.0, %v5065
        %5067 = vmatmul.f32.gmra.mxu0 %v5028
        %v5068 = vpop.f32.mrf.mxu0
        %v5069 = vadd.f32 0.0, %v5068
        %5070 = vmatmul.f32.gmra.mxu0 %v5031
        %v5071 = vpop.f32.mrf.mxu0
        %v5072 = vadd.f32 0.0, %v5071
        %5073 = vdwg.mxu0
        %5082 = vrot.lane.b32.xlu0 %v1015, 96
        %v5083 = vpop.permute.xlu0 %5082
        %5084 = vrot.lane.b32.xlu0 %v1018, 96
        %v5085 = vpop.permute.xlu0 %5084
        %5086 = vrot.lane.b32.xlu0 %v1021, 96
        %v5087 = vpop.permute.xlu0 %5086
        %5088 = vrot.lane.b32.xlu0 %v1024, 96
        %v5089 = vpop.permute.xlu0 %5088
        %5090 = vrot.lane.b32.xlu0 %v1027, 96
        %v5091 = vpop.permute.xlu0 %5090
        %5092 = vrot.lane.b32.xlu0 %v1030, 96
        %v5093 = vpop.permute.xlu0 %5092
        %5094 = vrot.lane.b32.xlu0 %v1033, 96
        %v5095 = vpop.permute.xlu0 %5094
        %5096 = vrot.lane.b32.xlu0 %v1036, 96
        %v5097 = vpop.permute.xlu0 %5096
        %v5107 = vsel %vm1807, %v4565, 0
        %v5110 = vsel %vm1807, %v4566, 0
        %v5113 = vsel %vm1807, %v4567, 0
        %v5116 = vsel %vm1807, %v4568, 0
        %v5119 = vsel %vm1807, %v4569, 0
        %v5122 = vsel %vm1807, %v4570, 0
        %v5125 = vsel %vm1807, %v4571, 0
        %v5128 = vsel %vm1807, %v4572, 0
        %5130 = vmatpush.msra.mxu0 0.0
        %5131 = vmatpush.msra.mxu0 0.0
        %5132 = vmatpush.msra.mxu0 0.0
        %5133 = vmatpush.msra.mxu0 0.0
        %5134 = vmatpush.msra.mxu0 0.0
        %5135 = vmatpush.msra.mxu0 0.0
        %5136 = vmatpush.msra.mxu0 0.0
        %5137 = vmatpush.msra.mxu0 0.0
        %5138 = vmatpush.msra.mxu0 %v5097
        %5139 = vmatpush.msra.mxu0 %v5095
        %5140 = vmatpush.msra.mxu0 %v5093
        %5141 = vmatpush.msra.mxu0 %v5091
        %5142 = vmatpush.msra.mxu0 %v5089
        %5143 = vmatpush.msra.mxu0 %v5087
        %5144 = vmatpush.msra.mxu0 %v5085
        %5145 = vmatpush.msra.mxu0 %v5083
        %5146 = vmatmul.f32.gmra.mxu0 %v5107
        %v5147 = vpop.f32.mrf.mxu0
        %v5148 = vadd.f32 0.0, %v5147
        %5149 = vmatmul.f32.gmra.mxu0 %v5110
        %v5150 = vpop.f32.mrf.mxu0
        %v5151 = vadd.f32 0.0, %v5150
        %5152 = vmatmul.f32.gmra.mxu0 %v5113
        %v5153 = vpop.f32.mrf.mxu0
        %v5154 = vadd.f32 0.0, %v5153
        %5155 = vmatmul.f32.gmra.mxu0 %v5116
        %v5156 = vpop.f32.mrf.mxu0
        %v5157 = vadd.f32 0.0, %v5156
        %5158 = vmatmul.f32.gmra.mxu0 %v5119
        %v5159 = vpop.f32.mrf.mxu0
        %v5160 = vadd.f32 0.0, %v5159
        %5161 = vmatmul.f32.gmra.mxu0 %v5122
        %v5162 = vpop.f32.mrf.mxu0
        %v5163 = vadd.f32 0.0, %v5162
        %5164 = vmatmul.f32.gmra.mxu0 %v5125
        %v5165 = vpop.f32.mrf.mxu0
        %v5166 = vadd.f32 0.0, %v5165
        %5167 = vmatmul.f32.gmra.mxu0 %v5128
        %v5168 = vpop.f32.mrf.mxu0
        %v5169 = vadd.f32 0.0, %v5168
        %5170 = vdwg.mxu0
        %5179 = vrot.lane.b32.xlu0 %v1039, 96
        %v5180 = vpop.permute.xlu0 %5179
        %5181 = vrot.lane.b32.xlu0 %v1042, 96
        %v5182 = vpop.permute.xlu0 %5181
        %5183 = vrot.lane.b32.xlu0 %v1045, 96
        %v5184 = vpop.permute.xlu0 %5183
        %5185 = vrot.lane.b32.xlu0 %v1048, 96
        %v5186 = vpop.permute.xlu0 %5185
        %5187 = vrot.lane.b32.xlu0 %v1051, 96
        %v5188 = vpop.permute.xlu0 %5187
        %5189 = vrot.lane.b32.xlu0 %v1054, 96
        %v5190 = vpop.permute.xlu0 %5189
        %5191 = vrot.lane.b32.xlu0 %v1057, 96
        %v5192 = vpop.permute.xlu0 %5191
        %5193 = vrot.lane.b32.xlu0 %v1060, 96
        %v5194 = vpop.permute.xlu0 %5193
        %v5204 = vsel %vm1807, %v4573, 0
        %v5207 = vsel %vm1807, %v4574, 0
        %v5210 = vsel %vm1807, %v4575, 0
        %v5213 = vsel %vm1807, %v4576, 0
        %v5216 = vsel %vm1807, %v4577, 0
        %v5219 = vsel %vm1807, %v4578, 0
        %v5222 = vsel %vm1807, %v4579, 0
        %v5225 = vsel %vm1807, %v4580, 0
        %5227 = vmatpush.msra.mxu0 0.0
        %5228 = vmatpush.msra.mxu0 0.0
        %5229 = vmatpush.msra.mxu0 0.0
        %5230 = vmatpush.msra.mxu0 0.0
        %5231 = vmatpush.msra.mxu0 0.0
        %5232 = vmatpush.msra.mxu0 0.0
        %5233 = vmatpush.msra.mxu0 0.0
        %5234 = vmatpush.msra.mxu0 0.0
        %5235 = vmatpush.msra.mxu0 %v5194
        %5236 = vmatpush.msra.mxu0 %v5192
        %5237 = vmatpush.msra.mxu0 %v5190
        %5238 = vmatpush.msra.mxu0 %v5188
        %5239 = vmatpush.msra.mxu0 %v5186
        %5240 = vmatpush.msra.mxu0 %v5184
        %5241 = vmatpush.msra.mxu0 %v5182
        %5242 = vmatpush.msra.mxu0 %v5180
        %5243 = vmatmul.f32.gmra.mxu0 %v5204
        %v5244 = vpop.f32.mrf.mxu0
        %v5245 = vadd.f32 0.0, %v5244
        %5246 = vmatmul.f32.gmra.mxu0 %v5207
        %v5247 = vpop.f32.mrf.mxu0
        %v5248 = vadd.f32 0.0, %v5247
        %5249 = vmatmul.f32.gmra.mxu0 %v5210
        %v5250 = vpop.f32.mrf.mxu0
        %v5251 = vadd.f32 0.0, %v5250
        %5252 = vmatmul.f32.gmra.mxu0 %v5213
        %v5253 = vpop.f32.mrf.mxu0
        %v5254 = vadd.f32 0.0, %v5253
        %5255 = vmatmul.f32.gmra.mxu0 %v5216
        %v5256 = vpop.f32.mrf.mxu0
        %v5257 = vadd.f32 0.0, %v5256
        %5258 = vmatmul.f32.gmra.mxu0 %v5219
        %v5259 = vpop.f32.mrf.mxu0
        %v5260 = vadd.f32 0.0, %v5259
        %5261 = vmatmul.f32.gmra.mxu0 %v5222
        %v5262 = vpop.f32.mrf.mxu0
        %v5263 = vadd.f32 0.0, %v5262
        %5264 = vmatmul.f32.gmra.mxu0 %v5225
        %v5265 = vpop.f32.mrf.mxu0
        %v5266 = vadd.f32 0.0, %v5265
        %5267 = vdwg.mxu0
        %5276 = vrot.lane.b32.xlu0 %v1063, 96
        %v5277 = vpop.permute.xlu0 %5276
        %5278 = vrot.lane.b32.xlu0 %v1066, 96
        %v5279 = vpop.permute.xlu0 %5278
        %5280 = vrot.lane.b32.xlu0 %v1069, 96
        %v5281 = vpop.permute.xlu0 %5280
        %5282 = vrot.lane.b32.xlu0 %v1072, 96
        %v5283 = vpop.permute.xlu0 %5282
        %5284 = vrot.lane.b32.xlu0 %v1075, 96
        %v5285 = vpop.permute.xlu0 %5284
        %5286 = vrot.lane.b32.xlu0 %v1078, 96
        %v5287 = vpop.permute.xlu0 %5286
        %5288 = vrot.lane.b32.xlu0 %v1081, 96
        %v5289 = vpop.permute.xlu0 %5288
        %5290 = vrot.lane.b32.xlu0 %v1084, 96
        %v5291 = vpop.permute.xlu0 %5290
        %v5301 = vsel %vm1807, %v4581, 0
        %v5304 = vsel %vm1807, %v4582, 0
        %v5307 = vsel %vm1807, %v4583, 0
        %v5310 = vsel %vm1807, %v4584, 0
        %v5313 = vsel %vm1807, %v4585, 0
        %v5316 = vsel %vm1807, %v4586, 0
        %v5319 = vsel %vm1807, %v4587, 0
        %v5322 = vsel %vm1807, %v4588, 0
        %5324 = vmatpush.msra.mxu0 0.0
        %5325 = vmatpush.msra.mxu0 0.0
        %5326 = vmatpush.msra.mxu0 0.0
        %5327 = vmatpush.msra.mxu0 0.0
        %5328 = vmatpush.msra.mxu0 0.0
        %5329 = vmatpush.msra.mxu0 0.0
        %5330 = vmatpush.msra.mxu0 0.0
        %5331 = vmatpush.msra.mxu0 0.0
        %5332 = vmatpush.msra.mxu0 %v5291
        %5333 = vmatpush.msra.mxu0 %v5289
        %5334 = vmatpush.msra.mxu0 %v5287
        %5335 = vmatpush.msra.mxu0 %v5285
        %5336 = vmatpush.msra.mxu0 %v5283
        %5337 = vmatpush.msra.mxu0 %v5281
        %5338 = vmatpush.msra.mxu0 %v5279
        %5339 = vmatpush.msra.mxu0 %v5277
        %5340 = vmatmul.f32.gmra.mxu0 %v5301
        %v5341 = vpop.f32.mrf.mxu0
        %v5342 = vadd.f32 0.0, %v5341
        %5343 = vmatmul.f32.gmra.mxu0 %v5304
        %v5344 = vpop.f32.mrf.mxu0
        %v5345 = vadd.f32 0.0, %v5344
        %5346 = vmatmul.f32.gmra.mxu0 %v5307
        %v5347 = vpop.f32.mrf.mxu0
        %v5348 = vadd.f32 0.0, %v5347
        %5349 = vmatmul.f32.gmra.mxu0 %v5310
        %v5350 = vpop.f32.mrf.mxu0
        %v5351 = vadd.f32 0.0, %v5350
        %5352 = vmatmul.f32.gmra.mxu0 %v5313
        %v5353 = vpop.f32.mrf.mxu0
        %v5354 = vadd.f32 0.0, %v5353
        %5355 = vmatmul.f32.gmra.mxu0 %v5316
        %v5356 = vpop.f32.mrf.mxu0
        %v5357 = vadd.f32 0.0, %v5356
        %5358 = vmatmul.f32.gmra.mxu0 %v5319
        %v5359 = vpop.f32.mrf.mxu0
        %v5360 = vadd.f32 0.0, %v5359
        %5361 = vmatmul.f32.gmra.mxu0 %v5322
        %v5362 = vpop.f32.mrf.mxu0
        %v5363 = vadd.f32 0.0, %v5362
        %5364 = vdwg.mxu0
        %v5365 = vld [vmem:[#allocation8 + $0x20] sm:$0xff]
        %v5366 = vld [vmem:[#allocation8 + $0x28] sm:$0xff]
        %v5367 = vld [vmem:[#allocation8 + $0x30] sm:$0xff]
        %v5368 = vld [vmem:[#allocation8 + $0x38] sm:$0xff]
        %v5370 = vsel %vm1094, %v4663, 0
        %v5373 = vsel %vm1094, %v4666, 0
        %v5376 = vsel %vm1094, %v4669, 0
        %v5379 = vsel %vm1094, %v4672, 0
        %v5382 = vsel %vm1094, %v4675, 0
        %v5385 = vsel %vm1094, %v4678, 0
        %v5388 = vsel %vm1094, %v4681, 0
        %v5391 = vsel %vm1094, %v4684, 0
        %v5394 = vsel %vm1094, %v4760, 0
        %v5397 = vsel %vm1094, %v4763, 0
        %v5400 = vsel %vm1094, %v4766, 0
        %v5403 = vsel %vm1094, %v4769, 0
        %v5406 = vsel %vm1094, %v4772, 0
        %v5409 = vsel %vm1094, %v4775, 0
        %v5412 = vsel %vm1094, %v4778, 0
        %v5415 = vsel %vm1094, %v4781, 0
        %v5418 = vsel %vm1094, %v4857, 0
        %v5421 = vsel %vm1094, %v4860, 0
        %v5424 = vsel %vm1094, %v4863, 0
        %v5427 = vsel %vm1094, %v4866, 0
        %v5430 = vsel %vm1094, %v4869, 0
        %v5433 = vsel %vm1094, %v4872, 0
        %v5436 = vsel %vm1094, %v4875, 0
        %v5439 = vsel %vm1094, %v4878, 0
        %v5442 = vsel %vm1094, %v4954, 0
        %v5445 = vsel %vm1094, %v4957, 0
        %v5448 = vsel %vm1094, %v4960, 0
        %v5451 = vsel %vm1094, %v4963, 0
        %v5454 = vsel %vm1094, %v4966, 0
        %v5457 = vsel %vm1094, %v4969, 0
        %v5460 = vsel %vm1094, %v4972, 0
        %v5463 = vsel %vm1094, %v4975, 0
        %v5466 = vsel %vm1094, %v5051, 0
        %v5469 = vsel %vm1094, %v5054, 0
        %v5472 = vsel %vm1094, %v5057, 0
        %v5475 = vsel %vm1094, %v5060, 0
        %v5478 = vsel %vm1094, %v5063, 0
        %v5481 = vsel %vm1094, %v5066, 0
        %v5484 = vsel %vm1094, %v5069, 0
        %v5487 = vsel %vm1094, %v5072, 0
        %v5490 = vsel %vm1094, %v5148, 0
        %v5493 = vsel %vm1094, %v5151, 0
        %v5496 = vsel %vm1094, %v5154, 0
        %v5499 = vsel %vm1094, %v5157, 0
        %v5502 = vsel %vm1094, %v5160, 0
        %v5505 = vsel %vm1094, %v5163, 0
        %v5508 = vsel %vm1094, %v5166, 0
        %v5511 = vsel %vm1094, %v5169, 0
        %v5514 = vsel %vm1094, %v5245, 0
        %v5517 = vsel %vm1094, %v5248, 0
        %v5520 = vsel %vm1094, %v5251, 0
        %v5523 = vsel %vm1094, %v5254, 0
        %v5526 = vsel %vm1094, %v5257, 0
        %v5529 = vsel %vm1094, %v5260, 0
        %v5532 = vsel %vm1094, %v5263, 0
        %v5535 = vsel %vm1094, %v5266, 0
        %v5538 = vsel %vm1094, %v5342, 0
        %v5541 = vsel %vm1094, %v5345, 0
        %v5544 = vsel %vm1094, %v5348, 0
        %v5547 = vsel %vm1094, %v5351, 0
        %v5550 = vsel %vm1094, %v5354, 0
        %v5553 = vsel %vm1094, %v5357, 0
        %v5556 = vsel %vm1094, %v5360, 0
        %v5559 = vsel %vm1094, %v5363, 0
        %5561 = vmatpush.msra.mxu0 0.0
        %5562 = vmatpush.msra.mxu0 0.0
        %5563 = vmatpush.msra.mxu0 0.0
        %5564 = vmatpush.msra.mxu0 0.0
        %5565 = vmatpush.msra.mxu0 0.0
        %5566 = vmatpush.msra.mxu0 0.0
        %5567 = vmatpush.msra.mxu0 0.0
        %5568 = vmatpush.msra.mxu0 0.0
        %5569 = vmatpush.msra.mxu0 0.0
        %5570 = vmatpush.msra.mxu0 0.0
        %5571 = vmatpush.msra.mxu0 0.0
        %5572 = vmatpush.msra.mxu0 0.0
        %5573 = vmatpush.msra.mxu0 %v5368
        %5574 = vmatpush.msra.mxu0 %v5367
        %5575 = vmatpush.msra.mxu0 %v5366
        %5576 = vmatpush.msra.mxu0 %v5365
        %5577 = vmatmul.f32.gmra.mxu0 %v5370
        %v5578 = vpop.f32.mrf.mxu0
        %v5579 = vadd.f32 0.0, %v5578
        %5580 = vmatmul.f32.gmra.mxu0 %v5373
        %v5581 = vpop.f32.mrf.mxu0
        %v5582 = vadd.f32 0.0, %v5581
        %5583 = vmatmul.f32.gmra.mxu0 %v5376
        %v5584 = vpop.f32.mrf.mxu0
        %v5585 = vadd.f32 0.0, %v5584
        %5586 = vmatmul.f32.gmra.mxu0 %v5379
        %v5587 = vpop.f32.mrf.mxu0
        %v5588 = vadd.f32 0.0, %v5587
        %5589 = vmatmul.f32.gmra.mxu0 %v5382
        %v5590 = vpop.f32.mrf.mxu0
        %v5591 = vadd.f32 0.0, %v5590
        %5592 = vmatmul.f32.gmra.mxu0 %v5385
        %v5593 = vpop.f32.mrf.mxu0
        %v5594 = vadd.f32 0.0, %v5593
        %5595 = vmatmul.f32.gmra.mxu0 %v5388
        %v5596 = vpop.f32.mrf.mxu0
        %v5597 = vadd.f32 0.0, %v5596
        %5598 = vmatmul.f32.gmra.mxu0 %v5391
        %v5599 = vpop.f32.mrf.mxu0
        %v5600 = vadd.f32 0.0, %v5599
        %5601 = vmatmul.f32.gmra.mxu0 %v5394
        %v5602 = vpop.f32.mrf.mxu0
        %v5603 = vadd.f32 0.0, %v5602
        %5604 = vmatmul.f32.gmra.mxu0 %v5397
        %v5605 = vpop.f32.mrf.mxu0
        %v5606 = vadd.f32 0.0, %v5605
        %5607 = vmatmul.f32.gmra.mxu0 %v5400
        %v5608 = vpop.f32.mrf.mxu0
        %v5609 = vadd.f32 0.0, %v5608
        %5610 = vmatmul.f32.gmra.mxu0 %v5403
        %v5611 = vpop.f32.mrf.mxu0
        %v5612 = vadd.f32 0.0, %v5611
        %5613 = vmatmul.f32.gmra.mxu0 %v5406
        %v5614 = vpop.f32.mrf.mxu0
        %v5615 = vadd.f32 0.0, %v5614
        %5616 = vmatmul.f32.gmra.mxu0 %v5409
        %v5617 = vpop.f32.mrf.mxu0
        %v5618 = vadd.f32 0.0, %v5617
        %5619 = vmatmul.f32.gmra.mxu0 %v5412
        %v5620 = vpop.f32.mrf.mxu0
        %v5621 = vadd.f32 0.0, %v5620
        %5622 = vmatmul.f32.gmra.mxu0 %v5415
        %v5623 = vpop.f32.mrf.mxu0
        %v5624 = vadd.f32 0.0, %v5623
        %5625 = vmatmul.f32.gmra.mxu0 %v5418
        %v5626 = vpop.f32.mrf.mxu0
        %v5627 = vadd.f32 0.0, %v5626
        %5628 = vmatmul.f32.gmra.mxu0 %v5421
        %v5629 = vpop.f32.mrf.mxu0
        %v5630 = vadd.f32 0.0, %v5629
        %5631 = vmatmul.f32.gmra.mxu0 %v5424
        %v5632 = vpop.f32.mrf.mxu0
        %v5633 = vadd.f32 0.0, %v5632
        %5634 = vmatmul.f32.gmra.mxu0 %v5427
        %v5635 = vpop.f32.mrf.mxu0
        %v5636 = vadd.f32 0.0, %v5635
        %5637 = vmatmul.f32.gmra.mxu0 %v5430
        %v5638 = vpop.f32.mrf.mxu0
        %v5639 = vadd.f32 0.0, %v5638
        %5640 = vmatmul.f32.gmra.mxu0 %v5433
        %v5641 = vpop.f32.mrf.mxu0
        %v5642 = vadd.f32 0.0, %v5641
        %5643 = vmatmul.f32.gmra.mxu0 %v5436
        %v5644 = vpop.f32.mrf.mxu0
        %v5645 = vadd.f32 0.0, %v5644
        %5646 = vmatmul.f32.gmra.mxu0 %v5439
        %v5647 = vpop.f32.mrf.mxu0
        %v5648 = vadd.f32 0.0, %v5647
        %5649 = vmatmul.f32.gmra.mxu0 %v5442
        %v5650 = vpop.f32.mrf.mxu0
        %v5651 = vadd.f32 0.0, %v5650
        %5652 = vmatmul.f32.gmra.mxu0 %v5445
        %v5653 = vpop.f32.mrf.mxu0
        %v5654 = vadd.f32 0.0, %v5653
        %5655 = vmatmul.f32.gmra.mxu0 %v5448
        %v5656 = vpop.f32.mrf.mxu0
        %v5657 = vadd.f32 0.0, %v5656
        %5658 = vmatmul.f32.gmra.mxu0 %v5451
        %v5659 = vpop.f32.mrf.mxu0
        %v5660 = vadd.f32 0.0, %v5659
        %5661 = vmatmul.f32.gmra.mxu0 %v5454
        %v5662 = vpop.f32.mrf.mxu0
        %v5663 = vadd.f32 0.0, %v5662
        %5664 = vmatmul.f32.gmra.mxu0 %v5457
        %v5665 = vpop.f32.mrf.mxu0
        %v5666 = vadd.f32 0.0, %v5665
        %5667 = vmatmul.f32.gmra.mxu0 %v5460
        %v5668 = vpop.f32.mrf.mxu0
        %v5669 = vadd.f32 0.0, %v5668
        %5670 = vmatmul.f32.gmra.mxu0 %v5463
        %v5671 = vpop.f32.mrf.mxu0
        %v5672 = vadd.f32 0.0, %v5671
        %5673 = vmatmul.f32.gmra.mxu0 %v5466
        %v5674 = vpop.f32.mrf.mxu0
        %v5675 = vadd.f32 0.0, %v5674
        %5676 = vmatmul.f32.gmra.mxu0 %v5469
        %v5677 = vpop.f32.mrf.mxu0
        %v5678 = vadd.f32 0.0, %v5677
        %5679 = vmatmul.f32.gmra.mxu0 %v5472
        %v5680 = vpop.f32.mrf.mxu0
        %v5681 = vadd.f32 0.0, %v5680
        %5682 = vmatmul.f32.gmra.mxu0 %v5475
        %v5683 = vpop.f32.mrf.mxu0
        %v5684 = vadd.f32 0.0, %v5683
        %5685 = vmatmul.f32.gmra.mxu0 %v5478
        %v5686 = vpop.f32.mrf.mxu0
        %v5687 = vadd.f32 0.0, %v5686
        %5688 = vmatmul.f32.gmra.mxu0 %v5481
        %v5689 = vpop.f32.mrf.mxu0
        %v5690 = vadd.f32 0.0, %v5689
        %5691 = vmatmul.f32.gmra.mxu0 %v5484
        %v5692 = vpop.f32.mrf.mxu0
        %v5693 = vadd.f32 0.0, %v5692
        %5694 = vmatmul.f32.gmra.mxu0 %v5487
        %v5695 = vpop.f32.mrf.mxu0
        %v5696 = vadd.f32 0.0, %v5695
        %5697 = vmatmul.f32.gmra.mxu0 %v5490
        %v5698 = vpop.f32.mrf.mxu0
        %v5699 = vadd.f32 0.0, %v5698
        %5700 = vmatmul.f32.gmra.mxu0 %v5493
        %v5701 = vpop.f32.mrf.mxu0
        %v5702 = vadd.f32 0.0, %v5701
        %5703 = vmatmul.f32.gmra.mxu0 %v5496
        %v5704 = vpop.f32.mrf.mxu0
        %v5705 = vadd.f32 0.0, %v5704
        %5706 = vmatmul.f32.gmra.mxu0 %v5499
        %v5707 = vpop.f32.mrf.mxu0
        %v5708 = vadd.f32 0.0, %v5707
        %5709 = vmatmul.f32.gmra.mxu0 %v5502
        %v5710 = vpop.f32.mrf.mxu0
        %v5711 = vadd.f32 0.0, %v5710
        %5712 = vmatmul.f32.gmra.mxu0 %v5505
        %v5713 = vpop.f32.mrf.mxu0
        %v5714 = vadd.f32 0.0, %v5713
        %5715 = vmatmul.f32.gmra.mxu0 %v5508
        %v5716 = vpop.f32.mrf.mxu0
        %v5717 = vadd.f32 0.0, %v5716
        %5718 = vmatmul.f32.gmra.mxu0 %v5511
        %v5719 = vpop.f32.mrf.mxu0
        %v5720 = vadd.f32 0.0, %v5719
        %5721 = vmatmul.f32.gmra.mxu0 %v5514
        %v5722 = vpop.f32.mrf.mxu0
        %v5723 = vadd.f32 0.0, %v5722
        %5724 = vmatmul.f32.gmra.mxu0 %v5517
        %v5725 = vpop.f32.mrf.mxu0
        %v5726 = vadd.f32 0.0, %v5725
        %5727 = vmatmul.f32.gmra.mxu0 %v5520
        %v5728 = vpop.f32.mrf.mxu0
        %v5729 = vadd.f32 0.0, %v5728
        %5730 = vmatmul.f32.gmra.mxu0 %v5523
        %v5731 = vpop.f32.mrf.mxu0
        %v5732 = vadd.f32 0.0, %v5731
        %5733 = vmatmul.f32.gmra.mxu0 %v5526
        %v5734 = vpop.f32.mrf.mxu0
        %v5735 = vadd.f32 0.0, %v5734
        %5736 = vmatmul.f32.gmra.mxu0 %v5529
        %v5737 = vpop.f32.mrf.mxu0
        %v5738 = vadd.f32 0.0, %v5737
        %5739 = vmatmul.f32.gmra.mxu0 %v5532
        %v5740 = vpop.f32.mrf.mxu0
        %v5741 = vadd.f32 0.0, %v5740
        %5742 = vmatmul.f32.gmra.mxu0 %v5535
        %v5743 = vpop.f32.mrf.mxu0
        %v5744 = vadd.f32 0.0, %v5743
        %5745 = vmatmul.f32.gmra.mxu0 %v5538
        %v5746 = vpop.f32.mrf.mxu0
        %v5747 = vadd.f32 0.0, %v5746
        %5748 = vmatmul.f32.gmra.mxu0 %v5541
        %v5749 = vpop.f32.mrf.mxu0
        %v5750 = vadd.f32 0.0, %v5749
        %5751 = vmatmul.f32.gmra.mxu0 %v5544
        %v5752 = vpop.f32.mrf.mxu0
        %v5753 = vadd.f32 0.0, %v5752
        %5754 = vmatmul.f32.gmra.mxu0 %v5547
        %v5755 = vpop.f32.mrf.mxu0
        %v5756 = vadd.f32 0.0, %v5755
        %5757 = vmatmul.f32.gmra.mxu0 %v5550
        %v5758 = vpop.f32.mrf.mxu0
        %v5759 = vadd.f32 0.0, %v5758
        %5760 = vmatmul.f32.gmra.mxu0 %v5553
        %v5761 = vpop.f32.mrf.mxu0
        %v5762 = vadd.f32 0.0, %v5761
        %5763 = vmatmul.f32.gmra.mxu0 %v5556
        %v5764 = vpop.f32.mrf.mxu0
        %v5765 = vadd.f32 0.0, %v5764
        %5766 = vmatmul.f32.gmra.mxu0 %v5559
        %v5767 = vpop.f32.mrf.mxu0
        %v5768 = vadd.f32 0.0, %v5767
        %5769 = vdwg.mxu0
        %v5771 = vsel %vm1094, %v2554, 0
        %v5774 = vsel %vm1094, %v2557, 0
        %v5777 = vsel %vm1094, %v2560, 0
        %v5780 = vsel %vm1094, %v2563, 0
        %v5783 = vsel %vm1094, %v2566, 0
        %v5786 = vsel %vm1094, %v2569, 0
        %v5789 = vsel %vm1094, %v2572, 0
        %v5792 = vsel %vm1094, %v2575, 0
        %v5795 = vsel %vm1094, %v2619, 0
        %v5798 = vsel %vm1094, %v2622, 0
        %v5801 = vsel %vm1094, %v2625, 0
        %v5804 = vsel %vm1094, %v2628, 0
        %v5807 = vsel %vm1094, %v2631, 0
        %v5810 = vsel %vm1094, %v2634, 0
        %v5813 = vsel %vm1094, %v2637, 0
        %v5816 = vsel %vm1094, %v2640, 0
        %v5819 = vsel %vm1094, %v2684, 0
        %v5822 = vsel %vm1094, %v2687, 0
        %v5825 = vsel %vm1094, %v2690, 0
        %v5828 = vsel %vm1094, %v2693, 0
        %v5831 = vsel %vm1094, %v2696, 0
        %v5834 = vsel %vm1094, %v2699, 0
        %v5837 = vsel %vm1094, %v2702, 0
        %v5840 = vsel %vm1094, %v2705, 0
        %v5843 = vsel %vm1094, %v2749, 0
        %v5846 = vsel %vm1094, %v2752, 0
        %v5849 = vsel %vm1094, %v2755, 0
        %v5852 = vsel %vm1094, %v2758, 0
        %v5855 = vsel %vm1094, %v2761, 0
        %v5858 = vsel %vm1094, %v2764, 0
        %v5861 = vsel %vm1094, %v2767, 0
        %v5864 = vsel %vm1094, %v2770, 0
        %v5867 = vsel %vm1094, %v2814, 0
        %v5870 = vsel %vm1094, %v2817, 0
        %v5873 = vsel %vm1094, %v2820, 0
        %v5876 = vsel %vm1094, %v2823, 0
        %v5879 = vsel %vm1094, %v2826, 0
        %v5882 = vsel %vm1094, %v2829, 0
        %v5885 = vsel %vm1094, %v2832, 0
        %v5888 = vsel %vm1094, %v2835, 0
        %v5891 = vsel %vm1094, %v2879, 0
        %v5894 = vsel %vm1094, %v2882, 0
        %v5897 = vsel %vm1094, %v2885, 0
        %v5900 = vsel %vm1094, %v2888, 0
        %v5903 = vsel %vm1094, %v2891, 0
        %v5906 = vsel %vm1094, %v2894, 0
        %v5909 = vsel %vm1094, %v2897, 0
        %v5912 = vsel %vm1094, %v2900, 0
        %v5915 = vsel %vm1094, %v2944, 0
        %v5918 = vsel %vm1094, %v2947, 0
        %v5921 = vsel %vm1094, %v2950, 0
        %v5924 = vsel %vm1094, %v2953, 0
        %v5927 = vsel %vm1094, %v2956, 0
        %v5930 = vsel %vm1094, %v2959, 0
        %v5933 = vsel %vm1094, %v2962, 0
        %v5936 = vsel %vm1094, %v2965, 0
        %v5939 = vsel %vm1094, %v3009, 0
        %v5942 = vsel %vm1094, %v3012, 0
        %v5945 = vsel %vm1094, %v3015, 0
        %v5948 = vsel %vm1094, %v3018, 0
        %v5951 = vsel %vm1094, %v3021, 0
        %v5954 = vsel %vm1094, %v3024, 0
        %v5957 = vsel %vm1094, %v3027, 0
        %v5960 = vsel %vm1094, %v3030, 0
        %5962 = vmatpush.msra.mxu0 0.0
        %5963 = vmatpush.msra.mxu0 0.0
        %5964 = vmatpush.msra.mxu0 0.0
        %5965 = vmatpush.msra.mxu0 0.0
        %5966 = vmatpush.msra.mxu0 0.0
        %5967 = vmatpush.msra.mxu0 0.0
        %5968 = vmatpush.msra.mxu0 0.0
        %5969 = vmatpush.msra.mxu0 0.0
        %5970 = vmatpush.msra.mxu0 0.0
        %5971 = vmatpush.msra.mxu0 0.0
        %5972 = vmatpush.msra.mxu0 0.0
        %5973 = vmatpush.msra.mxu0 0.0
        %5974 = vmatpush.msra.mxu0 %v3035
        %5975 = vmatpush.msra.mxu0 %v3034
        %5976 = vmatpush.msra.mxu0 %v3033
        %5977 = vmatpush.msra.mxu0 %v3032
        %5978 = vmatmul.f32.gmra.mxu0 %v5771
        %v5979 = vpop.f32.mrf.mxu0
        %v5980 = vadd.f32 %v5579, %v5979
        %5981 = vmatmul.f32.gmra.mxu0 %v5774
        %v5982 = vpop.f32.mrf.mxu0
        %v5983 = vadd.f32 %v5582, %v5982
        %5984 = vmatmul.f32.gmra.mxu0 %v5777
        %v5985 = vpop.f32.mrf.mxu0
        %v5986 = vadd.f32 %v5585, %v5985
        %5987 = vmatmul.f32.gmra.mxu0 %v5780
        %v5988 = vpop.f32.mrf.mxu0
        %v5989 = vadd.f32 %v5588, %v5988
        %5990 = vmatmul.f32.gmra.mxu0 %v5783
        %v5991 = vpop.f32.mrf.mxu0
        %v5992 = vadd.f32 %v5591, %v5991
        %5993 = vmatmul.f32.gmra.mxu0 %v5786
        %v5994 = vpop.f32.mrf.mxu0
        %v5995 = vadd.f32 %v5594, %v5994
        %5996 = vmatmul.f32.gmra.mxu0 %v5789
        %v5997 = vpop.f32.mrf.mxu0
        %v5998 = vadd.f32 %v5597, %v5997
        %5999 = vmatmul.f32.gmra.mxu0 %v5792
        %v6000 = vpop.f32.mrf.mxu0
        %v6001 = vadd.f32 %v5600, %v6000
        %6002 = vmatmul.f32.gmra.mxu0 %v5795
        %v6003 = vpop.f32.mrf.mxu0
        %v6004 = vadd.f32 %v5603, %v6003
        %6005 = vmatmul.f32.gmra.mxu0 %v5798
        %v6006 = vpop.f32.mrf.mxu0
        %v6007 = vadd.f32 %v5606, %v6006
        %6008 = vmatmul.f32.gmra.mxu0 %v5801
        %v6009 = vpop.f32.mrf.mxu0
        %v6010 = vadd.f32 %v5609, %v6009
        %6011 = vmatmul.f32.gmra.mxu0 %v5804
        %v6012 = vpop.f32.mrf.mxu0
        %v6013 = vadd.f32 %v5612, %v6012
        %6014 = vmatmul.f32.gmra.mxu0 %v5807
        %v6015 = vpop.f32.mrf.mxu0
        %v6016 = vadd.f32 %v5615, %v6015
        %6017 = vmatmul.f32.gmra.mxu0 %v5810
        %v6018 = vpop.f32.mrf.mxu0
        %v6019 = vadd.f32 %v5618, %v6018
        %6020 = vmatmul.f32.gmra.mxu0 %v5813
        %v6021 = vpop.f32.mrf.mxu0
        %v6022 = vadd.f32 %v5621, %v6021
        %6023 = vmatmul.f32.gmra.mxu0 %v5816
        %v6024 = vpop.f32.mrf.mxu0
        %v6025 = vadd.f32 %v5624, %v6024
        %6026 = vmatmul.f32.gmra.mxu0 %v5819
        %v6027 = vpop.f32.mrf.mxu0
        %v6028 = vadd.f32 %v5627, %v6027
        %6029 = vmatmul.f32.gmra.mxu0 %v5822
        %v6030 = vpop.f32.mrf.mxu0
        %v6031 = vadd.f32 %v5630, %v6030
        %6032 = vmatmul.f32.gmra.mxu0 %v5825
        %v6033 = vpop.f32.mrf.mxu0
        %v6034 = vadd.f32 %v5633, %v6033
        %6035 = vmatmul.f32.gmra.mxu0 %v5828
        %v6036 = vpop.f32.mrf.mxu0
        %v6037 = vadd.f32 %v5636, %v6036
        %6038 = vmatmul.f32.gmra.mxu0 %v5831
        %v6039 = vpop.f32.mrf.mxu0
        %v6040 = vadd.f32 %v5639, %v6039
        %6041 = vmatmul.f32.gmra.mxu0 %v5834
        %v6042 = vpop.f32.mrf.mxu0
        %v6043 = vadd.f32 %v5642, %v6042
        %6044 = vmatmul.f32.gmra.mxu0 %v5837
        %v6045 = vpop.f32.mrf.mxu0
        %v6046 = vadd.f32 %v5645, %v6045
        %6047 = vmatmul.f32.gmra.mxu0 %v5840
        %v6048 = vpop.f32.mrf.mxu0
        %v6049 = vadd.f32 %v5648, %v6048
        %6050 = vmatmul.f32.gmra.mxu0 %v5843
        %v6051 = vpop.f32.mrf.mxu0
        %v6052 = vadd.f32 %v5651, %v6051
        %6053 = vmatmul.f32.gmra.mxu0 %v5846
        %v6054 = vpop.f32.mrf.mxu0
        %v6055 = vadd.f32 %v5654, %v6054
        %6056 = vmatmul.f32.gmra.mxu0 %v5849
        %v6057 = vpop.f32.mrf.mxu0
        %v6058 = vadd.f32 %v5657, %v6057
        %6059 = vmatmul.f32.gmra.mxu0 %v5852
        %v6060 = vpop.f32.mrf.mxu0
        %v6061 = vadd.f32 %v5660, %v6060
        %6062 = vmatmul.f32.gmra.mxu0 %v5855
        %v6063 = vpop.f32.mrf.mxu0
        %v6064 = vadd.f32 %v5663, %v6063
        %6065 = vmatmul.f32.gmra.mxu0 %v5858
        %v6066 = vpop.f32.mrf.mxu0
        %v6067 = vadd.f32 %v5666, %v6066
        %6068 = vmatmul.f32.gmra.mxu0 %v5861
        %v6069 = vpop.f32.mrf.mxu0
        %v6070 = vadd.f32 %v5669, %v6069
        %6071 = vmatmul.f32.gmra.mxu0 %v5864
        %v6072 = vpop.f32.mrf.mxu0
        %v6073 = vadd.f32 %v5672, %v6072
        %6074 = vmatmul.f32.gmra.mxu0 %v5867
        %v6075 = vpop.f32.mrf.mxu0
        %v6076 = vadd.f32 %v5675, %v6075
        %6077 = vmatmul.f32.gmra.mxu0 %v5870
        %v6078 = vpop.f32.mrf.mxu0
        %v6079 = vadd.f32 %v5678, %v6078
        %6080 = vmatmul.f32.gmra.mxu0 %v5873
        %v6081 = vpop.f32.mrf.mxu0
        %v6082 = vadd.f32 %v5681, %v6081
        %6083 = vmatmul.f32.gmra.mxu0 %v5876
        %v6084 = vpop.f32.mrf.mxu0
        %v6085 = vadd.f32 %v5684, %v6084
        %6086 = vmatmul.f32.gmra.mxu0 %v5879
        %v6087 = vpop.f32.mrf.mxu0
        %v6088 = vadd.f32 %v5687, %v6087
        %6089 = vmatmul.f32.gmra.mxu0 %v5882
        %v6090 = vpop.f32.mrf.mxu0
        %v6091 = vadd.f32 %v5690, %v6090
        %6092 = vmatmul.f32.gmra.mxu0 %v5885
        %v6093 = vpop.f32.mrf.mxu0
        %v6094 = vadd.f32 %v5693, %v6093
        %6095 = vmatmul.f32.gmra.mxu0 %v5888
        %v6096 = vpop.f32.mrf.mxu0
        %v6097 = vadd.f32 %v5696, %v6096
        %6098 = vmatmul.f32.gmra.mxu0 %v5891
        %v6099 = vpop.f32.mrf.mxu0
        %v6100 = vadd.f32 %v5699, %v6099
        %6101 = vmatmul.f32.gmra.mxu0 %v5894
        %v6102 = vpop.f32.mrf.mxu0
        %v6103 = vadd.f32 %v5702, %v6102
        %6104 = vmatmul.f32.gmra.mxu0 %v5897
        %v6105 = vpop.f32.mrf.mxu0
        %v6106 = vadd.f32 %v5705, %v6105
        %6107 = vmatmul.f32.gmra.mxu0 %v5900
        %v6108 = vpop.f32.mrf.mxu0
        %v6109 = vadd.f32 %v5708, %v6108
        %6110 = vmatmul.f32.gmra.mxu0 %v5903
        %v6111 = vpop.f32.mrf.mxu0
        %v6112 = vadd.f32 %v5711, %v6111
        %6113 = vmatmul.f32.gmra.mxu0 %v5906
        %v6114 = vpop.f32.mrf.mxu0
        %v6115 = vadd.f32 %v5714, %v6114
        %6116 = vmatmul.f32.gmra.mxu0 %v5909
        %v6117 = vpop.f32.mrf.mxu0
        %v6118 = vadd.f32 %v5717, %v6117
        %6119 = vmatmul.f32.gmra.mxu0 %v5912
        %v6120 = vpop.f32.mrf.mxu0
        %v6121 = vadd.f32 %v5720, %v6120
        %6122 = vmatmul.f32.gmra.mxu0 %v5915
        %v6123 = vpop.f32.mrf.mxu0
        %v6124 = vadd.f32 %v5723, %v6123
        %6125 = vmatmul.f32.gmra.mxu0 %v5918
        %v6126 = vpop.f32.mrf.mxu0
        %v6127 = vadd.f32 %v5726, %v6126
        %6128 = vmatmul.f32.gmra.mxu0 %v5921
        %v6129 = vpop.f32.mrf.mxu0
        %v6130 = vadd.f32 %v5729, %v6129
        %6131 = vmatmul.f32.gmra.mxu0 %v5924
        %v6132 = vpop.f32.mrf.mxu0
        %v6133 = vadd.f32 %v5732, %v6132
        %6134 = vmatmul.f32.gmra.mxu0 %v5927
        %v6135 = vpop.f32.mrf.mxu0
        %v6136 = vadd.f32 %v5735, %v6135
        %6137 = vmatmul.f32.gmra.mxu0 %v5930
        %v6138 = vpop.f32.mrf.mxu0
        %v6139 = vadd.f32 %v5738, %v6138
        %6140 = vmatmul.f32.gmra.mxu0 %v5933
        %v6141 = vpop.f32.mrf.mxu0
        %v6142 = vadd.f32 %v5741, %v6141
        %6143 = vmatmul.f32.gmra.mxu0 %v5936
        %v6144 = vpop.f32.mrf.mxu0
        %v6145 = vadd.f32 %v5744, %v6144
        %6146 = vmatmul.f32.gmra.mxu0 %v5939
        %v6147 = vpop.f32.mrf.mxu0
        %v6148 = vadd.f32 %v5747, %v6147
        %6149 = vmatmul.f32.gmra.mxu0 %v5942
        %v6150 = vpop.f32.mrf.mxu0
        %v6151 = vadd.f32 %v5750, %v6150
        %6152 = vmatmul.f32.gmra.mxu0 %v5945
        %v6153 = vpop.f32.mrf.mxu0
        %v6154 = vadd.f32 %v5753, %v6153
        %6155 = vmatmul.f32.gmra.mxu0 %v5948
        %v6156 = vpop.f32.mrf.mxu0
        %v6157 = vadd.f32 %v5756, %v6156
        %6158 = vmatmul.f32.gmra.mxu0 %v5951
        %v6159 = vpop.f32.mrf.mxu0
        %v6160 = vadd.f32 %v5759, %v6159
        %6161 = vmatmul.f32.gmra.mxu0 %v5954
        %v6162 = vpop.f32.mrf.mxu0
        %v6163 = vadd.f32 %v5762, %v6162
        %6164 = vmatmul.f32.gmra.mxu0 %v5957
        %v6165 = vpop.f32.mrf.mxu0
        %v6166 = vadd.f32 %v5765, %v6165
        %6167 = vmatmul.f32.gmra.mxu0 %v5960
        %v6168 = vpop.f32.mrf.mxu0
        %v6169 = vadd.f32 %v5768, %v6168
        %6170 = vdwg.mxu0
        %s6171 = scalar_lea.vmem [#allocation10], 128
        %v6172 = vld [vmem:[%s6171] sm:$0xff]
        %v6173 = vld [vmem:[%s6171 + $0x8] sm:$0xff]
        %v6174 = vld [vmem:[%s6171 + $0x10] sm:$0xff]
        %v6175 = vld [vmem:[%s6171 + $0x18] sm:$0xff]
        %v6176 = vld [vmem:[%s6171 + $0x20] sm:$0xff]
        %v6177 = vld [vmem:[%s6171 + $0x28] sm:$0xff]
        %v6178 = vld [vmem:[%s6171 + $0x30] sm:$0xff]
        %v6179 = vld [vmem:[%s6171 + $0x38] sm:$0xff]
        %6180 = vrot.lane.b32.xlu0 %v477, 64
        %v6181 = vpop.permute.xlu0 %6180
        %6182 = vrot.lane.b32.xlu0 %v480, 64
        %v6183 = vpop.permute.xlu0 %6182
        %6184 = vrot.lane.b32.xlu0 %v483, 64
        %v6185 = vpop.permute.xlu0 %6184
        %6186 = vrot.lane.b32.xlu0 %v486, 64
        %v6187 = vpop.permute.xlu0 %6186
        %6188 = vrot.lane.b32.xlu0 %v489, 64
        %v6189 = vpop.permute.xlu0 %6188
        %6190 = vrot.lane.b32.xlu0 %v492, 64
        %v6191 = vpop.permute.xlu0 %6190
        %6192 = vrot.lane.b32.xlu0 %v495, 64
        %v6193 = vpop.permute.xlu0 %6192
        %6194 = vrot.lane.b32.xlu0 %v498, 64
        %v6195 = vpop.permute.xlu0 %6194
        %6196 = vrot.lane.b32.xlu0 %v686, 64
        %v6197 = vpop.permute.xlu0 %6196
        %6198 = vrot.lane.b32.xlu0 %v689, 64
        %v6199 = vpop.permute.xlu0 %6198
        %6200 = vrot.lane.b32.xlu0 %v692, 64
        %v6201 = vpop.permute.xlu0 %6200
        %6202 = vrot.lane.b32.xlu0 %v695, 64
        %v6203 = vpop.permute.xlu0 %6202
        %6204 = vrot.lane.b32.xlu0 %v698, 64
        %v6205 = vpop.permute.xlu0 %6204
        %6206 = vrot.lane.b32.xlu0 %v701, 64
        %v6207 = vpop.permute.xlu0 %6206
        %6208 = vrot.lane.b32.xlu0 %v704, 64
        %v6209 = vpop.permute.xlu0 %6208
        %6210 = vrot.lane.b32.xlu0 %v707, 64
        %v6211 = vpop.permute.xlu0 %6210
        %v6212 = vsel %vm1094, %v6181, 0
        %v6214 = vsel %vm1094, %v6183, 0
        %v6216 = vsel %vm1094, %v6185, 0
        %v6218 = vsel %vm1094, %v6187, 0
        %v6220 = vsel %vm1094, %v6189, 0
        %v6222 = vsel %vm1094, %v6191, 0
        %v6224 = vsel %vm1094, %v6193, 0
        %v6226 = vsel %vm1094, %v6195, 0
        %v6228 = vsel %vm1094, %v6197, 0
        %v6230 = vsel %vm1094, %v6199, 0
        %v6232 = vsel %vm1094, %v6201, 0
        %v6234 = vsel %vm1094, %v6203, 0
        %v6236 = vsel %vm1094, %v6205, 0
        %v6238 = vsel %vm1094, %v6207, 0
        %v6240 = vsel %vm1094, %v6209, 0
        %v6242 = vsel %vm1094, %v6211, 0
        %6244 = vmatpush.xpose.msra.mxu0 0.0
        %6245 = vmatpush.xpose.msra.mxu0 0.0
        %6246 = vmatpush.xpose.msra.mxu0 0.0
        %6247 = vmatpush.xpose.msra.mxu0 0.0
        %6248 = vmatpush.xpose.msra.mxu0 0.0
        %6249 = vmatpush.xpose.msra.mxu0 0.0
        %6250 = vmatpush.xpose.msra.mxu0 0.0
        %6251 = vmatpush.xpose.msra.mxu0 0.0
        %6252 = vmatpush.xpose.msra.mxu0 %v6242
        %6253 = vmatpush.xpose.msra.mxu0 %v6240
        %6254 = vmatpush.xpose.msra.mxu0 %v6238
        %6255 = vmatpush.xpose.msra.mxu0 %v6236
        %6256 = vmatpush.xpose.msra.mxu0 %v6234
        %6257 = vmatpush.xpose.msra.mxu0 %v6232
        %6258 = vmatpush.xpose.msra.mxu0 %v6230
        %6259 = vmatpush.xpose.msra.mxu0 %v6228
        %6260 = vmatmul.f32.gmra.mxu0 %v6212
        %v6261 = vpop.f32.mrf.mxu0
        %v6262 = vadd.f32 %v6172, %v6261
        %6263 = vmatmul.f32.gmra.mxu0 %v6214
        %v6264 = vpop.f32.mrf.mxu0
        %v6265 = vadd.f32 %v6173, %v6264
        %6266 = vmatmul.f32.gmra.mxu0 %v6216
        %v6267 = vpop.f32.mrf.mxu0
        %v6268 = vadd.f32 %v6174, %v6267
        %6269 = vmatmul.f32.gmra.mxu0 %v6218
        %v6270 = vpop.f32.mrf.mxu0
        %v6271 = vadd.f32 %v6175, %v6270
        %6272 = vmatmul.f32.gmra.mxu0 %v6220
        %v6273 = vpop.f32.mrf.mxu0
        %v6274 = vadd.f32 %v6176, %v6273
        %6275 = vmatmul.f32.gmra.mxu0 %v6222
        %v6276 = vpop.f32.mrf.mxu0
        %v6277 = vadd.f32 %v6177, %v6276
        %6278 = vmatmul.f32.gmra.mxu0 %v6224
        %v6279 = vpop.f32.mrf.mxu0
        %v6280 = vadd.f32 %v6178, %v6279
        %6281 = vmatmul.f32.gmra.mxu0 %v6226
        %v6282 = vpop.f32.mrf.mxu0
        %v6283 = vadd.f32 %v6179, %v6282
        %6284 = vdwg.mxu0
        %6285 = vrot.lane.b32.xlu0 %v501, 64
        %v6286 = vpop.permute.xlu0 %6285
        %6287 = vrot.lane.b32.xlu0 %v504, 64
        %v6288 = vpop.permute.xlu0 %6287
        %6289 = vrot.lane.b32.xlu0 %v507, 64
        %v6290 = vpop.permute.xlu0 %6289
        %6291 = vrot.lane.b32.xlu0 %v510, 64
        %v6292 = vpop.permute.xlu0 %6291
        %6293 = vrot.lane.b32.xlu0 %v513, 64
        %v6294 = vpop.permute.xlu0 %6293
        %6295 = vrot.lane.b32.xlu0 %v516, 64
        %v6296 = vpop.permute.xlu0 %6295
        %6297 = vrot.lane.b32.xlu0 %v519, 64
        %v6298 = vpop.permute.xlu0 %6297
        %6299 = vrot.lane.b32.xlu0 %v522, 64
        %v6300 = vpop.permute.xlu0 %6299
        %6301 = vrot.lane.b32.xlu0 %v710, 64
        %v6302 = vpop.permute.xlu0 %6301
        %6303 = vrot.lane.b32.xlu0 %v713, 64
        %v6304 = vpop.permute.xlu0 %6303
        %6305 = vrot.lane.b32.xlu0 %v716, 64
        %v6306 = vpop.permute.xlu0 %6305
        %6307 = vrot.lane.b32.xlu0 %v719, 64
        %v6308 = vpop.permute.xlu0 %6307
        %6309 = vrot.lane.b32.xlu0 %v722, 64
        %v6310 = vpop.permute.xlu0 %6309
        %6311 = vrot.lane.b32.xlu0 %v725, 64
        %v6312 = vpop.permute.xlu0 %6311
        %6313 = vrot.lane.b32.xlu0 %v728, 64
        %v6314 = vpop.permute.xlu0 %6313
        %6315 = vrot.lane.b32.xlu0 %v731, 64
        %v6316 = vpop.permute.xlu0 %6315
        %v6317 = vsel %vm1094, %v6286, 0
        %v6319 = vsel %vm1094, %v6288, 0
        %v6321 = vsel %vm1094, %v6290, 0
        %v6323 = vsel %vm1094, %v6292, 0
        %v6325 = vsel %vm1094, %v6294, 0
        %v6327 = vsel %vm1094, %v6296, 0
        %v6329 = vsel %vm1094, %v6298, 0
        %v6331 = vsel %vm1094, %v6300, 0
        %v6333 = vsel %vm1094, %v6302, 0
        %v6335 = vsel %vm1094, %v6304, 0
        %v6337 = vsel %vm1094, %v6306, 0
        %v6339 = vsel %vm1094, %v6308, 0
        %v6341 = vsel %vm1094, %v6310, 0
        %v6343 = vsel %vm1094, %v6312, 0
        %v6345 = vsel %vm1094, %v6314, 0
        %v6347 = vsel %vm1094, %v6316, 0
        %6349 = vmatpush.xpose.msra.mxu0 0.0
        %6350 = vmatpush.xpose.msra.mxu0 0.0
        %6351 = vmatpush.xpose.msra.mxu0 0.0
        %6352 = vmatpush.xpose.msra.mxu0 0.0
        %6353 = vmatpush.xpose.msra.mxu0 0.0
        %6354 = vmatpush.xpose.msra.mxu0 0.0
        %6355 = vmatpush.xpose.msra.mxu0 0.0
        %6356 = vmatpush.xpose.msra.mxu0 0.0
        %6357 = vmatpush.xpose.msra.mxu0 %v6347
        %6358 = vmatpush.xpose.msra.mxu0 %v6345
        %6359 = vmatpush.xpose.msra.mxu0 %v6343
        %6360 = vmatpush.xpose.msra.mxu0 %v6341
        %6361 = vmatpush.xpose.msra.mxu0 %v6339
        %6362 = vmatpush.xpose.msra.mxu0 %v6337
        %6363 = vmatpush.xpose.msra.mxu0 %v6335
        %6364 = vmatpush.xpose.msra.mxu0 %v6333
        %6365 = vmatmul.f32.gmra.mxu0 %v6317
        %v6366 = vpop.f32.mrf.mxu0
        %v6367 = vadd.f32 %v6172, %v6366
        %6368 = vmatmul.f32.gmra.mxu0 %v6319
        %v6369 = vpop.f32.mrf.mxu0
        %v6370 = vadd.f32 %v6173, %v6369
        %6371 = vmatmul.f32.gmra.mxu0 %v6321
        %v6372 = vpop.f32.mrf.mxu0
        %v6373 = vadd.f32 %v6174, %v6372
        %6374 = vmatmul.f32.gmra.mxu0 %v6323
        %v6375 = vpop.f32.mrf.mxu0
        %v6376 = vadd.f32 %v6175, %v6375
        %6377 = vmatmul.f32.gmra.mxu0 %v6325
        %v6378 = vpop.f32.mrf.mxu0
        %v6379 = vadd.f32 %v6176, %v6378
        %6380 = vmatmul.f32.gmra.mxu0 %v6327
        %v6381 = vpop.f32.mrf.mxu0
        %v6382 = vadd.f32 %v6177, %v6381
        %6383 = vmatmul.f32.gmra.mxu0 %v6329
        %v6384 = vpop.f32.mrf.mxu0
        %v6385 = vadd.f32 %v6178, %v6384
        %6386 = vmatmul.f32.gmra.mxu0 %v6331
        %v6387 = vpop.f32.mrf.mxu0
        %v6388 = vadd.f32 %v6179, %v6387
        %6389 = vdwg.mxu0
        %6390 = vrot.lane.b32.xlu0 %v525, 64
        %v6391 = vpop.permute.xlu0 %6390
        %6392 = vrot.lane.b32.xlu0 %v528, 64
        %v6393 = vpop.permute.xlu0 %6392
        %6394 = vrot.lane.b32.xlu0 %v531, 64
        %v6395 = vpop.permute.xlu0 %6394
        %6396 = vrot.lane.b32.xlu0 %v534, 64
        %v6397 = vpop.permute.xlu0 %6396
        %6398 = vrot.lane.b32.xlu0 %v537, 64
        %v6399 = vpop.permute.xlu0 %6398
        %6400 = vrot.lane.b32.xlu0 %v540, 64
        %v6401 = vpop.permute.xlu0 %6400
        %6402 = vrot.lane.b32.xlu0 %v543, 64
        %v6403 = vpop.permute.xlu0 %6402
        %6404 = vrot.lane.b32.xlu0 %v546, 64
        %v6405 = vpop.permute.xlu0 %6404
        %6406 = vrot.lane.b32.xlu0 %v734, 64
        %v6407 = vpop.permute.xlu0 %6406
        %6408 = vrot.lane.b32.xlu0 %v737, 64
        %v6409 = vpop.permute.xlu0 %6408
        %6410 = vrot.lane.b32.xlu0 %v740, 64
        %v6411 = vpop.permute.xlu0 %6410
        %6412 = vrot.lane.b32.xlu0 %v743, 64
        %v6413 = vpop.permute.xlu0 %6412
        %6414 = vrot.lane.b32.xlu0 %v746, 64
        %v6415 = vpop.permute.xlu0 %6414
        %6416 = vrot.lane.b32.xlu0 %v749, 64
        %v6417 = vpop.permute.xlu0 %6416
        %6418 = vrot.lane.b32.xlu0 %v752, 64
        %v6419 = vpop.permute.xlu0 %6418
        %6420 = vrot.lane.b32.xlu0 %v755, 64
        %v6421 = vpop.permute.xlu0 %6420
        %v6422 = vsel %vm1094, %v6391, 0
        %v6424 = vsel %vm1094, %v6393, 0
        %v6426 = vsel %vm1094, %v6395, 0
        %v6428 = vsel %vm1094, %v6397, 0
        %v6430 = vsel %vm1094, %v6399, 0
        %v6432 = vsel %vm1094, %v6401, 0
        %v6434 = vsel %vm1094, %v6403, 0
        %v6436 = vsel %vm1094, %v6405, 0
        %v6438 = vsel %vm1094, %v6407, 0
        %v6440 = vsel %vm1094, %v6409, 0
        %v6442 = vsel %vm1094, %v6411, 0
        %v6444 = vsel %vm1094, %v6413, 0
        %v6446 = vsel %vm1094, %v6415, 0
        %v6448 = vsel %vm1094, %v6417, 0
        %v6450 = vsel %vm1094, %v6419, 0
        %v6452 = vsel %vm1094, %v6421, 0
        %6454 = vmatpush.xpose.msra.mxu0 0.0
        %6455 = vmatpush.xpose.msra.mxu0 0.0
        %6456 = vmatpush.xpose.msra.mxu0 0.0
        %6457 = vmatpush.xpose.msra.mxu0 0.0
        %6458 = vmatpush.xpose.msra.mxu0 0.0
        %6459 = vmatpush.xpose.msra.mxu0 0.0
        %6460 = vmatpush.xpose.msra.mxu0 0.0
        %6461 = vmatpush.xpose.msra.mxu0 0.0
        %6462 = vmatpush.xpose.msra.mxu0 %v6452
        %6463 = vmatpush.xpose.msra.mxu0 %v6450
        %6464 = vmatpush.xpose.msra.mxu0 %v6448
        %6465 = vmatpush.xpose.msra.mxu0 %v6446
        %6466 = vmatpush.xpose.msra.mxu0 %v6444
        %6467 = vmatpush.xpose.msra.mxu0 %v6442
        %6468 = vmatpush.xpose.msra.mxu0 %v6440
        %6469 = vmatpush.xpose.msra.mxu0 %v6438
        %6470 = vmatmul.f32.gmra.mxu0 %v6422
        %v6471 = vpop.f32.mrf.mxu0
        %v6472 = vadd.f32 %v6172, %v6471
        %6473 = vmatmul.f32.gmra.mxu0 %v6424
        %v6474 = vpop.f32.mrf.mxu0
        %v6475 = vadd.f32 %v6173, %v6474
        %6476 = vmatmul.f32.gmra.mxu0 %v6426
        %v6477 = vpop.f32.mrf.mxu0
        %v6478 = vadd.f32 %v6174, %v6477
        %6479 = vmatmul.f32.gmra.mxu0 %v6428
        %v6480 = vpop.f32.mrf.mxu0
        %v6481 = vadd.f32 %v6175, %v6480
        %6482 = vmatmul.f32.gmra.mxu0 %v6430
        %v6483 = vpop.f32.mrf.mxu0
        %v6484 = vadd.f32 %v6176, %v6483
        %6485 = vmatmul.f32.gmra.mxu0 %v6432
        %v6486 = vpop.f32.mrf.mxu0
        %v6487 = vadd.f32 %v6177, %v6486
        %6488 = vmatmul.f32.gmra.mxu0 %v6434
        %v6489 = vpop.f32.mrf.mxu0
        %v6490 = vadd.f32 %v6178, %v6489
        %6491 = vmatmul.f32.gmra.mxu0 %v6436
        %v6492 = vpop.f32.mrf.mxu0
        %v6493 = vadd.f32 %v6179, %v6492
        %6494 = vdwg.mxu0
        %6495 = vrot.lane.b32.xlu0 %v549, 64
        %v6496 = vpop.permute.xlu0 %6495
        %6497 = vrot.lane.b32.xlu0 %v552, 64
        %v6498 = vpop.permute.xlu0 %6497
        %6499 = vrot.lane.b32.xlu0 %v555, 64
        %v6500 = vpop.permute.xlu0 %6499
        %6501 = vrot.lane.b32.xlu0 %v558, 64
        %v6502 = vpop.permute.xlu0 %6501
        %6503 = vrot.lane.b32.xlu0 %v561, 64
        %v6504 = vpop.permute.xlu0 %6503
        %6505 = vrot.lane.b32.xlu0 %v564, 64
        %v6506 = vpop.permute.xlu0 %6505
        %6507 = vrot.lane.b32.xlu0 %v567, 64
        %v6508 = vpop.permute.xlu0 %6507
        %6509 = vrot.lane.b32.xlu0 %v570, 64
        %v6510 = vpop.permute.xlu0 %6509
        %6511 = vrot.lane.b32.xlu0 %v758, 64
        %v6512 = vpop.permute.xlu0 %6511
        %6513 = vrot.lane.b32.xlu0 %v761, 64
        %v6514 = vpop.permute.xlu0 %6513
        %6515 = vrot.lane.b32.xlu0 %v764, 64
        %v6516 = vpop.permute.xlu0 %6515
        %6517 = vrot.lane.b32.xlu0 %v767, 64
        %v6518 = vpop.permute.xlu0 %6517
        %6519 = vrot.lane.b32.xlu0 %v770, 64
        %v6520 = vpop.permute.xlu0 %6519
        %6521 = vrot.lane.b32.xlu0 %v773, 64
        %v6522 = vpop.permute.xlu0 %6521
        %6523 = vrot.lane.b32.xlu0 %v776, 64
        %v6524 = vpop.permute.xlu0 %6523
        %6525 = vrot.lane.b32.xlu0 %v779, 64
        %v6526 = vpop.permute.xlu0 %6525
        %v6527 = vsel %vm1094, %v6496, 0
        %v6529 = vsel %vm1094, %v6498, 0
        %v6531 = vsel %vm1094, %v6500, 0
        %v6533 = vsel %vm1094, %v6502, 0
        %v6535 = vsel %vm1094, %v6504, 0
        %v6537 = vsel %vm1094, %v6506, 0
        %v6539 = vsel %vm1094, %v6508, 0
        %v6541 = vsel %vm1094, %v6510, 0
        %v6543 = vsel %vm1094, %v6512, 0
        %v6545 = vsel %vm1094, %v6514, 0
        %v6547 = vsel %vm1094, %v6516, 0
        %v6549 = vsel %vm1094, %v6518, 0
        %v6551 = vsel %vm1094, %v6520, 0
        %v6553 = vsel %vm1094, %v6522, 0
        %v6555 = vsel %vm1094, %v6524, 0
        %v6557 = vsel %vm1094, %v6526, 0
        %6559 = vmatpush.xpose.msra.mxu0 0.0
        %6560 = vmatpush.xpose.msra.mxu0 0.0
        %6561 = vmatpush.xpose.msra.mxu0 0.0
        %6562 = vmatpush.xpose.msra.mxu0 0.0
        %6563 = vmatpush.xpose.msra.mxu0 0.0
        %6564 = vmatpush.xpose.msra.mxu0 0.0
        %6565 = vmatpush.xpose.msra.mxu0 0.0
        %6566 = vmatpush.xpose.msra.mxu0 0.0
        %6567 = vmatpush.xpose.msra.mxu0 %v6557
        %6568 = vmatpush.xpose.msra.mxu0 %v6555
        %6569 = vmatpush.xpose.msra.mxu0 %v6553
        %6570 = vmatpush.xpose.msra.mxu0 %v6551
        %6571 = vmatpush.xpose.msra.mxu0 %v6549
        %6572 = vmatpush.xpose.msra.mxu0 %v6547
        %6573 = vmatpush.xpose.msra.mxu0 %v6545
        %6574 = vmatpush.xpose.msra.mxu0 %v6543
        %6575 = vmatmul.f32.gmra.mxu0 %v6527
        %v6576 = vpop.f32.mrf.mxu0
        %v6577 = vadd.f32 %v6172, %v6576
        %6578 = vmatmul.f32.gmra.mxu0 %v6529
        %v6579 = vpop.f32.mrf.mxu0
        %v6580 = vadd.f32 %v6173, %v6579
        %6581 = vmatmul.f32.gmra.mxu0 %v6531
        %v6582 = vpop.f32.mrf.mxu0
        %v6583 = vadd.f32 %v6174, %v6582
        %6584 = vmatmul.f32.gmra.mxu0 %v6533
        %v6585 = vpop.f32.mrf.mxu0
        %v6586 = vadd.f32 %v6175, %v6585
        %6587 = vmatmul.f32.gmra.mxu0 %v6535
        %v6588 = vpop.f32.mrf.mxu0
        %v6589 = vadd.f32 %v6176, %v6588
        %6590 = vmatmul.f32.gmra.mxu0 %v6537
        %v6591 = vpop.f32.mrf.mxu0
        %v6592 = vadd.f32 %v6177, %v6591
        %6593 = vmatmul.f32.gmra.mxu0 %v6539
        %v6594 = vpop.f32.mrf.mxu0
        %v6595 = vadd.f32 %v6178, %v6594
        %6596 = vmatmul.f32.gmra.mxu0 %v6541
        %v6597 = vpop.f32.mrf.mxu0
        %v6598 = vadd.f32 %v6179, %v6597
        %6599 = vdwg.mxu0
        %6600 = vrot.lane.b32.xlu0 %v573, 64
        %v6601 = vpop.permute.xlu0 %6600
        %6602 = vrot.lane.b32.xlu0 %v576, 64
        %v6603 = vpop.permute.xlu0 %6602
        %6604 = vrot.lane.b32.xlu0 %v579, 64
        %v6605 = vpop.permute.xlu0 %6604
        %6606 = vrot.lane.b32.xlu0 %v582, 64
        %v6607 = vpop.permute.xlu0 %6606
        %6608 = vrot.lane.b32.xlu0 %v585, 64
        %v6609 = vpop.permute.xlu0 %6608
        %6610 = vrot.lane.b32.xlu0 %v588, 64
        %v6611 = vpop.permute.xlu0 %6610
        %6612 = vrot.lane.b32.xlu0 %v591, 64
        %v6613 = vpop.permute.xlu0 %6612
        %6614 = vrot.lane.b32.xlu0 %v594, 64
        %v6615 = vpop.permute.xlu0 %6614
        %6616 = vrot.lane.b32.xlu0 %v782, 64
        %v6617 = vpop.permute.xlu0 %6616
        %6618 = vrot.lane.b32.xlu0 %v785, 64
        %v6619 = vpop.permute.xlu0 %6618
        %6620 = vrot.lane.b32.xlu0 %v788, 64
        %v6621 = vpop.permute.xlu0 %6620
        %6622 = vrot.lane.b32.xlu0 %v791, 64
        %v6623 = vpop.permute.xlu0 %6622
        %6624 = vrot.lane.b32.xlu0 %v794, 64
        %v6625 = vpop.permute.xlu0 %6624
        %6626 = vrot.lane.b32.xlu0 %v797, 64
        %v6627 = vpop.permute.xlu0 %6626
        %6628 = vrot.lane.b32.xlu0 %v800, 64
        %v6629 = vpop.permute.xlu0 %6628
        %6630 = vrot.lane.b32.xlu0 %v803, 64
        %v6631 = vpop.permute.xlu0 %6630
        %v6632 = vsel %vm1094, %v6601, 0
        %v6634 = vsel %vm1094, %v6603, 0
        %v6636 = vsel %vm1094, %v6605, 0
        %v6638 = vsel %vm1094, %v6607, 0
        %v6640 = vsel %vm1094, %v6609, 0
        %v6642 = vsel %vm1094, %v6611, 0
        %v6644 = vsel %vm1094, %v6613, 0
        %v6646 = vsel %vm1094, %v6615, 0
        %v6648 = vsel %vm1094, %v6617, 0
        %v6650 = vsel %vm1094, %v6619, 0
        %v6652 = vsel %vm1094, %v6621, 0
        %v6654 = vsel %vm1094, %v6623, 0
        %v6656 = vsel %vm1094, %v6625, 0
        %v6658 = vsel %vm1094, %v6627, 0
        %v6660 = vsel %vm1094, %v6629, 0
        %v6662 = vsel %vm1094, %v6631, 0
        %6664 = vmatpush.xpose.msra.mxu0 0.0
        %6665 = vmatpush.xpose.msra.mxu0 0.0
        %6666 = vmatpush.xpose.msra.mxu0 0.0
        %6667 = vmatpush.xpose.msra.mxu0 0.0
        %6668 = vmatpush.xpose.msra.mxu0 0.0
        %6669 = vmatpush.xpose.msra.mxu0 0.0
        %6670 = vmatpush.xpose.msra.mxu0 0.0
        %6671 = vmatpush.xpose.msra.mxu0 0.0
        %6672 = vmatpush.xpose.msra.mxu0 %v6662
        %6673 = vmatpush.xpose.msra.mxu0 %v6660
        %6674 = vmatpush.xpose.msra.mxu0 %v6658
        %6675 = vmatpush.xpose.msra.mxu0 %v6656
        %6676 = vmatpush.xpose.msra.mxu0 %v6654
        %6677 = vmatpush.xpose.msra.mxu0 %v6652
        %6678 = vmatpush.xpose.msra.mxu0 %v6650
        %6679 = vmatpush.xpose.msra.mxu0 %v6648
        %6680 = vmatmul.f32.gmra.mxu0 %v6632
        %v6681 = vpop.f32.mrf.mxu0
        %v6682 = vadd.f32 %v6172, %v6681
        %6683 = vmatmul.f32.gmra.mxu0 %v6634
        %v6684 = vpop.f32.mrf.mxu0
        %v6685 = vadd.f32 %v6173, %v6684
        %6686 = vmatmul.f32.gmra.mxu0 %v6636
        %v6687 = vpop.f32.mrf.mxu0
        %v6688 = vadd.f32 %v6174, %v6687
        %6689 = vmatmul.f32.gmra.mxu0 %v6638
        %v6690 = vpop.f32.mrf.mxu0
        %v6691 = vadd.f32 %v6175, %v6690
        %6692 = vmatmul.f32.gmra.mxu0 %v6640
        %v6693 = vpop.f32.mrf.mxu0
        %v6694 = vadd.f32 %v6176, %v6693
        %6695 = vmatmul.f32.gmra.mxu0 %v6642
        %v6696 = vpop.f32.mrf.mxu0
        %v6697 = vadd.f32 %v6177, %v6696
        %6698 = vmatmul.f32.gmra.mxu0 %v6644
        %v6699 = vpop.f32.mrf.mxu0
        %v6700 = vadd.f32 %v6178, %v6699
        %6701 = vmatmul.f32.gmra.mxu0 %v6646
        %v6702 = vpop.f32.mrf.mxu0
        %v6703 = vadd.f32 %v6179, %v6702
        %6704 = vdwg.mxu0
        %6705 = vrot.lane.b32.xlu0 %v597, 64
        %v6706 = vpop.permute.xlu0 %6705
        %6707 = vrot.lane.b32.xlu0 %v600, 64
        %v6708 = vpop.permute.xlu0 %6707
        %6709 = vrot.lane.b32.xlu0 %v603, 64
        %v6710 = vpop.permute.xlu0 %6709
        %6711 = vrot.lane.b32.xlu0 %v606, 64
        %v6712 = vpop.permute.xlu0 %6711
        %6713 = vrot.lane.b32.xlu0 %v609, 64
        %v6714 = vpop.permute.xlu0 %6713
        %6715 = vrot.lane.b32.xlu0 %v612, 64
        %v6716 = vpop.permute.xlu0 %6715
        %6717 = vrot.lane.b32.xlu0 %v615, 64
        %v6718 = vpop.permute.xlu0 %6717
        %6719 = vrot.lane.b32.xlu0 %v618, 64
        %v6720 = vpop.permute.xlu0 %6719
        %6721 = vrot.lane.b32.xlu0 %v806, 64
        %v6722 = vpop.permute.xlu0 %6721
        %6723 = vrot.lane.b32.xlu0 %v809, 64
        %v6724 = vpop.permute.xlu0 %6723
        %6725 = vrot.lane.b32.xlu0 %v812, 64
        %v6726 = vpop.permute.xlu0 %6725
        %6727 = vrot.lane.b32.xlu0 %v815, 64
        %v6728 = vpop.permute.xlu0 %6727
        %6729 = vrot.lane.b32.xlu0 %v818, 64
        %v6730 = vpop.permute.xlu0 %6729
        %6731 = vrot.lane.b32.xlu0 %v821, 64
        %v6732 = vpop.permute.xlu0 %6731
        %6733 = vrot.lane.b32.xlu0 %v824, 64
        %v6734 = vpop.permute.xlu0 %6733
        %6735 = vrot.lane.b32.xlu0 %v827, 64
        %v6736 = vpop.permute.xlu0 %6735
        %v6737 = vsel %vm1094, %v6706, 0
        %v6739 = vsel %vm1094, %v6708, 0
        %v6741 = vsel %vm1094, %v6710, 0
        %v6743 = vsel %vm1094, %v6712, 0
        %v6745 = vsel %vm1094, %v6714, 0
        %v6747 = vsel %vm1094, %v6716, 0
        %v6749 = vsel %vm1094, %v6718, 0
        %v6751 = vsel %vm1094, %v6720, 0
        %v6753 = vsel %vm1094, %v6722, 0
        %v6755 = vsel %vm1094, %v6724, 0
        %v6757 = vsel %vm1094, %v6726, 0
        %v6759 = vsel %vm1094, %v6728, 0
        %v6761 = vsel %vm1094, %v6730, 0
        %v6763 = vsel %vm1094, %v6732, 0
        %v6765 = vsel %vm1094, %v6734, 0
        %v6767 = vsel %vm1094, %v6736, 0
        %6769 = vmatpush.xpose.msra.mxu0 0.0
        %6770 = vmatpush.xpose.msra.mxu0 0.0
        %6771 = vmatpush.xpose.msra.mxu0 0.0
        %6772 = vmatpush.xpose.msra.mxu0 0.0
        %6773 = vmatpush.xpose.msra.mxu0 0.0
        %6774 = vmatpush.xpose.msra.mxu0 0.0
        %6775 = vmatpush.xpose.msra.mxu0 0.0
        %6776 = vmatpush.xpose.msra.mxu0 0.0
        %6777 = vmatpush.xpose.msra.mxu0 %v6767
        %6778 = vmatpush.xpose.msra.mxu0 %v6765
        %6779 = vmatpush.xpose.msra.mxu0 %v6763
        %6780 = vmatpush.xpose.msra.mxu0 %v6761
        %6781 = vmatpush.xpose.msra.mxu0 %v6759
        %6782 = vmatpush.xpose.msra.mxu0 %v6757
        %6783 = vmatpush.xpose.msra.mxu0 %v6755
        %6784 = vmatpush.xpose.msra.mxu0 %v6753
        %6785 = vmatmul.f32.gmra.mxu0 %v6737
        %v6786 = vpop.f32.mrf.mxu0
        %v6787 = vadd.f32 %v6172, %v6786
        %6788 = vmatmul.f32.gmra.mxu0 %v6739
        %v6789 = vpop.f32.mrf.mxu0
        %v6790 = vadd.f32 %v6173, %v6789
        %6791 = vmatmul.f32.gmra.mxu0 %v6741
        %v6792 = vpop.f32.mrf.mxu0
        %v6793 = vadd.f32 %v6174, %v6792
        %6794 = vmatmul.f32.gmra.mxu0 %v6743
        %v6795 = vpop.f32.mrf.mxu0
        %v6796 = vadd.f32 %v6175, %v6795
        %6797 = vmatmul.f32.gmra.mxu0 %v6745
        %v6798 = vpop.f32.mrf.mxu0
        %v6799 = vadd.f32 %v6176, %v6798
        %6800 = vmatmul.f32.gmra.mxu0 %v6747
        %v6801 = vpop.f32.mrf.mxu0
        %v6802 = vadd.f32 %v6177, %v6801
        %6803 = vmatmul.f32.gmra.mxu0 %v6749
        %v6804 = vpop.f32.mrf.mxu0
        %v6805 = vadd.f32 %v6178, %v6804
        %6806 = vmatmul.f32.gmra.mxu0 %v6751
        %v6807 = vpop.f32.mrf.mxu0
        %v6808 = vadd.f32 %v6179, %v6807
        %6809 = vdwg.mxu0
        %6810 = vrot.lane.b32.xlu0 %v621, 64
        %v6811 = vpop.permute.xlu0 %6810
        %6812 = vrot.lane.b32.xlu0 %v624, 64
        %v6813 = vpop.permute.xlu0 %6812
        %6814 = vrot.lane.b32.xlu0 %v627, 64
        %v6815 = vpop.permute.xlu0 %6814
        %6816 = vrot.lane.b32.xlu0 %v630, 64
        %v6817 = vpop.permute.xlu0 %6816
        %6818 = vrot.lane.b32.xlu0 %v633, 64
        %v6819 = vpop.permute.xlu0 %6818
        %6820 = vrot.lane.b32.xlu0 %v636, 64
        %v6821 = vpop.permute.xlu0 %6820
        %6822 = vrot.lane.b32.xlu0 %v639, 64
        %v6823 = vpop.permute.xlu0 %6822
        %6824 = vrot.lane.b32.xlu0 %v642, 64
        %v6825 = vpop.permute.xlu0 %6824
        %6826 = vrot.lane.b32.xlu0 %v830, 64
        %v6827 = vpop.permute.xlu0 %6826
        %6828 = vrot.lane.b32.xlu0 %v833, 64
        %v6829 = vpop.permute.xlu0 %6828
        %6830 = vrot.lane.b32.xlu0 %v836, 64
        %v6831 = vpop.permute.xlu0 %6830
        %6832 = vrot.lane.b32.xlu0 %v839, 64
        %v6833 = vpop.permute.xlu0 %6832
        %6834 = vrot.lane.b32.xlu0 %v842, 64
        %v6835 = vpop.permute.xlu0 %6834
        %6836 = vrot.lane.b32.xlu0 %v845, 64
        %v6837 = vpop.permute.xlu0 %6836
        %6838 = vrot.lane.b32.xlu0 %v848, 64
        %v6839 = vpop.permute.xlu0 %6838
        %6840 = vrot.lane.b32.xlu0 %v851, 64
        %v6841 = vpop.permute.xlu0 %6840
        %v6842 = vsel %vm1094, %v6811, 0
        %v6844 = vsel %vm1094, %v6813, 0
        %v6846 = vsel %vm1094, %v6815, 0
        %v6848 = vsel %vm1094, %v6817, 0
        %v6850 = vsel %vm1094, %v6819, 0
        %v6852 = vsel %vm1094, %v6821, 0
        %v6854 = vsel %vm1094, %v6823, 0
        %v6856 = vsel %vm1094, %v6825, 0
        %v6858 = vsel %vm1094, %v6827, 0
        %v6860 = vsel %vm1094, %v6829, 0
        %v6862 = vsel %vm1094, %v6831, 0
        %v6864 = vsel %vm1094, %v6833, 0
        %v6866 = vsel %vm1094, %v6835, 0
        %v6868 = vsel %vm1094, %v6837, 0
        %v6870 = vsel %vm1094, %v6839, 0
        %v6872 = vsel %vm1094, %v6841, 0
        %6874 = vmatpush.xpose.msra.mxu0 0.0
        %6875 = vmatpush.xpose.msra.mxu0 0.0
        %6876 = vmatpush.xpose.msra.mxu0 0.0
        %6877 = vmatpush.xpose.msra.mxu0 0.0
        %6878 = vmatpush.xpose.msra.mxu0 0.0
        %6879 = vmatpush.xpose.msra.mxu0 0.0
        %6880 = vmatpush.xpose.msra.mxu0 0.0
        %6881 = vmatpush.xpose.msra.mxu0 0.0
        %6882 = vmatpush.xpose.msra.mxu0 %v6872
        %6883 = vmatpush.xpose.msra.mxu0 %v6870
        %6884 = vmatpush.xpose.msra.mxu0 %v6868
        %6885 = vmatpush.xpose.msra.mxu0 %v6866
        %6886 = vmatpush.xpose.msra.mxu0 %v6864
        %6887 = vmatpush.xpose.msra.mxu0 %v6862
        %6888 = vmatpush.xpose.msra.mxu0 %v6860
        %6889 = vmatpush.xpose.msra.mxu0 %v6858
        %6890 = vmatmul.f32.gmra.mxu0 %v6842
        %v6891 = vpop.f32.mrf.mxu0
        %v6892 = vadd.f32 %v6172, %v6891
        %6893 = vmatmul.f32.gmra.mxu0 %v6844
        %v6894 = vpop.f32.mrf.mxu0
        %v6895 = vadd.f32 %v6173, %v6894
        %6896 = vmatmul.f32.gmra.mxu0 %v6846
        %v6897 = vpop.f32.mrf.mxu0
        %v6898 = vadd.f32 %v6174, %v6897
        %6899 = vmatmul.f32.gmra.mxu0 %v6848
        %v6900 = vpop.f32.mrf.mxu0
        %v6901 = vadd.f32 %v6175, %v6900
        %6902 = vmatmul.f32.gmra.mxu0 %v6850
        %v6903 = vpop.f32.mrf.mxu0
        %v6904 = vadd.f32 %v6176, %v6903
        %6905 = vmatmul.f32.gmra.mxu0 %v6852
        %v6906 = vpop.f32.mrf.mxu0
        %v6907 = vadd.f32 %v6177, %v6906
        %6908 = vmatmul.f32.gmra.mxu0 %v6854
        %v6909 = vpop.f32.mrf.mxu0
        %v6910 = vadd.f32 %v6178, %v6909
        %6911 = vmatmul.f32.gmra.mxu0 %v6856
        %v6912 = vpop.f32.mrf.mxu0
        %v6913 = vadd.f32 %v6179, %v6912
        %6914 = vdwg.mxu0
        %6915 = vrot.lane.b32.xlu0 %v645, 64
        %v6916 = vpop.permute.xlu0 %6915
        %6917 = vrot.lane.b32.xlu0 %v648, 64
        %v6918 = vpop.permute.xlu0 %6917
        %6919 = vrot.lane.b32.xlu0 %v651, 64
        %v6920 = vpop.permute.xlu0 %6919
        %6921 = vrot.lane.b32.xlu0 %v654, 64
        %v6922 = vpop.permute.xlu0 %6921
        %6923 = vrot.lane.b32.xlu0 %v657, 64
        %v6924 = vpop.permute.xlu0 %6923
        %6925 = vrot.lane.b32.xlu0 %v660, 64
        %v6926 = vpop.permute.xlu0 %6925
        %6927 = vrot.lane.b32.xlu0 %v663, 64
        %v6928 = vpop.permute.xlu0 %6927
        %6929 = vrot.lane.b32.xlu0 %v666, 64
        %v6930 = vpop.permute.xlu0 %6929
        %6931 = vrot.lane.b32.xlu0 %v854, 64
        %v6932 = vpop.permute.xlu0 %6931
        %6933 = vrot.lane.b32.xlu0 %v857, 64
        %v6934 = vpop.permute.xlu0 %6933
        %6935 = vrot.lane.b32.xlu0 %v860, 64
        %v6936 = vpop.permute.xlu0 %6935
        %6937 = vrot.lane.b32.xlu0 %v863, 64
        %v6938 = vpop.permute.xlu0 %6937
        %6939 = vrot.lane.b32.xlu0 %v866, 64
        %v6940 = vpop.permute.xlu0 %6939
        %6941 = vrot.lane.b32.xlu0 %v869, 64
        %v6942 = vpop.permute.xlu0 %6941
        %6943 = vrot.lane.b32.xlu0 %v872, 64
        %v6944 = vpop.permute.xlu0 %6943
        %6945 = vrot.lane.b32.xlu0 %v875, 64
        %v6946 = vpop.permute.xlu0 %6945
        %v6947 = vsel %vm1094, %v6916, 0
        %v6949 = vsel %vm1094, %v6918, 0
        %v6951 = vsel %vm1094, %v6920, 0
        %v6953 = vsel %vm1094, %v6922, 0
        %v6955 = vsel %vm1094, %v6924, 0
        %v6957 = vsel %vm1094, %v6926, 0
        %v6959 = vsel %vm1094, %v6928, 0
        %v6961 = vsel %vm1094, %v6930, 0
        %v6963 = vsel %vm1094, %v6932, 0
        %v6965 = vsel %vm1094, %v6934, 0
        %v6967 = vsel %vm1094, %v6936, 0
        %v6969 = vsel %vm1094, %v6938, 0
        %v6971 = vsel %vm1094, %v6940, 0
        %v6973 = vsel %vm1094, %v6942, 0
        %v6975 = vsel %vm1094, %v6944, 0
        %v6977 = vsel %vm1094, %v6946, 0
        %6979 = vmatpush.xpose.msra.mxu0 0.0
        %6980 = vmatpush.xpose.msra.mxu0 0.0
        %6981 = vmatpush.xpose.msra.mxu0 0.0
        %6982 = vmatpush.xpose.msra.mxu0 0.0
        %6983 = vmatpush.xpose.msra.mxu0 0.0
        %6984 = vmatpush.xpose.msra.mxu0 0.0
        %6985 = vmatpush.xpose.msra.mxu0 0.0
        %6986 = vmatpush.xpose.msra.mxu0 0.0
        %6987 = vmatpush.xpose.msra.mxu0 %v6977
        %6988 = vmatpush.xpose.msra.mxu0 %v6975
        %6989 = vmatpush.xpose.msra.mxu0 %v6973
        %6990 = vmatpush.xpose.msra.mxu0 %v6971
        %6991 = vmatpush.xpose.msra.mxu0 %v6969
        %6992 = vmatpush.xpose.msra.mxu0 %v6967
        %6993 = vmatpush.xpose.msra.mxu0 %v6965
        %6994 = vmatpush.xpose.msra.mxu0 %v6963
        %6995 = vmatmul.f32.gmra.mxu0 %v6947
        %v6996 = vpop.f32.mrf.mxu0
        %v6997 = vadd.f32 %v6172, %v6996
        %6998 = vmatmul.f32.gmra.mxu0 %v6949
        %v6999 = vpop.f32.mrf.mxu0
        %v7000 = vadd.f32 %v6173, %v6999
        %7001 = vmatmul.f32.gmra.mxu0 %v6951
        %v7002 = vpop.f32.mrf.mxu0
        %v7003 = vadd.f32 %v6174, %v7002
        %7004 = vmatmul.f32.gmra.mxu0 %v6953
        %v7005 = vpop.f32.mrf.mxu0
        %v7006 = vadd.f32 %v6175, %v7005
        %7007 = vmatmul.f32.gmra.mxu0 %v6955
        %v7008 = vpop.f32.mrf.mxu0
        %v7009 = vadd.f32 %v6176, %v7008
        %7010 = vmatmul.f32.gmra.mxu0 %v6957
        %v7011 = vpop.f32.mrf.mxu0
        %v7012 = vadd.f32 %v6177, %v7011
        %7013 = vmatmul.f32.gmra.mxu0 %v6959
        %v7014 = vpop.f32.mrf.mxu0
        %v7015 = vadd.f32 %v6178, %v7014
        %7016 = vmatmul.f32.gmra.mxu0 %v6961
        %v7017 = vpop.f32.mrf.mxu0
        %v7018 = vadd.f32 %v6179, %v7017
        %7019 = vdwg.mxu0
        %v7020 = vsel %vm1807, %v6262, -inf
        %7021 = vmax.xlane.f32.xlu0 %v7020
        %v7022 = vpop.xlane.xlu0 %7021
        %v7023 = vsel %vm1807, %v6265, -inf
        %7024 = vmax.xlane.f32.xlu0 %v7023
        %v7025 = vpop.xlane.xlu0 %7024
        %v7026 = vsel %vm1807, %v6268, -inf
        %7027 = vmax.xlane.f32.xlu0 %v7026
        %v7028 = vpop.xlane.xlu0 %7027
        %v7029 = vsel %vm1807, %v6271, -inf
        %7030 = vmax.xlane.f32.xlu0 %v7029
        %v7031 = vpop.xlane.xlu0 %7030
        %v7032 = vsel %vm1807, %v6274, -inf
        %7033 = vmax.xlane.f32.xlu0 %v7032
        %v7034 = vpop.xlane.xlu0 %7033
        %v7035 = vsel %vm1807, %v6277, -inf
        %7036 = vmax.xlane.f32.xlu0 %v7035
        %v7037 = vpop.xlane.xlu0 %7036
        %v7038 = vsel %vm1807, %v6280, -inf
        %7039 = vmax.xlane.f32.xlu0 %v7038
        %v7040 = vpop.xlane.xlu0 %7039
        %v7041 = vsel %vm1807, %v6283, -inf
        %7042 = vmax.xlane.f32.xlu0 %v7041
        %v7043 = vpop.xlane.xlu0 %7042
        %v7044 = vsel %vm1807, %v6367, -inf
        %7045 = vmax.xlane.f32.xlu0 %v7044
        %v7046 = vpop.xlane.xlu0 %7045
        %v7047 = vsel %vm1807, %v6370, -inf
        %7048 = vmax.xlane.f32.xlu0 %v7047
        %v7049 = vpop.xlane.xlu0 %7048
        %v7050 = vsel %vm1807, %v6373, -inf
        %7051 = vmax.xlane.f32.xlu0 %v7050
        %v7052 = vpop.xlane.xlu0 %7051
        %v7053 = vsel %vm1807, %v6376, -inf
        %7054 = vmax.xlane.f32.xlu0 %v7053
        %v7055 = vpop.xlane.xlu0 %7054
        %v7056 = vsel %vm1807, %v6379, -inf
        %7057 = vmax.xlane.f32.xlu0 %v7056
        %v7058 = vpop.xlane.xlu0 %7057
        %v7059 = vsel %vm1807, %v6382, -inf
        %7060 = vmax.xlane.f32.xlu0 %v7059
        %v7061 = vpop.xlane.xlu0 %7060
        %v7062 = vsel %vm1807, %v6385, -inf
        %7063 = vmax.xlane.f32.xlu0 %v7062
        %v7064 = vpop.xlane.xlu0 %7063
        %v7065 = vsel %vm1807, %v6388, -inf
        %7066 = vmax.xlane.f32.xlu0 %v7065
        %v7067 = vpop.xlane.xlu0 %7066
        %v7068 = vsel %vm1807, %v6472, -inf
        %7069 = vmax.xlane.f32.xlu0 %v7068
        %v7070 = vpop.xlane.xlu0 %7069
        %v7071 = vsel %vm1807, %v6475, -inf
        %7072 = vmax.xlane.f32.xlu0 %v7071
        %v7073 = vpop.xlane.xlu0 %7072
        %v7074 = vsel %vm1807, %v6478, -inf
        %7075 = vmax.xlane.f32.xlu0 %v7074
        %v7076 = vpop.xlane.xlu0 %7075
        %v7077 = vsel %vm1807, %v6481, -inf
        %7078 = vmax.xlane.f32.xlu0 %v7077
        %v7079 = vpop.xlane.xlu0 %7078
        %v7080 = vsel %vm1807, %v6484, -inf
        %7081 = vmax.xlane.f32.xlu0 %v7080
        %v7082 = vpop.xlane.xlu0 %7081
        %v7083 = vsel %vm1807, %v6487, -inf
        %7084 = vmax.xlane.f32.xlu0 %v7083
        %v7085 = vpop.xlane.xlu0 %7084
        %v7086 = vsel %vm1807, %v6490, -inf
        %7087 = vmax.xlane.f32.xlu0 %v7086
        %v7088 = vpop.xlane.xlu0 %7087
        %v7089 = vsel %vm1807, %v6493, -inf
        %7090 = vmax.xlane.f32.xlu0 %v7089
        %v7091 = vpop.xlane.xlu0 %7090
        %v7092 = vsel %vm1807, %v6577, -inf
        %7093 = vmax.xlane.f32.xlu0 %v7092
        %v7094 = vpop.xlane.xlu0 %7093
        %v7095 = vsel %vm1807, %v6580, -inf
        %7096 = vmax.xlane.f32.xlu0 %v7095
        %v7097 = vpop.xlane.xlu0 %7096
        %v7098 = vsel %vm1807, %v6583, -inf
        %7099 = vmax.xlane.f32.xlu0 %v7098
        %v7100 = vpop.xlane.xlu0 %7099
        %v7101 = vsel %vm1807, %v6586, -inf
        %7102 = vmax.xlane.f32.xlu0 %v7101
        %v7103 = vpop.xlane.xlu0 %7102
        %v7104 = vsel %vm1807, %v6589, -inf
        %7105 = vmax.xlane.f32.xlu0 %v7104
        %v7106 = vpop.xlane.xlu0 %7105
        %v7107 = vsel %vm1807, %v6592, -inf
        %7108 = vmax.xlane.f32.xlu0 %v7107
        %v7109 = vpop.xlane.xlu0 %7108
        %v7110 = vsel %vm1807, %v6595, -inf
        %7111 = vmax.xlane.f32.xlu0 %v7110
        %v7112 = vpop.xlane.xlu0 %7111
        %v7113 = vsel %vm1807, %v6598, -inf
        %7114 = vmax.xlane.f32.xlu0 %v7113
        %v7115 = vpop.xlane.xlu0 %7114
        %v7116 = vsel %vm1807, %v6682, -inf
        %7117 = vmax.xlane.f32.xlu0 %v7116
        %v7118 = vpop.xlane.xlu0 %7117
        %v7119 = vsel %vm1807, %v6685, -inf
        %7120 = vmax.xlane.f32.xlu0 %v7119
        %v7121 = vpop.xlane.xlu0 %7120
        %v7122 = vsel %vm1807, %v6688, -inf
        %7123 = vmax.xlane.f32.xlu0 %v7122
        %v7124 = vpop.xlane.xlu0 %7123
        %v7125 = vsel %vm1807, %v6691, -inf
        %7126 = vmax.xlane.f32.xlu0 %v7125
        %v7127 = vpop.xlane.xlu0 %7126
        %v7128 = vsel %vm1807, %v6694, -inf
        %7129 = vmax.xlane.f32.xlu0 %v7128
        %v7130 = vpop.xlane.xlu0 %7129
        %v7131 = vsel %vm1807, %v6697, -inf
        %7132 = vmax.xlane.f32.xlu0 %v7131
        %v7133 = vpop.xlane.xlu0 %7132
        %v7134 = vsel %vm1807, %v6700, -inf
        %7135 = vmax.xlane.f32.xlu0 %v7134
        %v7136 = vpop.xlane.xlu0 %7135
        %v7137 = vsel %vm1807, %v6703, -inf
        %7138 = vmax.xlane.f32.xlu0 %v7137
        %v7139 = vpop.xlane.xlu0 %7138
        %v7140 = vsel %vm1807, %v6787, -inf
        %7141 = vmax.xlane.f32.xlu0 %v7140
        %v7142 = vpop.xlane.xlu0 %7141
        %v7143 = vsel %vm1807, %v6790, -inf
        %7144 = vmax.xlane.f32.xlu0 %v7143
        %v7145 = vpop.xlane.xlu0 %7144
        %v7146 = vsel %vm1807, %v6793, -inf
        %7147 = vmax.xlane.f32.xlu0 %v7146
        %v7148 = vpop.xlane.xlu0 %7147
        %v7149 = vsel %vm1807, %v6796, -inf
        %7150 = vmax.xlane.f32.xlu0 %v7149
        %v7151 = vpop.xlane.xlu0 %7150
        %v7152 = vsel %vm1807, %v6799, -inf
        %7153 = vmax.xlane.f32.xlu0 %v7152
        %v7154 = vpop.xlane.xlu0 %7153
        %v7155 = vsel %vm1807, %v6802, -inf
        %7156 = vmax.xlane.f32.xlu0 %v7155
        %v7157 = vpop.xlane.xlu0 %7156
        %v7158 = vsel %vm1807, %v6805, -inf
        %7159 = vmax.xlane.f32.xlu0 %v7158
        %v7160 = vpop.xlane.xlu0 %7159
        %v7161 = vsel %vm1807, %v6808, -inf
        %7162 = vmax.xlane.f32.xlu0 %v7161
        %v7163 = vpop.xlane.xlu0 %7162
        %v7164 = vsel %vm1807, %v6892, -inf
        %7165 = vmax.xlane.f32.xlu0 %v7164
        %v7166 = vpop.xlane.xlu0 %7165
        %v7167 = vsel %vm1807, %v6895, -inf
        %7168 = vmax.xlane.f32.xlu0 %v7167
        %v7169 = vpop.xlane.xlu0 %7168
        %v7170 = vsel %vm1807, %v6898, -inf
        %7171 = vmax.xlane.f32.xlu0 %v7170
        %v7172 = vpop.xlane.xlu0 %7171
        %v7173 = vsel %vm1807, %v6901, -inf
        %7174 = vmax.xlane.f32.xlu0 %v7173
        %v7175 = vpop.xlane.xlu0 %7174
        %v7176 = vsel %vm1807, %v6904, -inf
        %7177 = vmax.xlane.f32.xlu0 %v7176
        %v7178 = vpop.xlane.xlu0 %7177
        %v7179 = vsel %vm1807, %v6907, -inf
        %7180 = vmax.xlane.f32.xlu0 %v7179
        %v7181 = vpop.xlane.xlu0 %7180
        %v7182 = vsel %vm1807, %v6910, -inf
        %7183 = vmax.xlane.f32.xlu0 %v7182
        %v7184 = vpop.xlane.xlu0 %7183
        %v7185 = vsel %vm1807, %v6913, -inf
        %7186 = vmax.xlane.f32.xlu0 %v7185
        %v7187 = vpop.xlane.xlu0 %7186
        %v7188 = vsel %vm1807, %v6997, -inf
        %7189 = vmax.xlane.f32.xlu0 %v7188
        %v7190 = vpop.xlane.xlu0 %7189
        %v7191 = vsel %vm1807, %v7000, -inf
        %7192 = vmax.xlane.f32.xlu0 %v7191
        %v7193 = vpop.xlane.xlu0 %7192
        %v7194 = vsel %vm1807, %v7003, -inf
        %7195 = vmax.xlane.f32.xlu0 %v7194
        %v7196 = vpop.xlane.xlu0 %7195
        %v7197 = vsel %vm1807, %v7006, -inf
        %7198 = vmax.xlane.f32.xlu0 %v7197
        %v7199 = vpop.xlane.xlu0 %7198
        %v7200 = vsel %vm1807, %v7009, -inf
        %7201 = vmax.xlane.f32.xlu0 %v7200
        %v7202 = vpop.xlane.xlu0 %7201
        %v7203 = vsel %vm1807, %v7012, -inf
        %7204 = vmax.xlane.f32.xlu0 %v7203
        %v7205 = vpop.xlane.xlu0 %7204
        %v7206 = vsel %vm1807, %v7015, -inf
        %7207 = vmax.xlane.f32.xlu0 %v7206
        %v7208 = vpop.xlane.xlu0 %7207
        %v7209 = vsel %vm1807, %v7018, -inf
        %7210 = vmax.xlane.f32.xlu0 %v7209
        %v7211 = vpop.xlane.xlu0 %7210
        %v7212 = vsub.f32 %v6262, %v7022
        %v7213 = vsub.f32 %v6265, %v7025
        %v7214 = vsub.f32 %v6268, %v7028
        %v7215 = vsub.f32 %v6271, %v7031
        %v7216 = vsub.f32 %v6274, %v7034
        %v7217 = vsub.f32 %v6277, %v7037
        %v7218 = vsub.f32 %v6280, %v7040
        %v7219 = vsub.f32 %v6283, %v7043
        %v7220 = vsub.f32 %v6367, %v7046
        %v7221 = vsub.f32 %v6370, %v7049
        %v7222 = vsub.f32 %v6373, %v7052
        %v7223 = vsub.f32 %v6376, %v7055
        %v7224 = vsub.f32 %v6379, %v7058
        %v7225 = vsub.f32 %v6382, %v7061
        %v7226 = vsub.f32 %v6385, %v7064
        %v7227 = vsub.f32 %v6388, %v7067
        %v7228 = vsub.f32 %v6472, %v7070
        %v7229 = vsub.f32 %v6475, %v7073
        %v7230 = vsub.f32 %v6478, %v7076
        %v7231 = vsub.f32 %v6481, %v7079
        %v7232 = vsub.f32 %v6484, %v7082
        %v7233 = vsub.f32 %v6487, %v7085
        %v7234 = vsub.f32 %v6490, %v7088
        %v7235 = vsub.f32 %v6493, %v7091
        %v7236 = vsub.f32 %v6577, %v7094
        %v7237 = vsub.f32 %v6580, %v7097
        %v7238 = vsub.f32 %v6583, %v7100
        %v7239 = vsub.f32 %v6586, %v7103
        %v7240 = vsub.f32 %v6589, %v7106
        %v7241 = vsub.f32 %v6592, %v7109
        %v7242 = vsub.f32 %v6595, %v7112
        %v7243 = vsub.f32 %v6598, %v7115
        %v7244 = vsub.f32 %v6682, %v7118
        %v7245 = vsub.f32 %v6685, %v7121
        %v7246 = vsub.f32 %v6688, %v7124
        %v7247 = vsub.f32 %v6691, %v7127
        %v7248 = vsub.f32 %v6694, %v7130
        %v7249 = vsub.f32 %v6697, %v7133
        %v7250 = vsub.f32 %v6700, %v7136
        %v7251 = vsub.f32 %v6703, %v7139
        %v7252 = vsub.f32 %v6787, %v7142
        %v7253 = vsub.f32 %v6790, %v7145
        %v7254 = vsub.f32 %v6793, %v7148
        %v7255 = vsub.f32 %v6796, %v7151
        %v7256 = vsub.f32 %v6799, %v7154
        %v7257 = vsub.f32 %v6802, %v7157
        %v7258 = vsub.f32 %v6805, %v7160
        %v7259 = vsub.f32 %v6808, %v7163
        %v7260 = vsub.f32 %v6892, %v7166
        %v7261 = vsub.f32 %v6895, %v7169
        %v7262 = vsub.f32 %v6898, %v7172
        %v7263 = vsub.f32 %v6901, %v7175
        %v7264 = vsub.f32 %v6904, %v7178
        %v7265 = vsub.f32 %v6907, %v7181
        %v7266 = vsub.f32 %v6910, %v7184
        %v7267 = vsub.f32 %v6913, %v7187
        %v7268 = vsub.f32 %v6997, %v7190
        %v7269 = vsub.f32 %v7000, %v7193
        %v7270 = vsub.f32 %v7003, %v7196
        %v7271 = vsub.f32 %v7006, %v7199
        %v7272 = vsub.f32 %v7009, %v7202
        %v7273 = vsub.f32 %v7012, %v7205
        %v7274 = vsub.f32 %v7015, %v7208
        %v7275 = vsub.f32 %v7018, %v7211
        %v7276 = vmul.f32 %v7212, 1.442695
        %v7277 = vpow.pop %v7276
        %v7278 = vmul.f32 %v7213, 1.442695
        %v7279 = vpow.pop %v7278
        %v7280 = vmul.f32 %v7214, 1.442695
        %v7281 = vpow.pop %v7280
        %v7282 = vmul.f32 %v7215, 1.442695
        %v7283 = vpow.pop %v7282
        %v7284 = vmul.f32 %v7216, 1.442695
        %v7285 = vpow.pop %v7284
        %v7286 = vmul.f32 %v7217, 1.442695
        %v7287 = vpow.pop %v7286
        %v7288 = vmul.f32 %v7218, 1.442695
        %v7289 = vpow.pop %v7288
        %v7290 = vmul.f32 %v7219, 1.442695
        %v7291 = vpow.pop %v7290
        %v7292 = vmul.f32 %v7220, 1.442695
        %v7293 = vpow.pop %v7292
        %v7294 = vmul.f32 %v7221, 1.442695
        %v7295 = vpow.pop %v7294
        %v7296 = vmul.f32 %v7222, 1.442695
        %v7297 = vpow.pop %v7296
        %v7298 = vmul.f32 %v7223, 1.442695
        %v7299 = vpow.pop %v7298
        %v7300 = vmul.f32 %v7224, 1.442695
        %v7301 = vpow.pop %v7300
        %v7302 = vmul.f32 %v7225, 1.442695
        %v7303 = vpow.pop %v7302
        %v7304 = vmul.f32 %v7226, 1.442695
        %v7305 = vpow.pop %v7304
        %v7306 = vmul.f32 %v7227, 1.442695
        %v7307 = vpow.pop %v7306
        %v7308 = vmul.f32 %v7228, 1.442695
        %v7309 = vpow.pop %v7308
        %v7310 = vmul.f32 %v7229, 1.442695
        %v7311 = vpow.pop %v7310
        %v7312 = vmul.f32 %v7230, 1.442695
        %v7313 = vpow.pop %v7312
        %v7314 = vmul.f32 %v7231, 1.442695
        %v7315 = vpow.pop %v7314
        %v7316 = vmul.f32 %v7232, 1.442695
        %v7317 = vpow.pop %v7316
        %v7318 = vmul.f32 %v7233, 1.442695
        %v7319 = vpow.pop %v7318
        %v7320 = vmul.f32 %v7234, 1.442695
        %v7321 = vpow.pop %v7320
        %v7322 = vmul.f32 %v7235, 1.442695
        %v7323 = vpow.pop %v7322
        %v7324 = vmul.f32 %v7236, 1.442695
        %v7325 = vpow.pop %v7324
        %v7326 = vmul.f32 %v7237, 1.442695
        %v7327 = vpow.pop %v7326
        %v7328 = vmul.f32 %v7238, 1.442695
        %v7329 = vpow.pop %v7328
        %v7330 = vmul.f32 %v7239, 1.442695
        %v7331 = vpow.pop %v7330
        %v7332 = vmul.f32 %v7240, 1.442695
        %v7333 = vpow.pop %v7332
        %v7334 = vmul.f32 %v7241, 1.442695
        %v7335 = vpow.pop %v7334
        %v7336 = vmul.f32 %v7242, 1.442695
        %v7337 = vpow.pop %v7336
        %v7338 = vmul.f32 %v7243, 1.442695
        %v7339 = vpow.pop %v7338
        %v7340 = vmul.f32 %v7244, 1.442695
        %v7341 = vpow.pop %v7340
        %v7342 = vmul.f32 %v7245, 1.442695
        %v7343 = vpow.pop %v7342
        %v7344 = vmul.f32 %v7246, 1.442695
        %v7345 = vpow.pop %v7344
        %v7346 = vmul.f32 %v7247, 1.442695
        %v7347 = vpow.pop %v7346
        %v7348 = vmul.f32 %v7248, 1.442695
        %v7349 = vpow.pop %v7348
        %v7350 = vmul.f32 %v7249, 1.442695
        %v7351 = vpow.pop %v7350
        %v7352 = vmul.f32 %v7250, 1.442695
        %v7353 = vpow.pop %v7352
        %v7354 = vmul.f32 %v7251, 1.442695
        %v7355 = vpow.pop %v7354
        %v7356 = vmul.f32 %v7252, 1.442695
        %v7357 = vpow.pop %v7356
        %v7358 = vmul.f32 %v7253, 1.442695
        %v7359 = vpow.pop %v7358
        %v7360 = vmul.f32 %v7254, 1.442695
        %v7361 = vpow.pop %v7360
        %v7362 = vmul.f32 %v7255, 1.442695
        %v7363 = vpow.pop %v7362
        %v7364 = vmul.f32 %v7256, 1.442695
        %v7365 = vpow.pop %v7364
        %v7366 = vmul.f32 %v7257, 1.442695
        %v7367 = vpow.pop %v7366
        %v7368 = vmul.f32 %v7258, 1.442695
        %v7369 = vpow.pop %v7368
        %v7370 = vmul.f32 %v7259, 1.442695
        %v7371 = vpow.pop %v7370
        %v7372 = vmul.f32 %v7260, 1.442695
        %v7373 = vpow.pop %v7372
        %v7374 = vmul.f32 %v7261, 1.442695
        %v7375 = vpow.pop %v7374
        %v7376 = vmul.f32 %v7262, 1.442695
        %v7377 = vpow.pop %v7376
        %v7378 = vmul.f32 %v7263, 1.442695
        %v7379 = vpow.pop %v7378
        %v7380 = vmul.f32 %v7264, 1.442695
        %v7381 = vpow.pop %v7380
        %v7382 = vmul.f32 %v7265, 1.442695
        %v7383 = vpow.pop %v7382
        %v7384 = vmul.f32 %v7266, 1.442695
        %v7385 = vpow.pop %v7384
        %v7386 = vmul.f32 %v7267, 1.442695
        %v7387 = vpow.pop %v7386
        %v7388 = vmul.f32 %v7268, 1.442695
        %v7389 = vpow.pop %v7388
        %v7390 = vmul.f32 %v7269, 1.442695
        %v7391 = vpow.pop %v7390
        %v7392 = vmul.f32 %v7270, 1.442695
        %v7393 = vpow.pop %v7392
        %v7394 = vmul.f32 %v7271, 1.442695
        %v7395 = vpow.pop %v7394
        %v7396 = vmul.f32 %v7272, 1.442695
        %v7397 = vpow.pop %v7396
        %v7398 = vmul.f32 %v7273, 1.442695
        %v7399 = vpow.pop %v7398
        %v7400 = vmul.f32 %v7274, 1.442695
        %v7401 = vpow.pop %v7400
        %v7402 = vmul.f32 %v7275, 1.442695
        %v7403 = vpow.pop %v7402
        %v7404 = vsel %vm1807, %v7277, 0.0
        %7405 = vadd.xlane.f32.xlu0 %v7404
        %v7406 = vpop.xlane.xlu0 %7405
        %v7407 = vsel %vm1807, %v7279, 0.0
        %7408 = vadd.xlane.f32.xlu0 %v7407
        %v7409 = vpop.xlane.xlu0 %7408
        %v7410 = vsel %vm1807, %v7281, 0.0
        %7411 = vadd.xlane.f32.xlu0 %v7410
        %v7412 = vpop.xlane.xlu0 %7411
        %v7413 = vsel %vm1807, %v7283, 0.0
        %7414 = vadd.xlane.f32.xlu0 %v7413
        %v7415 = vpop.xlane.xlu0 %7414
        %v7416 = vsel %vm1807, %v7285, 0.0
        %7417 = vadd.xlane.f32.xlu0 %v7416
        %v7418 = vpop.xlane.xlu0 %7417
        %v7419 = vsel %vm1807, %v7287, 0.0
        %7420 = vadd.xlane.f32.xlu0 %v7419
        %v7421 = vpop.xlane.xlu0 %7420
        %v7422 = vsel %vm1807, %v7289, 0.0
        %7423 = vadd.xlane.f32.xlu0 %v7422
        %v7424 = vpop.xlane.xlu0 %7423
        %v7425 = vsel %vm1807, %v7291, 0.0
        %7426 = vadd.xlane.f32.xlu0 %v7425
        %v7427 = vpop.xlane.xlu0 %7426
        %v7428 = vsel %vm1807, %v7293, 0.0
        %7429 = vadd.xlane.f32.xlu0 %v7428
        %v7430 = vpop.xlane.xlu0 %7429
        %v7431 = vsel %vm1807, %v7295, 0.0
        %7432 = vadd.xlane.f32.xlu0 %v7431
        %v7433 = vpop.xlane.xlu0 %7432
        %v7434 = vsel %vm1807, %v7297, 0.0
        %7435 = vadd.xlane.f32.xlu0 %v7434
        %v7436 = vpop.xlane.xlu0 %7435
        %v7437 = vsel %vm1807, %v7299, 0.0
        %7438 = vadd.xlane.f32.xlu0 %v7437
        %v7439 = vpop.xlane.xlu0 %7438
        %v7440 = vsel %vm1807, %v7301, 0.0
        %7441 = vadd.xlane.f32.xlu0 %v7440
        %v7442 = vpop.xlane.xlu0 %7441
        %v7443 = vsel %vm1807, %v7303, 0.0
        %7444 = vadd.xlane.f32.xlu0 %v7443
        %v7445 = vpop.xlane.xlu0 %7444
        %v7446 = vsel %vm1807, %v7305, 0.0
        %7447 = vadd.xlane.f32.xlu0 %v7446
        %v7448 = vpop.xlane.xlu0 %7447
        %v7449 = vsel %vm1807, %v7307, 0.0
        %7450 = vadd.xlane.f32.xlu0 %v7449
        %v7451 = vpop.xlane.xlu0 %7450
        %v7452 = vsel %vm1807, %v7309, 0.0
        %7453 = vadd.xlane.f32.xlu0 %v7452
        %v7454 = vpop.xlane.xlu0 %7453
        %v7455 = vsel %vm1807, %v7311, 0.0
        %7456 = vadd.xlane.f32.xlu0 %v7455
        %v7457 = vpop.xlane.xlu0 %7456
        %v7458 = vsel %vm1807, %v7313, 0.0
        %7459 = vadd.xlane.f32.xlu0 %v7458
        %v7460 = vpop.xlane.xlu0 %7459
        %v7461 = vsel %vm1807, %v7315, 0.0
        %7462 = vadd.xlane.f32.xlu0 %v7461
        %v7463 = vpop.xlane.xlu0 %7462
        %v7464 = vsel %vm1807, %v7317, 0.0
        %7465 = vadd.xlane.f32.xlu0 %v7464
        %v7466 = vpop.xlane.xlu0 %7465
        %v7467 = vsel %vm1807, %v7319, 0.0
        %7468 = vadd.xlane.f32.xlu0 %v7467
        %v7469 = vpop.xlane.xlu0 %7468
        %v7470 = vsel %vm1807, %v7321, 0.0
        %7471 = vadd.xlane.f32.xlu0 %v7470
        %v7472 = vpop.xlane.xlu0 %7471
        %v7473 = vsel %vm1807, %v7323, 0.0
        %7474 = vadd.xlane.f32.xlu0 %v7473
        %v7475 = vpop.xlane.xlu0 %7474
        %v7476 = vsel %vm1807, %v7325, 0.0
        %7477 = vadd.xlane.f32.xlu0 %v7476
        %v7478 = vpop.xlane.xlu0 %7477
        %v7479 = vsel %vm1807, %v7327, 0.0
        %7480 = vadd.xlane.f32.xlu0 %v7479
        %v7481 = vpop.xlane.xlu0 %7480
        %v7482 = vsel %vm1807, %v7329, 0.0
        %7483 = vadd.xlane.f32.xlu0 %v7482
        %v7484 = vpop.xlane.xlu0 %7483
        %v7485 = vsel %vm1807, %v7331, 0.0
        %7486 = vadd.xlane.f32.xlu0 %v7485
        %v7487 = vpop.xlane.xlu0 %7486
        %v7488 = vsel %vm1807, %v7333, 0.0
        %7489 = vadd.xlane.f32.xlu0 %v7488
        %v7490 = vpop.xlane.xlu0 %7489
        %v7491 = vsel %vm1807, %v7335, 0.0
        %7492 = vadd.xlane.f32.xlu0 %v7491
        %v7493 = vpop.xlane.xlu0 %7492
        %v7494 = vsel %vm1807, %v7337, 0.0
        %7495 = vadd.xlane.f32.xlu0 %v7494
        %v7496 = vpop.xlane.xlu0 %7495
        %v7497 = vsel %vm1807, %v7339, 0.0
        %7498 = vadd.xlane.f32.xlu0 %v7497
        %v7499 = vpop.xlane.xlu0 %7498
        %v7500 = vsel %vm1807, %v7341, 0.0
        %7501 = vadd.xlane.f32.xlu0 %v7500
        %v7502 = vpop.xlane.xlu0 %7501
        %v7503 = vsel %vm1807, %v7343, 0.0
        %7504 = vadd.xlane.f32.xlu0 %v7503
        %v7505 = vpop.xlane.xlu0 %7504
        %v7506 = vsel %vm1807, %v7345, 0.0
        %7507 = vadd.xlane.f32.xlu0 %v7506
        %v7508 = vpop.xlane.xlu0 %7507
        %v7509 = vsel %vm1807, %v7347, 0.0
        %7510 = vadd.xlane.f32.xlu0 %v7509
        %v7511 = vpop.xlane.xlu0 %7510
        %v7512 = vsel %vm1807, %v7349, 0.0
        %7513 = vadd.xlane.f32.xlu0 %v7512
        %v7514 = vpop.xlane.xlu0 %7513
        %v7515 = vsel %vm1807, %v7351, 0.0
        %7516 = vadd.xlane.f32.xlu0 %v7515
        %v7517 = vpop.xlane.xlu0 %7516
        %v7518 = vsel %vm1807, %v7353, 0.0
        %7519 = vadd.xlane.f32.xlu0 %v7518
        %v7520 = vpop.xlane.xlu0 %7519
        %v7521 = vsel %vm1807, %v7355, 0.0
        %7522 = vadd.xlane.f32.xlu0 %v7521
        %v7523 = vpop.xlane.xlu0 %7522
        %v7524 = vsel %vm1807, %v7357, 0.0
        %7525 = vadd.xlane.f32.xlu0 %v7524
        %v7526 = vpop.xlane.xlu0 %7525
        %v7527 = vsel %vm1807, %v7359, 0.0
        %7528 = vadd.xlane.f32.xlu0 %v7527
        %v7529 = vpop.xlane.xlu0 %7528
        %v7530 = vsel %vm1807, %v7361, 0.0
        %7531 = vadd.xlane.f32.xlu0 %v7530
        %v7532 = vpop.xlane.xlu0 %7531
        %v7533 = vsel %vm1807, %v7363, 0.0
        %7534 = vadd.xlane.f32.xlu0 %v7533
        %v7535 = vpop.xlane.xlu0 %7534
        %v7536 = vsel %vm1807, %v7365, 0.0
        %7537 = vadd.xlane.f32.xlu0 %v7536
        %v7538 = vpop.xlane.xlu0 %7537
        %v7539 = vsel %vm1807, %v7367, 0.0
        %7540 = vadd.xlane.f32.xlu0 %v7539
        %v7541 = vpop.xlane.xlu0 %7540
        %v7542 = vsel %vm1807, %v7369, 0.0
        %7543 = vadd.xlane.f32.xlu0 %v7542
        %v7544 = vpop.xlane.xlu0 %7543
        %v7545 = vsel %vm1807, %v7371, 0.0
        %7546 = vadd.xlane.f32.xlu0 %v7545
        %v7547 = vpop.xlane.xlu0 %7546
        %v7548 = vsel %vm1807, %v7373, 0.0
        %7549 = vadd.xlane.f32.xlu0 %v7548
        %v7550 = vpop.xlane.xlu0 %7549
        %v7551 = vsel %vm1807, %v7375, 0.0
        %7552 = vadd.xlane.f32.xlu0 %v7551
        %v7553 = vpop.xlane.xlu0 %7552
        %v7554 = vsel %vm1807, %v7377, 0.0
        %7555 = vadd.xlane.f32.xlu0 %v7554
        %v7556 = vpop.xlane.xlu0 %7555
        %v7557 = vsel %vm1807, %v7379, 0.0
        %7558 = vadd.xlane.f32.xlu0 %v7557
        %v7559 = vpop.xlane.xlu0 %7558
        %v7560 = vsel %vm1807, %v7381, 0.0
        %7561 = vadd.xlane.f32.xlu0 %v7560
        %v7562 = vpop.xlane.xlu0 %7561
        %v7563 = vsel %vm1807, %v7383, 0.0
        %7564 = vadd.xlane.f32.xlu0 %v7563
        %v7565 = vpop.xlane.xlu0 %7564
        %v7566 = vsel %vm1807, %v7385, 0.0
        %7567 = vadd.xlane.f32.xlu0 %v7566
        %v7568 = vpop.xlane.xlu0 %7567
        %v7569 = vsel %vm1807, %v7387, 0.0
        %7570 = vadd.xlane.f32.xlu0 %v7569
        %v7571 = vpop.xlane.xlu0 %7570
        %v7572 = vsel %vm1807, %v7389, 0.0
        %7573 = vadd.xlane.f32.xlu0 %v7572
        %v7574 = vpop.xlane.xlu0 %7573
        %v7575 = vsel %vm1807, %v7391, 0.0
        %7576 = vadd.xlane.f32.xlu0 %v7575
        %v7577 = vpop.xlane.xlu0 %7576
        %v7578 = vsel %vm1807, %v7393, 0.0
        %7579 = vadd.xlane.f32.xlu0 %v7578
        %v7580 = vpop.xlane.xlu0 %7579
        %v7581 = vsel %vm1807, %v7395, 0.0
        %7582 = vadd.xlane.f32.xlu0 %v7581
        %v7583 = vpop.xlane.xlu0 %7582
        %v7584 = vsel %vm1807, %v7397, 0.0
        %7585 = vadd.xlane.f32.xlu0 %v7584
        %v7586 = vpop.xlane.xlu0 %7585
        %v7587 = vsel %vm1807, %v7399, 0.0
        %7588 = vadd.xlane.f32.xlu0 %v7587
        %v7589 = vpop.xlane.xlu0 %7588
        %v7590 = vsel %vm1807, %v7401, 0.0
        %7591 = vadd.xlane.f32.xlu0 %v7590
        %v7592 = vpop.xlane.xlu0 %7591
        %v7593 = vsel %vm1807, %v7403, 0.0
        %7594 = vadd.xlane.f32.xlu0 %v7593
        %v7595 = vpop.xlane.xlu0 %7594
        %v7596 = vrcp.pop %v7406
        %v7597 = vrcp.pop %v7409
        %v7598 = vrcp.pop %v7412
        %v7599 = vrcp.pop %v7415
        %v7600 = vrcp.pop %v7418
        %v7601 = vrcp.pop %v7421
        %v7602 = vrcp.pop %v7424
        %v7603 = vrcp.pop %v7427
        %v7604 = vrcp.pop %v7430
        %v7605 = vrcp.pop %v7433
        %v7606 = vrcp.pop %v7436
        %v7607 = vrcp.pop %v7439
        %v7608 = vrcp.pop %v7442
        %v7609 = vrcp.pop %v7445
        %v7610 = vrcp.pop %v7448
        %v7611 = vrcp.pop %v7451
        %v7612 = vrcp.pop %v7454
        %v7613 = vrcp.pop %v7457
        %v7614 = vrcp.pop %v7460
        %v7615 = vrcp.pop %v7463
        %v7616 = vrcp.pop %v7466
        %v7617 = vrcp.pop %v7469
        %v7618 = vrcp.pop %v7472
        %v7619 = vrcp.pop %v7475
        %v7620 = vrcp.pop %v7478
        %v7621 = vrcp.pop %v7481
        %v7622 = vrcp.pop %v7484
        %v7623 = vrcp.pop %v7487
        %v7624 = vrcp.pop %v7490
        %v7625 = vrcp.pop %v7493
        %v7626 = vrcp.pop %v7496
        %v7627 = vrcp.pop %v7499
        %v7628 = vrcp.pop %v7502
        %v7629 = vrcp.pop %v7505
        %v7630 = vrcp.pop %v7508
        %v7631 = vrcp.pop %v7511
        %v7632 = vrcp.pop %v7514
        %v7633 = vrcp.pop %v7517
        %v7634 = vrcp.pop %v7520
        %v7635 = vrcp.pop %v7523
        %v7636 = vrcp.pop %v7526
        %v7637 = vrcp.pop %v7529
        %v7638 = vrcp.pop %v7532
        %v7639 = vrcp.pop %v7535
        %v7640 = vrcp.pop %v7538
        %v7641 = vrcp.pop %v7541
        %v7642 = vrcp.pop %v7544
        %v7643 = vrcp.pop %v7547
        %v7644 = vrcp.pop %v7550
        %v7645 = vrcp.pop %v7553
        %v7646 = vrcp.pop %v7556
        %v7647 = vrcp.pop %v7559
        %v7648 = vrcp.pop %v7562
        %v7649 = vrcp.pop %v7565
        %v7650 = vrcp.pop %v7568
        %v7651 = vrcp.pop %v7571
        %v7652 = vrcp.pop %v7574
        %v7653 = vrcp.pop %v7577
        %v7654 = vrcp.pop %v7580
        %v7655 = vrcp.pop %v7583
        %v7656 = vrcp.pop %v7586
        %v7657 = vrcp.pop %v7589
        %v7658 = vrcp.pop %v7592
        %v7659 = vrcp.pop %v7595
        %v7660 = vmul.f32 %v7277, %v7596
        %v7661 = vmul.f32 %v7279, %v7597
        %v7662 = vmul.f32 %v7281, %v7598
        %v7663 = vmul.f32 %v7283, %v7599
        %v7664 = vmul.f32 %v7285, %v7600
        %v7665 = vmul.f32 %v7287, %v7601
        %v7666 = vmul.f32 %v7289, %v7602
        %v7667 = vmul.f32 %v7291, %v7603
        %v7668 = vmul.f32 %v7293, %v7604
        %v7669 = vmul.f32 %v7295, %v7605
        %v7670 = vmul.f32 %v7297, %v7606
        %v7671 = vmul.f32 %v7299, %v7607
        %v7672 = vmul.f32 %v7301, %v7608
        %v7673 = vmul.f32 %v7303, %v7609
        %v7674 = vmul.f32 %v7305, %v7610
        %v7675 = vmul.f32 %v7307, %v7611
        %v7676 = vmul.f32 %v7309, %v7612
        %v7677 = vmul.f32 %v7311, %v7613
        %v7678 = vmul.f32 %v7313, %v7614
        %v7679 = vmul.f32 %v7315, %v7615
        %v7680 = vmul.f32 %v7317, %v7616
        %v7681 = vmul.f32 %v7319, %v7617
        %v7682 = vmul.f32 %v7321, %v7618
        %v7683 = vmul.f32 %v7323, %v7619
        %v7684 = vmul.f32 %v7325, %v7620
        %v7685 = vmul.f32 %v7327, %v7621
        %v7686 = vmul.f32 %v7329, %v7622
        %v7687 = vmul.f32 %v7331, %v7623
        %v7688 = vmul.f32 %v7333, %v7624
        %v7689 = vmul.f32 %v7335, %v7625
        %v7690 = vmul.f32 %v7337, %v7626
        %v7691 = vmul.f32 %v7339, %v7627
        %v7692 = vmul.f32 %v7341, %v7628
        %v7693 = vmul.f32 %v7343, %v7629
        %v7694 = vmul.f32 %v7345, %v7630
        %v7695 = vmul.f32 %v7347, %v7631
        %v7696 = vmul.f32 %v7349, %v7632
        %v7697 = vmul.f32 %v7351, %v7633
        %v7698 = vmul.f32 %v7353, %v7634
        %v7699 = vmul.f32 %v7355, %v7635
        %v7700 = vmul.f32 %v7357, %v7636
        %v7701 = vmul.f32 %v7359, %v7637
        %v7702 = vmul.f32 %v7361, %v7638
        %v7703 = vmul.f32 %v7363, %v7639
        %v7704 = vmul.f32 %v7365, %v7640
        %v7705 = vmul.f32 %v7367, %v7641
        %v7706 = vmul.f32 %v7369, %v7642
        %v7707 = vmul.f32 %v7371, %v7643
        %v7708 = vmul.f32 %v7373, %v7644
        %v7709 = vmul.f32 %v7375, %v7645
        %v7710 = vmul.f32 %v7377, %v7646
        %v7711 = vmul.f32 %v7379, %v7647
        %v7712 = vmul.f32 %v7381, %v7648
        %v7713 = vmul.f32 %v7383, %v7649
        %v7714 = vmul.f32 %v7385, %v7650
        %v7715 = vmul.f32 %v7387, %v7651
        %v7716 = vmul.f32 %v7389, %v7652
        %v7717 = vmul.f32 %v7391, %v7653
        %v7718 = vmul.f32 %v7393, %v7654
        %v7719 = vmul.f32 %v7395, %v7655
        %v7720 = vmul.f32 %v7397, %v7656
        %v7721 = vmul.f32 %v7399, %v7657
        %v7722 = vmul.f32 %v7401, %v7658
        %v7723 = vmul.f32 %v7403, %v7659
        %7724 = vrot.lane.b32.xlu0 %v895, 64
        %v7725 = vpop.permute.xlu0 %7724
        %7726 = vrot.lane.b32.xlu0 %v898, 64
        %v7727 = vpop.permute.xlu0 %7726
        %7728 = vrot.lane.b32.xlu0 %v901, 64
        %v7729 = vpop.permute.xlu0 %7728
        %7730 = vrot.lane.b32.xlu0 %v904, 64
        %v7731 = vpop.permute.xlu0 %7730
        %7732 = vrot.lane.b32.xlu0 %v907, 64
        %v7733 = vpop.permute.xlu0 %7732
        %7734 = vrot.lane.b32.xlu0 %v910, 64
        %v7735 = vpop.permute.xlu0 %7734
        %7736 = vrot.lane.b32.xlu0 %v913, 64
        %v7737 = vpop.permute.xlu0 %7736
        %7738 = vrot.lane.b32.xlu0 %v916, 64
        %v7739 = vpop.permute.xlu0 %7738
        %v7749 = vsel %vm1807, %v7660, 0
        %v7752 = vsel %vm1807, %v7661, 0
        %v7755 = vsel %vm1807, %v7662, 0
        %v7758 = vsel %vm1807, %v7663, 0
        %v7761 = vsel %vm1807, %v7664, 0
        %v7764 = vsel %vm1807, %v7665, 0
        %v7767 = vsel %vm1807, %v7666, 0
        %v7770 = vsel %vm1807, %v7667, 0
        %7772 = vmatpush.msra.mxu0 0.0
        %7773 = vmatpush.msra.mxu0 0.0
        %7774 = vmatpush.msra.mxu0 0.0
        %7775 = vmatpush.msra.mxu0 0.0
        %7776 = vmatpush.msra.mxu0 0.0
        %7777 = vmatpush.msra.mxu0 0.0
        %7778 = vmatpush.msra.mxu0 0.0
        %7779 = vmatpush.msra.mxu0 0.0
        %7780 = vmatpush.msra.mxu0 %v7739
        %7781 = vmatpush.msra.mxu0 %v7737
        %7782 = vmatpush.msra.mxu0 %v7735
        %7783 = vmatpush.msra.mxu0 %v7733
        %7784 = vmatpush.msra.mxu0 %v7731
        %7785 = vmatpush.msra.mxu0 %v7729
        %7786 = vmatpush.msra.mxu0 %v7727
        %7787 = vmatpush.msra.mxu0 %v7725
        %7788 = vmatmul.f32.gmra.mxu0 %v7749
        %v7789 = vpop.f32.mrf.mxu0
        %v7790 = vadd.f32 0.0, %v7789
        %7791 = vmatmul.f32.gmra.mxu0 %v7752
        %v7792 = vpop.f32.mrf.mxu0
        %v7793 = vadd.f32 0.0, %v7792
        %7794 = vmatmul.f32.gmra.mxu0 %v7755
        %v7795 = vpop.f32.mrf.mxu0
        %v7796 = vadd.f32 0.0, %v7795
        %7797 = vmatmul.f32.gmra.mxu0 %v7758
        %v7798 = vpop.f32.mrf.mxu0
        %v7799 = vadd.f32 0.0, %v7798
        %7800 = vmatmul.f32.gmra.mxu0 %v7761
        %v7801 = vpop.f32.mrf.mxu0
        %v7802 = vadd.f32 0.0, %v7801
        %7803 = vmatmul.f32.gmra.mxu0 %v7764
        %v7804 = vpop.f32.mrf.mxu0
        %v7805 = vadd.f32 0.0, %v7804
        %7806 = vmatmul.f32.gmra.mxu0 %v7767
        %v7807 = vpop.f32.mrf.mxu0
        %v7808 = vadd.f32 0.0, %v7807
        %7809 = vmatmul.f32.gmra.mxu0 %v7770
        %v7810 = vpop.f32.mrf.mxu0
        %v7811 = vadd.f32 0.0, %v7810
        %7812 = vdwg.mxu0
        %7813 = vrot.lane.b32.xlu0 %v919, 64
        %v7814 = vpop.permute.xlu0 %7813
        %7815 = vrot.lane.b32.xlu0 %v922, 64
        %v7816 = vpop.permute.xlu0 %7815
        %7817 = vrot.lane.b32.xlu0 %v925, 64
        %v7818 = vpop.permute.xlu0 %7817
        %7819 = vrot.lane.b32.xlu0 %v928, 64
        %v7820 = vpop.permute.xlu0 %7819
        %7821 = vrot.lane.b32.xlu0 %v931, 64
        %v7822 = vpop.permute.xlu0 %7821
        %7823 = vrot.lane.b32.xlu0 %v934, 64
        %v7824 = vpop.permute.xlu0 %7823
        %7825 = vrot.lane.b32.xlu0 %v937, 64
        %v7826 = vpop.permute.xlu0 %7825
        %7827 = vrot.lane.b32.xlu0 %v940, 64
        %v7828 = vpop.permute.xlu0 %7827
        %v7838 = vsel %vm1807, %v7668, 0
        %v7841 = vsel %vm1807, %v7669, 0
        %v7844 = vsel %vm1807, %v7670, 0
        %v7847 = vsel %vm1807, %v7671, 0
        %v7850 = vsel %vm1807, %v7672, 0
        %v7853 = vsel %vm1807, %v7673, 0
        %v7856 = vsel %vm1807, %v7674, 0
        %v7859 = vsel %vm1807, %v7675, 0
        %7861 = vmatpush.msra.mxu0 0.0
        %7862 = vmatpush.msra.mxu0 0.0
        %7863 = vmatpush.msra.mxu0 0.0
        %7864 = vmatpush.msra.mxu0 0.0
        %7865 = vmatpush.msra.mxu0 0.0
        %7866 = vmatpush.msra.mxu0 0.0
        %7867 = vmatpush.msra.mxu0 0.0
        %7868 = vmatpush.msra.mxu0 0.0
        %7869 = vmatpush.msra.mxu0 %v7828
        %7870 = vmatpush.msra.mxu0 %v7826
        %7871 = vmatpush.msra.mxu0 %v7824
        %7872 = vmatpush.msra.mxu0 %v7822
        %7873 = vmatpush.msra.mxu0 %v7820
        %7874 = vmatpush.msra.mxu0 %v7818
        %7875 = vmatpush.msra.mxu0 %v7816
        %7876 = vmatpush.msra.mxu0 %v7814
        %7877 = vmatmul.f32.gmra.mxu0 %v7838
        %v7878 = vpop.f32.mrf.mxu0
        %v7879 = vadd.f32 0.0, %v7878
        %7880 = vmatmul.f32.gmra.mxu0 %v7841
        %v7881 = vpop.f32.mrf.mxu0
        %v7882 = vadd.f32 0.0, %v7881
        %7883 = vmatmul.f32.gmra.mxu0 %v7844
        %v7884 = vpop.f32.mrf.mxu0
        %v7885 = vadd.f32 0.0, %v7884
        %7886 = vmatmul.f32.gmra.mxu0 %v7847
        %v7887 = vpop.f32.mrf.mxu0
        %v7888 = vadd.f32 0.0, %v7887
        %7889 = vmatmul.f32.gmra.mxu0 %v7850
        %v7890 = vpop.f32.mrf.mxu0
        %v7891 = vadd.f32 0.0, %v7890
        %7892 = vmatmul.f32.gmra.mxu0 %v7853
        %v7893 = vpop.f32.mrf.mxu0
        %v7894 = vadd.f32 0.0, %v7893
        %7895 = vmatmul.f32.gmra.mxu0 %v7856
        %v7896 = vpop.f32.mrf.mxu0
        %v7897 = vadd.f32 0.0, %v7896
        %7898 = vmatmul.f32.gmra.mxu0 %v7859
        %v7899 = vpop.f32.mrf.mxu0
        %v7900 = vadd.f32 0.0, %v7899
        %7901 = vdwg.mxu0
        %7902 = vrot.lane.b32.xlu0 %v943, 64
        %v7903 = vpop.permute.xlu0 %7902
        %7904 = vrot.lane.b32.xlu0 %v946, 64
        %v7905 = vpop.permute.xlu0 %7904
        %7906 = vrot.lane.b32.xlu0 %v949, 64
        %v7907 = vpop.permute.xlu0 %7906
        %7908 = vrot.lane.b32.xlu0 %v952, 64
        %v7909 = vpop.permute.xlu0 %7908
        %7910 = vrot.lane.b32.xlu0 %v955, 64
        %v7911 = vpop.permute.xlu0 %7910
        %7912 = vrot.lane.b32.xlu0 %v958, 64
        %v7913 = vpop.permute.xlu0 %7912
        %7914 = vrot.lane.b32.xlu0 %v961, 64
        %v7915 = vpop.permute.xlu0 %7914
        %7916 = vrot.lane.b32.xlu0 %v964, 64
        %v7917 = vpop.permute.xlu0 %7916
        %v7927 = vsel %vm1807, %v7676, 0
        %v7930 = vsel %vm1807, %v7677, 0
        %v7933 = vsel %vm1807, %v7678, 0
        %v7936 = vsel %vm1807, %v7679, 0
        %v7939 = vsel %vm1807, %v7680, 0
        %v7942 = vsel %vm1807, %v7681, 0
        %v7945 = vsel %vm1807, %v7682, 0
        %v7948 = vsel %vm1807, %v7683, 0
        %7950 = vmatpush.msra.mxu0 0.0
        %7951 = vmatpush.msra.mxu0 0.0
        %7952 = vmatpush.msra.mxu0 0.0
        %7953 = vmatpush.msra.mxu0 0.0
        %7954 = vmatpush.msra.mxu0 0.0
        %7955 = vmatpush.msra.mxu0 0.0
        %7956 = vmatpush.msra.mxu0 0.0
        %7957 = vmatpush.msra.mxu0 0.0
        %7958 = vmatpush.msra.mxu0 %v7917
        %7959 = vmatpush.msra.mxu0 %v7915
        %7960 = vmatpush.msra.mxu0 %v7913
        %7961 = vmatpush.msra.mxu0 %v7911
        %7962 = vmatpush.msra.mxu0 %v7909
        %7963 = vmatpush.msra.mxu0 %v7907
        %7964 = vmatpush.msra.mxu0 %v7905
        %7965 = vmatpush.msra.mxu0 %v7903
        %7966 = vmatmul.f32.gmra.mxu0 %v7927
        %v7967 = vpop.f32.mrf.mxu0
        %v7968 = vadd.f32 0.0, %v7967
        %7969 = vmatmul.f32.gmra.mxu0 %v7930
        %v7970 = vpop.f32.mrf.mxu0
        %v7971 = vadd.f32 0.0, %v7970
        %7972 = vmatmul.f32.gmra.mxu0 %v7933
        %v7973 = vpop.f32.mrf.mxu0
        %v7974 = vadd.f32 0.0, %v7973
        %7975 = vmatmul.f32.gmra.mxu0 %v7936
        %v7976 = vpop.f32.mrf.mxu0
        %v7977 = vadd.f32 0.0, %v7976
        %7978 = vmatmul.f32.gmra.mxu0 %v7939
        %v7979 = vpop.f32.mrf.mxu0
        %v7980 = vadd.f32 0.0, %v7979
        %7981 = vmatmul.f32.gmra.mxu0 %v7942
        %v7982 = vpop.f32.mrf.mxu0
        %v7983 = vadd.f32 0.0, %v7982
        %7984 = vmatmul.f32.gmra.mxu0 %v7945
        %v7985 = vpop.f32.mrf.mxu0
        %v7986 = vadd.f32 0.0, %v7985
        %7987 = vmatmul.f32.gmra.mxu0 %v7948
        %v7988 = vpop.f32.mrf.mxu0
        %v7989 = vadd.f32 0.0, %v7988
        %7990 = vdwg.mxu0
        %7991 = vrot.lane.b32.xlu0 %v967, 64
        %v7992 = vpop.permute.xlu0 %7991
        %7993 = vrot.lane.b32.xlu0 %v970, 64
        %v7994 = vpop.permute.xlu0 %7993
        %7995 = vrot.lane.b32.xlu0 %v973, 64
        %v7996 = vpop.permute.xlu0 %7995
        %7997 = vrot.lane.b32.xlu0 %v976, 64
        %v7998 = vpop.permute.xlu0 %7997
        %7999 = vrot.lane.b32.xlu0 %v979, 64
        %v8000 = vpop.permute.xlu0 %7999
        %8001 = vrot.lane.b32.xlu0 %v982, 64
        %v8002 = vpop.permute.xlu0 %8001
        %8003 = vrot.lane.b32.xlu0 %v985, 64
        %v8004 = vpop.permute.xlu0 %8003
        %8005 = vrot.lane.b32.xlu0 %v988, 64
        %v8006 = vpop.permute.xlu0 %8005
        %v8016 = vsel %vm1807, %v7684, 0
        %v8019 = vsel %vm1807, %v7685, 0
        %v8022 = vsel %vm1807, %v7686, 0
        %v8025 = vsel %vm1807, %v7687, 0
        %v8028 = vsel %vm1807, %v7688, 0
        %v8031 = vsel %vm1807, %v7689, 0
        %v8034 = vsel %vm1807, %v7690, 0
        %v8037 = vsel %vm1807, %v7691, 0
        %8039 = vmatpush.msra.mxu0 0.0
        %8040 = vmatpush.msra.mxu0 0.0
        %8041 = vmatpush.msra.mxu0 0.0
        %8042 = vmatpush.msra.mxu0 0.0
        %8043 = vmatpush.msra.mxu0 0.0
        %8044 = vmatpush.msra.mxu0 0.0
        %8045 = vmatpush.msra.mxu0 0.0
        %8046 = vmatpush.msra.mxu0 0.0
        %8047 = vmatpush.msra.mxu0 %v8006
        %8048 = vmatpush.msra.mxu0 %v8004
        %8049 = vmatpush.msra.mxu0 %v8002
        %8050 = vmatpush.msra.mxu0 %v8000
        %8051 = vmatpush.msra.mxu0 %v7998
        %8052 = vmatpush.msra.mxu0 %v7996
        %8053 = vmatpush.msra.mxu0 %v7994
        %8054 = vmatpush.msra.mxu0 %v7992
        %8055 = vmatmul.f32.gmra.mxu0 %v8016
        %v8056 = vpop.f32.mrf.mxu0
        %v8057 = vadd.f32 0.0, %v8056
        %8058 = vmatmul.f32.gmra.mxu0 %v8019
        %v8059 = vpop.f32.mrf.mxu0
        %v8060 = vadd.f32 0.0, %v8059
        %8061 = vmatmul.f32.gmra.mxu0 %v8022
        %v8062 = vpop.f32.mrf.mxu0
        %v8063 = vadd.f32 0.0, %v8062
        %8064 = vmatmul.f32.gmra.mxu0 %v8025
        %v8065 = vpop.f32.mrf.mxu0
        %v8066 = vadd.f32 0.0, %v8065
        %8067 = vmatmul.f32.gmra.mxu0 %v8028
        %v8068 = vpop.f32.mrf.mxu0
        %v8069 = vadd.f32 0.0, %v8068
        %8070 = vmatmul.f32.gmra.mxu0 %v8031
        %v8071 = vpop.f32.mrf.mxu0
        %v8072 = vadd.f32 0.0, %v8071
        %8073 = vmatmul.f32.gmra.mxu0 %v8034
        %v8074 = vpop.f32.mrf.mxu0
        %v8075 = vadd.f32 0.0, %v8074
        %8076 = vmatmul.f32.gmra.mxu0 %v8037
        %v8077 = vpop.f32.mrf.mxu0
        %v8078 = vadd.f32 0.0, %v8077
        %8079 = vdwg.mxu0
        %8080 = vrot.lane.b32.xlu0 %v991, 64
        %v8081 = vpop.permute.xlu0 %8080
        %8082 = vrot.lane.b32.xlu0 %v994, 64
        %v8083 = vpop.permute.xlu0 %8082
        %8084 = vrot.lane.b32.xlu0 %v997, 64
        %v8085 = vpop.permute.xlu0 %8084
        %8086 = vrot.lane.b32.xlu0 %v1000, 64
        %v8087 = vpop.permute.xlu0 %8086
        %8088 = vrot.lane.b32.xlu0 %v1003, 64
        %v8089 = vpop.permute.xlu0 %8088
        %8090 = vrot.lane.b32.xlu0 %v1006, 64
        %v8091 = vpop.permute.xlu0 %8090
        %8092 = vrot.lane.b32.xlu0 %v1009, 64
        %v8093 = vpop.permute.xlu0 %8092
        %8094 = vrot.lane.b32.xlu0 %v1012, 64
        %v8095 = vpop.permute.xlu0 %8094
        %v8105 = vsel %vm1807, %v7692, 0
        %v8108 = vsel %vm1807, %v7693, 0
        %v8111 = vsel %vm1807, %v7694, 0
        %v8114 = vsel %vm1807, %v7695, 0
        %v8117 = vsel %vm1807, %v7696, 0
        %v8120 = vsel %vm1807, %v7697, 0
        %v8123 = vsel %vm1807, %v7698, 0
        %v8126 = vsel %vm1807, %v7699, 0
        %8128 = vmatpush.msra.mxu0 0.0
        %8129 = vmatpush.msra.mxu0 0.0
        %8130 = vmatpush.msra.mxu0 0.0
        %8131 = vmatpush.msra.mxu0 0.0
        %8132 = vmatpush.msra.mxu0 0.0
        %8133 = vmatpush.msra.mxu0 0.0
        %8134 = vmatpush.msra.mxu0 0.0
        %8135 = vmatpush.msra.mxu0 0.0
        %8136 = vmatpush.msra.mxu0 %v8095
        %8137 = vmatpush.msra.mxu0 %v8093
        %8138 = vmatpush.msra.mxu0 %v8091
        %8139 = vmatpush.msra.mxu0 %v8089
        %8140 = vmatpush.msra.mxu0 %v8087
        %8141 = vmatpush.msra.mxu0 %v8085
        %8142 = vmatpush.msra.mxu0 %v8083
        %8143 = vmatpush.msra.mxu0 %v8081
        %8144 = vmatmul.f32.gmra.mxu0 %v8105
        %v8145 = vpop.f32.mrf.mxu0
        %v8146 = vadd.f32 0.0, %v8145
        %8147 = vmatmul.f32.gmra.mxu0 %v8108
        %v8148 = vpop.f32.mrf.mxu0
        %v8149 = vadd.f32 0.0, %v8148
        %8150 = vmatmul.f32.gmra.mxu0 %v8111
        %v8151 = vpop.f32.mrf.mxu0
        %v8152 = vadd.f32 0.0, %v8151
        %8153 = vmatmul.f32.gmra.mxu0 %v8114
        %v8154 = vpop.f32.mrf.mxu0
        %v8155 = vadd.f32 0.0, %v8154
        %8156 = vmatmul.f32.gmra.mxu0 %v8117
        %v8157 = vpop.f32.mrf.mxu0
        %v8158 = vadd.f32 0.0, %v8157
        %8159 = vmatmul.f32.gmra.mxu0 %v8120
        %v8160 = vpop.f32.mrf.mxu0
        %v8161 = vadd.f32 0.0, %v8160
        %8162 = vmatmul.f32.gmra.mxu0 %v8123
        %v8163 = vpop.f32.mrf.mxu0
        %v8164 = vadd.f32 0.0, %v8163
        %8165 = vmatmul.f32.gmra.mxu0 %v8126
        %v8166 = vpop.f32.mrf.mxu0
        %v8167 = vadd.f32 0.0, %v8166
        %8168 = vdwg.mxu0
        %8169 = vrot.lane.b32.xlu0 %v1015, 64
        %v8170 = vpop.permute.xlu0 %8169
        %8171 = vrot.lane.b32.xlu0 %v1018, 64
        %v8172 = vpop.permute.xlu0 %8171
        %8173 = vrot.lane.b32.xlu0 %v1021, 64
        %v8174 = vpop.permute.xlu0 %8173
        %8175 = vrot.lane.b32.xlu0 %v1024, 64
        %v8176 = vpop.permute.xlu0 %8175
        %8177 = vrot.lane.b32.xlu0 %v1027, 64
        %v8178 = vpop.permute.xlu0 %8177
        %8179 = vrot.lane.b32.xlu0 %v1030, 64
        %v8180 = vpop.permute.xlu0 %8179
        %8181 = vrot.lane.b32.xlu0 %v1033, 64
        %v8182 = vpop.permute.xlu0 %8181
        %8183 = vrot.lane.b32.xlu0 %v1036, 64
        %v8184 = vpop.permute.xlu0 %8183
        %v8194 = vsel %vm1807, %v7700, 0
        %v8197 = vsel %vm1807, %v7701, 0
        %v8200 = vsel %vm1807, %v7702, 0
        %v8203 = vsel %vm1807, %v7703, 0
        %v8206 = vsel %vm1807, %v7704, 0
        %v8209 = vsel %vm1807, %v7705, 0
        %v8212 = vsel %vm1807, %v7706, 0
        %v8215 = vsel %vm1807, %v7707, 0
        %8217 = vmatpush.msra.mxu0 0.0
        %8218 = vmatpush.msra.mxu0 0.0
        %8219 = vmatpush.msra.mxu0 0.0
        %8220 = vmatpush.msra.mxu0 0.0
        %8221 = vmatpush.msra.mxu0 0.0
        %8222 = vmatpush.msra.mxu0 0.0
        %8223 = vmatpush.msra.mxu0 0.0
        %8224 = vmatpush.msra.mxu0 0.0
        %8225 = vmatpush.msra.mxu0 %v8184
        %8226 = vmatpush.msra.mxu0 %v8182
        %8227 = vmatpush.msra.mxu0 %v8180
        %8228 = vmatpush.msra.mxu0 %v8178
        %8229 = vmatpush.msra.mxu0 %v8176
        %8230 = vmatpush.msra.mxu0 %v8174
        %8231 = vmatpush.msra.mxu0 %v8172
        %8232 = vmatpush.msra.mxu0 %v8170
        %8233 = vmatmul.f32.gmra.mxu0 %v8194
        %v8234 = vpop.f32.mrf.mxu0
        %v8235 = vadd.f32 0.0, %v8234
        %8236 = vmatmul.f32.gmra.mxu0 %v8197
        %v8237 = vpop.f32.mrf.mxu0
        %v8238 = vadd.f32 0.0, %v8237
        %8239 = vmatmul.f32.gmra.mxu0 %v8200
        %v8240 = vpop.f32.mrf.mxu0
        %v8241 = vadd.f32 0.0, %v8240
        %8242 = vmatmul.f32.gmra.mxu0 %v8203
        %v8243 = vpop.f32.mrf.mxu0
        %v8244 = vadd.f32 0.0, %v8243
        %8245 = vmatmul.f32.gmra.mxu0 %v8206
        %v8246 = vpop.f32.mrf.mxu0
        %v8247 = vadd.f32 0.0, %v8246
        %8248 = vmatmul.f32.gmra.mxu0 %v8209
        %v8249 = vpop.f32.mrf.mxu0
        %v8250 = vadd.f32 0.0, %v8249
        %8251 = vmatmul.f32.gmra.mxu0 %v8212
        %v8252 = vpop.f32.mrf.mxu0
        %v8253 = vadd.f32 0.0, %v8252
        %8254 = vmatmul.f32.gmra.mxu0 %v8215
        %v8255 = vpop.f32.mrf.mxu0
        %v8256 = vadd.f32 0.0, %v8255
        %8257 = vdwg.mxu0
        %8258 = vrot.lane.b32.xlu0 %v1039, 64
        %v8259 = vpop.permute.xlu0 %8258
        %8260 = vrot.lane.b32.xlu0 %v1042, 64
        %v8261 = vpop.permute.xlu0 %8260
        %8262 = vrot.lane.b32.xlu0 %v1045, 64
        %v8263 = vpop.permute.xlu0 %8262
        %8264 = vrot.lane.b32.xlu0 %v1048, 64
        %v8265 = vpop.permute.xlu0 %8264
        %8266 = vrot.lane.b32.xlu0 %v1051, 64
        %v8267 = vpop.permute.xlu0 %8266
        %8268 = vrot.lane.b32.xlu0 %v1054, 64
        %v8269 = vpop.permute.xlu0 %8268
        %8270 = vrot.lane.b32.xlu0 %v1057, 64
        %v8271 = vpop.permute.xlu0 %8270
        %8272 = vrot.lane.b32.xlu0 %v1060, 64
        %v8273 = vpop.permute.xlu0 %8272
        %v8283 = vsel %vm1807, %v7708, 0
        %v8286 = vsel %vm1807, %v7709, 0
        %v8289 = vsel %vm1807, %v7710, 0
        %v8292 = vsel %vm1807, %v7711, 0
        %v8295 = vsel %vm1807, %v7712, 0
        %v8298 = vsel %vm1807, %v7713, 0
        %v8301 = vsel %vm1807, %v7714, 0
        %v8304 = vsel %vm1807, %v7715, 0
        %8306 = vmatpush.msra.mxu0 0.0
        %8307 = vmatpush.msra.mxu0 0.0
        %8308 = vmatpush.msra.mxu0 0.0
        %8309 = vmatpush.msra.mxu0 0.0
        %8310 = vmatpush.msra.mxu0 0.0
        %8311 = vmatpush.msra.mxu0 0.0
        %8312 = vmatpush.msra.mxu0 0.0
        %8313 = vmatpush.msra.mxu0 0.0
        %8314 = vmatpush.msra.mxu0 %v8273
        %8315 = vmatpush.msra.mxu0 %v8271
        %8316 = vmatpush.msra.mxu0 %v8269
        %8317 = vmatpush.msra.mxu0 %v8267
        %8318 = vmatpush.msra.mxu0 %v8265
        %8319 = vmatpush.msra.mxu0 %v8263
        %8320 = vmatpush.msra.mxu0 %v8261
        %8321 = vmatpush.msra.mxu0 %v8259
        %8322 = vmatmul.f32.gmra.mxu0 %v8283
        %v8323 = vpop.f32.mrf.mxu0
        %v8324 = vadd.f32 0.0, %v8323
        %8325 = vmatmul.f32.gmra.mxu0 %v8286
        %v8326 = vpop.f32.mrf.mxu0
        %v8327 = vadd.f32 0.0, %v8326
        %8328 = vmatmul.f32.gmra.mxu0 %v8289
        %v8329 = vpop.f32.mrf.mxu0
        %v8330 = vadd.f32 0.0, %v8329
        %8331 = vmatmul.f32.gmra.mxu0 %v8292
        %v8332 = vpop.f32.mrf.mxu0
        %v8333 = vadd.f32 0.0, %v8332
        %8334 = vmatmul.f32.gmra.mxu0 %v8295
        %v8335 = vpop.f32.mrf.mxu0
        %v8336 = vadd.f32 0.0, %v8335
        %8337 = vmatmul.f32.gmra.mxu0 %v8298
        %v8338 = vpop.f32.mrf.mxu0
        %v8339 = vadd.f32 0.0, %v8338
        %8340 = vmatmul.f32.gmra.mxu0 %v8301
        %v8341 = vpop.f32.mrf.mxu0
        %v8342 = vadd.f32 0.0, %v8341
        %8343 = vmatmul.f32.gmra.mxu0 %v8304
        %v8344 = vpop.f32.mrf.mxu0
        %v8345 = vadd.f32 0.0, %v8344
        %8346 = vdwg.mxu0
        %8347 = vrot.lane.b32.xlu0 %v1063, 64
        %v8348 = vpop.permute.xlu0 %8347
        %8349 = vrot.lane.b32.xlu0 %v1066, 64
        %v8350 = vpop.permute.xlu0 %8349
        %8351 = vrot.lane.b32.xlu0 %v1069, 64
        %v8352 = vpop.permute.xlu0 %8351
        %8353 = vrot.lane.b32.xlu0 %v1072, 64
        %v8354 = vpop.permute.xlu0 %8353
        %8355 = vrot.lane.b32.xlu0 %v1075, 64
        %v8356 = vpop.permute.xlu0 %8355
        %8357 = vrot.lane.b32.xlu0 %v1078, 64
        %v8358 = vpop.permute.xlu0 %8357
        %8359 = vrot.lane.b32.xlu0 %v1081, 64
        %v8360 = vpop.permute.xlu0 %8359
        %8361 = vrot.lane.b32.xlu0 %v1084, 64
        %v8362 = vpop.permute.xlu0 %8361
        %v8372 = vsel %vm1807, %v7716, 0
        %v8375 = vsel %vm1807, %v7717, 0
        %v8378 = vsel %vm1807, %v7718, 0
        %v8381 = vsel %vm1807, %v7719, 0
        %v8384 = vsel %vm1807, %v7720, 0
        %v8387 = vsel %vm1807, %v7721, 0
        %v8390 = vsel %vm1807, %v7722, 0
        %v8393 = vsel %vm1807, %v7723, 0
        %8395 = vmatpush.msra.mxu0 0.0
        %8396 = vmatpush.msra.mxu0 0.0
        %8397 = vmatpush.msra.mxu0 0.0
        %8398 = vmatpush.msra.mxu0 0.0
        %8399 = vmatpush.msra.mxu0 0.0
        %8400 = vmatpush.msra.mxu0 0.0
        %8401 = vmatpush.msra.mxu0 0.0
        %8402 = vmatpush.msra.mxu0 0.0
        %8403 = vmatpush.msra.mxu0 %v8362
        %8404 = vmatpush.msra.mxu0 %v8360
        %8405 = vmatpush.msra.mxu0 %v8358
        %8406 = vmatpush.msra.mxu0 %v8356
        %8407 = vmatpush.msra.mxu0 %v8354
        %8408 = vmatpush.msra.mxu0 %v8352
        %8409 = vmatpush.msra.mxu0 %v8350
        %8410 = vmatpush.msra.mxu0 %v8348
        %8411 = vmatmul.f32.gmra.mxu0 %v8372
        %v8412 = vpop.f32.mrf.mxu0
        %v8413 = vadd.f32 0.0, %v8412
        %8414 = vmatmul.f32.gmra.mxu0 %v8375
        %v8415 = vpop.f32.mrf.mxu0
        %v8416 = vadd.f32 0.0, %v8415
        %8417 = vmatmul.f32.gmra.mxu0 %v8378
        %v8418 = vpop.f32.mrf.mxu0
        %v8419 = vadd.f32 0.0, %v8418
        %8420 = vmatmul.f32.gmra.mxu0 %v8381
        %v8421 = vpop.f32.mrf.mxu0
        %v8422 = vadd.f32 0.0, %v8421
        %8423 = vmatmul.f32.gmra.mxu0 %v8384
        %v8424 = vpop.f32.mrf.mxu0
        %v8425 = vadd.f32 0.0, %v8424
        %8426 = vmatmul.f32.gmra.mxu0 %v8387
        %v8427 = vpop.f32.mrf.mxu0
        %v8428 = vadd.f32 0.0, %v8427
        %8429 = vmatmul.f32.gmra.mxu0 %v8390
        %v8430 = vpop.f32.mrf.mxu0
        %v8431 = vadd.f32 0.0, %v8430
        %8432 = vmatmul.f32.gmra.mxu0 %v8393
        %v8433 = vpop.f32.mrf.mxu0
        %v8434 = vadd.f32 0.0, %v8433
        %8435 = vdwg.mxu0
        %v8436 = vld [vmem:[#allocation8 + $0x40] sm:$0xff]
        %v8437 = vld [vmem:[#allocation8 + $0x48] sm:$0xff]
        %v8438 = vld [vmem:[#allocation8 + $0x50] sm:$0xff]
        %v8439 = vld [vmem:[#allocation8 + $0x58] sm:$0xff]
        %v8441 = vsel %vm1094, %v7790, 0
        %v8444 = vsel %vm1094, %v7793, 0
        %v8447 = vsel %vm1094, %v7796, 0
        %v8450 = vsel %vm1094, %v7799, 0
        %v8453 = vsel %vm1094, %v7802, 0
        %v8456 = vsel %vm1094, %v7805, 0
        %v8459 = vsel %vm1094, %v7808, 0
        %v8462 = vsel %vm1094, %v7811, 0
        %v8465 = vsel %vm1094, %v7879, 0
        %v8468 = vsel %vm1094, %v7882, 0
        %v8471 = vsel %vm1094, %v7885, 0
        %v8474 = vsel %vm1094, %v7888, 0
        %v8477 = vsel %vm1094, %v7891, 0
        %v8480 = vsel %vm1094, %v7894, 0
        %v8483 = vsel %vm1094, %v7897, 0
        %v8486 = vsel %vm1094, %v7900, 0
        %v8489 = vsel %vm1094, %v7968, 0
        %v8492 = vsel %vm1094, %v7971, 0
        %v8495 = vsel %vm1094, %v7974, 0
        %v8498 = vsel %vm1094, %v7977, 0
        %v8501 = vsel %vm1094, %v7980, 0
        %v8504 = vsel %vm1094, %v7983, 0
        %v8507 = vsel %vm1094, %v7986, 0
        %v8510 = vsel %vm1094, %v7989, 0
        %v8513 = vsel %vm1094, %v8057, 0
        %v8516 = vsel %vm1094, %v8060, 0
        %v8519 = vsel %vm1094, %v8063, 0
        %v8522 = vsel %vm1094, %v8066, 0
        %v8525 = vsel %vm1094, %v8069, 0
        %v8528 = vsel %vm1094, %v8072, 0
        %v8531 = vsel %vm1094, %v8075, 0
        %v8534 = vsel %vm1094, %v8078, 0
        %v8537 = vsel %vm1094, %v8146, 0
        %v8540 = vsel %vm1094, %v8149, 0
        %v8543 = vsel %vm1094, %v8152, 0
        %v8546 = vsel %vm1094, %v8155, 0
        %v8549 = vsel %vm1094, %v8158, 0
        %v8552 = vsel %vm1094, %v8161, 0
        %v8555 = vsel %vm1094, %v8164, 0
        %v8558 = vsel %vm1094, %v8167, 0
        %v8561 = vsel %vm1094, %v8235, 0
        %v8564 = vsel %vm1094, %v8238, 0
        %v8567 = vsel %vm1094, %v8241, 0
        %v8570 = vsel %vm1094, %v8244, 0
        %v8573 = vsel %vm1094, %v8247, 0
        %v8576 = vsel %vm1094, %v8250, 0
        %v8579 = vsel %vm1094, %v8253, 0
        %v8582 = vsel %vm1094, %v8256, 0
        %v8585 = vsel %vm1094, %v8324, 0
        %v8588 = vsel %vm1094, %v8327, 0
        %v8591 = vsel %vm1094, %v8330, 0
        %v8594 = vsel %vm1094, %v8333, 0
        %v8597 = vsel %vm1094, %v8336, 0
        %v8600 = vsel %vm1094, %v8339, 0
        %v8603 = vsel %vm1094, %v8342, 0
        %v8606 = vsel %vm1094, %v8345, 0
        %v8609 = vsel %vm1094, %v8413, 0
        %v8612 = vsel %vm1094, %v8416, 0
        %v8615 = vsel %vm1094, %v8419, 0
        %v8618 = vsel %vm1094, %v8422, 0
        %v8621 = vsel %vm1094, %v8425, 0
        %v8624 = vsel %vm1094, %v8428, 0
        %v8627 = vsel %vm1094, %v8431, 0
        %v8630 = vsel %vm1094, %v8434, 0
        %8632 = vmatpush.msra.mxu0 0.0
        %8633 = vmatpush.msra.mxu0 0.0
        %8634 = vmatpush.msra.mxu0 0.0
        %8635 = vmatpush.msra.mxu0 0.0
        %8636 = vmatpush.msra.mxu0 0.0
        %8637 = vmatpush.msra.mxu0 0.0
        %8638 = vmatpush.msra.mxu0 0.0
        %8639 = vmatpush.msra.mxu0 0.0
        %8640 = vmatpush.msra.mxu0 0.0
        %8641 = vmatpush.msra.mxu0 0.0
        %8642 = vmatpush.msra.mxu0 0.0
        %8643 = vmatpush.msra.mxu0 0.0
        %8644 = vmatpush.msra.mxu0 %v8439
        %8645 = vmatpush.msra.mxu0 %v8438
        %8646 = vmatpush.msra.mxu0 %v8437
        %8647 = vmatpush.msra.mxu0 %v8436
        %8648 = vmatmul.f32.gmra.mxu0 %v8441
        %v8649 = vpop.f32.mrf.mxu0
        %v8650 = vadd.f32 0.0, %v8649
        %8651 = vmatmul.f32.gmra.mxu0 %v8444
        %v8652 = vpop.f32.mrf.mxu0
        %v8653 = vadd.f32 0.0, %v8652
        %8654 = vmatmul.f32.gmra.mxu0 %v8447
        %v8655 = vpop.f32.mrf.mxu0
        %v8656 = vadd.f32 0.0, %v8655
        %8657 = vmatmul.f32.gmra.mxu0 %v8450
        %v8658 = vpop.f32.mrf.mxu0
        %v8659 = vadd.f32 0.0, %v8658
        %8660 = vmatmul.f32.gmra.mxu0 %v8453
        %v8661 = vpop.f32.mrf.mxu0
        %v8662 = vadd.f32 0.0, %v8661
        %8663 = vmatmul.f32.gmra.mxu0 %v8456
        %v8664 = vpop.f32.mrf.mxu0
        %v8665 = vadd.f32 0.0, %v8664
        %8666 = vmatmul.f32.gmra.mxu0 %v8459
        %v8667 = vpop.f32.mrf.mxu0
        %v8668 = vadd.f32 0.0, %v8667
        %8669 = vmatmul.f32.gmra.mxu0 %v8462
        %v8670 = vpop.f32.mrf.mxu0
        %v8671 = vadd.f32 0.0, %v8670
        %8672 = vmatmul.f32.gmra.mxu0 %v8465
        %v8673 = vpop.f32.mrf.mxu0
        %v8674 = vadd.f32 0.0, %v8673
        %8675 = vmatmul.f32.gmra.mxu0 %v8468
        %v8676 = vpop.f32.mrf.mxu0
        %v8677 = vadd.f32 0.0, %v8676
        %8678 = vmatmul.f32.gmra.mxu0 %v8471
        %v8679 = vpop.f32.mrf.mxu0
        %v8680 = vadd.f32 0.0, %v8679
        %8681 = vmatmul.f32.gmra.mxu0 %v8474
        %v8682 = vpop.f32.mrf.mxu0
        %v8683 = vadd.f32 0.0, %v8682
        %8684 = vmatmul.f32.gmra.mxu0 %v8477
        %v8685 = vpop.f32.mrf.mxu0
        %v8686 = vadd.f32 0.0, %v8685
        %8687 = vmatmul.f32.gmra.mxu0 %v8480
        %v8688 = vpop.f32.mrf.mxu0
        %v8689 = vadd.f32 0.0, %v8688
        %8690 = vmatmul.f32.gmra.mxu0 %v8483
        %v8691 = vpop.f32.mrf.mxu0
        %v8692 = vadd.f32 0.0, %v8691
        %8693 = vmatmul.f32.gmra.mxu0 %v8486
        %v8694 = vpop.f32.mrf.mxu0
        %v8695 = vadd.f32 0.0, %v8694
        %8696 = vmatmul.f32.gmra.mxu0 %v8489
        %v8697 = vpop.f32.mrf.mxu0
        %v8698 = vadd.f32 0.0, %v8697
        %8699 = vmatmul.f32.gmra.mxu0 %v8492
        %v8700 = vpop.f32.mrf.mxu0
        %v8701 = vadd.f32 0.0, %v8700
        %8702 = vmatmul.f32.gmra.mxu0 %v8495
        %v8703 = vpop.f32.mrf.mxu0
        %v8704 = vadd.f32 0.0, %v8703
        %8705 = vmatmul.f32.gmra.mxu0 %v8498
        %v8706 = vpop.f32.mrf.mxu0
        %v8707 = vadd.f32 0.0, %v8706
        %8708 = vmatmul.f32.gmra.mxu0 %v8501
        %v8709 = vpop.f32.mrf.mxu0
        %v8710 = vadd.f32 0.0, %v8709
        %8711 = vmatmul.f32.gmra.mxu0 %v8504
        %v8712 = vpop.f32.mrf.mxu0
        %v8713 = vadd.f32 0.0, %v8712
        %8714 = vmatmul.f32.gmra.mxu0 %v8507
        %v8715 = vpop.f32.mrf.mxu0
        %v8716 = vadd.f32 0.0, %v8715
        %8717 = vmatmul.f32.gmra.mxu0 %v8510
        %v8718 = vpop.f32.mrf.mxu0
        %v8719 = vadd.f32 0.0, %v8718
        %8720 = vmatmul.f32.gmra.mxu0 %v8513
        %v8721 = vpop.f32.mrf.mxu0
        %v8722 = vadd.f32 0.0, %v8721
        %8723 = vmatmul.f32.gmra.mxu0 %v8516
        %v8724 = vpop.f32.mrf.mxu0
        %v8725 = vadd.f32 0.0, %v8724
        %8726 = vmatmul.f32.gmra.mxu0 %v8519
        %v8727 = vpop.f32.mrf.mxu0
        %v8728 = vadd.f32 0.0, %v8727
        %8729 = vmatmul.f32.gmra.mxu0 %v8522
        %v8730 = vpop.f32.mrf.mxu0
        %v8731 = vadd.f32 0.0, %v8730
        %8732 = vmatmul.f32.gmra.mxu0 %v8525
        %v8733 = vpop.f32.mrf.mxu0
        %v8734 = vadd.f32 0.0, %v8733
        %8735 = vmatmul.f32.gmra.mxu0 %v8528
        %v8736 = vpop.f32.mrf.mxu0
        %v8737 = vadd.f32 0.0, %v8736
        %8738 = vmatmul.f32.gmra.mxu0 %v8531
        %v8739 = vpop.f32.mrf.mxu0
        %v8740 = vadd.f32 0.0, %v8739
        %8741 = vmatmul.f32.gmra.mxu0 %v8534
        %v8742 = vpop.f32.mrf.mxu0
        %v8743 = vadd.f32 0.0, %v8742
        %8744 = vmatmul.f32.gmra.mxu0 %v8537
        %v8745 = vpop.f32.mrf.mxu0
        %v8746 = vadd.f32 0.0, %v8745
        %8747 = vmatmul.f32.gmra.mxu0 %v8540
        %v8748 = vpop.f32.mrf.mxu0
        %v8749 = vadd.f32 0.0, %v8748
        %8750 = vmatmul.f32.gmra.mxu0 %v8543
        %v8751 = vpop.f32.mrf.mxu0
        %v8752 = vadd.f32 0.0, %v8751
        %8753 = vmatmul.f32.gmra.mxu0 %v8546
        %v8754 = vpop.f32.mrf.mxu0
        %v8755 = vadd.f32 0.0, %v8754
        %8756 = vmatmul.f32.gmra.mxu0 %v8549
        %v8757 = vpop.f32.mrf.mxu0
        %v8758 = vadd.f32 0.0, %v8757
        %8759 = vmatmul.f32.gmra.mxu0 %v8552
        %v8760 = vpop.f32.mrf.mxu0
        %v8761 = vadd.f32 0.0, %v8760
        %8762 = vmatmul.f32.gmra.mxu0 %v8555
        %v8763 = vpop.f32.mrf.mxu0
        %v8764 = vadd.f32 0.0, %v8763
        %8765 = vmatmul.f32.gmra.mxu0 %v8558
        %v8766 = vpop.f32.mrf.mxu0
        %v8767 = vadd.f32 0.0, %v8766
        %8768 = vmatmul.f32.gmra.mxu0 %v8561
        %v8769 = vpop.f32.mrf.mxu0
        %v8770 = vadd.f32 0.0, %v8769
        %8771 = vmatmul.f32.gmra.mxu0 %v8564
        %v8772 = vpop.f32.mrf.mxu0
        %v8773 = vadd.f32 0.0, %v8772
        %8774 = vmatmul.f32.gmra.mxu0 %v8567
        %v8775 = vpop.f32.mrf.mxu0
        %v8776 = vadd.f32 0.0, %v8775
        %8777 = vmatmul.f32.gmra.mxu0 %v8570
        %v8778 = vpop.f32.mrf.mxu0
        %v8779 = vadd.f32 0.0, %v8778
        %8780 = vmatmul.f32.gmra.mxu0 %v8573
        %v8781 = vpop.f32.mrf.mxu0
        %v8782 = vadd.f32 0.0, %v8781
        %8783 = vmatmul.f32.gmra.mxu0 %v8576
        %v8784 = vpop.f32.mrf.mxu0
        %v8785 = vadd.f32 0.0, %v8784
        %8786 = vmatmul.f32.gmra.mxu0 %v8579
        %v8787 = vpop.f32.mrf.mxu0
        %v8788 = vadd.f32 0.0, %v8787
        %8789 = vmatmul.f32.gmra.mxu0 %v8582
        %v8790 = vpop.f32.mrf.mxu0
        %v8791 = vadd.f32 0.0, %v8790
        %8792 = vmatmul.f32.gmra.mxu0 %v8585
        %v8793 = vpop.f32.mrf.mxu0
        %v8794 = vadd.f32 0.0, %v8793
        %8795 = vmatmul.f32.gmra.mxu0 %v8588
        %v8796 = vpop.f32.mrf.mxu0
        %v8797 = vadd.f32 0.0, %v8796
        %8798 = vmatmul.f32.gmra.mxu0 %v8591
        %v8799 = vpop.f32.mrf.mxu0
        %v8800 = vadd.f32 0.0, %v8799
        %8801 = vmatmul.f32.gmra.mxu0 %v8594
        %v8802 = vpop.f32.mrf.mxu0
        %v8803 = vadd.f32 0.0, %v8802
        %8804 = vmatmul.f32.gmra.mxu0 %v8597
        %v8805 = vpop.f32.mrf.mxu0
        %v8806 = vadd.f32 0.0, %v8805
        %8807 = vmatmul.f32.gmra.mxu0 %v8600
        %v8808 = vpop.f32.mrf.mxu0
        %v8809 = vadd.f32 0.0, %v8808
        %8810 = vmatmul.f32.gmra.mxu0 %v8603
        %v8811 = vpop.f32.mrf.mxu0
        %v8812 = vadd.f32 0.0, %v8811
        %8813 = vmatmul.f32.gmra.mxu0 %v8606
        %v8814 = vpop.f32.mrf.mxu0
        %v8815 = vadd.f32 0.0, %v8814
        %8816 = vmatmul.f32.gmra.mxu0 %v8609
        %v8817 = vpop.f32.mrf.mxu0
        %v8818 = vadd.f32 0.0, %v8817
        %8819 = vmatmul.f32.gmra.mxu0 %v8612
        %v8820 = vpop.f32.mrf.mxu0
        %v8821 = vadd.f32 0.0, %v8820
        %8822 = vmatmul.f32.gmra.mxu0 %v8615
        %v8823 = vpop.f32.mrf.mxu0
        %v8824 = vadd.f32 0.0, %v8823
        %8825 = vmatmul.f32.gmra.mxu0 %v8618
        %v8826 = vpop.f32.mrf.mxu0
        %v8827 = vadd.f32 0.0, %v8826
        %8828 = vmatmul.f32.gmra.mxu0 %v8621
        %v8829 = vpop.f32.mrf.mxu0
        %v8830 = vadd.f32 0.0, %v8829
        %8831 = vmatmul.f32.gmra.mxu0 %v8624
        %v8832 = vpop.f32.mrf.mxu0
        %v8833 = vadd.f32 0.0, %v8832
        %8834 = vmatmul.f32.gmra.mxu0 %v8627
        %v8835 = vpop.f32.mrf.mxu0
        %v8836 = vadd.f32 0.0, %v8835
        %8837 = vmatmul.f32.gmra.mxu0 %v8630
        %v8838 = vpop.f32.mrf.mxu0
        %v8839 = vadd.f32 0.0, %v8838
        %8840 = vdwg.mxu0
        %v8841 = vadd.f32 %v5980, %v8650
        %v8842 = vadd.f32 %v5983, %v8653
        %v8843 = vadd.f32 %v5986, %v8656
        %v8844 = vadd.f32 %v5989, %v8659
        %v8845 = vadd.f32 %v5992, %v8662
        %v8846 = vadd.f32 %v5995, %v8665
        %v8847 = vadd.f32 %v5998, %v8668
        %v8848 = vadd.f32 %v6001, %v8671
        %v8849 = vadd.f32 %v6004, %v8674
        %v8850 = vadd.f32 %v6007, %v8677
        %v8851 = vadd.f32 %v6010, %v8680
        %v8852 = vadd.f32 %v6013, %v8683
        %v8853 = vadd.f32 %v6016, %v8686
        %v8854 = vadd.f32 %v6019, %v8689
        %v8855 = vadd.f32 %v6022, %v8692
        %v8856 = vadd.f32 %v6025, %v8695
        %v8857 = vadd.f32 %v6028, %v8698
        %v8858 = vadd.f32 %v6031, %v8701
        %v8859 = vadd.f32 %v6034, %v8704
        %v8860 = vadd.f32 %v6037, %v8707
        %v8861 = vadd.f32 %v6040, %v8710
        %v8862 = vadd.f32 %v6043, %v8713
        %v8863 = vadd.f32 %v6046, %v8716
        %v8864 = vadd.f32 %v6049, %v8719
        %v8865 = vadd.f32 %v6052, %v8722
        %v8866 = vadd.f32 %v6055, %v8725
        %v8867 = vadd.f32 %v6058, %v8728
        %v8868 = vadd.f32 %v6061, %v8731
        %v8869 = vadd.f32 %v6064, %v8734
        %v8870 = vadd.f32 %v6067, %v8737
        %v8871 = vadd.f32 %v6070, %v8740
        %v8872 = vadd.f32 %v6073, %v8743
        %v8873 = vadd.f32 %v6076, %v8746
        %v8874 = vadd.f32 %v6079, %v8749
        %v8875 = vadd.f32 %v6082, %v8752
        %v8876 = vadd.f32 %v6085, %v8755
        %v8877 = vadd.f32 %v6088, %v8758
        %v8878 = vadd.f32 %v6091, %v8761
        %v8879 = vadd.f32 %v6094, %v8764
        %v8880 = vadd.f32 %v6097, %v8767
        %v8881 = vadd.f32 %v6100, %v8770
        %v8882 = vadd.f32 %v6103, %v8773
        %v8883 = vadd.f32 %v6106, %v8776
        %v8884 = vadd.f32 %v6109, %v8779
        %v8885 = vadd.f32 %v6112, %v8782
        %v8886 = vadd.f32 %v6115, %v8785
        %v8887 = vadd.f32 %v6118, %v8788
        %v8888 = vadd.f32 %v6121, %v8791
        %v8889 = vadd.f32 %v6124, %v8794
        %v8890 = vadd.f32 %v6127, %v8797
        %v8891 = vadd.f32 %v6130, %v8800
        %v8892 = vadd.f32 %v6133, %v8803
        %v8893 = vadd.f32 %v6136, %v8806
        %v8894 = vadd.f32 %v6139, %v8809
        %v8895 = vadd.f32 %v6142, %v8812
        %v8896 = vadd.f32 %v6145, %v8815
        %v8897 = vadd.f32 %v6148, %v8818
        %v8898 = vadd.f32 %v6151, %v8821
        %v8899 = vadd.f32 %v6154, %v8824
        %v8900 = vadd.f32 %v6157, %v8827
        %v8901 = vadd.f32 %v6160, %v8830
        %v8902 = vadd.f32 %v6163, %v8833
        %v8903 = vadd.f32 %v6166, %v8836
        %v8904 = vadd.f32 %v6169, %v8839
        %s8905 = scalar_lea.vmem [#allocation10], 192
        %v8906 = vld [vmem:[%s8905] sm:$0xff]
        %v8907 = vld [vmem:[%s8905 + $0x8] sm:$0xff]
        %v8908 = vld [vmem:[%s8905 + $0x10] sm:$0xff]
        %v8909 = vld [vmem:[%s8905 + $0x18] sm:$0xff]
        %v8910 = vld [vmem:[%s8905 + $0x20] sm:$0xff]
        %v8911 = vld [vmem:[%s8905 + $0x28] sm:$0xff]
        %v8912 = vld [vmem:[%s8905 + $0x30] sm:$0xff]
        %v8913 = vld [vmem:[%s8905 + $0x38] sm:$0xff]
        %8914 = vrot.lane.b32.xlu0 %v477, 32
        %v8915 = vpop.permute.xlu0 %8914
        %8916 = vrot.lane.b32.xlu0 %v480, 32
        %v8917 = vpop.permute.xlu0 %8916
        %8918 = vrot.lane.b32.xlu0 %v483, 32
        %v8919 = vpop.permute.xlu0 %8918
        %8920 = vrot.lane.b32.xlu0 %v486, 32
        %v8921 = vpop.permute.xlu0 %8920
        %8922 = vrot.lane.b32.xlu0 %v489, 32
        %v8923 = vpop.permute.xlu0 %8922
        %8924 = vrot.lane.b32.xlu0 %v492, 32
        %v8925 = vpop.permute.xlu0 %8924
        %8926 = vrot.lane.b32.xlu0 %v495, 32
        %v8927 = vpop.permute.xlu0 %8926
        %8928 = vrot.lane.b32.xlu0 %v498, 32
        %v8929 = vpop.permute.xlu0 %8928
        %8930 = vrot.lane.b32.xlu0 %v686, 32
        %v8931 = vpop.permute.xlu0 %8930
        %8932 = vrot.lane.b32.xlu0 %v689, 32
        %v8933 = vpop.permute.xlu0 %8932
        %8934 = vrot.lane.b32.xlu0 %v692, 32
        %v8935 = vpop.permute.xlu0 %8934
        %8936 = vrot.lane.b32.xlu0 %v695, 32
        %v8937 = vpop.permute.xlu0 %8936
        %8938 = vrot.lane.b32.xlu0 %v698, 32
        %v8939 = vpop.permute.xlu0 %8938
        %8940 = vrot.lane.b32.xlu0 %v701, 32
        %v8941 = vpop.permute.xlu0 %8940
        %8942 = vrot.lane.b32.xlu0 %v704, 32
        %v8943 = vpop.permute.xlu0 %8942
        %8944 = vrot.lane.b32.xlu0 %v707, 32
        %v8945 = vpop.permute.xlu0 %8944
        %v8946 = vsel %vm1094, %v8915, 0
        %v8948 = vsel %vm1094, %v8917, 0
        %v8950 = vsel %vm1094, %v8919, 0
        %v8952 = vsel %vm1094, %v8921, 0
        %v8954 = vsel %vm1094, %v8923, 0
        %v8956 = vsel %vm1094, %v8925, 0
        %v8958 = vsel %vm1094, %v8927, 0
        %v8960 = vsel %vm1094, %v8929, 0
        %v8962 = vsel %vm1094, %v8931, 0
        %v8964 = vsel %vm1094, %v8933, 0
        %v8966 = vsel %vm1094, %v8935, 0
        %v8968 = vsel %vm1094, %v8937, 0
        %v8970 = vsel %vm1094, %v8939, 0
        %v8972 = vsel %vm1094, %v8941, 0
        %v8974 = vsel %vm1094, %v8943, 0
        %v8976 = vsel %vm1094, %v8945, 0
        %8978 = vmatpush.xpose.msra.mxu0 0.0
        %8979 = vmatpush.xpose.msra.mxu0 0.0
        %8980 = vmatpush.xpose.msra.mxu0 0.0
        %8981 = vmatpush.xpose.msra.mxu0 0.0
        %8982 = vmatpush.xpose.msra.mxu0 0.0
        %8983 = vmatpush.xpose.msra.mxu0 0.0
        %8984 = vmatpush.xpose.msra.mxu0 0.0
        %8985 = vmatpush.xpose.msra.mxu0 0.0
        %8986 = vmatpush.xpose.msra.mxu0 %v8976
        %8987 = vmatpush.xpose.msra.mxu0 %v8974
        %8988 = vmatpush.xpose.msra.mxu0 %v8972
        %8989 = vmatpush.xpose.msra.mxu0 %v8970
        %8990 = vmatpush.xpose.msra.mxu0 %v8968
        %8991 = vmatpush.xpose.msra.mxu0 %v8966
        %8992 = vmatpush.xpose.msra.mxu0 %v8964
        %8993 = vmatpush.xpose.msra.mxu0 %v8962
        %8994 = vmatmul.f32.gmra.mxu0 %v8946
        %v8995 = vpop.f32.mrf.mxu0
        %v8996 = vadd.f32 %v8906, %v8995
        %8997 = vmatmul.f32.gmra.mxu0 %v8948
        %v8998 = vpop.f32.mrf.mxu0
        %v8999 = vadd.f32 %v8907, %v8998
        %9000 = vmatmul.f32.gmra.mxu0 %v8950
        %v9001 = vpop.f32.mrf.mxu0
        %v9002 = vadd.f32 %v8908, %v9001
        %9003 = vmatmul.f32.gmra.mxu0 %v8952
        %v9004 = vpop.f32.mrf.mxu0
        %v9005 = vadd.f32 %v8909, %v9004
        %9006 = vmatmul.f32.gmra.mxu0 %v8954
        %v9007 = vpop.f32.mrf.mxu0
        %v9008 = vadd.f32 %v8910, %v9007
        %9009 = vmatmul.f32.gmra.mxu0 %v8956
        %v9010 = vpop.f32.mrf.mxu0
        %v9011 = vadd.f32 %v8911, %v9010
        %9012 = vmatmul.f32.gmra.mxu0 %v8958
        %v9013 = vpop.f32.mrf.mxu0
        %v9014 = vadd.f32 %v8912, %v9013
        %9015 = vmatmul.f32.gmra.mxu0 %v8960
        %v9016 = vpop.f32.mrf.mxu0
        %v9017 = vadd.f32 %v8913, %v9016
        %9018 = vdwg.mxu0
        %9019 = vrot.lane.b32.xlu0 %v501, 32
        %v9020 = vpop.permute.xlu0 %9019
        %9021 = vrot.lane.b32.xlu0 %v504, 32
        %v9022 = vpop.permute.xlu0 %9021
        %9023 = vrot.lane.b32.xlu0 %v507, 32
        %v9024 = vpop.permute.xlu0 %9023
        %9025 = vrot.lane.b32.xlu0 %v510, 32
        %v9026 = vpop.permute.xlu0 %9025
        %9027 = vrot.lane.b32.xlu0 %v513, 32
        %v9028 = vpop.permute.xlu0 %9027
        %9029 = vrot.lane.b32.xlu0 %v516, 32
        %v9030 = vpop.permute.xlu0 %9029
        %9031 = vrot.lane.b32.xlu0 %v519, 32
        %v9032 = vpop.permute.xlu0 %9031
        %9033 = vrot.lane.b32.xlu0 %v522, 32
        %v9034 = vpop.permute.xlu0 %9033
        %9035 = vrot.lane.b32.xlu0 %v710, 32
        %v9036 = vpop.permute.xlu0 %9035
        %9037 = vrot.lane.b32.xlu0 %v713, 32
        %v9038 = vpop.permute.xlu0 %9037
        %9039 = vrot.lane.b32.xlu0 %v716, 32
        %v9040 = vpop.permute.xlu0 %9039
        %9041 = vrot.lane.b32.xlu0 %v719, 32
        %v9042 = vpop.permute.xlu0 %9041
        %9043 = vrot.lane.b32.xlu0 %v722, 32
        %v9044 = vpop.permute.xlu0 %9043
        %9045 = vrot.lane.b32.xlu0 %v725, 32
        %v9046 = vpop.permute.xlu0 %9045
        %9047 = vrot.lane.b32.xlu0 %v728, 32
        %v9048 = vpop.permute.xlu0 %9047
        %9049 = vrot.lane.b32.xlu0 %v731, 32
        %v9050 = vpop.permute.xlu0 %9049
        %v9051 = vsel %vm1094, %v9020, 0
        %v9053 = vsel %vm1094, %v9022, 0
        %v9055 = vsel %vm1094, %v9024, 0
        %v9057 = vsel %vm1094, %v9026, 0
        %v9059 = vsel %vm1094, %v9028, 0
        %v9061 = vsel %vm1094, %v9030, 0
        %v9063 = vsel %vm1094, %v9032, 0
        %v9065 = vsel %vm1094, %v9034, 0
        %v9067 = vsel %vm1094, %v9036, 0
        %v9069 = vsel %vm1094, %v9038, 0
        %v9071 = vsel %vm1094, %v9040, 0
        %v9073 = vsel %vm1094, %v9042, 0
        %v9075 = vsel %vm1094, %v9044, 0
        %v9077 = vsel %vm1094, %v9046, 0
        %v9079 = vsel %vm1094, %v9048, 0
        %v9081 = vsel %vm1094, %v9050, 0
        %9083 = vmatpush.xpose.msra.mxu0 0.0
        %9084 = vmatpush.xpose.msra.mxu0 0.0
        %9085 = vmatpush.xpose.msra.mxu0 0.0
        %9086 = vmatpush.xpose.msra.mxu0 0.0
        %9087 = vmatpush.xpose.msra.mxu0 0.0
        %9088 = vmatpush.xpose.msra.mxu0 0.0
        %9089 = vmatpush.xpose.msra.mxu0 0.0
        %9090 = vmatpush.xpose.msra.mxu0 0.0
        %9091 = vmatpush.xpose.msra.mxu0 %v9081
        %9092 = vmatpush.xpose.msra.mxu0 %v9079
        %9093 = vmatpush.xpose.msra.mxu0 %v9077
        %9094 = vmatpush.xpose.msra.mxu0 %v9075
        %9095 = vmatpush.xpose.msra.mxu0 %v9073
        %9096 = vmatpush.xpose.msra.mxu0 %v9071
        %9097 = vmatpush.xpose.msra.mxu0 %v9069
        %9098 = vmatpush.xpose.msra.mxu0 %v9067
        %9099 = vmatmul.f32.gmra.mxu0 %v9051
        %v9100 = vpop.f32.mrf.mxu0
        %v9101 = vadd.f32 %v8906, %v9100
        %9102 = vmatmul.f32.gmra.mxu0 %v9053
        %v9103 = vpop.f32.mrf.mxu0
        %v9104 = vadd.f32 %v8907, %v9103
        %9105 = vmatmul.f32.gmra.mxu0 %v9055
        %v9106 = vpop.f32.mrf.mxu0
        %v9107 = vadd.f32 %v8908, %v9106
        %9108 = vmatmul.f32.gmra.mxu0 %v9057
        %v9109 = vpop.f32.mrf.mxu0
        %v9110 = vadd.f32 %v8909, %v9109
        %9111 = vmatmul.f32.gmra.mxu0 %v9059
        %v9112 = vpop.f32.mrf.mxu0
        %v9113 = vadd.f32 %v8910, %v9112
        %9114 = vmatmul.f32.gmra.mxu0 %v9061
        %v9115 = vpop.f32.mrf.mxu0
        %v9116 = vadd.f32 %v8911, %v9115
        %9117 = vmatmul.f32.gmra.mxu0 %v9063
        %v9118 = vpop.f32.mrf.mxu0
        %v9119 = vadd.f32 %v8912, %v9118
        %9120 = vmatmul.f32.gmra.mxu0 %v9065
        %v9121 = vpop.f32.mrf.mxu0
        %v9122 = vadd.f32 %v8913, %v9121
        %9123 = vdwg.mxu0
        %9124 = vrot.lane.b32.xlu0 %v525, 32
        %v9125 = vpop.permute.xlu0 %9124
        %9126 = vrot.lane.b32.xlu0 %v528, 32
        %v9127 = vpop.permute.xlu0 %9126
        %9128 = vrot.lane.b32.xlu0 %v531, 32
        %v9129 = vpop.permute.xlu0 %9128
        %9130 = vrot.lane.b32.xlu0 %v534, 32
        %v9131 = vpop.permute.xlu0 %9130
        %9132 = vrot.lane.b32.xlu0 %v537, 32
        %v9133 = vpop.permute.xlu0 %9132
        %9134 = vrot.lane.b32.xlu0 %v540, 32
        %v9135 = vpop.permute.xlu0 %9134
        %9136 = vrot.lane.b32.xlu0 %v543, 32
        %v9137 = vpop.permute.xlu0 %9136
        %9138 = vrot.lane.b32.xlu0 %v546, 32
        %v9139 = vpop.permute.xlu0 %9138
        %9140 = vrot.lane.b32.xlu0 %v734, 32
        %v9141 = vpop.permute.xlu0 %9140
        %9142 = vrot.lane.b32.xlu0 %v737, 32
        %v9143 = vpop.permute.xlu0 %9142
        %9144 = vrot.lane.b32.xlu0 %v740, 32
        %v9145 = vpop.permute.xlu0 %9144
        %9146 = vrot.lane.b32.xlu0 %v743, 32
        %v9147 = vpop.permute.xlu0 %9146
        %9148 = vrot.lane.b32.xlu0 %v746, 32
        %v9149 = vpop.permute.xlu0 %9148
        %9150 = vrot.lane.b32.xlu0 %v749, 32
        %v9151 = vpop.permute.xlu0 %9150
        %9152 = vrot.lane.b32.xlu0 %v752, 32
        %v9153 = vpop.permute.xlu0 %9152
        %9154 = vrot.lane.b32.xlu0 %v755, 32
        %v9155 = vpop.permute.xlu0 %9154
        %v9156 = vsel %vm1094, %v9125, 0
        %v9158 = vsel %vm1094, %v9127, 0
        %v9160 = vsel %vm1094, %v9129, 0
        %v9162 = vsel %vm1094, %v9131, 0
        %v9164 = vsel %vm1094, %v9133, 0
        %v9166 = vsel %vm1094, %v9135, 0
        %v9168 = vsel %vm1094, %v9137, 0
        %v9170 = vsel %vm1094, %v9139, 0
        %v9172 = vsel %vm1094, %v9141, 0
        %v9174 = vsel %vm1094, %v9143, 0
        %v9176 = vsel %vm1094, %v9145, 0
        %v9178 = vsel %vm1094, %v9147, 0
        %v9180 = vsel %vm1094, %v9149, 0
        %v9182 = vsel %vm1094, %v9151, 0
        %v9184 = vsel %vm1094, %v9153, 0
        %v9186 = vsel %vm1094, %v9155, 0
        %9188 = vmatpush.xpose.msra.mxu0 0.0
        %9189 = vmatpush.xpose.msra.mxu0 0.0
        %9190 = vmatpush.xpose.msra.mxu0 0.0
        %9191 = vmatpush.xpose.msra.mxu0 0.0
        %9192 = vmatpush.xpose.msra.mxu0 0.0
        %9193 = vmatpush.xpose.msra.mxu0 0.0
        %9194 = vmatpush.xpose.msra.mxu0 0.0
        %9195 = vmatpush.xpose.msra.mxu0 0.0
        %9196 = vmatpush.xpose.msra.mxu0 %v9186
        %9197 = vmatpush.xpose.msra.mxu0 %v9184
        %9198 = vmatpush.xpose.msra.mxu0 %v9182
        %9199 = vmatpush.xpose.msra.mxu0 %v9180
        %9200 = vmatpush.xpose.msra.mxu0 %v9178
        %9201 = vmatpush.xpose.msra.mxu0 %v9176
        %9202 = vmatpush.xpose.msra.mxu0 %v9174
        %9203 = vmatpush.xpose.msra.mxu0 %v9172
        %9204 = vmatmul.f32.gmra.mxu0 %v9156
        %v9205 = vpop.f32.mrf.mxu0
        %v9206 = vadd.f32 %v8906, %v9205
        %9207 = vmatmul.f32.gmra.mxu0 %v9158
        %v9208 = vpop.f32.mrf.mxu0
        %v9209 = vadd.f32 %v8907, %v9208
        %9210 = vmatmul.f32.gmra.mxu0 %v9160
        %v9211 = vpop.f32.mrf.mxu0
        %v9212 = vadd.f32 %v8908, %v9211
        %9213 = vmatmul.f32.gmra.mxu0 %v9162
        %v9214 = vpop.f32.mrf.mxu0
        %v9215 = vadd.f32 %v8909, %v9214
        %9216 = vmatmul.f32.gmra.mxu0 %v9164
        %v9217 = vpop.f32.mrf.mxu0
        %v9218 = vadd.f32 %v8910, %v9217
        %9219 = vmatmul.f32.gmra.mxu0 %v9166
        %v9220 = vpop.f32.mrf.mxu0
        %v9221 = vadd.f32 %v8911, %v9220
        %9222 = vmatmul.f32.gmra.mxu0 %v9168
        %v9223 = vpop.f32.mrf.mxu0
        %v9224 = vadd.f32 %v8912, %v9223
        %9225 = vmatmul.f32.gmra.mxu0 %v9170
        %v9226 = vpop.f32.mrf.mxu0
        %v9227 = vadd.f32 %v8913, %v9226
        %9228 = vdwg.mxu0
        %9229 = vrot.lane.b32.xlu0 %v549, 32
        %v9230 = vpop.permute.xlu0 %9229
        %9231 = vrot.lane.b32.xlu0 %v552, 32
        %v9232 = vpop.permute.xlu0 %9231
        %9233 = vrot.lane.b32.xlu0 %v555, 32
        %v9234 = vpop.permute.xlu0 %9233
        %9235 = vrot.lane.b32.xlu0 %v558, 32
        %v9236 = vpop.permute.xlu0 %9235
        %9237 = vrot.lane.b32.xlu0 %v561, 32
        %v9238 = vpop.permute.xlu0 %9237
        %9239 = vrot.lane.b32.xlu0 %v564, 32
        %v9240 = vpop.permute.xlu0 %9239
        %9241 = vrot.lane.b32.xlu0 %v567, 32
        %v9242 = vpop.permute.xlu0 %9241
        %9243 = vrot.lane.b32.xlu0 %v570, 32
        %v9244 = vpop.permute.xlu0 %9243
        %9245 = vrot.lane.b32.xlu0 %v758, 32
        %v9246 = vpop.permute.xlu0 %9245
        %9247 = vrot.lane.b32.xlu0 %v761, 32
        %v9248 = vpop.permute.xlu0 %9247
        %9249 = vrot.lane.b32.xlu0 %v764, 32
        %v9250 = vpop.permute.xlu0 %9249
        %9251 = vrot.lane.b32.xlu0 %v767, 32
        %v9252 = vpop.permute.xlu0 %9251
        %9253 = vrot.lane.b32.xlu0 %v770, 32
        %v9254 = vpop.permute.xlu0 %9253
        %9255 = vrot.lane.b32.xlu0 %v773, 32
        %v9256 = vpop.permute.xlu0 %9255
        %9257 = vrot.lane.b32.xlu0 %v776, 32
        %v9258 = vpop.permute.xlu0 %9257
        %9259 = vrot.lane.b32.xlu0 %v779, 32
        %v9260 = vpop.permute.xlu0 %9259
        %v9261 = vsel %vm1094, %v9230, 0
        %v9263 = vsel %vm1094, %v9232, 0
        %v9265 = vsel %vm1094, %v9234, 0
        %v9267 = vsel %vm1094, %v9236, 0
        %v9269 = vsel %vm1094, %v9238, 0
        %v9271 = vsel %vm1094, %v9240, 0
        %v9273 = vsel %vm1094, %v9242, 0
        %v9275 = vsel %vm1094, %v9244, 0
        %v9277 = vsel %vm1094, %v9246, 0
        %v9279 = vsel %vm1094, %v9248, 0
        %v9281 = vsel %vm1094, %v9250, 0
        %v9283 = vsel %vm1094, %v9252, 0
        %v9285 = vsel %vm1094, %v9254, 0
        %v9287 = vsel %vm1094, %v9256, 0
        %v9289 = vsel %vm1094, %v9258, 0
        %v9291 = vsel %vm1094, %v9260, 0
        %9293 = vmatpush.xpose.msra.mxu0 0.0
        %9294 = vmatpush.xpose.msra.mxu0 0.0
        %9295 = vmatpush.xpose.msra.mxu0 0.0
        %9296 = vmatpush.xpose.msra.mxu0 0.0
        %9297 = vmatpush.xpose.msra.mxu0 0.0
        %9298 = vmatpush.xpose.msra.mxu0 0.0
        %9299 = vmatpush.xpose.msra.mxu0 0.0
        %9300 = vmatpush.xpose.msra.mxu0 0.0
        %9301 = vmatpush.xpose.msra.mxu0 %v9291
        %9302 = vmatpush.xpose.msra.mxu0 %v9289
        %9303 = vmatpush.xpose.msra.mxu0 %v9287
        %9304 = vmatpush.xpose.msra.mxu0 %v9285
        %9305 = vmatpush.xpose.msra.mxu0 %v9283
        %9306 = vmatpush.xpose.msra.mxu0 %v9281
        %9307 = vmatpush.xpose.msra.mxu0 %v9279
        %9308 = vmatpush.xpose.msra.mxu0 %v9277
        %9309 = vmatmul.f32.gmra.mxu0 %v9261
        %v9310 = vpop.f32.mrf.mxu0
        %v9311 = vadd.f32 %v8906, %v9310
        %9312 = vmatmul.f32.gmra.mxu0 %v9263
        %v9313 = vpop.f32.mrf.mxu0
        %v9314 = vadd.f32 %v8907, %v9313
        %9315 = vmatmul.f32.gmra.mxu0 %v9265
        %v9316 = vpop.f32.mrf.mxu0
        %v9317 = vadd.f32 %v8908, %v9316
        %9318 = vmatmul.f32.gmra.mxu0 %v9267
        %v9319 = vpop.f32.mrf.mxu0
        %v9320 = vadd.f32 %v8909, %v9319
        %9321 = vmatmul.f32.gmra.mxu0 %v9269
        %v9322 = vpop.f32.mrf.mxu0
        %v9323 = vadd.f32 %v8910, %v9322
        %9324 = vmatmul.f32.gmra.mxu0 %v9271
        %v9325 = vpop.f32.mrf.mxu0
        %v9326 = vadd.f32 %v8911, %v9325
        %9327 = vmatmul.f32.gmra.mxu0 %v9273
        %v9328 = vpop.f32.mrf.mxu0
        %v9329 = vadd.f32 %v8912, %v9328
        %9330 = vmatmul.f32.gmra.mxu0 %v9275
        %v9331 = vpop.f32.mrf.mxu0
        %v9332 = vadd.f32 %v8913, %v9331
        %9333 = vdwg.mxu0
        %9334 = vrot.lane.b32.xlu0 %v573, 32
        %v9335 = vpop.permute.xlu0 %9334
        %9336 = vrot.lane.b32.xlu0 %v576, 32
        %v9337 = vpop.permute.xlu0 %9336
        %9338 = vrot.lane.b32.xlu0 %v579, 32
        %v9339 = vpop.permute.xlu0 %9338
        %9340 = vrot.lane.b32.xlu0 %v582, 32
        %v9341 = vpop.permute.xlu0 %9340
        %9342 = vrot.lane.b32.xlu0 %v585, 32
        %v9343 = vpop.permute.xlu0 %9342
        %9344 = vrot.lane.b32.xlu0 %v588, 32
        %v9345 = vpop.permute.xlu0 %9344
        %9346 = vrot.lane.b32.xlu0 %v591, 32
        %v9347 = vpop.permute.xlu0 %9346
        %9348 = vrot.lane.b32.xlu0 %v594, 32
        %v9349 = vpop.permute.xlu0 %9348
        %9350 = vrot.lane.b32.xlu0 %v782, 32
        %v9351 = vpop.permute.xlu0 %9350
        %9352 = vrot.lane.b32.xlu0 %v785, 32
        %v9353 = vpop.permute.xlu0 %9352
        %9354 = vrot.lane.b32.xlu0 %v788, 32
        %v9355 = vpop.permute.xlu0 %9354
        %9356 = vrot.lane.b32.xlu0 %v791, 32
        %v9357 = vpop.permute.xlu0 %9356
        %9358 = vrot.lane.b32.xlu0 %v794, 32
        %v9359 = vpop.permute.xlu0 %9358
        %9360 = vrot.lane.b32.xlu0 %v797, 32
        %v9361 = vpop.permute.xlu0 %9360
        %9362 = vrot.lane.b32.xlu0 %v800, 32
        %v9363 = vpop.permute.xlu0 %9362
        %9364 = vrot.lane.b32.xlu0 %v803, 32
        %v9365 = vpop.permute.xlu0 %9364
        %v9366 = vsel %vm1094, %v9335, 0
        %v9368 = vsel %vm1094, %v9337, 0
        %v9370 = vsel %vm1094, %v9339, 0
        %v9372 = vsel %vm1094, %v9341, 0
        %v9374 = vsel %vm1094, %v9343, 0
        %v9376 = vsel %vm1094, %v9345, 0
        %v9378 = vsel %vm1094, %v9347, 0
        %v9380 = vsel %vm1094, %v9349, 0
        %v9382 = vsel %vm1094, %v9351, 0
        %v9384 = vsel %vm1094, %v9353, 0
        %v9386 = vsel %vm1094, %v9355, 0
        %v9388 = vsel %vm1094, %v9357, 0
        %v9390 = vsel %vm1094, %v9359, 0
        %v9392 = vsel %vm1094, %v9361, 0
        %v9394 = vsel %vm1094, %v9363, 0
        %v9396 = vsel %vm1094, %v9365, 0
        %9398 = vmatpush.xpose.msra.mxu0 0.0
        %9399 = vmatpush.xpose.msra.mxu0 0.0
        %9400 = vmatpush.xpose.msra.mxu0 0.0
        %9401 = vmatpush.xpose.msra.mxu0 0.0
        %9402 = vmatpush.xpose.msra.mxu0 0.0
        %9403 = vmatpush.xpose.msra.mxu0 0.0
        %9404 = vmatpush.xpose.msra.mxu0 0.0
        %9405 = vmatpush.xpose.msra.mxu0 0.0
        %9406 = vmatpush.xpose.msra.mxu0 %v9396
        %9407 = vmatpush.xpose.msra.mxu0 %v9394
        %9408 = vmatpush.xpose.msra.mxu0 %v9392
        %9409 = vmatpush.xpose.msra.mxu0 %v9390
        %9410 = vmatpush.xpose.msra.mxu0 %v9388
        %9411 = vmatpush.xpose.msra.mxu0 %v9386
        %9412 = vmatpush.xpose.msra.mxu0 %v9384
        %9413 = vmatpush.xpose.msra.mxu0 %v9382
        %9414 = vmatmul.f32.gmra.mxu0 %v9366
        %v9415 = vpop.f32.mrf.mxu0
        %v9416 = vadd.f32 %v8906, %v9415
        %9417 = vmatmul.f32.gmra.mxu0 %v9368
        %v9418 = vpop.f32.mrf.mxu0
        %v9419 = vadd.f32 %v8907, %v9418
        %9420 = vmatmul.f32.gmra.mxu0 %v9370
        %v9421 = vpop.f32.mrf.mxu0
        %v9422 = vadd.f32 %v8908, %v9421
        %9423 = vmatmul.f32.gmra.mxu0 %v9372
        %v9424 = vpop.f32.mrf.mxu0
        %v9425 = vadd.f32 %v8909, %v9424
        %9426 = vmatmul.f32.gmra.mxu0 %v9374
        %v9427 = vpop.f32.mrf.mxu0
        %v9428 = vadd.f32 %v8910, %v9427
        %9429 = vmatmul.f32.gmra.mxu0 %v9376
        %v9430 = vpop.f32.mrf.mxu0
        %v9431 = vadd.f32 %v8911, %v9430
        %9432 = vmatmul.f32.gmra.mxu0 %v9378
        %v9433 = vpop.f32.mrf.mxu0
        %v9434 = vadd.f32 %v8912, %v9433
        %9435 = vmatmul.f32.gmra.mxu0 %v9380
        %v9436 = vpop.f32.mrf.mxu0
        %v9437 = vadd.f32 %v8913, %v9436
        %9438 = vdwg.mxu0
        %9439 = vrot.lane.b32.xlu0 %v597, 32
        %v9440 = vpop.permute.xlu0 %9439
        %9441 = vrot.lane.b32.xlu0 %v600, 32
        %v9442 = vpop.permute.xlu0 %9441
        %9443 = vrot.lane.b32.xlu0 %v603, 32
        %v9444 = vpop.permute.xlu0 %9443
        %9445 = vrot.lane.b32.xlu0 %v606, 32
        %v9446 = vpop.permute.xlu0 %9445
        %9447 = vrot.lane.b32.xlu0 %v609, 32
        %v9448 = vpop.permute.xlu0 %9447
        %9449 = vrot.lane.b32.xlu0 %v612, 32
        %v9450 = vpop.permute.xlu0 %9449
        %9451 = vrot.lane.b32.xlu0 %v615, 32
        %v9452 = vpop.permute.xlu0 %9451
        %9453 = vrot.lane.b32.xlu0 %v618, 32
        %v9454 = vpop.permute.xlu0 %9453
        %9455 = vrot.lane.b32.xlu0 %v806, 32
        %v9456 = vpop.permute.xlu0 %9455
        %9457 = vrot.lane.b32.xlu0 %v809, 32
        %v9458 = vpop.permute.xlu0 %9457
        %9459 = vrot.lane.b32.xlu0 %v812, 32
        %v9460 = vpop.permute.xlu0 %9459
        %9461 = vrot.lane.b32.xlu0 %v815, 32
        %v9462 = vpop.permute.xlu0 %9461
        %9463 = vrot.lane.b32.xlu0 %v818, 32
        %v9464 = vpop.permute.xlu0 %9463
        %9465 = vrot.lane.b32.xlu0 %v821, 32
        %v9466 = vpop.permute.xlu0 %9465
        %9467 = vrot.lane.b32.xlu0 %v824, 32
        %v9468 = vpop.permute.xlu0 %9467
        %9469 = vrot.lane.b32.xlu0 %v827, 32
        %v9470 = vpop.permute.xlu0 %9469
        %v9471 = vsel %vm1094, %v9440, 0
        %v9473 = vsel %vm1094, %v9442, 0
        %v9475 = vsel %vm1094, %v9444, 0
        %v9477 = vsel %vm1094, %v9446, 0
        %v9479 = vsel %vm1094, %v9448, 0
        %v9481 = vsel %vm1094, %v9450, 0
        %v9483 = vsel %vm1094, %v9452, 0
        %v9485 = vsel %vm1094, %v9454, 0
        %v9487 = vsel %vm1094, %v9456, 0
        %v9489 = vsel %vm1094, %v9458, 0
        %v9491 = vsel %vm1094, %v9460, 0
        %v9493 = vsel %vm1094, %v9462, 0
        %v9495 = vsel %vm1094, %v9464, 0
        %v9497 = vsel %vm1094, %v9466, 0
        %v9499 = vsel %vm1094, %v9468, 0
        %v9501 = vsel %vm1094, %v9470, 0
        %9503 = vmatpush.xpose.msra.mxu0 0.0
        %9504 = vmatpush.xpose.msra.mxu0 0.0
        %9505 = vmatpush.xpose.msra.mxu0 0.0
        %9506 = vmatpush.xpose.msra.mxu0 0.0
        %9507 = vmatpush.xpose.msra.mxu0 0.0
        %9508 = vmatpush.xpose.msra.mxu0 0.0
        %9509 = vmatpush.xpose.msra.mxu0 0.0
        %9510 = vmatpush.xpose.msra.mxu0 0.0
        %9511 = vmatpush.xpose.msra.mxu0 %v9501
        %9512 = vmatpush.xpose.msra.mxu0 %v9499
        %9513 = vmatpush.xpose.msra.mxu0 %v9497
        %9514 = vmatpush.xpose.msra.mxu0 %v9495
        %9515 = vmatpush.xpose.msra.mxu0 %v9493
        %9516 = vmatpush.xpose.msra.mxu0 %v9491
        %9517 = vmatpush.xpose.msra.mxu0 %v9489
        %9518 = vmatpush.xpose.msra.mxu0 %v9487
        %9519 = vmatmul.f32.gmra.mxu0 %v9471
        %v9520 = vpop.f32.mrf.mxu0
        %v9521 = vadd.f32 %v8906, %v9520
        %9522 = vmatmul.f32.gmra.mxu0 %v9473
        %v9523 = vpop.f32.mrf.mxu0
        %v9524 = vadd.f32 %v8907, %v9523
        %9525 = vmatmul.f32.gmra.mxu0 %v9475
        %v9526 = vpop.f32.mrf.mxu0
        %v9527 = vadd.f32 %v8908, %v9526
        %9528 = vmatmul.f32.gmra.mxu0 %v9477
        %v9529 = vpop.f32.mrf.mxu0
        %v9530 = vadd.f32 %v8909, %v9529
        %9531 = vmatmul.f32.gmra.mxu0 %v9479
        %v9532 = vpop.f32.mrf.mxu0
        %v9533 = vadd.f32 %v8910, %v9532
        %9534 = vmatmul.f32.gmra.mxu0 %v9481
        %v9535 = vpop.f32.mrf.mxu0
        %v9536 = vadd.f32 %v8911, %v9535
        %9537 = vmatmul.f32.gmra.mxu0 %v9483
        %v9538 = vpop.f32.mrf.mxu0
        %v9539 = vadd.f32 %v8912, %v9538
        %9540 = vmatmul.f32.gmra.mxu0 %v9485
        %v9541 = vpop.f32.mrf.mxu0
        %v9542 = vadd.f32 %v8913, %v9541
        %9543 = vdwg.mxu0
        %9544 = vrot.lane.b32.xlu0 %v621, 32
        %v9545 = vpop.permute.xlu0 %9544
        %9546 = vrot.lane.b32.xlu0 %v624, 32
        %v9547 = vpop.permute.xlu0 %9546
        %9548 = vrot.lane.b32.xlu0 %v627, 32
        %v9549 = vpop.permute.xlu0 %9548
        %9550 = vrot.lane.b32.xlu0 %v630, 32
        %v9551 = vpop.permute.xlu0 %9550
        %9552 = vrot.lane.b32.xlu0 %v633, 32
        %v9553 = vpop.permute.xlu0 %9552
        %9554 = vrot.lane.b32.xlu0 %v636, 32
        %v9555 = vpop.permute.xlu0 %9554
        %9556 = vrot.lane.b32.xlu0 %v639, 32
        %v9557 = vpop.permute.xlu0 %9556
        %9558 = vrot.lane.b32.xlu0 %v642, 32
        %v9559 = vpop.permute.xlu0 %9558
        %9560 = vrot.lane.b32.xlu0 %v830, 32
        %v9561 = vpop.permute.xlu0 %9560
        %9562 = vrot.lane.b32.xlu0 %v833, 32
        %v9563 = vpop.permute.xlu0 %9562
        %9564 = vrot.lane.b32.xlu0 %v836, 32
        %v9565 = vpop.permute.xlu0 %9564
        %9566 = vrot.lane.b32.xlu0 %v839, 32
        %v9567 = vpop.permute.xlu0 %9566
        %9568 = vrot.lane.b32.xlu0 %v842, 32
        %v9569 = vpop.permute.xlu0 %9568
        %9570 = vrot.lane.b32.xlu0 %v845, 32
        %v9571 = vpop.permute.xlu0 %9570
        %9572 = vrot.lane.b32.xlu0 %v848, 32
        %v9573 = vpop.permute.xlu0 %9572
        %9574 = vrot.lane.b32.xlu0 %v851, 32
        %v9575 = vpop.permute.xlu0 %9574
        %v9576 = vsel %vm1094, %v9545, 0
        %v9578 = vsel %vm1094, %v9547, 0
        %v9580 = vsel %vm1094, %v9549, 0
        %v9582 = vsel %vm1094, %v9551, 0
        %v9584 = vsel %vm1094, %v9553, 0
        %v9586 = vsel %vm1094, %v9555, 0
        %v9588 = vsel %vm1094, %v9557, 0
        %v9590 = vsel %vm1094, %v9559, 0
        %v9592 = vsel %vm1094, %v9561, 0
        %v9594 = vsel %vm1094, %v9563, 0
        %v9596 = vsel %vm1094, %v9565, 0
        %v9598 = vsel %vm1094, %v9567, 0
        %v9600 = vsel %vm1094, %v9569, 0
        %v9602 = vsel %vm1094, %v9571, 0
        %v9604 = vsel %vm1094, %v9573, 0
        %v9606 = vsel %vm1094, %v9575, 0
        %9608 = vmatpush.xpose.msra.mxu0 0.0
        %9609 = vmatpush.xpose.msra.mxu0 0.0
        %9610 = vmatpush.xpose.msra.mxu0 0.0
        %9611 = vmatpush.xpose.msra.mxu0 0.0
        %9612 = vmatpush.xpose.msra.mxu0 0.0
        %9613 = vmatpush.xpose.msra.mxu0 0.0
        %9614 = vmatpush.xpose.msra.mxu0 0.0
        %9615 = vmatpush.xpose.msra.mxu0 0.0
        %9616 = vmatpush.xpose.msra.mxu0 %v9606
        %9617 = vmatpush.xpose.msra.mxu0 %v9604
        %9618 = vmatpush.xpose.msra.mxu0 %v9602
        %9619 = vmatpush.xpose.msra.mxu0 %v9600
        %9620 = vmatpush.xpose.msra.mxu0 %v9598
        %9621 = vmatpush.xpose.msra.mxu0 %v9596
        %9622 = vmatpush.xpose.msra.mxu0 %v9594
        %9623 = vmatpush.xpose.msra.mxu0 %v9592
        %9624 = vmatmul.f32.gmra.mxu0 %v9576
        %v9625 = vpop.f32.mrf.mxu0
        %v9626 = vadd.f32 %v8906, %v9625
        %9627 = vmatmul.f32.gmra.mxu0 %v9578
        %v9628 = vpop.f32.mrf.mxu0
        %v9629 = vadd.f32 %v8907, %v9628
        %9630 = vmatmul.f32.gmra.mxu0 %v9580
        %v9631 = vpop.f32.mrf.mxu0
        %v9632 = vadd.f32 %v8908, %v9631
        %9633 = vmatmul.f32.gmra.mxu0 %v9582
        %v9634 = vpop.f32.mrf.mxu0
        %v9635 = vadd.f32 %v8909, %v9634
        %9636 = vmatmul.f32.gmra.mxu0 %v9584
        %v9637 = vpop.f32.mrf.mxu0
        %v9638 = vadd.f32 %v8910, %v9637
        %9639 = vmatmul.f32.gmra.mxu0 %v9586
        %v9640 = vpop.f32.mrf.mxu0
        %v9641 = vadd.f32 %v8911, %v9640
        %9642 = vmatmul.f32.gmra.mxu0 %v9588
        %v9643 = vpop.f32.mrf.mxu0
        %v9644 = vadd.f32 %v8912, %v9643
        %9645 = vmatmul.f32.gmra.mxu0 %v9590
        %v9646 = vpop.f32.mrf.mxu0
        %v9647 = vadd.f32 %v8913, %v9646
        %9648 = vdwg.mxu0
        %9649 = vrot.lane.b32.xlu0 %v645, 32
        %v9650 = vpop.permute.xlu0 %9649
        %9651 = vrot.lane.b32.xlu0 %v648, 32
        %v9652 = vpop.permute.xlu0 %9651
        %9653 = vrot.lane.b32.xlu0 %v651, 32
        %v9654 = vpop.permute.xlu0 %9653
        %9655 = vrot.lane.b32.xlu0 %v654, 32
        %v9656 = vpop.permute.xlu0 %9655
        %9657 = vrot.lane.b32.xlu0 %v657, 32
        %v9658 = vpop.permute.xlu0 %9657
        %9659 = vrot.lane.b32.xlu0 %v660, 32
        %v9660 = vpop.permute.xlu0 %9659
        %9661 = vrot.lane.b32.xlu0 %v663, 32
        %v9662 = vpop.permute.xlu0 %9661
        %9663 = vrot.lane.b32.xlu0 %v666, 32
        %v9664 = vpop.permute.xlu0 %9663
        %9665 = vrot.lane.b32.xlu0 %v854, 32
        %v9666 = vpop.permute.xlu0 %9665
        %9667 = vrot.lane.b32.xlu0 %v857, 32
        %v9668 = vpop.permute.xlu0 %9667
        %9669 = vrot.lane.b32.xlu0 %v860, 32
        %v9670 = vpop.permute.xlu0 %9669
        %9671 = vrot.lane.b32.xlu0 %v863, 32
        %v9672 = vpop.permute.xlu0 %9671
        %9673 = vrot.lane.b32.xlu0 %v866, 32
        %v9674 = vpop.permute.xlu0 %9673
        %9675 = vrot.lane.b32.xlu0 %v869, 32
        %v9676 = vpop.permute.xlu0 %9675
        %9677 = vrot.lane.b32.xlu0 %v872, 32
        %v9678 = vpop.permute.xlu0 %9677
        %9679 = vrot.lane.b32.xlu0 %v875, 32
        %v9680 = vpop.permute.xlu0 %9679
        %v9681 = vsel %vm1094, %v9650, 0
        %v9683 = vsel %vm1094, %v9652, 0
        %v9685 = vsel %vm1094, %v9654, 0
        %v9687 = vsel %vm1094, %v9656, 0
        %v9689 = vsel %vm1094, %v9658, 0
        %v9691 = vsel %vm1094, %v9660, 0
        %v9693 = vsel %vm1094, %v9662, 0
        %v9695 = vsel %vm1094, %v9664, 0
        %v9697 = vsel %vm1094, %v9666, 0
        %v9699 = vsel %vm1094, %v9668, 0
        %v9701 = vsel %vm1094, %v9670, 0
        %v9703 = vsel %vm1094, %v9672, 0
        %v9705 = vsel %vm1094, %v9674, 0
        %v9707 = vsel %vm1094, %v9676, 0
        %v9709 = vsel %vm1094, %v9678, 0
        %v9711 = vsel %vm1094, %v9680, 0
        %9713 = vmatpush.xpose.msra.mxu0 0.0
        %9714 = vmatpush.xpose.msra.mxu0 0.0
        %9715 = vmatpush.xpose.msra.mxu0 0.0
        %9716 = vmatpush.xpose.msra.mxu0 0.0
        %9717 = vmatpush.xpose.msra.mxu0 0.0
        %9718 = vmatpush.xpose.msra.mxu0 0.0
        %9719 = vmatpush.xpose.msra.mxu0 0.0
        %9720 = vmatpush.xpose.msra.mxu0 0.0
        %9721 = vmatpush.xpose.msra.mxu0 %v9711
        %9722 = vmatpush.xpose.msra.mxu0 %v9709
        %9723 = vmatpush.xpose.msra.mxu0 %v9707
        %9724 = vmatpush.xpose.msra.mxu0 %v9705
        %9725 = vmatpush.xpose.msra.mxu0 %v9703
        %9726 = vmatpush.xpose.msra.mxu0 %v9701
        %9727 = vmatpush.xpose.msra.mxu0 %v9699
        %9728 = vmatpush.xpose.msra.mxu0 %v9697
        %9729 = vmatmul.f32.gmra.mxu0 %v9681
        %v9730 = vpop.f32.mrf.mxu0
        %v9731 = vadd.f32 %v8906, %v9730
        %9732 = vmatmul.f32.gmra.mxu0 %v9683
        %v9733 = vpop.f32.mrf.mxu0
        %v9734 = vadd.f32 %v8907, %v9733
        %9735 = vmatmul.f32.gmra.mxu0 %v9685
        %v9736 = vpop.f32.mrf.mxu0
        %v9737 = vadd.f32 %v8908, %v9736
        %9738 = vmatmul.f32.gmra.mxu0 %v9687
        %v9739 = vpop.f32.mrf.mxu0
        %v9740 = vadd.f32 %v8909, %v9739
        %9741 = vmatmul.f32.gmra.mxu0 %v9689
        %v9742 = vpop.f32.mrf.mxu0
        %v9743 = vadd.f32 %v8910, %v9742
        %9744 = vmatmul.f32.gmra.mxu0 %v9691
        %v9745 = vpop.f32.mrf.mxu0
        %v9746 = vadd.f32 %v8911, %v9745
        %9747 = vmatmul.f32.gmra.mxu0 %v9693
        %v9748 = vpop.f32.mrf.mxu0
        %v9749 = vadd.f32 %v8912, %v9748
        %9750 = vmatmul.f32.gmra.mxu0 %v9695
        %v9751 = vpop.f32.mrf.mxu0
        %v9752 = vadd.f32 %v8913, %v9751
        %9753 = vdwg.mxu0
        %v9754 = vsel %vm1807, %v8996, -inf
        %9755 = vmax.xlane.f32.xlu0 %v9754
        %v9756 = vpop.xlane.xlu0 %9755
        %v9757 = vsel %vm1807, %v8999, -inf
        %9758 = vmax.xlane.f32.xlu0 %v9757
        %v9759 = vpop.xlane.xlu0 %9758
        %v9760 = vsel %vm1807, %v9002, -inf
        %9761 = vmax.xlane.f32.xlu0 %v9760
        %v9762 = vpop.xlane.xlu0 %9761
        %v9763 = vsel %vm1807, %v9005, -inf
        %9764 = vmax.xlane.f32.xlu0 %v9763
        %v9765 = vpop.xlane.xlu0 %9764
        %v9766 = vsel %vm1807, %v9008, -inf
        %9767 = vmax.xlane.f32.xlu0 %v9766
        %v9768 = vpop.xlane.xlu0 %9767
        %v9769 = vsel %vm1807, %v9011, -inf
        %9770 = vmax.xlane.f32.xlu0 %v9769
        %v9771 = vpop.xlane.xlu0 %9770
        %v9772 = vsel %vm1807, %v9014, -inf
        %9773 = vmax.xlane.f32.xlu0 %v9772
        %v9774 = vpop.xlane.xlu0 %9773
        %v9775 = vsel %vm1807, %v9017, -inf
        %9776 = vmax.xlane.f32.xlu0 %v9775
        %v9777 = vpop.xlane.xlu0 %9776
        %v9778 = vsel %vm1807, %v9101, -inf
        %9779 = vmax.xlane.f32.xlu0 %v9778
        %v9780 = vpop.xlane.xlu0 %9779
        %v9781 = vsel %vm1807, %v9104, -inf
        %9782 = vmax.xlane.f32.xlu0 %v9781
        %v9783 = vpop.xlane.xlu0 %9782
        %v9784 = vsel %vm1807, %v9107, -inf
        %9785 = vmax.xlane.f32.xlu0 %v9784
        %v9786 = vpop.xlane.xlu0 %9785
        %v9787 = vsel %vm1807, %v9110, -inf
        %9788 = vmax.xlane.f32.xlu0 %v9787
        %v9789 = vpop.xlane.xlu0 %9788
        %v9790 = vsel %vm1807, %v9113, -inf
        %9791 = vmax.xlane.f32.xlu0 %v9790
        %v9792 = vpop.xlane.xlu0 %9791
        %v9793 = vsel %vm1807, %v9116, -inf
        %9794 = vmax.xlane.f32.xlu0 %v9793
        %v9795 = vpop.xlane.xlu0 %9794
        %v9796 = vsel %vm1807, %v9119, -inf
        %9797 = vmax.xlane.f32.xlu0 %v9796
        %v9798 = vpop.xlane.xlu0 %9797
        %v9799 = vsel %vm1807, %v9122, -inf
        %9800 = vmax.xlane.f32.xlu0 %v9799
        %v9801 = vpop.xlane.xlu0 %9800
        %v9802 = vsel %vm1807, %v9206, -inf
        %9803 = vmax.xlane.f32.xlu0 %v9802
        %v9804 = vpop.xlane.xlu0 %9803
        %v9805 = vsel %vm1807, %v9209, -inf
        %9806 = vmax.xlane.f32.xlu0 %v9805
        %v9807 = vpop.xlane.xlu0 %9806
        %v9808 = vsel %vm1807, %v9212, -inf
        %9809 = vmax.xlane.f32.xlu0 %v9808
        %v9810 = vpop.xlane.xlu0 %9809
        %v9811 = vsel %vm1807, %v9215, -inf
        %9812 = vmax.xlane.f32.xlu0 %v9811
        %v9813 = vpop.xlane.xlu0 %9812
        %v9814 = vsel %vm1807, %v9218, -inf
        %9815 = vmax.xlane.f32.xlu0 %v9814
        %v9816 = vpop.xlane.xlu0 %9815
        %v9817 = vsel %vm1807, %v9221, -inf
        %9818 = vmax.xlane.f32.xlu0 %v9817
        %v9819 = vpop.xlane.xlu0 %9818
        %v9820 = vsel %vm1807, %v9224, -inf
        %9821 = vmax.xlane.f32.xlu0 %v9820
        %v9822 = vpop.xlane.xlu0 %9821
        %v9823 = vsel %vm1807, %v9227, -inf
        %9824 = vmax.xlane.f32.xlu0 %v9823
        %v9825 = vpop.xlane.xlu0 %9824
        %v9826 = vsel %vm1807, %v9311, -inf
        %9827 = vmax.xlane.f32.xlu0 %v9826
        %v9828 = vpop.xlane.xlu0 %9827
        %v9829 = vsel %vm1807, %v9314, -inf
        %9830 = vmax.xlane.f32.xlu0 %v9829
        %v9831 = vpop.xlane.xlu0 %9830
        %v9832 = vsel %vm1807, %v9317, -inf
        %9833 = vmax.xlane.f32.xlu0 %v9832
        %v9834 = vpop.xlane.xlu0 %9833
        %v9835 = vsel %vm1807, %v9320, -inf
        %9836 = vmax.xlane.f32.xlu0 %v9835
        %v9837 = vpop.xlane.xlu0 %9836
        %v9838 = vsel %vm1807, %v9323, -inf
        %9839 = vmax.xlane.f32.xlu0 %v9838
        %v9840 = vpop.xlane.xlu0 %9839
        %v9841 = vsel %vm1807, %v9326, -inf
        %9842 = vmax.xlane.f32.xlu0 %v9841
        %v9843 = vpop.xlane.xlu0 %9842
        %v9844 = vsel %vm1807, %v9329, -inf
        %9845 = vmax.xlane.f32.xlu0 %v9844
        %v9846 = vpop.xlane.xlu0 %9845
        %v9847 = vsel %vm1807, %v9332, -inf
        %9848 = vmax.xlane.f32.xlu0 %v9847
        %v9849 = vpop.xlane.xlu0 %9848
        %v9850 = vsel %vm1807, %v9416, -inf
        %9851 = vmax.xlane.f32.xlu0 %v9850
        %v9852 = vpop.xlane.xlu0 %9851
        %v9853 = vsel %vm1807, %v9419, -inf
        %9854 = vmax.xlane.f32.xlu0 %v9853
        %v9855 = vpop.xlane.xlu0 %9854
        %v9856 = vsel %vm1807, %v9422, -inf
        %9857 = vmax.xlane.f32.xlu0 %v9856
        %v9858 = vpop.xlane.xlu0 %9857
        %v9859 = vsel %vm1807, %v9425, -inf
        %9860 = vmax.xlane.f32.xlu0 %v9859
        %v9861 = vpop.xlane.xlu0 %9860
        %v9862 = vsel %vm1807, %v9428, -inf
        %9863 = vmax.xlane.f32.xlu0 %v9862
        %v9864 = vpop.xlane.xlu0 %9863
        %v9865 = vsel %vm1807, %v9431, -inf
        %9866 = vmax.xlane.f32.xlu0 %v9865
        %v9867 = vpop.xlane.xlu0 %9866
        %v9868 = vsel %vm1807, %v9434, -inf
        %9869 = vmax.xlane.f32.xlu0 %v9868
        %v9870 = vpop.xlane.xlu0 %9869
        %v9871 = vsel %vm1807, %v9437, -inf
        %9872 = vmax.xlane.f32.xlu0 %v9871
        %v9873 = vpop.xlane.xlu0 %9872
        %v9874 = vsel %vm1807, %v9521, -inf
        %9875 = vmax.xlane.f32.xlu0 %v9874
        %v9876 = vpop.xlane.xlu0 %9875
        %v9877 = vsel %vm1807, %v9524, -inf
        %9878 = vmax.xlane.f32.xlu0 %v9877
        %v9879 = vpop.xlane.xlu0 %9878
        %v9880 = vsel %vm1807, %v9527, -inf
        %9881 = vmax.xlane.f32.xlu0 %v9880
        %v9882 = vpop.xlane.xlu0 %9881
        %v9883 = vsel %vm1807, %v9530, -inf
        %9884 = vmax.xlane.f32.xlu0 %v9883
        %v9885 = vpop.xlane.xlu0 %9884
        %v9886 = vsel %vm1807, %v9533, -inf
        %9887 = vmax.xlane.f32.xlu0 %v9886
        %v9888 = vpop.xlane.xlu0 %9887
        %v9889 = vsel %vm1807, %v9536, -inf
        %9890 = vmax.xlane.f32.xlu0 %v9889
        %v9891 = vpop.xlane.xlu0 %9890
        %v9892 = vsel %vm1807, %v9539, -inf
        %9893 = vmax.xlane.f32.xlu0 %v9892
        %v9894 = vpop.xlane.xlu0 %9893
        %v9895 = vsel %vm1807, %v9542, -inf
        %9896 = vmax.xlane.f32.xlu0 %v9895
        %v9897 = vpop.xlane.xlu0 %9896
        %v9898 = vsel %vm1807, %v9626, -inf
        %9899 = vmax.xlane.f32.xlu0 %v9898
        %v9900 = vpop.xlane.xlu0 %9899
        %v9901 = vsel %vm1807, %v9629, -inf
        %9902 = vmax.xlane.f32.xlu0 %v9901
        %v9903 = vpop.xlane.xlu0 %9902
        %v9904 = vsel %vm1807, %v9632, -inf
        %9905 = vmax.xlane.f32.xlu0 %v9904
        %v9906 = vpop.xlane.xlu0 %9905
        %v9907 = vsel %vm1807, %v9635, -inf
        %9908 = vmax.xlane.f32.xlu0 %v9907
        %v9909 = vpop.xlane.xlu0 %9908
        %v9910 = vsel %vm1807, %v9638, -inf
        %9911 = vmax.xlane.f32.xlu0 %v9910
        %v9912 = vpop.xlane.xlu0 %9911
        %v9913 = vsel %vm1807, %v9641, -inf
        %9914 = vmax.xlane.f32.xlu0 %v9913
        %v9915 = vpop.xlane.xlu0 %9914
        %v9916 = vsel %vm1807, %v9644, -inf
        %9917 = vmax.xlane.f32.xlu0 %v9916
        %v9918 = vpop.xlane.xlu0 %9917
        %v9919 = vsel %vm1807, %v9647, -inf
        %9920 = vmax.xlane.f32.xlu0 %v9919
        %v9921 = vpop.xlane.xlu0 %9920
        %v9922 = vsel %vm1807, %v9731, -inf
        %9923 = vmax.xlane.f32.xlu0 %v9922
        %v9924 = vpop.xlane.xlu0 %9923
        %v9925 = vsel %vm1807, %v9734, -inf
        %9926 = vmax.xlane.f32.xlu0 %v9925
        %v9927 = vpop.xlane.xlu0 %9926
        %v9928 = vsel %vm1807, %v9737, -inf
        %9929 = vmax.xlane.f32.xlu0 %v9928
        %v9930 = vpop.xlane.xlu0 %9929
        %v9931 = vsel %vm1807, %v9740, -inf
        %9932 = vmax.xlane.f32.xlu0 %v9931
        %v9933 = vpop.xlane.xlu0 %9932
        %v9934 = vsel %vm1807, %v9743, -inf
        %9935 = vmax.xlane.f32.xlu0 %v9934
        %v9936 = vpop.xlane.xlu0 %9935
        %v9937 = vsel %vm1807, %v9746, -inf
        %9938 = vmax.xlane.f32.xlu0 %v9937
        %v9939 = vpop.xlane.xlu0 %9938
        %v9940 = vsel %vm1807, %v9749, -inf
        %9941 = vmax.xlane.f32.xlu0 %v9940
        %v9942 = vpop.xlane.xlu0 %9941
        %v9943 = vsel %vm1807, %v9752, -inf
        %9944 = vmax.xlane.f32.xlu0 %v9943
        %v9945 = vpop.xlane.xlu0 %9944
        %v9946 = vsub.f32 %v8996, %v9756
        %v9947 = vsub.f32 %v8999, %v9759
        %v9948 = vsub.f32 %v9002, %v9762
        %v9949 = vsub.f32 %v9005, %v9765
        %v9950 = vsub.f32 %v9008, %v9768
        %v9951 = vsub.f32 %v9011, %v9771
        %v9952 = vsub.f32 %v9014, %v9774
        %v9953 = vsub.f32 %v9017, %v9777
        %v9954 = vsub.f32 %v9101, %v9780
        %v9955 = vsub.f32 %v9104, %v9783
        %v9956 = vsub.f32 %v9107, %v9786
        %v9957 = vsub.f32 %v9110, %v9789
        %v9958 = vsub.f32 %v9113, %v9792
        %v9959 = vsub.f32 %v9116, %v9795
        %v9960 = vsub.f32 %v9119, %v9798
        %v9961 = vsub.f32 %v9122, %v9801
        %v9962 = vsub.f32 %v9206, %v9804
        %v9963 = vsub.f32 %v9209, %v9807
        %v9964 = vsub.f32 %v9212, %v9810
        %v9965 = vsub.f32 %v9215, %v9813
        %v9966 = vsub.f32 %v9218, %v9816
        %v9967 = vsub.f32 %v9221, %v9819
        %v9968 = vsub.f32 %v9224, %v9822
        %v9969 = vsub.f32 %v9227, %v9825
        %v9970 = vsub.f32 %v9311, %v9828
        %v9971 = vsub.f32 %v9314, %v9831
        %v9972 = vsub.f32 %v9317, %v9834
        %v9973 = vsub.f32 %v9320, %v9837
        %v9974 = vsub.f32 %v9323, %v9840
        %v9975 = vsub.f32 %v9326, %v9843
        %v9976 = vsub.f32 %v9329, %v9846
        %v9977 = vsub.f32 %v9332, %v9849
        %v9978 = vsub.f32 %v9416, %v9852
        %v9979 = vsub.f32 %v9419, %v9855
        %v9980 = vsub.f32 %v9422, %v9858
        %v9981 = vsub.f32 %v9425, %v9861
        %v9982 = vsub.f32 %v9428, %v9864
        %v9983 = vsub.f32 %v9431, %v9867
        %v9984 = vsub.f32 %v9434, %v9870
        %v9985 = vsub.f32 %v9437, %v9873
        %v9986 = vsub.f32 %v9521, %v9876
        %v9987 = vsub.f32 %v9524, %v9879
        %v9988 = vsub.f32 %v9527, %v9882
        %v9989 = vsub.f32 %v9530, %v9885
        %v9990 = vsub.f32 %v9533, %v9888
        %v9991 = vsub.f32 %v9536, %v9891
        %v9992 = vsub.f32 %v9539, %v9894
        %v9993 = vsub.f32 %v9542, %v9897
        %v9994 = vsub.f32 %v9626, %v9900
        %v9995 = vsub.f32 %v9629, %v9903
        %v9996 = vsub.f32 %v9632, %v9906
        %v9997 = vsub.f32 %v9635, %v9909
        %v9998 = vsub.f32 %v9638, %v9912
        %v9999 = vsub.f32 %v9641, %v9915
        %v10000 = vsub.f32 %v9644, %v9918
        %v10001 = vsub.f32 %v9647, %v9921
        %v10002 = vsub.f32 %v9731, %v9924
        %v10003 = vsub.f32 %v9734, %v9927
        %v10004 = vsub.f32 %v9737, %v9930
        %v10005 = vsub.f32 %v9740, %v9933
        %v10006 = vsub.f32 %v9743, %v9936
        %v10007 = vsub.f32 %v9746, %v9939
        %v10008 = vsub.f32 %v9749, %v9942
        %v10009 = vsub.f32 %v9752, %v9945
        %v10010 = vmul.f32 %v9946, 1.442695
        %v10011 = vpow.pop %v10010
        %v10012 = vmul.f32 %v9947, 1.442695
        %v10013 = vpow.pop %v10012
        %v10014 = vmul.f32 %v9948, 1.442695
        %v10015 = vpow.pop %v10014
        %v10016 = vmul.f32 %v9949, 1.442695
        %v10017 = vpow.pop %v10016
        %v10018 = vmul.f32 %v9950, 1.442695
        %v10019 = vpow.pop %v10018
        %v10020 = vmul.f32 %v9951, 1.442695
        %v10021 = vpow.pop %v10020
        %v10022 = vmul.f32 %v9952, 1.442695
        %v10023 = vpow.pop %v10022
        %v10024 = vmul.f32 %v9953, 1.442695
        %v10025 = vpow.pop %v10024
        %v10026 = vmul.f32 %v9954, 1.442695
        %v10027 = vpow.pop %v10026
        %v10028 = vmul.f32 %v9955, 1.442695
        %v10029 = vpow.pop %v10028
        %v10030 = vmul.f32 %v9956, 1.442695
        %v10031 = vpow.pop %v10030
        %v10032 = vmul.f32 %v9957, 1.442695
        %v10033 = vpow.pop %v10032
        %v10034 = vmul.f32 %v9958, 1.442695
        %v10035 = vpow.pop %v10034
        %v10036 = vmul.f32 %v9959, 1.442695
        %v10037 = vpow.pop %v10036
        %v10038 = vmul.f32 %v9960, 1.442695
        %v10039 = vpow.pop %v10038
        %v10040 = vmul.f32 %v9961, 1.442695
        %v10041 = vpow.pop %v10040
        %v10042 = vmul.f32 %v9962, 1.442695
        %v10043 = vpow.pop %v10042
        %v10044 = vmul.f32 %v9963, 1.442695
        %v10045 = vpow.pop %v10044
        %v10046 = vmul.f32 %v9964, 1.442695
        %v10047 = vpow.pop %v10046
        %v10048 = vmul.f32 %v9965, 1.442695
        %v10049 = vpow.pop %v10048
        %v10050 = vmul.f32 %v9966, 1.442695
        %v10051 = vpow.pop %v10050
        %v10052 = vmul.f32 %v9967, 1.442695
        %v10053 = vpow.pop %v10052
        %v10054 = vmul.f32 %v9968, 1.442695
        %v10055 = vpow.pop %v10054
        %v10056 = vmul.f32 %v9969, 1.442695
        %v10057 = vpow.pop %v10056
        %v10058 = vmul.f32 %v9970, 1.442695
        %v10059 = vpow.pop %v10058
        %v10060 = vmul.f32 %v9971, 1.442695
        %v10061 = vpow.pop %v10060
        %v10062 = vmul.f32 %v9972, 1.442695
        %v10063 = vpow.pop %v10062
        %v10064 = vmul.f32 %v9973, 1.442695
        %v10065 = vpow.pop %v10064
        %v10066 = vmul.f32 %v9974, 1.442695
        %v10067 = vpow.pop %v10066
        %v10068 = vmul.f32 %v9975, 1.442695
        %v10069 = vpow.pop %v10068
        %v10070 = vmul.f32 %v9976, 1.442695
        %v10071 = vpow.pop %v10070
        %v10072 = vmul.f32 %v9977, 1.442695
        %v10073 = vpow.pop %v10072
        %v10074 = vmul.f32 %v9978, 1.442695
        %v10075 = vpow.pop %v10074
        %v10076 = vmul.f32 %v9979, 1.442695
        %v10077 = vpow.pop %v10076
        %v10078 = vmul.f32 %v9980, 1.442695
        %v10079 = vpow.pop %v10078
        %v10080 = vmul.f32 %v9981, 1.442695
        %v10081 = vpow.pop %v10080
        %v10082 = vmul.f32 %v9982, 1.442695
        %v10083 = vpow.pop %v10082
        %v10084 = vmul.f32 %v9983, 1.442695
        %v10085 = vpow.pop %v10084
        %v10086 = vmul.f32 %v9984, 1.442695
        %v10087 = vpow.pop %v10086
        %v10088 = vmul.f32 %v9985, 1.442695
        %v10089 = vpow.pop %v10088
        %v10090 = vmul.f32 %v9986, 1.442695
        %v10091 = vpow.pop %v10090
        %v10092 = vmul.f32 %v9987, 1.442695
        %v10093 = vpow.pop %v10092
        %v10094 = vmul.f32 %v9988, 1.442695
        %v10095 = vpow.pop %v10094
        %v10096 = vmul.f32 %v9989, 1.442695
        %v10097 = vpow.pop %v10096
        %v10098 = vmul.f32 %v9990, 1.442695
        %v10099 = vpow.pop %v10098
        %v10100 = vmul.f32 %v9991, 1.442695
        %v10101 = vpow.pop %v10100
        %v10102 = vmul.f32 %v9992, 1.442695
        %v10103 = vpow.pop %v10102
        %v10104 = vmul.f32 %v9993, 1.442695
        %v10105 = vpow.pop %v10104
        %v10106 = vmul.f32 %v9994, 1.442695
        %v10107 = vpow.pop %v10106
        %v10108 = vmul.f32 %v9995, 1.442695
        %v10109 = vpow.pop %v10108
        %v10110 = vmul.f32 %v9996, 1.442695
        %v10111 = vpow.pop %v10110
        %v10112 = vmul.f32 %v9997, 1.442695
        %v10113 = vpow.pop %v10112
        %v10114 = vmul.f32 %v9998, 1.442695
        %v10115 = vpow.pop %v10114
        %v10116 = vmul.f32 %v9999, 1.442695
        %v10117 = vpow.pop %v10116
        %v10118 = vmul.f32 %v10000, 1.442695
        %v10119 = vpow.pop %v10118
        %v10120 = vmul.f32 %v10001, 1.442695
        %v10121 = vpow.pop %v10120
        %v10122 = vmul.f32 %v10002, 1.442695
        %v10123 = vpow.pop %v10122
        %v10124 = vmul.f32 %v10003, 1.442695
        %v10125 = vpow.pop %v10124
        %v10126 = vmul.f32 %v10004, 1.442695
        %v10127 = vpow.pop %v10126
        %v10128 = vmul.f32 %v10005, 1.442695
        %v10129 = vpow.pop %v10128
        %v10130 = vmul.f32 %v10006, 1.442695
        %v10131 = vpow.pop %v10130
        %v10132 = vmul.f32 %v10007, 1.442695
        %v10133 = vpow.pop %v10132
        %v10134 = vmul.f32 %v10008, 1.442695
        %v10135 = vpow.pop %v10134
        %v10136 = vmul.f32 %v10009, 1.442695
        %v10137 = vpow.pop %v10136
        %v10138 = vsel %vm1807, %v10011, 0.0
        %10139 = vadd.xlane.f32.xlu0 %v10138
        %v10140 = vpop.xlane.xlu0 %10139
        %v10141 = vsel %vm1807, %v10013, 0.0
        %10142 = vadd.xlane.f32.xlu0 %v10141
        %v10143 = vpop.xlane.xlu0 %10142
        %v10144 = vsel %vm1807, %v10015, 0.0
        %10145 = vadd.xlane.f32.xlu0 %v10144
        %v10146 = vpop.xlane.xlu0 %10145
        %v10147 = vsel %vm1807, %v10017, 0.0
        %10148 = vadd.xlane.f32.xlu0 %v10147
        %v10149 = vpop.xlane.xlu0 %10148
        %v10150 = vsel %vm1807, %v10019, 0.0
        %10151 = vadd.xlane.f32.xlu0 %v10150
        %v10152 = vpop.xlane.xlu0 %10151
        %v10153 = vsel %vm1807, %v10021, 0.0
        %10154 = vadd.xlane.f32.xlu0 %v10153
        %v10155 = vpop.xlane.xlu0 %10154
        %v10156 = vsel %vm1807, %v10023, 0.0
        %10157 = vadd.xlane.f32.xlu0 %v10156
        %v10158 = vpop.xlane.xlu0 %10157
        %v10159 = vsel %vm1807, %v10025, 0.0
        %10160 = vadd.xlane.f32.xlu0 %v10159
        %v10161 = vpop.xlane.xlu0 %10160
        %v10162 = vsel %vm1807, %v10027, 0.0
        %10163 = vadd.xlane.f32.xlu0 %v10162
        %v10164 = vpop.xlane.xlu0 %10163
        %v10165 = vsel %vm1807, %v10029, 0.0
        %10166 = vadd.xlane.f32.xlu0 %v10165
        %v10167 = vpop.xlane.xlu0 %10166
        %v10168 = vsel %vm1807, %v10031, 0.0
        %10169 = vadd.xlane.f32.xlu0 %v10168
        %v10170 = vpop.xlane.xlu0 %10169
        %v10171 = vsel %vm1807, %v10033, 0.0
        %10172 = vadd.xlane.f32.xlu0 %v10171
        %v10173 = vpop.xlane.xlu0 %10172
        %v10174 = vsel %vm1807, %v10035, 0.0
        %10175 = vadd.xlane.f32.xlu0 %v10174
        %v10176 = vpop.xlane.xlu0 %10175
        %v10177 = vsel %vm1807, %v10037, 0.0
        %10178 = vadd.xlane.f32.xlu0 %v10177
        %v10179 = vpop.xlane.xlu0 %10178
        %v10180 = vsel %vm1807, %v10039, 0.0
        %10181 = vadd.xlane.f32.xlu0 %v10180
        %v10182 = vpop.xlane.xlu0 %10181
        %v10183 = vsel %vm1807, %v10041, 0.0
        %10184 = vadd.xlane.f32.xlu0 %v10183
        %v10185 = vpop.xlane.xlu0 %10184
        %v10186 = vsel %vm1807, %v10043, 0.0
        %10187 = vadd.xlane.f32.xlu0 %v10186
        %v10188 = vpop.xlane.xlu0 %10187
        %v10189 = vsel %vm1807, %v10045, 0.0
        %10190 = vadd.xlane.f32.xlu0 %v10189
        %v10191 = vpop.xlane.xlu0 %10190
        %v10192 = vsel %vm1807, %v10047, 0.0
        %10193 = vadd.xlane.f32.xlu0 %v10192
        %v10194 = vpop.xlane.xlu0 %10193
        %v10195 = vsel %vm1807, %v10049, 0.0
        %10196 = vadd.xlane.f32.xlu0 %v10195
        %v10197 = vpop.xlane.xlu0 %10196
        %v10198 = vsel %vm1807, %v10051, 0.0
        %10199 = vadd.xlane.f32.xlu0 %v10198
        %v10200 = vpop.xlane.xlu0 %10199
        %v10201 = vsel %vm1807, %v10053, 0.0
        %10202 = vadd.xlane.f32.xlu0 %v10201
        %v10203 = vpop.xlane.xlu0 %10202
        %v10204 = vsel %vm1807, %v10055, 0.0
        %10205 = vadd.xlane.f32.xlu0 %v10204
        %v10206 = vpop.xlane.xlu0 %10205
        %v10207 = vsel %vm1807, %v10057, 0.0
        %10208 = vadd.xlane.f32.xlu0 %v10207
        %v10209 = vpop.xlane.xlu0 %10208
        %v10210 = vsel %vm1807, %v10059, 0.0
        %10211 = vadd.xlane.f32.xlu0 %v10210
        %v10212 = vpop.xlane.xlu0 %10211
        %v10213 = vsel %vm1807, %v10061, 0.0
        %10214 = vadd.xlane.f32.xlu0 %v10213
        %v10215 = vpop.xlane.xlu0 %10214
        %v10216 = vsel %vm1807, %v10063, 0.0
        %10217 = vadd.xlane.f32.xlu0 %v10216
        %v10218 = vpop.xlane.xlu0 %10217
        %v10219 = vsel %vm1807, %v10065, 0.0
        %10220 = vadd.xlane.f32.xlu0 %v10219
        %v10221 = vpop.xlane.xlu0 %10220
        %v10222 = vsel %vm1807, %v10067, 0.0
        %10223 = vadd.xlane.f32.xlu0 %v10222
        %v10224 = vpop.xlane.xlu0 %10223
        %v10225 = vsel %vm1807, %v10069, 0.0
        %10226 = vadd.xlane.f32.xlu0 %v10225
        %v10227 = vpop.xlane.xlu0 %10226
        %v10228 = vsel %vm1807, %v10071, 0.0
        %10229 = vadd.xlane.f32.xlu0 %v10228
        %v10230 = vpop.xlane.xlu0 %10229
        %v10231 = vsel %vm1807, %v10073, 0.0
        %10232 = vadd.xlane.f32.xlu0 %v10231
        %v10233 = vpop.xlane.xlu0 %10232
        %v10234 = vsel %vm1807, %v10075, 0.0
        %10235 = vadd.xlane.f32.xlu0 %v10234
        %v10236 = vpop.xlane.xlu0 %10235
        %v10237 = vsel %vm1807, %v10077, 0.0
        %10238 = vadd.xlane.f32.xlu0 %v10237
        %v10239 = vpop.xlane.xlu0 %10238
        %v10240 = vsel %vm1807, %v10079, 0.0
        %10241 = vadd.xlane.f32.xlu0 %v10240
        %v10242 = vpop.xlane.xlu0 %10241
        %v10243 = vsel %vm1807, %v10081, 0.0
        %10244 = vadd.xlane.f32.xlu0 %v10243
        %v10245 = vpop.xlane.xlu0 %10244
        %v10246 = vsel %vm1807, %v10083, 0.0
        %10247 = vadd.xlane.f32.xlu0 %v10246
        %v10248 = vpop.xlane.xlu0 %10247
        %v10249 = vsel %vm1807, %v10085, 0.0
        %10250 = vadd.xlane.f32.xlu0 %v10249
        %v10251 = vpop.xlane.xlu0 %10250
        %v10252 = vsel %vm1807, %v10087, 0.0
        %10253 = vadd.xlane.f32.xlu0 %v10252
        %v10254 = vpop.xlane.xlu0 %10253
        %v10255 = vsel %vm1807, %v10089, 0.0
        %10256 = vadd.xlane.f32.xlu0 %v10255
        %v10257 = vpop.xlane.xlu0 %10256
        %v10258 = vsel %vm1807, %v10091, 0.0
        %10259 = vadd.xlane.f32.xlu0 %v10258
        %v10260 = vpop.xlane.xlu0 %10259
        %v10261 = vsel %vm1807, %v10093, 0.0
        %10262 = vadd.xlane.f32.xlu0 %v10261
        %v10263 = vpop.xlane.xlu0 %10262
        %v10264 = vsel %vm1807, %v10095, 0.0
        %10265 = vadd.xlane.f32.xlu0 %v10264
        %v10266 = vpop.xlane.xlu0 %10265
        %v10267 = vsel %vm1807, %v10097, 0.0
        %10268 = vadd.xlane.f32.xlu0 %v10267
        %v10269 = vpop.xlane.xlu0 %10268
        %v10270 = vsel %vm1807, %v10099, 0.0
        %10271 = vadd.xlane.f32.xlu0 %v10270
        %v10272 = vpop.xlane.xlu0 %10271
        %v10273 = vsel %vm1807, %v10101, 0.0
        %10274 = vadd.xlane.f32.xlu0 %v10273
        %v10275 = vpop.xlane.xlu0 %10274
        %v10276 = vsel %vm1807, %v10103, 0.0
        %10277 = vadd.xlane.f32.xlu0 %v10276
        %v10278 = vpop.xlane.xlu0 %10277
        %v10279 = vsel %vm1807, %v10105, 0.0
        %10280 = vadd.xlane.f32.xlu0 %v10279
        %v10281 = vpop.xlane.xlu0 %10280
        %v10282 = vsel %vm1807, %v10107, 0.0
        %10283 = vadd.xlane.f32.xlu0 %v10282
        %v10284 = vpop.xlane.xlu0 %10283
        %v10285 = vsel %vm1807, %v10109, 0.0
        %10286 = vadd.xlane.f32.xlu0 %v10285
        %v10287 = vpop.xlane.xlu0 %10286
        %v10288 = vsel %vm1807, %v10111, 0.0
        %10289 = vadd.xlane.f32.xlu0 %v10288
        %v10290 = vpop.xlane.xlu0 %10289
        %v10291 = vsel %vm1807, %v10113, 0.0
        %10292 = vadd.xlane.f32.xlu0 %v10291
        %v10293 = vpop.xlane.xlu0 %10292
        %v10294 = vsel %vm1807, %v10115, 0.0
        %10295 = vadd.xlane.f32.xlu0 %v10294
        %v10296 = vpop.xlane.xlu0 %10295
        %v10297 = vsel %vm1807, %v10117, 0.0
        %10298 = vadd.xlane.f32.xlu0 %v10297
        %v10299 = vpop.xlane.xlu0 %10298
        %v10300 = vsel %vm1807, %v10119, 0.0
        %10301 = vadd.xlane.f32.xlu0 %v10300
        %v10302 = vpop.xlane.xlu0 %10301
        %v10303 = vsel %vm1807, %v10121, 0.0
        %10304 = vadd.xlane.f32.xlu0 %v10303
        %v10305 = vpop.xlane.xlu0 %10304
        %v10306 = vsel %vm1807, %v10123, 0.0
        %10307 = vadd.xlane.f32.xlu0 %v10306
        %v10308 = vpop.xlane.xlu0 %10307
        %v10309 = vsel %vm1807, %v10125, 0.0
        %10310 = vadd.xlane.f32.xlu0 %v10309
        %v10311 = vpop.xlane.xlu0 %10310
        %v10312 = vsel %vm1807, %v10127, 0.0
        %10313 = vadd.xlane.f32.xlu0 %v10312
        %v10314 = vpop.xlane.xlu0 %10313
        %v10315 = vsel %vm1807, %v10129, 0.0
        %10316 = vadd.xlane.f32.xlu0 %v10315
        %v10317 = vpop.xlane.xlu0 %10316
        %v10318 = vsel %vm1807, %v10131, 0.0
        %10319 = vadd.xlane.f32.xlu0 %v10318
        %v10320 = vpop.xlane.xlu0 %10319
        %v10321 = vsel %vm1807, %v10133, 0.0
        %10322 = vadd.xlane.f32.xlu0 %v10321
        %v10323 = vpop.xlane.xlu0 %10322
        %v10324 = vsel %vm1807, %v10135, 0.0
        %10325 = vadd.xlane.f32.xlu0 %v10324
        %v10326 = vpop.xlane.xlu0 %10325
        %v10327 = vsel %vm1807, %v10137, 0.0
        %10328 = vadd.xlane.f32.xlu0 %v10327
        %v10329 = vpop.xlane.xlu0 %10328
        %v10330 = vrcp.pop %v10140
        %v10331 = vrcp.pop %v10143
        %v10332 = vrcp.pop %v10146
        %v10333 = vrcp.pop %v10149
        %v10334 = vrcp.pop %v10152
        %v10335 = vrcp.pop %v10155
        %v10336 = vrcp.pop %v10158
        %v10337 = vrcp.pop %v10161
        %v10338 = vrcp.pop %v10164
        %v10339 = vrcp.pop %v10167
        %v10340 = vrcp.pop %v10170
        %v10341 = vrcp.pop %v10173
        %v10342 = vrcp.pop %v10176
        %v10343 = vrcp.pop %v10179
        %v10344 = vrcp.pop %v10182
        %v10345 = vrcp.pop %v10185
        %v10346 = vrcp.pop %v10188
        %v10347 = vrcp.pop %v10191
        %v10348 = vrcp.pop %v10194
        %v10349 = vrcp.pop %v10197
        %v10350 = vrcp.pop %v10200
        %v10351 = vrcp.pop %v10203
        %v10352 = vrcp.pop %v10206
        %v10353 = vrcp.pop %v10209
        %v10354 = vrcp.pop %v10212
        %v10355 = vrcp.pop %v10215
        %v10356 = vrcp.pop %v10218
        %v10357 = vrcp.pop %v10221
        %v10358 = vrcp.pop %v10224
        %v10359 = vrcp.pop %v10227
        %v10360 = vrcp.pop %v10230
        %v10361 = vrcp.pop %v10233
        %v10362 = vrcp.pop %v10236
        %v10363 = vrcp.pop %v10239
        %v10364 = vrcp.pop %v10242
        %v10365 = vrcp.pop %v10245
        %v10366 = vrcp.pop %v10248
        %v10367 = vrcp.pop %v10251
        %v10368 = vrcp.pop %v10254
        %v10369 = vrcp.pop %v10257
        %v10370 = vrcp.pop %v10260
        %v10371 = vrcp.pop %v10263
        %v10372 = vrcp.pop %v10266
        %v10373 = vrcp.pop %v10269
        %v10374 = vrcp.pop %v10272
        %v10375 = vrcp.pop %v10275
        %v10376 = vrcp.pop %v10278
        %v10377 = vrcp.pop %v10281
        %v10378 = vrcp.pop %v10284
        %v10379 = vrcp.pop %v10287
        %v10380 = vrcp.pop %v10290
        %v10381 = vrcp.pop %v10293
        %v10382 = vrcp.pop %v10296
        %v10383 = vrcp.pop %v10299
        %v10384 = vrcp.pop %v10302
        %v10385 = vrcp.pop %v10305
        %v10386 = vrcp.pop %v10308
        %v10387 = vrcp.pop %v10311
        %v10388 = vrcp.pop %v10314
        %v10389 = vrcp.pop %v10317
        %v10390 = vrcp.pop %v10320
        %v10391 = vrcp.pop %v10323
        %v10392 = vrcp.pop %v10326
        %v10393 = vrcp.pop %v10329
        %v10394 = vmul.f32 %v10011, %v10330
        %v10395 = vmul.f32 %v10013, %v10331
        %v10396 = vmul.f32 %v10015, %v10332
        %v10397 = vmul.f32 %v10017, %v10333
        %v10398 = vmul.f32 %v10019, %v10334
        %v10399 = vmul.f32 %v10021, %v10335
        %v10400 = vmul.f32 %v10023, %v10336
        %v10401 = vmul.f32 %v10025, %v10337
        %v10402 = vmul.f32 %v10027, %v10338
        %v10403 = vmul.f32 %v10029, %v10339
        %v10404 = vmul.f32 %v10031, %v10340
        %v10405 = vmul.f32 %v10033, %v10341
        %v10406 = vmul.f32 %v10035, %v10342
        %v10407 = vmul.f32 %v10037, %v10343
        %v10408 = vmul.f32 %v10039, %v10344
        %v10409 = vmul.f32 %v10041, %v10345
        %v10410 = vmul.f32 %v10043, %v10346
        %v10411 = vmul.f32 %v10045, %v10347
        %v10412 = vmul.f32 %v10047, %v10348
        %v10413 = vmul.f32 %v10049, %v10349
        %v10414 = vmul.f32 %v10051, %v10350
        %v10415 = vmul.f32 %v10053, %v10351
        %v10416 = vmul.f32 %v10055, %v10352
        %v10417 = vmul.f32 %v10057, %v10353
        %v10418 = vmul.f32 %v10059, %v10354
        %v10419 = vmul.f32 %v10061, %v10355
        %v10420 = vmul.f32 %v10063, %v10356
        %v10421 = vmul.f32 %v10065, %v10357
        %v10422 = vmul.f32 %v10067, %v10358
        %v10423 = vmul.f32 %v10069, %v10359
        %v10424 = vmul.f32 %v10071, %v10360
        %v10425 = vmul.f32 %v10073, %v10361
        %v10426 = vmul.f32 %v10075, %v10362
        %v10427 = vmul.f32 %v10077, %v10363
        %v10428 = vmul.f32 %v10079, %v10364
        %v10429 = vmul.f32 %v10081, %v10365
        %v10430 = vmul.f32 %v10083, %v10366
        %v10431 = vmul.f32 %v10085, %v10367
        %v10432 = vmul.f32 %v10087, %v10368
        %v10433 = vmul.f32 %v10089, %v10369
        %v10434 = vmul.f32 %v10091, %v10370
        %v10435 = vmul.f32 %v10093, %v10371
        %v10436 = vmul.f32 %v10095, %v10372
        %v10437 = vmul.f32 %v10097, %v10373
        %v10438 = vmul.f32 %v10099, %v10374
        %v10439 = vmul.f32 %v10101, %v10375
        %v10440 = vmul.f32 %v10103, %v10376
        %v10441 = vmul.f32 %v10105, %v10377
        %v10442 = vmul.f32 %v10107, %v10378
        %v10443 = vmul.f32 %v10109, %v10379
        %v10444 = vmul.f32 %v10111, %v10380
        %v10445 = vmul.f32 %v10113, %v10381
        %v10446 = vmul.f32 %v10115, %v10382
        %v10447 = vmul.f32 %v10117, %v10383
        %v10448 = vmul.f32 %v10119, %v10384
        %v10449 = vmul.f32 %v10121, %v10385
        %v10450 = vmul.f32 %v10123, %v10386
        %v10451 = vmul.f32 %v10125, %v10387
        %v10452 = vmul.f32 %v10127, %v10388
        %v10453 = vmul.f32 %v10129, %v10389
        %v10454 = vmul.f32 %v10131, %v10390
        %v10455 = vmul.f32 %v10133, %v10391
        %v10456 = vmul.f32 %v10135, %v10392
        %v10457 = vmul.f32 %v10137, %v10393
        %10458 = vrot.lane.b32.xlu0 %v895, 32
        %v10459 = vpop.permute.xlu0 %10458
        %10460 = vrot.lane.b32.xlu0 %v898, 32
        %v10461 = vpop.permute.xlu0 %10460
        %10462 = vrot.lane.b32.xlu0 %v901, 32
        %v10463 = vpop.permute.xlu0 %10462
        %10464 = vrot.lane.b32.xlu0 %v904, 32
        %v10465 = vpop.permute.xlu0 %10464
        %10466 = vrot.lane.b32.xlu0 %v907, 32
        %v10467 = vpop.permute.xlu0 %10466
        %10468 = vrot.lane.b32.xlu0 %v910, 32
        %v10469 = vpop.permute.xlu0 %10468
        %10470 = vrot.lane.b32.xlu0 %v913, 32
        %v10471 = vpop.permute.xlu0 %10470
        %10472 = vrot.lane.b32.xlu0 %v916, 32
        %v10473 = vpop.permute.xlu0 %10472
        %v10483 = vsel %vm1807, %v10394, 0
        %v10486 = vsel %vm1807, %v10395, 0
        %v10489 = vsel %vm1807, %v10396, 0
        %v10492 = vsel %vm1807, %v10397, 0
        %v10495 = vsel %vm1807, %v10398, 0
        %v10498 = vsel %vm1807, %v10399, 0
        %v10501 = vsel %vm1807, %v10400, 0
        %v10504 = vsel %vm1807, %v10401, 0
        %10506 = vmatpush.msra.mxu0 0.0
        %10507 = vmatpush.msra.mxu0 0.0
        %10508 = vmatpush.msra.mxu0 0.0
        %10509 = vmatpush.msra.mxu0 0.0
        %10510 = vmatpush.msra.mxu0 0.0
        %10511 = vmatpush.msra.mxu0 0.0
        %10512 = vmatpush.msra.mxu0 0.0
        %10513 = vmatpush.msra.mxu0 0.0
        %10514 = vmatpush.msra.mxu0 %v10473
        %10515 = vmatpush.msra.mxu0 %v10471
        %10516 = vmatpush.msra.mxu0 %v10469
        %10517 = vmatpush.msra.mxu0 %v10467
        %10518 = vmatpush.msra.mxu0 %v10465
        %10519 = vmatpush.msra.mxu0 %v10463
        %10520 = vmatpush.msra.mxu0 %v10461
        %10521 = vmatpush.msra.mxu0 %v10459
        %10522 = vmatmul.f32.gmra.mxu0 %v10483
        %v10523 = vpop.f32.mrf.mxu0
        %v10524 = vadd.f32 0.0, %v10523
        %10525 = vmatmul.f32.gmra.mxu0 %v10486
        %v10526 = vpop.f32.mrf.mxu0
        %v10527 = vadd.f32 0.0, %v10526
        %10528 = vmatmul.f32.gmra.mxu0 %v10489
        %v10529 = vpop.f32.mrf.mxu0
        %v10530 = vadd.f32 0.0, %v10529
        %10531 = vmatmul.f32.gmra.mxu0 %v10492
        %v10532 = vpop.f32.mrf.mxu0
        %v10533 = vadd.f32 0.0, %v10532
        %10534 = vmatmul.f32.gmra.mxu0 %v10495
        %v10535 = vpop.f32.mrf.mxu0
        %v10536 = vadd.f32 0.0, %v10535
        %10537 = vmatmul.f32.gmra.mxu0 %v10498
        %v10538 = vpop.f32.mrf.mxu0
        %v10539 = vadd.f32 0.0, %v10538
        %10540 = vmatmul.f32.gmra.mxu0 %v10501
        %v10541 = vpop.f32.mrf.mxu0
        %v10542 = vadd.f32 0.0, %v10541
        %10543 = vmatmul.f32.gmra.mxu0 %v10504
        %v10544 = vpop.f32.mrf.mxu0
        %v10545 = vadd.f32 0.0, %v10544
        %10546 = vdwg.mxu0
        %10547 = vrot.lane.b32.xlu0 %v919, 32
        %v10548 = vpop.permute.xlu0 %10547
        %10549 = vrot.lane.b32.xlu0 %v922, 32
        %v10550 = vpop.permute.xlu0 %10549
        %10551 = vrot.lane.b32.xlu0 %v925, 32
        %v10552 = vpop.permute.xlu0 %10551
        %10553 = vrot.lane.b32.xlu0 %v928, 32
        %v10554 = vpop.permute.xlu0 %10553
        %10555 = vrot.lane.b32.xlu0 %v931, 32
        %v10556 = vpop.permute.xlu0 %10555
        %10557 = vrot.lane.b32.xlu0 %v934, 32
        %v10558 = vpop.permute.xlu0 %10557
        %10559 = vrot.lane.b32.xlu0 %v937, 32
        %v10560 = vpop.permute.xlu0 %10559
        %10561 = vrot.lane.b32.xlu0 %v940, 32
        %v10562 = vpop.permute.xlu0 %10561
        %v10572 = vsel %vm1807, %v10402, 0
        %v10575 = vsel %vm1807, %v10403, 0
        %v10578 = vsel %vm1807, %v10404, 0
        %v10581 = vsel %vm1807, %v10405, 0
        %v10584 = vsel %vm1807, %v10406, 0
        %v10587 = vsel %vm1807, %v10407, 0
        %v10590 = vsel %vm1807, %v10408, 0
        %v10593 = vsel %vm1807, %v10409, 0
        %10595 = vmatpush.msra.mxu0 0.0
        %10596 = vmatpush.msra.mxu0 0.0
        %10597 = vmatpush.msra.mxu0 0.0
        %10598 = vmatpush.msra.mxu0 0.0
        %10599 = vmatpush.msra.mxu0 0.0
        %10600 = vmatpush.msra.mxu0 0.0
        %10601 = vmatpush.msra.mxu0 0.0
        %10602 = vmatpush.msra.mxu0 0.0
        %10603 = vmatpush.msra.mxu0 %v10562
        %10604 = vmatpush.msra.mxu0 %v10560
        %10605 = vmatpush.msra.mxu0 %v10558
        %10606 = vmatpush.msra.mxu0 %v10556
        %10607 = vmatpush.msra.mxu0 %v10554
        %10608 = vmatpush.msra.mxu0 %v10552
        %10609 = vmatpush.msra.mxu0 %v10550
        %10610 = vmatpush.msra.mxu0 %v10548
        %10611 = vmatmul.f32.gmra.mxu0 %v10572
        %v10612 = vpop.f32.mrf.mxu0
        %v10613 = vadd.f32 0.0, %v10612
        %10614 = vmatmul.f32.gmra.mxu0 %v10575
        %v10615 = vpop.f32.mrf.mxu0
        %v10616 = vadd.f32 0.0, %v10615
        %10617 = vmatmul.f32.gmra.mxu0 %v10578
        %v10618 = vpop.f32.mrf.mxu0
        %v10619 = vadd.f32 0.0, %v10618
        %10620 = vmatmul.f32.gmra.mxu0 %v10581
        %v10621 = vpop.f32.mrf.mxu0
        %v10622 = vadd.f32 0.0, %v10621
        %10623 = vmatmul.f32.gmra.mxu0 %v10584
        %v10624 = vpop.f32.mrf.mxu0
        %v10625 = vadd.f32 0.0, %v10624
        %10626 = vmatmul.f32.gmra.mxu0 %v10587
        %v10627 = vpop.f32.mrf.mxu0
        %v10628 = vadd.f32 0.0, %v10627
        %10629 = vmatmul.f32.gmra.mxu0 %v10590
        %v10630 = vpop.f32.mrf.mxu0
        %v10631 = vadd.f32 0.0, %v10630
        %10632 = vmatmul.f32.gmra.mxu0 %v10593
        %v10633 = vpop.f32.mrf.mxu0
        %v10634 = vadd.f32 0.0, %v10633
        %10635 = vdwg.mxu0
        %10636 = vrot.lane.b32.xlu0 %v943, 32
        %v10637 = vpop.permute.xlu0 %10636
        %10638 = vrot.lane.b32.xlu0 %v946, 32
        %v10639 = vpop.permute.xlu0 %10638
        %10640 = vrot.lane.b32.xlu0 %v949, 32
        %v10641 = vpop.permute.xlu0 %10640
        %10642 = vrot.lane.b32.xlu0 %v952, 32
        %v10643 = vpop.permute.xlu0 %10642
        %10644 = vrot.lane.b32.xlu0 %v955, 32
        %v10645 = vpop.permute.xlu0 %10644
        %10646 = vrot.lane.b32.xlu0 %v958, 32
        %v10647 = vpop.permute.xlu0 %10646
        %10648 = vrot.lane.b32.xlu0 %v961, 32
        %v10649 = vpop.permute.xlu0 %10648
        %10650 = vrot.lane.b32.xlu0 %v964, 32
        %v10651 = vpop.permute.xlu0 %10650
        %v10661 = vsel %vm1807, %v10410, 0
        %v10664 = vsel %vm1807, %v10411, 0
        %v10667 = vsel %vm1807, %v10412, 0
        %v10670 = vsel %vm1807, %v10413, 0
        %v10673 = vsel %vm1807, %v10414, 0
        %v10676 = vsel %vm1807, %v10415, 0
        %v10679 = vsel %vm1807, %v10416, 0
        %v10682 = vsel %vm1807, %v10417, 0
        %10684 = vmatpush.msra.mxu0 0.0
        %10685 = vmatpush.msra.mxu0 0.0
        %10686 = vmatpush.msra.mxu0 0.0
        %10687 = vmatpush.msra.mxu0 0.0
        %10688 = vmatpush.msra.mxu0 0.0
        %10689 = vmatpush.msra.mxu0 0.0
        %10690 = vmatpush.msra.mxu0 0.0
        %10691 = vmatpush.msra.mxu0 0.0
        %10692 = vmatpush.msra.mxu0 %v10651
        %10693 = vmatpush.msra.mxu0 %v10649
        %10694 = vmatpush.msra.mxu0 %v10647
        %10695 = vmatpush.msra.mxu0 %v10645
        %10696 = vmatpush.msra.mxu0 %v10643
        %10697 = vmatpush.msra.mxu0 %v10641
        %10698 = vmatpush.msra.mxu0 %v10639
        %10699 = vmatpush.msra.mxu0 %v10637
        %10700 = vmatmul.f32.gmra.mxu0 %v10661
        %v10701 = vpop.f32.mrf.mxu0
        %v10702 = vadd.f32 0.0, %v10701
        %10703 = vmatmul.f32.gmra.mxu0 %v10664
        %v10704 = vpop.f32.mrf.mxu0
        %v10705 = vadd.f32 0.0, %v10704
        %10706 = vmatmul.f32.gmra.mxu0 %v10667
        %v10707 = vpop.f32.mrf.mxu0
        %v10708 = vadd.f32 0.0, %v10707
        %10709 = vmatmul.f32.gmra.mxu0 %v10670
        %v10710 = vpop.f32.mrf.mxu0
        %v10711 = vadd.f32 0.0, %v10710
        %10712 = vmatmul.f32.gmra.mxu0 %v10673
        %v10713 = vpop.f32.mrf.mxu0
        %v10714 = vadd.f32 0.0, %v10713
        %10715 = vmatmul.f32.gmra.mxu0 %v10676
        %v10716 = vpop.f32.mrf.mxu0
        %v10717 = vadd.f32 0.0, %v10716
        %10718 = vmatmul.f32.gmra.mxu0 %v10679
        %v10719 = vpop.f32.mrf.mxu0
        %v10720 = vadd.f32 0.0, %v10719
        %10721 = vmatmul.f32.gmra.mxu0 %v10682
        %v10722 = vpop.f32.mrf.mxu0
        %v10723 = vadd.f32 0.0, %v10722
        %10724 = vdwg.mxu0
        %10725 = vrot.lane.b32.xlu0 %v967, 32
        %v10726 = vpop.permute.xlu0 %10725
        %10727 = vrot.lane.b32.xlu0 %v970, 32
        %v10728 = vpop.permute.xlu0 %10727
        %10729 = vrot.lane.b32.xlu0 %v973, 32
        %v10730 = vpop.permute.xlu0 %10729
        %10731 = vrot.lane.b32.xlu0 %v976, 32
        %v10732 = vpop.permute.xlu0 %10731
        %10733 = vrot.lane.b32.xlu0 %v979, 32
        %v10734 = vpop.permute.xlu0 %10733
        %10735 = vrot.lane.b32.xlu0 %v982, 32
        %v10736 = vpop.permute.xlu0 %10735
        %10737 = vrot.lane.b32.xlu0 %v985, 32
        %v10738 = vpop.permute.xlu0 %10737
        %10739 = vrot.lane.b32.xlu0 %v988, 32
        %v10740 = vpop.permute.xlu0 %10739
        %v10750 = vsel %vm1807, %v10418, 0
        %v10753 = vsel %vm1807, %v10419, 0
        %v10756 = vsel %vm1807, %v10420, 0
        %v10759 = vsel %vm1807, %v10421, 0
        %v10762 = vsel %vm1807, %v10422, 0
        %v10765 = vsel %vm1807, %v10423, 0
        %v10768 = vsel %vm1807, %v10424, 0
        %v10771 = vsel %vm1807, %v10425, 0
        %10773 = vmatpush.msra.mxu0 0.0
        %10774 = vmatpush.msra.mxu0 0.0
        %10775 = vmatpush.msra.mxu0 0.0
        %10776 = vmatpush.msra.mxu0 0.0
        %10777 = vmatpush.msra.mxu0 0.0
        %10778 = vmatpush.msra.mxu0 0.0
        %10779 = vmatpush.msra.mxu0 0.0
        %10780 = vmatpush.msra.mxu0 0.0
        %10781 = vmatpush.msra.mxu0 %v10740
        %10782 = vmatpush.msra.mxu0 %v10738
        %10783 = vmatpush.msra.mxu0 %v10736
        %10784 = vmatpush.msra.mxu0 %v10734
        %10785 = vmatpush.msra.mxu0 %v10732
        %10786 = vmatpush.msra.mxu0 %v10730
        %10787 = vmatpush.msra.mxu0 %v10728
        %10788 = vmatpush.msra.mxu0 %v10726
        %10789 = vmatmul.f32.gmra.mxu0 %v10750
        %v10790 = vpop.f32.mrf.mxu0
        %v10791 = vadd.f32 0.0, %v10790
        %10792 = vmatmul.f32.gmra.mxu0 %v10753
        %v10793 = vpop.f32.mrf.mxu0
        %v10794 = vadd.f32 0.0, %v10793
        %10795 = vmatmul.f32.gmra.mxu0 %v10756
        %v10796 = vpop.f32.mrf.mxu0
        %v10797 = vadd.f32 0.0, %v10796
        %10798 = vmatmul.f32.gmra.mxu0 %v10759
        %v10799 = vpop.f32.mrf.mxu0
        %v10800 = vadd.f32 0.0, %v10799
        %10801 = vmatmul.f32.gmra.mxu0 %v10762
        %v10802 = vpop.f32.mrf.mxu0
        %v10803 = vadd.f32 0.0, %v10802
        %10804 = vmatmul.f32.gmra.mxu0 %v10765
        %v10805 = vpop.f32.mrf.mxu0
        %v10806 = vadd.f32 0.0, %v10805
        %10807 = vmatmul.f32.gmra.mxu0 %v10768
        %v10808 = vpop.f32.mrf.mxu0
        %v10809 = vadd.f32 0.0, %v10808
        %10810 = vmatmul.f32.gmra.mxu0 %v10771
        %v10811 = vpop.f32.mrf.mxu0
        %v10812 = vadd.f32 0.0, %v10811
        %10813 = vdwg.mxu0
        %10814 = vrot.lane.b32.xlu0 %v991, 32
        %v10815 = vpop.permute.xlu0 %10814
        %10816 = vrot.lane.b32.xlu0 %v994, 32
        %v10817 = vpop.permute.xlu0 %10816
        %10818 = vrot.lane.b32.xlu0 %v997, 32
        %v10819 = vpop.permute.xlu0 %10818
        %10820 = vrot.lane.b32.xlu0 %v1000, 32
        %v10821 = vpop.permute.xlu0 %10820
        %10822 = vrot.lane.b32.xlu0 %v1003, 32
        %v10823 = vpop.permute.xlu0 %10822
        %10824 = vrot.lane.b32.xlu0 %v1006, 32
        %v10825 = vpop.permute.xlu0 %10824
        %10826 = vrot.lane.b32.xlu0 %v1009, 32
        %v10827 = vpop.permute.xlu0 %10826
        %10828 = vrot.lane.b32.xlu0 %v1012, 32
        %v10829 = vpop.permute.xlu0 %10828
        %v10839 = vsel %vm1807, %v10426, 0
        %v10842 = vsel %vm1807, %v10427, 0
        %v10845 = vsel %vm1807, %v10428, 0
        %v10848 = vsel %vm1807, %v10429, 0
        %v10851 = vsel %vm1807, %v10430, 0
        %v10854 = vsel %vm1807, %v10431, 0
        %v10857 = vsel %vm1807, %v10432, 0
        %v10860 = vsel %vm1807, %v10433, 0
        %10862 = vmatpush.msra.mxu0 0.0
        %10863 = vmatpush.msra.mxu0 0.0
        %10864 = vmatpush.msra.mxu0 0.0
        %10865 = vmatpush.msra.mxu0 0.0
        %10866 = vmatpush.msra.mxu0 0.0
        %10867 = vmatpush.msra.mxu0 0.0
        %10868 = vmatpush.msra.mxu0 0.0
        %10869 = vmatpush.msra.mxu0 0.0
        %10870 = vmatpush.msra.mxu0 %v10829
        %10871 = vmatpush.msra.mxu0 %v10827
        %10872 = vmatpush.msra.mxu0 %v10825
        %10873 = vmatpush.msra.mxu0 %v10823
        %10874 = vmatpush.msra.mxu0 %v10821
        %10875 = vmatpush.msra.mxu0 %v10819
        %10876 = vmatpush.msra.mxu0 %v10817
        %10877 = vmatpush.msra.mxu0 %v10815
        %10878 = vmatmul.f32.gmra.mxu0 %v10839
        %v10879 = vpop.f32.mrf.mxu0
        %v10880 = vadd.f32 0.0, %v10879
        %10881 = vmatmul.f32.gmra.mxu0 %v10842
        %v10882 = vpop.f32.mrf.mxu0
        %v10883 = vadd.f32 0.0, %v10882
        %10884 = vmatmul.f32.gmra.mxu0 %v10845
        %v10885 = vpop.f32.mrf.mxu0
        %v10886 = vadd.f32 0.0, %v10885
        %10887 = vmatmul.f32.gmra.mxu0 %v10848
        %v10888 = vpop.f32.mrf.mxu0
        %v10889 = vadd.f32 0.0, %v10888
        %10890 = vmatmul.f32.gmra.mxu0 %v10851
        %v10891 = vpop.f32.mrf.mxu0
        %v10892 = vadd.f32 0.0, %v10891
        %10893 = vmatmul.f32.gmra.mxu0 %v10854
        %v10894 = vpop.f32.mrf.mxu0
        %v10895 = vadd.f32 0.0, %v10894
        %10896 = vmatmul.f32.gmra.mxu0 %v10857
        %v10897 = vpop.f32.mrf.mxu0
        %v10898 = vadd.f32 0.0, %v10897
        %10899 = vmatmul.f32.gmra.mxu0 %v10860
        %v10900 = vpop.f32.mrf.mxu0
        %v10901 = vadd.f32 0.0, %v10900
        %10902 = vdwg.mxu0
        %10903 = vrot.lane.b32.xlu0 %v1015, 32
        %v10904 = vpop.permute.xlu0 %10903
        %10905 = vrot.lane.b32.xlu0 %v1018, 32
        %v10906 = vpop.permute.xlu0 %10905
        %10907 = vrot.lane.b32.xlu0 %v1021, 32
        %v10908 = vpop.permute.xlu0 %10907
        %10909 = vrot.lane.b32.xlu0 %v1024, 32
        %v10910 = vpop.permute.xlu0 %10909
        %10911 = vrot.lane.b32.xlu0 %v1027, 32
        %v10912 = vpop.permute.xlu0 %10911
        %10913 = vrot.lane.b32.xlu0 %v1030, 32
        %v10914 = vpop.permute.xlu0 %10913
        %10915 = vrot.lane.b32.xlu0 %v1033, 32
        %v10916 = vpop.permute.xlu0 %10915
        %10917 = vrot.lane.b32.xlu0 %v1036, 32
        %v10918 = vpop.permute.xlu0 %10917
        %v10928 = vsel %vm1807, %v10434, 0
        %v10931 = vsel %vm1807, %v10435, 0
        %v10934 = vsel %vm1807, %v10436, 0
        %v10937 = vsel %vm1807, %v10437, 0
        %v10940 = vsel %vm1807, %v10438, 0
        %v10943 = vsel %vm1807, %v10439, 0
        %v10946 = vsel %vm1807, %v10440, 0
        %v10949 = vsel %vm1807, %v10441, 0
        %10951 = vmatpush.msra.mxu0 0.0
        %10952 = vmatpush.msra.mxu0 0.0
        %10953 = vmatpush.msra.mxu0 0.0
        %10954 = vmatpush.msra.mxu0 0.0
        %10955 = vmatpush.msra.mxu0 0.0
        %10956 = vmatpush.msra.mxu0 0.0
        %10957 = vmatpush.msra.mxu0 0.0
        %10958 = vmatpush.msra.mxu0 0.0
        %10959 = vmatpush.msra.mxu0 %v10918
        %10960 = vmatpush.msra.mxu0 %v10916
        %10961 = vmatpush.msra.mxu0 %v10914
        %10962 = vmatpush.msra.mxu0 %v10912
        %10963 = vmatpush.msra.mxu0 %v10910
        %10964 = vmatpush.msra.mxu0 %v10908
        %10965 = vmatpush.msra.mxu0 %v10906
        %10966 = vmatpush.msra.mxu0 %v10904
        %10967 = vmatmul.f32.gmra.mxu0 %v10928
        %v10968 = vpop.f32.mrf.mxu0
        %v10969 = vadd.f32 0.0, %v10968
        %10970 = vmatmul.f32.gmra.mxu0 %v10931
        %v10971 = vpop.f32.mrf.mxu0
        %v10972 = vadd.f32 0.0, %v10971
        %10973 = vmatmul.f32.gmra.mxu0 %v10934
        %v10974 = vpop.f32.mrf.mxu0
        %v10975 = vadd.f32 0.0, %v10974
        %10976 = vmatmul.f32.gmra.mxu0 %v10937
        %v10977 = vpop.f32.mrf.mxu0
        %v10978 = vadd.f32 0.0, %v10977
        %10979 = vmatmul.f32.gmra.mxu0 %v10940
        %v10980 = vpop.f32.mrf.mxu0
        %v10981 = vadd.f32 0.0, %v10980
        %10982 = vmatmul.f32.gmra.mxu0 %v10943
        %v10983 = vpop.f32.mrf.mxu0
        %v10984 = vadd.f32 0.0, %v10983
        %10985 = vmatmul.f32.gmra.mxu0 %v10946
        %v10986 = vpop.f32.mrf.mxu0
        %v10987 = vadd.f32 0.0, %v10986
        %10988 = vmatmul.f32.gmra.mxu0 %v10949
        %v10989 = vpop.f32.mrf.mxu0
        %v10990 = vadd.f32 0.0, %v10989
        %10991 = vdwg.mxu0
        %10992 = vrot.lane.b32.xlu0 %v1039, 32
        %v10993 = vpop.permute.xlu0 %10992
        %10994 = vrot.lane.b32.xlu0 %v1042, 32
        %v10995 = vpop.permute.xlu0 %10994
        %10996 = vrot.lane.b32.xlu0 %v1045, 32
        %v10997 = vpop.permute.xlu0 %10996
        %10998 = vrot.lane.b32.xlu0 %v1048, 32
        %v10999 = vpop.permute.xlu0 %10998
        %11000 = vrot.lane.b32.xlu0 %v1051, 32
        %v11001 = vpop.permute.xlu0 %11000
        %11002 = vrot.lane.b32.xlu0 %v1054, 32
        %v11003 = vpop.permute.xlu0 %11002
        %11004 = vrot.lane.b32.xlu0 %v1057, 32
        %v11005 = vpop.permute.xlu0 %11004
        %11006 = vrot.lane.b32.xlu0 %v1060, 32
        %v11007 = vpop.permute.xlu0 %11006
        %v11017 = vsel %vm1807, %v10442, 0
        %v11020 = vsel %vm1807, %v10443, 0
        %v11023 = vsel %vm1807, %v10444, 0
        %v11026 = vsel %vm1807, %v10445, 0
        %v11029 = vsel %vm1807, %v10446, 0
        %v11032 = vsel %vm1807, %v10447, 0
        %v11035 = vsel %vm1807, %v10448, 0
        %v11038 = vsel %vm1807, %v10449, 0
        %11040 = vmatpush.msra.mxu0 0.0
        %11041 = vmatpush.msra.mxu0 0.0
        %11042 = vmatpush.msra.mxu0 0.0
        %11043 = vmatpush.msra.mxu0 0.0
        %11044 = vmatpush.msra.mxu0 0.0
        %11045 = vmatpush.msra.mxu0 0.0
        %11046 = vmatpush.msra.mxu0 0.0
        %11047 = vmatpush.msra.mxu0 0.0
        %11048 = vmatpush.msra.mxu0 %v11007
        %11049 = vmatpush.msra.mxu0 %v11005
        %11050 = vmatpush.msra.mxu0 %v11003
        %11051 = vmatpush.msra.mxu0 %v11001
        %11052 = vmatpush.msra.mxu0 %v10999
        %11053 = vmatpush.msra.mxu0 %v10997
        %11054 = vmatpush.msra.mxu0 %v10995
        %11055 = vmatpush.msra.mxu0 %v10993
        %11056 = vmatmul.f32.gmra.mxu0 %v11017
        %v11057 = vpop.f32.mrf.mxu0
        %v11058 = vadd.f32 0.0, %v11057
        %11059 = vmatmul.f32.gmra.mxu0 %v11020
        %v11060 = vpop.f32.mrf.mxu0
        %v11061 = vadd.f32 0.0, %v11060
        %11062 = vmatmul.f32.gmra.mxu0 %v11023
        %v11063 = vpop.f32.mrf.mxu0
        %v11064 = vadd.f32 0.0, %v11063
        %11065 = vmatmul.f32.gmra.mxu0 %v11026
        %v11066 = vpop.f32.mrf.mxu0
        %v11067 = vadd.f32 0.0, %v11066
        %11068 = vmatmul.f32.gmra.mxu0 %v11029
        %v11069 = vpop.f32.mrf.mxu0
        %v11070 = vadd.f32 0.0, %v11069
        %11071 = vmatmul.f32.gmra.mxu0 %v11032
        %v11072 = vpop.f32.mrf.mxu0
        %v11073 = vadd.f32 0.0, %v11072
        %11074 = vmatmul.f32.gmra.mxu0 %v11035
        %v11075 = vpop.f32.mrf.mxu0
        %v11076 = vadd.f32 0.0, %v11075
        %11077 = vmatmul.f32.gmra.mxu0 %v11038
        %v11078 = vpop.f32.mrf.mxu0
        %v11079 = vadd.f32 0.0, %v11078
        %11080 = vdwg.mxu0
        %11081 = vrot.lane.b32.xlu0 %v1063, 32
        %v11082 = vpop.permute.xlu0 %11081
        %11083 = vrot.lane.b32.xlu0 %v1066, 32
        %v11084 = vpop.permute.xlu0 %11083
        %11085 = vrot.lane.b32.xlu0 %v1069, 32
        %v11086 = vpop.permute.xlu0 %11085
        %11087 = vrot.lane.b32.xlu0 %v1072, 32
        %v11088 = vpop.permute.xlu0 %11087
        %11089 = vrot.lane.b32.xlu0 %v1075, 32
        %v11090 = vpop.permute.xlu0 %11089
        %11091 = vrot.lane.b32.xlu0 %v1078, 32
        %v11092 = vpop.permute.xlu0 %11091
        %11093 = vrot.lane.b32.xlu0 %v1081, 32
        %v11094 = vpop.permute.xlu0 %11093
        %11095 = vrot.lane.b32.xlu0 %v1084, 32
        %v11096 = vpop.permute.xlu0 %11095
        %v11106 = vsel %vm1807, %v10450, 0
        %v11109 = vsel %vm1807, %v10451, 0
        %v11112 = vsel %vm1807, %v10452, 0
        %v11115 = vsel %vm1807, %v10453, 0
        %v11118 = vsel %vm1807, %v10454, 0
        %v11121 = vsel %vm1807, %v10455, 0
        %v11124 = vsel %vm1807, %v10456, 0
        %v11127 = vsel %vm1807, %v10457, 0
        %11129 = vmatpush.msra.mxu0 0.0
        %11130 = vmatpush.msra.mxu0 0.0
        %11131 = vmatpush.msra.mxu0 0.0
        %11132 = vmatpush.msra.mxu0 0.0
        %11133 = vmatpush.msra.mxu0 0.0
        %11134 = vmatpush.msra.mxu0 0.0
        %11135 = vmatpush.msra.mxu0 0.0
        %11136 = vmatpush.msra.mxu0 0.0
        %11137 = vmatpush.msra.mxu0 %v11096
        %11138 = vmatpush.msra.mxu0 %v11094
        %11139 = vmatpush.msra.mxu0 %v11092
        %11140 = vmatpush.msra.mxu0 %v11090
        %11141 = vmatpush.msra.mxu0 %v11088
        %11142 = vmatpush.msra.mxu0 %v11086
        %11143 = vmatpush.msra.mxu0 %v11084
        %11144 = vmatpush.msra.mxu0 %v11082
        %11145 = vmatmul.f32.gmra.mxu0 %v11106
        %v11146 = vpop.f32.mrf.mxu0
        %v11147 = vadd.f32 0.0, %v11146
        %11148 = vmatmul.f32.gmra.mxu0 %v11109
        %v11149 = vpop.f32.mrf.mxu0
        %v11150 = vadd.f32 0.0, %v11149
        %11151 = vmatmul.f32.gmra.mxu0 %v11112
        %v11152 = vpop.f32.mrf.mxu0
        %v11153 = vadd.f32 0.0, %v11152
        %11154 = vmatmul.f32.gmra.mxu0 %v11115
        %v11155 = vpop.f32.mrf.mxu0
        %v11156 = vadd.f32 0.0, %v11155
        %11157 = vmatmul.f32.gmra.mxu0 %v11118
        %v11158 = vpop.f32.mrf.mxu0
        %v11159 = vadd.f32 0.0, %v11158
        %11160 = vmatmul.f32.gmra.mxu0 %v11121
        %v11161 = vpop.f32.mrf.mxu0
        %v11162 = vadd.f32 0.0, %v11161
        %11163 = vmatmul.f32.gmra.mxu0 %v11124
        %v11164 = vpop.f32.mrf.mxu0
        %v11165 = vadd.f32 0.0, %v11164
        %11166 = vmatmul.f32.gmra.mxu0 %v11127
        %v11167 = vpop.f32.mrf.mxu0
        %v11168 = vadd.f32 0.0, %v11167
        %11169 = vdwg.mxu0
        %v11170 = vld [vmem:[#allocation8 + $0x60] sm:$0xff]
        %v11171 = vld [vmem:[#allocation8 + $0x68] sm:$0xff]
        %v11172 = vld [vmem:[#allocation8 + $0x70] sm:$0xff]
        %v11173 = vld [vmem:[#allocation8 + $0x78] sm:$0xff]
        %v11175 = vsel %vm1094, %v10524, 0
        %v11178 = vsel %vm1094, %v10527, 0
        %v11181 = vsel %vm1094, %v10530, 0
        %v11184 = vsel %vm1094, %v10533, 0
        %v11187 = vsel %vm1094, %v10536, 0
        %v11190 = vsel %vm1094, %v10539, 0
        %v11193 = vsel %vm1094, %v10542, 0
        %v11196 = vsel %vm1094, %v10545, 0
        %v11199 = vsel %vm1094, %v10613, 0
        %v11202 = vsel %vm1094, %v10616, 0
        %v11205 = vsel %vm1094, %v10619, 0
        %v11208 = vsel %vm1094, %v10622, 0
        %v11211 = vsel %vm1094, %v10625, 0
        %v11214 = vsel %vm1094, %v10628, 0
        %v11217 = vsel %vm1094, %v10631, 0
        %v11220 = vsel %vm1094, %v10634, 0
        %v11223 = vsel %vm1094, %v10702, 0
        %v11226 = vsel %vm1094, %v10705, 0
        %v11229 = vsel %vm1094, %v10708, 0
        %v11232 = vsel %vm1094, %v10711, 0
        %v11235 = vsel %vm1094, %v10714, 0
        %v11238 = vsel %vm1094, %v10717, 0
        %v11241 = vsel %vm1094, %v10720, 0
        %v11244 = vsel %vm1094, %v10723, 0
        %v11247 = vsel %vm1094, %v10791, 0
        %v11250 = vsel %vm1094, %v10794, 0
        %v11253 = vsel %vm1094, %v10797, 0
        %v11256 = vsel %vm1094, %v10800, 0
        %v11259 = vsel %vm1094, %v10803, 0
        %v11262 = vsel %vm1094, %v10806, 0
        %v11265 = vsel %vm1094, %v10809, 0
        %v11268 = vsel %vm1094, %v10812, 0
        %v11271 = vsel %vm1094, %v10880, 0
        %v11274 = vsel %vm1094, %v10883, 0
        %v11277 = vsel %vm1094, %v10886, 0
        %v11280 = vsel %vm1094, %v10889, 0
        %v11283 = vsel %vm1094, %v10892, 0
        %v11286 = vsel %vm1094, %v10895, 0
        %v11289 = vsel %vm1094, %v10898, 0
        %v11292 = vsel %vm1094, %v10901, 0
        %v11295 = vsel %vm1094, %v10969, 0
        %v11298 = vsel %vm1094, %v10972, 0
        %v11301 = vsel %vm1094, %v10975, 0
        %v11304 = vsel %vm1094, %v10978, 0
        %v11307 = vsel %vm1094, %v10981, 0
        %v11310 = vsel %vm1094, %v10984, 0
        %v11313 = vsel %vm1094, %v10987, 0
        %v11316 = vsel %vm1094, %v10990, 0
        %v11319 = vsel %vm1094, %v11058, 0
        %v11322 = vsel %vm1094, %v11061, 0
        %v11325 = vsel %vm1094, %v11064, 0
        %v11328 = vsel %vm1094, %v11067, 0
        %v11331 = vsel %vm1094, %v11070, 0
        %v11334 = vsel %vm1094, %v11073, 0
        %v11337 = vsel %vm1094, %v11076, 0
        %v11340 = vsel %vm1094, %v11079, 0
        %v11343 = vsel %vm1094, %v11147, 0
        %v11346 = vsel %vm1094, %v11150, 0
        %v11349 = vsel %vm1094, %v11153, 0
        %v11352 = vsel %vm1094, %v11156, 0
        %v11355 = vsel %vm1094, %v11159, 0
        %v11358 = vsel %vm1094, %v11162, 0
        %v11361 = vsel %vm1094, %v11165, 0
        %v11364 = vsel %vm1094, %v11168, 0
        %11366 = vmatpush.msra.mxu0 0.0
        %11367 = vmatpush.msra.mxu0 0.0
        %11368 = vmatpush.msra.mxu0 0.0
        %11369 = vmatpush.msra.mxu0 0.0
        %11370 = vmatpush.msra.mxu0 0.0
        %11371 = vmatpush.msra.mxu0 0.0
        %11372 = vmatpush.msra.mxu0 0.0
        %11373 = vmatpush.msra.mxu0 0.0
        %11374 = vmatpush.msra.mxu0 0.0
        %11375 = vmatpush.msra.mxu0 0.0
        %11376 = vmatpush.msra.mxu0 0.0
        %11377 = vmatpush.msra.mxu0 0.0
        %11378 = vmatpush.msra.mxu0 %v11173
        %11379 = vmatpush.msra.mxu0 %v11172
        %11380 = vmatpush.msra.mxu0 %v11171
        %11381 = vmatpush.msra.mxu0 %v11170
        %11382 = vmatmul.f32.gmra.mxu0 %v11175
        %v11383 = vpop.f32.mrf.mxu0
        %v11384 = vadd.f32 0.0, %v11383
        %11385 = vmatmul.f32.gmra.mxu0 %v11178
        %v11386 = vpop.f32.mrf.mxu0
        %v11387 = vadd.f32 0.0, %v11386
        %11388 = vmatmul.f32.gmra.mxu0 %v11181
        %v11389 = vpop.f32.mrf.mxu0
        %v11390 = vadd.f32 0.0, %v11389
        %11391 = vmatmul.f32.gmra.mxu0 %v11184
        %v11392 = vpop.f32.mrf.mxu0
        %v11393 = vadd.f32 0.0, %v11392
        %11394 = vmatmul.f32.gmra.mxu0 %v11187
        %v11395 = vpop.f32.mrf.mxu0
        %v11396 = vadd.f32 0.0, %v11395
        %11397 = vmatmul.f32.gmra.mxu0 %v11190
        %v11398 = vpop.f32.mrf.mxu0
        %v11399 = vadd.f32 0.0, %v11398
        %11400 = vmatmul.f32.gmra.mxu0 %v11193
        %v11401 = vpop.f32.mrf.mxu0
        %v11402 = vadd.f32 0.0, %v11401
        %11403 = vmatmul.f32.gmra.mxu0 %v11196
        %v11404 = vpop.f32.mrf.mxu0
        %v11405 = vadd.f32 0.0, %v11404
        %11406 = vmatmul.f32.gmra.mxu0 %v11199
        %v11407 = vpop.f32.mrf.mxu0
        %v11408 = vadd.f32 0.0, %v11407
        %11409 = vmatmul.f32.gmra.mxu0 %v11202
        %v11410 = vpop.f32.mrf.mxu0
        %v11411 = vadd.f32 0.0, %v11410
        %11412 = vmatmul.f32.gmra.mxu0 %v11205
        %v11413 = vpop.f32.mrf.mxu0
        %v11414 = vadd.f32 0.0, %v11413
        %11415 = vmatmul.f32.gmra.mxu0 %v11208
        %v11416 = vpop.f32.mrf.mxu0
        %v11417 = vadd.f32 0.0, %v11416
        %11418 = vmatmul.f32.gmra.mxu0 %v11211
        %v11419 = vpop.f32.mrf.mxu0
        %v11420 = vadd.f32 0.0, %v11419
        %11421 = vmatmul.f32.gmra.mxu0 %v11214
        %v11422 = vpop.f32.mrf.mxu0
        %v11423 = vadd.f32 0.0, %v11422
        %11424 = vmatmul.f32.gmra.mxu0 %v11217
        %v11425 = vpop.f32.mrf.mxu0
        %v11426 = vadd.f32 0.0, %v11425
        %11427 = vmatmul.f32.gmra.mxu0 %v11220
        %v11428 = vpop.f32.mrf.mxu0
        %v11429 = vadd.f32 0.0, %v11428
        %11430 = vmatmul.f32.gmra.mxu0 %v11223
        %v11431 = vpop.f32.mrf.mxu0
        %v11432 = vadd.f32 0.0, %v11431
        %11433 = vmatmul.f32.gmra.mxu0 %v11226
        %v11434 = vpop.f32.mrf.mxu0
        %v11435 = vadd.f32 0.0, %v11434
        %11436 = vmatmul.f32.gmra.mxu0 %v11229
        %v11437 = vpop.f32.mrf.mxu0
        %v11438 = vadd.f32 0.0, %v11437
        %11439 = vmatmul.f32.gmra.mxu0 %v11232
        %v11440 = vpop.f32.mrf.mxu0
        %v11441 = vadd.f32 0.0, %v11440
        %11442 = vmatmul.f32.gmra.mxu0 %v11235
        %v11443 = vpop.f32.mrf.mxu0
        %v11444 = vadd.f32 0.0, %v11443
        %11445 = vmatmul.f32.gmra.mxu0 %v11238
        %v11446 = vpop.f32.mrf.mxu0
        %v11447 = vadd.f32 0.0, %v11446
        %11448 = vmatmul.f32.gmra.mxu0 %v11241
        %v11449 = vpop.f32.mrf.mxu0
        %v11450 = vadd.f32 0.0, %v11449
        %11451 = vmatmul.f32.gmra.mxu0 %v11244
        %v11452 = vpop.f32.mrf.mxu0
        %v11453 = vadd.f32 0.0, %v11452
        %11454 = vmatmul.f32.gmra.mxu0 %v11247
        %v11455 = vpop.f32.mrf.mxu0
        %v11456 = vadd.f32 0.0, %v11455
        %11457 = vmatmul.f32.gmra.mxu0 %v11250
        %v11458 = vpop.f32.mrf.mxu0
        %v11459 = vadd.f32 0.0, %v11458
        %11460 = vmatmul.f32.gmra.mxu0 %v11253
        %v11461 = vpop.f32.mrf.mxu0
        %v11462 = vadd.f32 0.0, %v11461
        %11463 = vmatmul.f32.gmra.mxu0 %v11256
        %v11464 = vpop.f32.mrf.mxu0
        %v11465 = vadd.f32 0.0, %v11464
        %11466 = vmatmul.f32.gmra.mxu0 %v11259
        %v11467 = vpop.f32.mrf.mxu0
        %v11468 = vadd.f32 0.0, %v11467
        %11469 = vmatmul.f32.gmra.mxu0 %v11262
        %v11470 = vpop.f32.mrf.mxu0
        %v11471 = vadd.f32 0.0, %v11470
        %11472 = vmatmul.f32.gmra.mxu0 %v11265
        %v11473 = vpop.f32.mrf.mxu0
        %v11474 = vadd.f32 0.0, %v11473
        %11475 = vmatmul.f32.gmra.mxu0 %v11268
        %v11476 = vpop.f32.mrf.mxu0
        %v11477 = vadd.f32 0.0, %v11476
        %11478 = vmatmul.f32.gmra.mxu0 %v11271
        %v11479 = vpop.f32.mrf.mxu0
        %v11480 = vadd.f32 0.0, %v11479
        %11481 = vmatmul.f32.gmra.mxu0 %v11274
        %v11482 = vpop.f32.mrf.mxu0
        %v11483 = vadd.f32 0.0, %v11482
        %11484 = vmatmul.f32.gmra.mxu0 %v11277
        %v11485 = vpop.f32.mrf.mxu0
        %v11486 = vadd.f32 0.0, %v11485
        %11487 = vmatmul.f32.gmra.mxu0 %v11280
        %v11488 = vpop.f32.mrf.mxu0
        %v11489 = vadd.f32 0.0, %v11488
        %11490 = vmatmul.f32.gmra.mxu0 %v11283
        %v11491 = vpop.f32.mrf.mxu0
        %v11492 = vadd.f32 0.0, %v11491
        %11493 = vmatmul.f32.gmra.mxu0 %v11286
        %v11494 = vpop.f32.mrf.mxu0
        %v11495 = vadd.f32 0.0, %v11494
        %11496 = vmatmul.f32.gmra.mxu0 %v11289
        %v11497 = vpop.f32.mrf.mxu0
        %v11498 = vadd.f32 0.0, %v11497
        %11499 = vmatmul.f32.gmra.mxu0 %v11292
        %v11500 = vpop.f32.mrf.mxu0
        %v11501 = vadd.f32 0.0, %v11500
        %11502 = vmatmul.f32.gmra.mxu0 %v11295
        %v11503 = vpop.f32.mrf.mxu0
        %v11504 = vadd.f32 0.0, %v11503
        %11505 = vmatmul.f32.gmra.mxu0 %v11298
        %v11506 = vpop.f32.mrf.mxu0
        %v11507 = vadd.f32 0.0, %v11506
        %11508 = vmatmul.f32.gmra.mxu0 %v11301
        %v11509 = vpop.f32.mrf.mxu0
        %v11510 = vadd.f32 0.0, %v11509
        %11511 = vmatmul.f32.gmra.mxu0 %v11304
        %v11512 = vpop.f32.mrf.mxu0
        %v11513 = vadd.f32 0.0, %v11512
        %11514 = vmatmul.f32.gmra.mxu0 %v11307
        %v11515 = vpop.f32.mrf.mxu0
        %v11516 = vadd.f32 0.0, %v11515
        %11517 = vmatmul.f32.gmra.mxu0 %v11310
        %v11518 = vpop.f32.mrf.mxu0
        %v11519 = vadd.f32 0.0, %v11518
        %11520 = vmatmul.f32.gmra.mxu0 %v11313
        %v11521 = vpop.f32.mrf.mxu0
        %v11522 = vadd.f32 0.0, %v11521
        %11523 = vmatmul.f32.gmra.mxu0 %v11316
        %v11524 = vpop.f32.mrf.mxu0
        %v11525 = vadd.f32 0.0, %v11524
        %11526 = vmatmul.f32.gmra.mxu0 %v11319
        %v11527 = vpop.f32.mrf.mxu0
        %v11528 = vadd.f32 0.0, %v11527
        %11529 = vmatmul.f32.gmra.mxu0 %v11322
        %v11530 = vpop.f32.mrf.mxu0
        %v11531 = vadd.f32 0.0, %v11530
        %11532 = vmatmul.f32.gmra.mxu0 %v11325
        %v11533 = vpop.f32.mrf.mxu0
        %v11534 = vadd.f32 0.0, %v11533
        %11535 = vmatmul.f32.gmra.mxu0 %v11328
        %v11536 = vpop.f32.mrf.mxu0
        %v11537 = vadd.f32 0.0, %v11536
        %11538 = vmatmul.f32.gmra.mxu0 %v11331
        %v11539 = vpop.f32.mrf.mxu0
        %v11540 = vadd.f32 0.0, %v11539
        %11541 = vmatmul.f32.gmra.mxu0 %v11334
        %v11542 = vpop.f32.mrf.mxu0
        %v11543 = vadd.f32 0.0, %v11542
        %11544 = vmatmul.f32.gmra.mxu0 %v11337
        %v11545 = vpop.f32.mrf.mxu0
        %v11546 = vadd.f32 0.0, %v11545
        %11547 = vmatmul.f32.gmra.mxu0 %v11340
        %v11548 = vpop.f32.mrf.mxu0
        %v11549 = vadd.f32 0.0, %v11548
        %11550 = vmatmul.f32.gmra.mxu0 %v11343
        %v11551 = vpop.f32.mrf.mxu0
        %v11552 = vadd.f32 0.0, %v11551
        %11553 = vmatmul.f32.gmra.mxu0 %v11346
        %v11554 = vpop.f32.mrf.mxu0
        %v11555 = vadd.f32 0.0, %v11554
        %11556 = vmatmul.f32.gmra.mxu0 %v11349
        %v11557 = vpop.f32.mrf.mxu0
        %v11558 = vadd.f32 0.0, %v11557
        %11559 = vmatmul.f32.gmra.mxu0 %v11352
        %v11560 = vpop.f32.mrf.mxu0
        %v11561 = vadd.f32 0.0, %v11560
        %11562 = vmatmul.f32.gmra.mxu0 %v11355
        %v11563 = vpop.f32.mrf.mxu0
        %v11564 = vadd.f32 0.0, %v11563
        %11565 = vmatmul.f32.gmra.mxu0 %v11358
        %v11566 = vpop.f32.mrf.mxu0
        %v11567 = vadd.f32 0.0, %v11566
        %11568 = vmatmul.f32.gmra.mxu0 %v11361
        %v11569 = vpop.f32.mrf.mxu0
        %v11570 = vadd.f32 0.0, %v11569
        %11571 = vmatmul.f32.gmra.mxu0 %v11364
        %v11572 = vpop.f32.mrf.mxu0
        %v11573 = vadd.f32 0.0, %v11572
        %11574 = vdwg.mxu0
        %v11575 = vadd.f32 %v8841, %v11384
        %v11576 = vadd.f32 %v8842, %v11387
        %v11577 = vadd.f32 %v8843, %v11390
        %v11578 = vadd.f32 %v8844, %v11393
        %v11579 = vadd.f32 %v8845, %v11396
        %v11580 = vadd.f32 %v8846, %v11399
        %v11581 = vadd.f32 %v8847, %v11402
        %v11582 = vadd.f32 %v8848, %v11405
        %v11583 = vadd.f32 %v8849, %v11408
        %v11584 = vadd.f32 %v8850, %v11411
        %v11585 = vadd.f32 %v8851, %v11414
        %v11586 = vadd.f32 %v8852, %v11417
        %v11587 = vadd.f32 %v8853, %v11420
        %v11588 = vadd.f32 %v8854, %v11423
        %v11589 = vadd.f32 %v8855, %v11426
        %v11590 = vadd.f32 %v8856, %v11429
        %v11591 = vadd.f32 %v8857, %v11432
        %v11592 = vadd.f32 %v8858, %v11435
        %v11593 = vadd.f32 %v8859, %v11438
        %v11594 = vadd.f32 %v8860, %v11441
        %v11595 = vadd.f32 %v8861, %v11444
        %v11596 = vadd.f32 %v8862, %v11447
        %v11597 = vadd.f32 %v8863, %v11450
        %v11598 = vadd.f32 %v8864, %v11453
        %v11599 = vadd.f32 %v8865, %v11456
        %v11600 = vadd.f32 %v8866, %v11459
        %v11601 = vadd.f32 %v8867, %v11462
        %v11602 = vadd.f32 %v8868, %v11465
        %v11603 = vadd.f32 %v8869, %v11468
        %v11604 = vadd.f32 %v8870, %v11471
        %v11605 = vadd.f32 %v8871, %v11474
        %v11606 = vadd.f32 %v8872, %v11477
        %v11607 = vadd.f32 %v8873, %v11480
        %v11608 = vadd.f32 %v8874, %v11483
        %v11609 = vadd.f32 %v8875, %v11486
        %v11610 = vadd.f32 %v8876, %v11489
        %v11611 = vadd.f32 %v8877, %v11492
        %v11612 = vadd.f32 %v8878, %v11495
        %v11613 = vadd.f32 %v8879, %v11498
        %v11614 = vadd.f32 %v8880, %v11501
        %v11615 = vadd.f32 %v8881, %v11504
        %v11616 = vadd.f32 %v8882, %v11507
        %v11617 = vadd.f32 %v8883, %v11510
        %v11618 = vadd.f32 %v8884, %v11513
        %v11619 = vadd.f32 %v8885, %v11516
        %v11620 = vadd.f32 %v8886, %v11519
        %v11621 = vadd.f32 %v8887, %v11522
        %v11622 = vadd.f32 %v8888, %v11525
        %v11623 = vadd.f32 %v8889, %v11528
        %v11624 = vadd.f32 %v8890, %v11531
        %v11625 = vadd.f32 %v8891, %v11534
        %v11626 = vadd.f32 %v8892, %v11537
        %v11627 = vadd.f32 %v8893, %v11540
        %v11628 = vadd.f32 %v8894, %v11543
        %v11629 = vadd.f32 %v8895, %v11546
        %v11630 = vadd.f32 %v8896, %v11549
        %v11631 = vadd.f32 %v8897, %v11552
        %v11632 = vadd.f32 %v8898, %v11555
        %v11633 = vadd.f32 %v8899, %v11558
        %v11634 = vadd.f32 %v8900, %v11561
        %v11635 = vadd.f32 %v8901, %v11564
        %v11636 = vadd.f32 %v8902, %v11567
        %v11637 = vadd.f32 %v8903, %v11570
        %v11638 = vadd.f32 %v8904, %v11573
        %v11639 = vld [vmem:[%s4] sm:$0x1]
        %v11641 = vperm.slane %v11639, 0
        %v11643 = vadd.f32 %v11575, %v11641
        %v11644 = vadd.f32 %v11576, %v11641
        %v11645 = vadd.f32 %v11577, %v11641
        %v11646 = vadd.f32 %v11578, %v11641
        %v11647 = vadd.f32 %v11579, %v11641
        %v11648 = vadd.f32 %v11580, %v11641
        %v11649 = vadd.f32 %v11581, %v11641
        %v11650 = vadd.f32 %v11582, %v11641
        %v11651 = vadd.f32 %v11583, %v11641
        %v11652 = vadd.f32 %v11584, %v11641
        %v11653 = vadd.f32 %v11585, %v11641
        %v11654 = vadd.f32 %v11586, %v11641
        %v11655 = vadd.f32 %v11587, %v11641
        %v11656 = vadd.f32 %v11588, %v11641
        %v11657 = vadd.f32 %v11589, %v11641
        %v11658 = vadd.f32 %v11590, %v11641
        %v11659 = vadd.f32 %v11591, %v11641
        %v11660 = vadd.f32 %v11592, %v11641
        %v11661 = vadd.f32 %v11593, %v11641
        %v11662 = vadd.f32 %v11594, %v11641
        %v11663 = vadd.f32 %v11595, %v11641
        %v11664 = vadd.f32 %v11596, %v11641
        %v11665 = vadd.f32 %v11597, %v11641
        %v11666 = vadd.f32 %v11598, %v11641
        %v11667 = vadd.f32 %v11599, %v11641
        %v11668 = vadd.f32 %v11600, %v11641
        %v11669 = vadd.f32 %v11601, %v11641
        %v11670 = vadd.f32 %v11602, %v11641
        %v11671 = vadd.f32 %v11603, %v11641
        %v11672 = vadd.f32 %v11604, %v11641
        %v11673 = vadd.f32 %v11605, %v11641
        %v11674 = vadd.f32 %v11606, %v11641
        %v11675 = vadd.f32 %v11607, %v11641
        %v11676 = vadd.f32 %v11608, %v11641
        %v11677 = vadd.f32 %v11609, %v11641
        %v11678 = vadd.f32 %v11610, %v11641
        %v11679 = vadd.f32 %v11611, %v11641
        %v11680 = vadd.f32 %v11612, %v11641
        %v11681 = vadd.f32 %v11613, %v11641
        %v11682 = vadd.f32 %v11614, %v11641
        %v11683 = vadd.f32 %v11615, %v11641
        %v11684 = vadd.f32 %v11616, %v11641
        %v11685 = vadd.f32 %v11617, %v11641
        %v11686 = vadd.f32 %v11618, %v11641
        %v11687 = vadd.f32 %v11619, %v11641
        %v11688 = vadd.f32 %v11620, %v11641
        %v11689 = vadd.f32 %v11621, %v11641
        %v11690 = vadd.f32 %v11622, %v11641
        %v11691 = vadd.f32 %v11623, %v11641
        %v11692 = vadd.f32 %v11624, %v11641
        %v11693 = vadd.f32 %v11625, %v11641
        %v11694 = vadd.f32 %v11626, %v11641
        %v11695 = vadd.f32 %v11627, %v11641
        %v11696 = vadd.f32 %v11628, %v11641
        %v11697 = vadd.f32 %v11629, %v11641
        %v11698 = vadd.f32 %v11630, %v11641
        %v11699 = vadd.f32 %v11631, %v11641
        %v11700 = vadd.f32 %v11632, %v11641
        %v11701 = vadd.f32 %v11633, %v11641
        %v11702 = vadd.f32 %v11634, %v11641
        %v11703 = vadd.f32 %v11635, %v11641
        %v11704 = vadd.f32 %v11636, %v11641
        %v11705 = vadd.f32 %v11637, %v11641
        %v11706 = vadd.f32 %v11638, %v11641
        %11707 = vst [vmem:[%s336] sm:$0xff] %v11643
        %11708 = vst [vmem:[%s336 + $0x8] sm:$0xff] %v11644
        %11709 = vst [vmem:[%s336 + $0x10] sm:$0xff] %v11645
        %11710 = vst [vmem:[%s336 + $0x18] sm:$0xff] %v11646
        %11711 = vst [vmem:[%s336 + $0x20] sm:$0xff] %v11647
        %11712 = vst [vmem:[%s336 + $0x28] sm:$0xff] %v11648
        %11713 = vst [vmem:[%s336 + $0x30] sm:$0xff] %v11649
        %11714 = vst [vmem:[%s336 + $0x38] sm:$0xff] %v11650
        %11715 = vst [vmem:[%s336 + $0x40] sm:$0xff] %v11651
        %11716 = vst [vmem:[%s336 + $0x48] sm:$0xff] %v11652
        %11717 = vst [vmem:[%s336 + $0x50] sm:$0xff] %v11653
        %11718 = vst [vmem:[%s336 + $0x58] sm:$0xff] %v11654
        %11719 = vst [vmem:[%s336 + $0x60] sm:$0xff] %v11655
        %11720 = vst [vmem:[%s336 + $0x68] sm:$0xff] %v11656
        %11721 = vst [vmem:[%s336 + $0x70] sm:$0xff] %v11657
        %11722 = vst [vmem:[%s336 + $0x78] sm:$0xff] %v11658
        %11723 = vst [vmem:[%s336 + $0x80] sm:$0xff] %v11659
        %11724 = vst [vmem:[%s336 + $0x88] sm:$0xff] %v11660
        %11725 = vst [vmem:[%s336 + $0x90] sm:$0xff] %v11661
        %11726 = vst [vmem:[%s336 + $0x98] sm:$0xff] %v11662
        %11727 = vst [vmem:[%s336 + $0xa0] sm:$0xff] %v11663
        %11728 = vst [vmem:[%s336 + $0xa8] sm:$0xff] %v11664
        %11729 = vst [vmem:[%s336 + $0xb0] sm:$0xff] %v11665
        %11730 = vst [vmem:[%s336 + $0xb8] sm:$0xff] %v11666
        %11731 = vst [vmem:[%s336 + $0xc0] sm:$0xff] %v11667
        %11732 = vst [vmem:[%s336 + $0xc8] sm:$0xff] %v11668
        %11733 = vst [vmem:[%s336 + $0xd0] sm:$0xff] %v11669
        %11734 = vst [vmem:[%s336 + $0xd8] sm:$0xff] %v11670
        %11735 = vst [vmem:[%s336 + $0xe0] sm:$0xff] %v11671
        %11736 = vst [vmem:[%s336 + $0xe8] sm:$0xff] %v11672
        %11737 = vst [vmem:[%s336 + $0xf0] sm:$0xff] %v11673
        %11738 = vst [vmem:[%s336 + $0xf8] sm:$0xff] %v11674
        %11739 = vst [vmem:[%s336 + $0x100] sm:$0xff] %v11675
        %11740 = vst [vmem:[%s336 + $0x108] sm:$0xff] %v11676
        %11741 = vst [vmem:[%s336 + $0x110] sm:$0xff] %v11677
        %11742 = vst [vmem:[%s336 + $0x118] sm:$0xff] %v11678
        %11743 = vst [vmem:[%s336 + $0x120] sm:$0xff] %v11679
        %11744 = vst [vmem:[%s336 + $0x128] sm:$0xff] %v11680
        %11745 = vst [vmem:[%s336 + $0x130] sm:$0xff] %v11681
        %11746 = vst [vmem:[%s336 + $0x138] sm:$0xff] %v11682
        %11747 = vst [vmem:[%s336 + $0x140] sm:$0xff] %v11683
        %11748 = vst [vmem:[%s336 + $0x148] sm:$0xff] %v11684
        %11749 = vst [vmem:[%s336 + $0x150] sm:$0xff] %v11685
        %11750 = vst [vmem:[%s336 + $0x158] sm:$0xff] %v11686
        %11751 = vst [vmem:[%s336 + $0x160] sm:$0xff] %v11687
        %11752 = vst [vmem:[%s336 + $0x168] sm:$0xff] %v11688
        %11753 = vst [vmem:[%s336 + $0x170] sm:$0xff] %v11689
        %11754 = vst [vmem:[%s336 + $0x178] sm:$0xff] %v11690
        %11755 = vst [vmem:[%s336 + $0x180] sm:$0xff] %v11691
        %11756 = vst [vmem:[%s336 + $0x188] sm:$0xff] %v11692
        %11757 = vst [vmem:[%s336 + $0x190] sm:$0xff] %v11693
        %11758 = vst [vmem:[%s336 + $0x198] sm:$0xff] %v11694
        %11759 = vst [vmem:[%s336 + $0x1a0] sm:$0xff] %v11695
        %11760 = vst [vmem:[%s336 + $0x1a8] sm:$0xff] %v11696
        %11761 = vst [vmem:[%s336 + $0x1b0] sm:$0xff] %v11697
        %11762 = vst [vmem:[%s336 + $0x1b8] sm:$0xff] %v11698
        %11763 = vst [vmem:[%s336 + $0x1c0] sm:$0xff] %v11699
        %11764 = vst [vmem:[%s336 + $0x1c8] sm:$0xff] %v11700
        %11765 = vst [vmem:[%s336 + $0x1d0] sm:$0xff] %v11701
        %11766 = vst [vmem:[%s336 + $0x1d8] sm:$0xff] %v11702
        %11767 = vst [vmem:[%s336 + $0x1e0] sm:$0xff] %v11703
        %11768 = vst [vmem:[%s336 + $0x1e8] sm:$0xff] %v11704
        %11769 = vst [vmem:[%s336 + $0x1f0] sm:$0xff] %v11705
        %11770 = vst [vmem:[%s336 + $0x1f8] sm:$0xff] %v11706
        %s11771 = sand.u32 %s164, 1
        %s11772 = scalar_lea.sflag [#allocation4], %s11771
        %s11773 = sand.u32 %s164, 1
        %s11774 = smul.addr %s11773, 512
        %s11775 = scalar_lea.vmem [#allocation11], %s11774
        // Predicated region
        $region65: #{tpu_custom_call.1} parent=43 // pred_check
          %p11776 = pneg %p174
        $region66: #{tpu_custom_call.1} parent=43 // pred_check_branch
          %11778 = sbr.rel (%p11776) target = $region68
        $region67: #{tpu_custom_call.1} parent=43 // pred_region
          %s11779 = smul.u32 8, %s25
          %11781 = vsyncadd %s11772, 0
          %s11782 = smul.addr %s11779, 8
          %s11783 = smul.addr %s11782, 8
          %s11784 = scalar_lea.hbm %s6, %s11783
          %s11785 = sshll.u32 %s11775, 4
          %s11786 = int_to_ptr.vmem [resolvable:$true] %s11785
          %s11787 = sshll.u32 %s11784, 4
          %s11788 = int_to_ptr.hbm [resolvable:$true] %s11787
          %11793 = dma.vmem_to_hbm [thread:$0]  %s11786, 8192, %s11788, %s11772, 128, 128, 8
        $region68: #{tpu_custom_call.1} parent=43 // pred_fallthru
          _
      $region44: #{tpu_custom_call.1} parent=5 // pred_fallthru
        _
      %p11794 = scmp.le.s32.totalorder 2, %s20
      // Predicated region
      $region69: #{tpu_custom_call.1} parent=5 // pred_check
        %p11795 = pneg %p11794
      $region70: #{tpu_custom_call.1} parent=5 // pred_check_branch
        %11797 = sbr.rel (%p11795) target = $region72
      $region71: #{tpu_custom_call.1} parent=5 // pred_region
        %s11798 = ssub.s32 %s20, 2
        // Predicated region
        $region73: #{tpu_custom_call.1} parent=71 // pred_check
          %p11799 = pneg %p180
        $region74: #{tpu_custom_call.1} parent=71 // pred_check_branch
          %11801 = sbr.rel (%p11799) target = $region76
        $region75: #{tpu_custom_call.1} parent=71 // pred_region
          %s11802 = sand.u32 %s165, 1
          %s11803 = scalar_lea.sflag [#allocation4], %s11802
          %s11804 = sand.u32 %s165, 1
          %s11805 = smul.addr %s11804, 512
          %s11806 = scalar_lea.vmem [#allocation11], %s11805
          %11808 = dma.done %s11803, 8192
        $region76: #{tpu_custom_call.1} parent=71 // pred_fallthru
          _
      $region72: #{tpu_custom_call.1} parent=5 // pred_fallthru
        _
    $region6: #{tpu_custom_call.1} parent=1 // loop_footer
      %s24 = sadd.s32 1, %s20
    $region7: #{tpu_custom_call.1} parent=1 // loop_footer_branch
      %19 = sbr.rel target = $region3
    $region8: #{tpu_custom_call.1} parent=1 // loop_exit
      _
    %11809 = vsyncpa [#allocation3], 1
    %s11810 = scalar_lea.sflag [#allocation3], 1
    %11811 = vsyncpa %s11810, 1
    %11812 = vsyncpa [#allocation6], 1
    %11813 = vsyncpa [#allocation9], 1
    %11814 = vsyncpa [#allocation4], 1
    %s11815 = scalar_lea.sflag [#allocation4], 1
    %11816 = vsyncpa %s11815, 1

</llo_original>
